<compile_context>
chip_gen: v5e
topology: v5e:2x2
jax: 0.10.0
libtpu: 0.0.40
codegen_flags: <defaults>
</compile_context>

<pallas_src>
import functools

import jax
import jax.numpy as jnp
from jax.experimental import pallas as pl
from jax.experimental.pallas import tpu as pltpu


# ------------------------------ small helpers -------------------------------

def _round_up(x, m):
    return ((x + m - 1) // m) * m


def _pick_tile(d, align, cap):
    r = _round_up(d, align)
    return r if r <= cap else cap


# --------------------------- fused tiled matmul ------------------------------
#
# out = act( [LN(x)] @ w + b ) [+ residual]
#   - x tiles cast to bf16, w stored in bf16, f32 accumulation on the MXU.
#   - optional LayerNorm prologue (requires K untiled: one K block).
#   - optional GELU activation and residual add fused into the epilogue.
#   - single-K-block case writes the output tile directly (no accumulator).

def _mm_kernel(*refs, activation, has_ln, has_res, true_k, eps, single_k):
    it = iter(refs)
    x_ref = next(it)
    w_ref = next(it)
    b_ref = next(it)
    g_ref = bb_ref = r_ref = None
    if has_ln:
        g_ref = next(it)
        bb_ref = next(it)
    if has_res:
        r_ref = next(it)
    o_ref = next(it)
    acc_ref = None if single_k else next(it)

    if has_ln:
        x = x_ref[...].astype(jnp.float32)
        # E[x], E[x^2] with the *true* K divisor -> zero K-padding is harmless.
        mean = jnp.sum(x, axis=-1, keepdims=True) / true_k
        ex2 = jnp.sum(x * x, axis=-1, keepdims=True) / true_k
        var = ex2 - mean * mean
        x = (x - mean) * jax.lax.rsqrt(var + eps)
        x = (x * g_ref[...] + bb_ref[...]).astype(jnp.bfloat16)
    else:
        x = x_ref[...].astype(jnp.bfloat16)

    part = jnp.dot(x, w_ref[...].astype(jnp.bfloat16),
                   preferred_element_type=jnp.float32)

    def epilogue(acc):
        out = acc + b_ref[...].astype(jnp.float32)
        if activation == "gelu":
            out = jax.nn.gelu(out)   # tanh approx (PyTorch uses erf; no ckpt so OK)
        if has_res:
            out = out + r_ref[...].astype(jnp.float32)
        o_ref[...] = out.astype(o_ref.dtype)

    if single_k:
        epilogue(part)
    else:
        @pl.when(pl.program_id(2) == 0)
        def _():
            acc_ref[...] = jnp.zeros_like(acc_ref)

        acc_ref[...] += part

        @pl.when(pl.program_id(2) == pl.num_programs(2) - 1)
        def _():
            epilogue(acc_ref[...])


def matmul_bias(x, w, b, activation=None, residual=None, ln=None, ln_eps=1e-5,
                out_dtype=jnp.float32):
    """x:[M,K] @ w:[K,N] + b:[N], optional LN(x) prologue / GELU / +residual epilogue."""
    M, K = x.shape
    Kw, N = w.shape
    assert K == Kw

    tm = _pick_tile(M, 16, 256)           # 16-alignment is bf16-output safe
    tn = _pick_tile(N, 128, 512)
    if ln is not None:
        tk = _round_up(K, 128)            # LN needs the whole row in one K block
    else:
        tk = _pick_tile(K, 128, 1024)
    Mp, Kp, Np = _round_up(M, tm), _round_up(K, tk), _round_up(N, tn)
    kt = Kp // tk
    single_k = (kt == 1)

    xp = jnp.pad(x, ((0, Mp - M), (0, Kp - K))) if (Mp != M or Kp != K) else x
    wp = jnp.pad(w, ((0, Kp - K), (0, Np - N))) if (Kp != K or Np != N) else w
    bp = (jnp.pad(b, (0, Np - N)) if Np != N else b).reshape(1, Np)

    inputs = [xp, wp, bp]
    in_specs = [
        pl.BlockSpec((tm, tk), lambda i, j, k: (i, k)),
        pl.BlockSpec((tk, tn), lambda i, j, k: (k, j)),
        pl.BlockSpec((1, tn), lambda i, j, k: (0, j)),
    ]
    if ln is not None:
        g, bb = ln
        gp = (jnp.pad(g, (0, Kp - K)) if Kp != K else g).reshape(1, Kp)
        bbp = (jnp.pad(bb, (0, Kp - K)) if Kp != K else bb).reshape(1, Kp)
        inputs += [gp, bbp]
        in_specs += [pl.BlockSpec((1, tk), lambda i, j, k: (0, k)),
                     pl.BlockSpec((1, tk), lambda i, j, k: (0, k))]
    if residual is not None:
        rp = (jnp.pad(residual, ((0, Mp - M), (0, Np - N)))
              if (Mp != M or Np != N) else residual)
        inputs += [rp]
        in_specs += [pl.BlockSpec((tm, tn), lambda i, j, k: (i, j))]

    scratch = [] if single_k else [pltpu.VMEM((tm, tn), jnp.float32)]

    out = pl.pallas_call(
        functools.partial(_mm_kernel, activation=activation,
                          has_ln=ln is not None, has_res=residual is not None,
                          true_k=K, eps=ln_eps, single_k=single_k),
        out_shape=jax.ShapeDtypeStruct((Mp, Np), out_dtype),
        grid=(Mp // tm, Np // tn, kt),
        in_specs=in_specs,
        out_specs=pl.BlockSpec((tm, tn), lambda i, j, k: (i, j)),
        scratch_shapes=scratch,
        compiler_params=pltpu.CompilerParams(
            dimension_semantics=("parallel", "parallel", "arbitrary")),
    )(*inputs)
    if Mp != M or Np != N:
        out = out[:M, :N]
    return out


# ------------------------ row-tiled layernorm / l2norm -----------------------

def _layernorm_kernel(x_ref, g_ref, b_ref, o_ref, *, eps):
    x = x_ref[...].astype(jnp.float32)
    mean = jnp.mean(x, axis=-1, keepdims=True)
    var = jnp.mean(jnp.square(x - mean), axis=-1, keepdims=True)
    y = (x - mean) * jax.lax.rsqrt(var + eps)
    o_ref[...] = (y * g_ref[...] + b_ref[...]).astype(o_ref.dtype)


def layernorm(x, g, b, eps=1e-5):
    M, D = x.shape
    tm = _pick_tile(M, 8, 512)
    Mp = _round_up(M, tm)
    xp = jnp.pad(x, ((0, Mp - M), (0, 0))) if Mp != M else x
    out = pl.pallas_call(
        functools.partial(_layernorm_kernel, eps=eps),
        out_shape=jax.ShapeDtypeStruct((Mp, D), jnp.float32),
        grid=(Mp // tm,),
        in_specs=[pl.BlockSpec((tm, D), lambda i: (i, 0)),
                  pl.BlockSpec((1, D), lambda i: (0, 0)),
                  pl.BlockSpec((1, D), lambda i: (0, 0))],
        out_specs=pl.BlockSpec((tm, D), lambda i: (i, 0)),
        compiler_params=pltpu.CompilerParams(dimension_semantics=("parallel",)),
    )(xp, g.reshape(1, D), b.reshape(1, D))
    return out[:M] if Mp != M else out


def _l2norm_kernel(x_ref, o_ref, *, eps):
    x = x_ref[...].astype(jnp.float32)
    nrm = jnp.sqrt(jnp.sum(x * x, axis=-1, keepdims=True))
    o_ref[...] = (x / jnp.maximum(nrm, eps)).astype(o_ref.dtype)   # == F.normalize


def l2_normalize(x, eps=1e-12):
    M, D = x.shape
    tm = _pick_tile(M, 8, 512)
    Mp = _round_up(M, tm)
    xp = jnp.pad(x, ((0, Mp - M), (0, 0))) if Mp != M else x
    out = pl.pallas_call(
        functools.partial(_l2norm_kernel, eps=eps),
        out_shape=jax.ShapeDtypeStruct((Mp, D), jnp.float32),
        grid=(Mp // tm,),
        in_specs=[pl.BlockSpec((tm, D), lambda i: (i, 0))],
        out_specs=pl.BlockSpec((tm, D), lambda i: (i, 0)),
        compiler_params=pltpu.CompilerParams(dimension_semantics=("parallel",)),
    )(xp)
    return out[:M] if Mp != M else out


# ------------------------- multi-head self attention -------------------------
#
# One grid step = one sequence, all heads.  Q/K/V are read straight out of the
# fused [B, N, 3D] QKV activation via BlockSpec index_maps (block index 0/1/2
# along the last axis), and the output is written lane-dense as [B, N, D] in
# bf16 (already in the layout / dtype the projection matmul wants).

def _attn_kernel(*refs, num_heads, scale, has_bias):
    if has_bias:
        q_ref, k_ref, v_ref, bias_ref, o_ref = refs
    else:
        q_ref, k_ref, v_ref, o_ref = refs
    q = q_ref[0]                               # [N, D], bf16
    k = k_ref[0]
    v = v_ref[0]
    D = q.shape[-1]
    Dh = D // num_heads

    outs = []
    for h in range(num_heads):                 # unrolled; 2D MXU matmuls per head
        sl = slice(h * Dh, (h + 1) * Dh)
        qh = q[:, sl].astype(jnp.bfloat16)
        kh = k[:, sl].astype(jnp.bfloat16)
        vh = v[:, sl].astype(jnp.bfloat16)
        s = jax.lax.dot_general(qh, kh, (((1,), (1,)), ((), ())),
                                preferred_element_type=jnp.float32) * scale
        if has_bias:
            s = s + bias_ref[0]                # additive key bias [1, N]
        s = s - jnp.max(s, axis=-1, keepdims=True)
        p = jnp.exp(s)
        p = p * pl.reciprocal(jnp.sum(p, axis=-1, keepdims=True), approx=True)
        outs.append(jnp.dot(p.astype(jnp.bfloat16), vh,
                            preferred_element_type=jnp.float32))
    o_ref[0] = jnp.concatenate(outs, axis=-1).astype(o_ref.dtype)


def mha_attention(qkv, num_heads, key_bias=None):
    """qkv: [B_, N, 3D] fused projection output; key_bias: [B_, N] additive or None."""
    B_, N, D3 = qkv.shape
    D = D3 // 3
    scale = (D // num_heads) ** -0.5
    has_bias = key_bias is not None

    in_specs = [
        pl.BlockSpec((1, N, D), lambda b: (b, 0, 0)),   # Q slice of qkv
        pl.BlockSpec((1, N, D), lambda b: (b, 0, 1)),   # K slice of qkv
        pl.BlockSpec((1, N, D), lambda b: (b, 0, 2)),   # V slice of qkv
    ]
    inputs = [qkv, qkv, qkv]
    if has_bias:
        in_specs.append(pl.BlockSpec((1, 1, N), lambda b: (b, 0, 0)))
        inputs.append(key_bias.reshape(B_, 1, N).astype(jnp.float32))

    return pl.pallas_call(
        functools.partial(_attn_kernel, num_heads=num_heads,
                          scale=scale, has_bias=has_bias),
        out_shape=jax.ShapeDtypeStruct((B_, N, D), jnp.bfloat16),
        grid=(B_,),
        in_specs=in_specs,
        out_specs=pl.BlockSpec((1, N, D), lambda b: (b, 0, 0)),
        compiler_params=pltpu.CompilerParams(dimension_semantics=("parallel",)),
    )(*inputs)


# ------------------------------- model glue ----------------------------------

def patch_embed(frames, w, b, patch, dim):
    """Conv2d(3, D, kernel=stride=patch) as patch-unfold + tiled Pallas matmul."""
    BT, C, H, W = frames.shape
    gh, gw = H // patch, W // patch
    # TODO(synk): the unfold transpose stays in plain JAX (one pass over the raw video);
    #             expressing this gather via BlockSpec index_maps is left out.
    x = frames.reshape(BT, C, gh, patch, gw, patch)
    x = jnp.transpose(x, (0, 2, 4, 1, 3, 5)).reshape(BT * gh * gw, C * patch * patch)
    out = matmul_bias(x, w, b)
    return out.reshape(BT, gh * gw, dim)


def transformer_block(x, p, num_heads, key_bias=None):
    """Pre-norm ViT block: x += Proj(MHA(LN1(x))); x += FC2(GELU(FC1(LN2(x))))."""
    B_, N, D = x.shape
    xf = x.reshape(B_ * N, D)
    # LN1 fused into QKV projection; qkv / attn out kept in bf16 (MXU-only consumers).
    qkv = matmul_bias(xf, p['w_qkv'], p['b_qkv'], ln=(p['ln1_g'], p['ln1_b']),
                      out_dtype=jnp.bfloat16)
    qkv = qkv.reshape(B_, N, 3 * D)
    attn = mha_attention(qkv, num_heads, key_bias=key_bias)        # [B_, N, D] bf16
    # Output projection with fused residual add (residual stream stays f32).
    x1 = matmul_bias(attn.reshape(B_ * N, D), p['w_proj'], p['b_proj'], residual=xf)
    # LN2 fused into FC1 (with GELU, bf16 hidden); residual fused into FC2.
    h = matmul_bias(x1, p['w_fc1'], p['b_fc1'], activation="gelu",
                    ln=(p['ln2_g'], p['ln2_b']), out_dtype=jnp.bfloat16)
    x2 = matmul_bias(h, p['w_fc2'], p['b_fc2'], residual=x1)
    return x2.reshape(B_, N, D)


def stam_forward(params, data, mask, cfg):
    """data: [B*T, 3, S, S]; mask: [B, T].  Returns (cls_emb[B,D], logits, frame_embs[T,B,D])."""
    B, T = mask.shape
    D, Hh = cfg['dim'], cfg['heads']
    BT = data.shape[0]

    # --- per-frame spatial ViT ---
    x = patch_embed(data, params['patch_w'], params['patch_b'], cfg['patch'], D)  # [BT,P,D]
    P = x.shape[1]
    cls = jnp.broadcast_to(params['cls_token'], (BT, 1, D))
    x = jnp.concatenate([cls, x], axis=1) + params['pos_embed']                   # [BT,P+1,D]
    for blk in params['spatial_blocks']:
        x = transformer_block(x, blk, Hh)                 # no key bias -> no mask DMA
    x = layernorm(x.reshape(BT * (P + 1), D),
                  params['norm_g'], params['norm_b']).reshape(BT, P + 1, D)
    frame_cls = x[:, 0].reshape(B, T, D)

    # --- temporal transformer aggregation over per-frame CLS tokens ---
    t = frame_cls + params['time_embed']
    tcls = jnp.broadcast_to(params['temporal_cls'], (B, 1, D))
    t = jnp.concatenate([tcls, t], axis=1)                                        # [B,T+1,D]
    key_mask = jnp.concatenate([jnp.ones((B, 1), mask.dtype), mask], axis=1)
    key_bias = jnp.where(key_mask > 0, 0.0, -1e9).astype(jnp.float32)             # [B,T+1]
    for blk in params['temporal_blocks']:
        t = transformer_block(t, blk, Hh, key_bias=key_bias)
    t = layernorm(t.reshape(B * (T + 1), D),
                  params['tnorm_g'], params['tnorm_b']).reshape(B, T + 1, D)

    cls_emb = t[:, 0]                                        # [B, D]
    frame_embs = jnp.transpose(t[:, 1:], (1, 0, 2))          # [T, B, D] (STAM convention)
    cls_logits = cls_emb                                     # num_classes == 0 -> identity head
    return cls_emb, cls_logits, frame_embs


def video_expert_forward(params, data, mask, *, cfg):
    """data: [B, T, 3, S, S]; mask: [B, T] (reducer=None)."""
    B, T, C, H, W = data.shape
    data = data.reshape(B * T, C, H, W)
    cls_emb, _cls_logits, frame_embs = stam_forward(params, data, mask, cfg)
    cls_emb_norm = l2_normalize(cls_emb)                                   # F.normalize dim=1
    frame_embs = jnp.transpose(frame_embs, (1, 0, 2))                      # permute(1,0,2)
    D = frame_embs.shape[-1]
    frame_embs_norm = l2_normalize(frame_embs.reshape(B * T, D)).reshape(B, T, D)  # dim=2
    return {
        'pooled_feature': cls_emb_norm,
        'token_features': frame_embs_norm,
        'attention_mask': mask,
    }


# ------------------------------ parameter init --------------------------------

def init_params(key, cfg):
    D, patch, C = cfg['dim'], cfg['patch'], 3
    P = (cfg['frame_size'] // patch) ** 2
    T = cfg['num_frames']
    hidden = cfg['mlp_hidden']
    keys = iter(jax.random.split(key, 128))

    def nrm(shape, scale=0.02, dtype=jnp.float32):
        return (scale * jax.random.normal(next(keys), shape, jnp.float32)).astype(dtype)

    # Weight matrices stored in bf16 (MXU operands, halves weight HBM traffic);
    # biases / LN params / embeddings stay f32.
    def block_params():
        return dict(
            ln1_g=jnp.ones((D,), jnp.float32), ln1_b=jnp.zeros((D,), jnp.float32),
            w_qkv=nrm((D, 3 * D), dtype=jnp.bfloat16), b_qkv=jnp.zeros((3 * D,), jnp.float32),
            w_proj=nrm((D, D), dtype=jnp.bfloat16), b_proj=jnp.zeros((D,), jnp.float32),
            ln2_g=jnp.ones((D,), jnp.float32), ln2_b=jnp.zeros((D,), jnp.float32),
            w_fc1=nrm((D, hidden), dtype=jnp.bfloat16), b_fc1=jnp.zeros((hidden,), jnp.float32),
            w_fc2=nrm((hidden, D), dtype=jnp.bfloat16), b_fc2=jnp.zeros((D,), jnp.float32),
        )

    return dict(
        patch_w=nrm((C * patch * patch, D), dtype=jnp.bfloat16),   # Conv2d weight flattened^T
        patch_b=jnp.zeros((D,), jnp.float32),
        cls_token=nrm((1, 1, D)),
        pos_embed=nrm((1, P + 1, D)),
        norm_g=jnp.ones((D,), jnp.float32), norm_b=jnp.zeros((D,), jnp.float32),
        temporal_cls=nrm((1, 1, D)),
        time_embed=nrm((1, T, D)),
        tnorm_g=jnp.ones((D,), jnp.float32), tnorm_b=jnp.zeros((D,), jnp.float32),
        spatial_blocks=[block_params() for _ in range(cfg['spatial_depth'])],
        temporal_blocks=[block_params() for _ in range(cfg['temporal_depth'])],
    )


# ----------------------------------- main --------------------------------------

if __name__ == "__main__":
    # Small config (dim kept at 128 so all lane dims are hardware-aligned).
    cfg = dict(num_frames=8, frame_size=16, patch=8, dim=128, heads=4,
               mlp_hidden=256, spatial_depth=1, temporal_depth=1)

    key = jax.random.PRNGKey(0)
    kp, kd = jax.random.split(key)
    params = init_params(kp, cfg)

    B, T, S = 2, cfg['num_frames'], cfg['frame_size']
    data = jax.random.normal(kd, (B, T, 3, S, S), jnp.float32)
    # last two frames of each clip are padding
    mask = jnp.concatenate([jnp.ones((B, T - 2), jnp.float32),
                            jnp.zeros((B, 2), jnp.float32)], axis=1)

    fwd = jax.jit(functools.partial(video_expert_forward, cfg=cfg))
    out = fwd(params, data, mask)
    out = jax.block_until_ready(out)

    assert out['pooled_feature'].shape == (B, cfg['dim'])
    assert out['token_features'].shape == (B, T, cfg['dim'])
    assert out['attention_mask'].shape == (B, T)
    # L2-normalized rows
    assert jnp.allclose(jnp.linalg.norm(out['pooled_feature'], axis=1), 1.0, atol=1e-4)
    assert jnp.allclose(jnp.linalg.norm(out['token_features'], axis=2), 1.0, atol=1e-4)

    print("KERNEL_OK")
</pallas_src>

<mosaic_0001>
module attributes {stable_mosaic.version = 11 : i64} {
  func.func @_mm_kernel(%arg0: i32, %arg1: i32, %arg2: i32, %arg3: memref<64x256xf32, #tpu.memory_space<vmem>>, %arg4: memref<256x128xbf16, #tpu.memory_space<vmem>>, %arg5: memref<1x128xf32, #tpu.memory_space<vmem>>, %arg6: memref<64x128xf32, #tpu.memory_space<vmem>>) attributes {dimension_semantics = [#tpu.dimension_semantics<parallel>, #tpu.dimension_semantics<parallel>, #tpu.dimension_semantics<arbitrary>], iteration_bounds = array<i64: 1, 1, 1>, scalar_prefetch = 0 : i64, scratch_operands = 0 : i64, tpu.core_type = #tpu.core_type<tc>, window_params = [{transform_indices = @transform_0, window_bounds = array<i64: 64, 256>}, {transform_indices = @transform_1, window_bounds = array<i64: 256, 128>}, {transform_indices = @transform_2, window_bounds = array<i64: 1, 128>}, {transform_indices = @transform_3, window_bounds = array<i64: 64, 128>}]} {
    %c0 = arith.constant 0 : index
    %c0_0 = arith.constant 0 : index
    %0 = vector.load %arg3[%c0, %c0_0] : memref<64x256xf32, #tpu.memory_space<vmem>>, vector<64x256xf32>
    %1 = arith.truncf %0 : vector<64x256xf32> to vector<64x256xbf16>
    %c0_1 = arith.constant 0 : index
    %c0_2 = arith.constant 0 : index
    %2 = vector.load %arg4[%c0_1, %c0_2] : memref<256x128xbf16, #tpu.memory_space<vmem>>, vector<256x128xbf16>
    %cst = arith.constant dense<0.000000e+00> : vector<64x128xf32>
    %3 = tpu.matmul %1, %2, %cst {dimension_numbers = #tpu.dot_dimension_numbers<[1], [0], [0], [1], [0, 0, 1, 1], [], []>} : vector<64x256xbf16>, vector<256x128xbf16>, vector<64x128xf32> -> vector<64x128xf32>
    %c0_3 = arith.constant 0 : index
    %c0_4 = arith.constant 0 : index
    %4 = vector.load %arg5[%c0_3, %c0_4] : memref<1x128xf32, #tpu.memory_space<vmem>>, vector<1x128xf32>
    %5 = vector.broadcast %4 : vector<1x128xf32> to vector<64x128xf32>
    %6 = arith.addf %3, %5 : vector<64x128xf32>
    %c0_5 = arith.constant 0 : index
    %c0_6 = arith.constant 0 : index
    %7 = vector.load %arg6[%c0_5, %c0_6] : memref<64x128xf32, #tpu.memory_space<vmem>>, vector<64x128xf32>
    tpu.vector_store %arg6[%c0_5, %c0_6], %6 {strides = array<i32>} : memref<64x128xf32, #tpu.memory_space<vmem>>, vector<64x128xf32>,
    return
  }
  func.func @transform_0(%arg0: i32, %arg1: i32, %arg2: i32) -> (i32, i32) {
    %c0_i32 = arith.constant 0 : i32
    return %arg0, %arg2 : i32, i32
  }
  func.func @transform_1(%arg0: i32, %arg1: i32, %arg2: i32) -> (i32, i32) {
    %c0_i32 = arith.constant 0 : i32
    return %arg2, %arg1 : i32, i32
  }
  func.func @transform_2(%arg0: i32, %arg1: i32, %arg2: i32) -> (i32, i32) {
    %c0_i32 = arith.constant 0 : i32
    %c0_i32_0 = arith.constant 0 : i32
    return %c0_i32, %arg1 : i32, i32
  }
  func.func @transform_3(%arg0: i32, %arg1: i32, %arg2: i32) -> (i32, i32) {
    %c0_i32 = arith.constant 0 : i32
    return %arg0, %arg1 : i32, i32
  }
}

module attributes {stable_mosaic.version = 11 : i64} {
  func.func @_mm_kernel(%arg0: i32, %arg1: i32, %arg2: i32, %arg3: memref<80x128xf32, #tpu.memory_space<vmem>>, %arg4: memref<128x384xbf16, #tpu.memory_space<vmem>>, %arg5: memref<1x384xf32, #tpu.memory_space<vmem>>, %arg6: memref<1x128xf32, #tpu.memory_space<vmem>>, %arg7: memref<1x128xf32, #tpu.memory_space<vmem>>, %arg8: memref<80x384xbf16, #tpu.memory_space<vmem>>) attributes {dimension_semantics = [#tpu.dimension_semantics<parallel>, #tpu.dimension_semantics<parallel>, #tpu.dimension_semantics<arbitrary>], iteration_bounds = array<i64: 1, 1, 1>, scalar_prefetch = 0 : i64, scratch_operands = 0 : i64, tpu.core_type = #tpu.core_type<tc>, window_params = [{transform_indices = @transform_0, window_bounds = array<i64: 80, 128>}, {transform_indices = @transform_1, window_bounds = array<i64: 128, 384>}, {transform_indices = @transform_2, window_bounds = array<i64: 1, 384>}, {transform_indices = @transform_3, window_bounds = array<i64: 1, 128>}, {transform_indices = @transform_4, window_bounds = array<i64: 1, 128>}, {transform_indices = @transform_5, window_bounds = array<i64: 80, 384>}]} {
    %c0 = arith.constant 0 : index
    %c0_0 = arith.constant 0 : index
    %0 = vector.load %arg3[%c0, %c0_0] : memref<80x128xf32, #tpu.memory_space<vmem>>, vector<80x128xf32>
    %cst = arith.constant dense<0.000000e+00> : vector<80xf32>
    %1 = vector.multi_reduction <add>, %0, %cst [1] : vector<80x128xf32> to vector<80xf32>
    %2 = vector.shape_cast %1 : vector<80xf32> to vector<80x1xf32>
    %cst_1 = arith.constant 1.280000e+02 : f32
    %3 = vector.broadcast %cst_1 : f32 to vector<80x1xf32>
    %4 = arith.divf %2, %3 : vector<80x1xf32>
    %5 = arith.mulf %0, %0 : vector<80x128xf32>
    %cst_2 = arith.constant dense<0.000000e+00> : vector<80xf32>
    %6 = vector.multi_reduction <add>, %5, %cst_2 [1] : vector<80x128xf32> to vector<80xf32>
    %7 = vector.shape_cast %6 : vector<80xf32> to vector<80x1xf32>
    %cst_3 = arith.constant 1.280000e+02 : f32
    %8 = vector.broadcast %cst_3 : f32 to vector<80x1xf32>
    %9 = arith.divf %7, %8 : vector<80x1xf32>
    %10 = arith.mulf %4, %4 : vector<80x1xf32>
    %11 = arith.subf %9, %10 : vector<80x1xf32>
    %12 = vector.broadcast %4 : vector<80x1xf32> to vector<80x128xf32>
    %13 = arith.subf %0, %12 : vector<80x128xf32>
    %cst_4 = arith.constant 9.99999974E-6 : f32
    %14 = vector.broadcast %cst_4 : f32 to vector<80x1xf32>
    %15 = arith.addf %11, %14 : vector<80x1xf32>
    %16 = math.rsqrt %15 : vector<80x1xf32>
    %17 = vector.broadcast %16 : vector<80x1xf32> to vector<80x128xf32>
    %18 = arith.mulf %13, %17 : vector<80x128xf32>
    %c0_5 = arith.constant 0 : index
    %c0_6 = arith.constant 0 : index
    %19 = vector.load %arg6[%c0_5, %c0_6] : memref<1x128xf32, #tpu.memory_space<vmem>>, vector<1x128xf32>
    %20 = vector.broadcast %19 : vector<1x128xf32> to vector<80x128xf32>
    %21 = arith.mulf %18, %20 : vector<80x128xf32>
    %c0_7 = arith.constant 0 : index
    %c0_8 = arith.constant 0 : index
    %22 = vector.load %arg7[%c0_7, %c0_8] : memref<1x128xf32, #tpu.memory_space<vmem>>, vector<1x128xf32>
    %23 = vector.broadcast %22 : vector<1x128xf32> to vector<80x128xf32>
    %24 = arith.addf %21, %23 : vector<80x128xf32>
    %25 = arith.truncf %24 : vector<80x128xf32> to vector<80x128xbf16>
    %c0_9 = arith.constant 0 : index
    %c0_10 = arith.constant 0 : index
    %26 = vector.load %arg4[%c0_9, %c0_10] : memref<128x384xbf16, #tpu.memory_space<vmem>>, vector<128x384xbf16>
    %cst_11 = arith.constant dense<0.000000e+00> : vector<80x384xf32>
    %27 = tpu.matmul %25, %26, %cst_11 {dimension_numbers = #tpu.dot_dimension_numbers<[1], [0], [0], [1], [0, 0, 1, 1], [], []>} : vector<80x128xbf16>, vector<128x384xbf16>, vector<80x384xf32> -> vector<80x384xf32>
    %c0_12 = arith.constant 0 : index
    %c0_13 = arith.constant 0 : index
    %28 = vector.load %arg5[%c0_12, %c0_13] : memref<1x384xf32, #tpu.memory_space<vmem>>, vector<1x384xf32>
    %29 = vector.broadcast %28 : vector<1x384xf32> to vector<80x384xf32>
    %30 = arith.addf %27, %29 : vector<80x384xf32>
    %31 = arith.truncf %30 : vector<80x384xf32> to vector<80x384xbf16>
    %c0_14 = arith.constant 0 : index
    %c0_15 = arith.constant 0 : index
    %32 = vector.load %arg8[%c0_14, %c0_15] : memref<80x384xbf16, #tpu.memory_space<vmem>>, vector<80x384xbf16>
    tpu.vector_store %arg8[%c0_14, %c0_15], %31 {strides = array<i32>} : memref<80x384xbf16, #tpu.memory_space<vmem>>, vector<80x384xbf16>,
    return
  }
  func.func @transform_0(%arg0: i32, %arg1: i32, %arg2: i32) -> (i32, i32) {
    %c0_i32 = arith.constant 0 : i32
    return %arg0, %arg2 : i32, i32
  }
  func.func @transform_1(%arg0: i32, %arg1: i32, %arg2: i32) -> (i32, i32) {
    %c0_i32 = arith.constant 0 : i32
    return %arg2, %arg1 : i32, i32
  }
  func.func @transform_2(%arg0: i32, %arg1: i32, %arg2: i32) -> (i32, i32) {
    %c0_i32 = arith.constant 0 : i32
    %c0_i32_0 = arith.constant 0 : i32
    return %c0_i32, %arg1 : i32, i32
  }
  func.func @transform_3(%arg0: i32, %arg1: i32, %arg2: i32) -> (i32, i32) {
    %c0_i32 = arith.constant 0 : i32
    %c0_i32_0 = arith.constant 0 : i32
    return %c0_i32, %arg2 : i32, i32
  }
  func.func @transform_4(%arg0: i32, %arg1: i32, %arg2: i32) -> (i32, i32) {
    %c0_i32 = arith.constant 0 : i32
    %c0_i32_0 = arith.constant 0 : i32
    return %c0_i32, %arg2 : i32, i32
  }
  func.func @transform_5(%arg0: i32, %arg1: i32, %arg2: i32) -> (i32, i32) {
    %c0_i32 = arith.constant 0 : i32
    return %arg0, %arg1 : i32, i32
  }
}

module attributes {stable_mosaic.version = 11 : i64} {
  func.func @_attn_kernel(%arg0: i32, %arg1: memref<1x5x128xbf16, #tpu.memory_space<vmem>>, %arg2: memref<1x5x128xbf16, #tpu.memory_space<vmem>>, %arg3: memref<1x5x128xbf16, #tpu.memory_space<vmem>>, %arg4: memref<1x5x128xbf16, #tpu.memory_space<vmem>>) attributes {dimension_semantics = [#tpu.dimension_semantics<parallel>], iteration_bounds = array<i64: 16>, scalar_prefetch = 0 : i64, scratch_operands = 0 : i64, tpu.core_type = #tpu.core_type<tc>, window_params = [{transform_indices = @transform_0, window_bounds = array<i64: 1, 5, 128>}, {transform_indices = @transform_1, window_bounds = array<i64: 1, 5, 128>}, {transform_indices = @transform_2, window_bounds = array<i64: 1, 5, 128>}, {transform_indices = @transform_3, window_bounds = array<i64: 1, 5, 128>}]} {
    %c0 = arith.constant 0 : index
    %c0_0 = arith.constant 0 : index
    %c0_1 = arith.constant 0 : index
    %0 = vector.load %arg1[%c0, %c0_0, %c0_1] : memref<1x5x128xbf16, #tpu.memory_space<vmem>>, vector<1x5x128xbf16>
    %1 = vector.shape_cast %0 : vector<1x5x128xbf16> to vector<5x128xbf16>
    %c0_2 = arith.constant 0 : index
    %c0_3 = arith.constant 0 : index
    %c0_4 = arith.constant 0 : index
    %2 = vector.load %arg2[%c0_2, %c0_3, %c0_4] : memref<1x5x128xbf16, #tpu.memory_space<vmem>>, vector<1x5x128xbf16>
    %3 = vector.shape_cast %2 : vector<1x5x128xbf16> to vector<5x128xbf16>
    %c0_5 = arith.constant 0 : index
    %c0_6 = arith.constant 0 : index
    %c0_7 = arith.constant 0 : index
    %4 = vector.load %arg3[%c0_5, %c0_6, %c0_7] : memref<1x5x128xbf16, #tpu.memory_space<vmem>>, vector<1x5x128xbf16>
    %5 = vector.shape_cast %4 : vector<1x5x128xbf16> to vector<5x128xbf16>
    %6 = vector.extract_strided_slice %1 {offsets = [0, 0], sizes = [5, 32], strides = [1, 1]} : vector<5x128xbf16> to vector<5x32xbf16>
    %7 = vector.extract_strided_slice %3 {offsets = [0, 0], sizes = [5, 32], strides = [1, 1]} : vector<5x128xbf16> to vector<5x32xbf16>
    %8 = vector.extract_strided_slice %5 {offsets = [0, 0], sizes = [5, 32], strides = [1, 1]} : vector<5x128xbf16> to vector<5x32xbf16>
    %cst = arith.constant dense<0.000000e+00> : vector<5x5xf32>
    %9 = tpu.matmul %6, %7, %cst {dimension_numbers = #tpu.dot_dimension_numbers<[1], [1], [0], [0], [0, 0, 1, 0], [], []>} : vector<5x32xbf16>, vector<5x32xbf16>, vector<5x5xf32> -> vector<5x5xf32>
    %cst_8 = arith.constant 0.176776692 : f32
    %10 = vector.broadcast %cst_8 : f32 to vector<5x5xf32>
    %11 = arith.mulf %9, %10 : vector<5x5xf32>
    %cst_9 = arith.constant dense<0xFF800000> : vector<5xf32>
    %12 = vector.multi_reduction <maximumf>, %11, %cst_9 [1] : vector<5x5xf32> to vector<5xf32>
    %13 = vector.shape_cast %12 : vector<5xf32> to vector<5x1xf32>
    %14 = vector.broadcast %13 : vector<5x1xf32> to vector<5x5xf32>
    %15 = arith.subf %11, %14 : vector<5x5xf32>
    %16 = math.exp %15 : vector<5x5xf32>
    %cst_10 = arith.constant dense<0.000000e+00> : vector<5xf32>
    %17 = vector.multi_reduction <add>, %16, %cst_10 [1] : vector<5x5xf32> to vector<5xf32>
    %18 = vector.shape_cast %17 : vector<5xf32> to vector<5x1xf32>
    %19 = tpu.reciprocal %18 {approx = true} : vector<5x1xf32> -> vector<5x1xf32>
    %20 = vector.broadcast %19 : vector<5x1xf32> to vector<5x5xf32>
    %21 = arith.mulf %16, %20 : vector<5x5xf32>
    %22 = arith.truncf %21 : vector<5x5xf32> to vector<5x5xbf16>
    %cst_11 = arith.constant dense<0.000000e+00> : vector<5x32xf32>
    %23 = tpu.matmul %22, %8, %cst_11 {dimension_numbers = #tpu.dot_dimension_numbers<[1], [0], [0], [1], [0, 0, 1, 1], [], []>} : vector<5x5xbf16>, vector<5x32xbf16>, vector<5x32xf32> -> vector<5x32xf32>
    %24 = vector.extract_strided_slice %1 {offsets = [0, 32], sizes = [5, 32], strides = [1, 1]} : vector<5x128xbf16> to vector<5x32xbf16>
    %25 = vector.extract_strided_slice %3 {offsets = [0, 32], sizes = [5, 32], strides = [1, 1]} : vector<5x128xbf16> to vector<5x32xbf16>
    %26 = vector.extract_strided_slice %5 {offsets = [0, 32], sizes = [5, 32], strides = [1, 1]} : vector<5x128xbf16> to vector<5x32xbf16>
    %cst_12 = arith.constant dense<0.000000e+00> : vector<5x5xf32>
    %27 = tpu.matmul %24, %25, %cst_12 {dimension_numbers = #tpu.dot_dimension_numbers<[1], [1], [0], [0], [0, 0, 1, 0], [], []>} : vector<5x32xbf16>, vector<5x32xbf16>, vector<5x5xf32> -> vector<5x5xf32>
    %cst_13 = arith.constant 0.176776692 : f32
    %28 = vector.broadcast %cst_13 : f32 to vector<5x5xf32>
    %29 = arith.mulf %27, %28 : vector<5x5xf32>
    %cst_14 = arith.constant dense<0xFF800000> : vector<5xf32>
    %30 = vector.multi_reduction <maximumf>, %29, %cst_14 [1] : vector<5x5xf32> to vector<5xf32>
    %31 = vector.shape_cast %30 : vector<5xf32> to vector<5x1xf32>
    %32 = vector.broadcast %31 : vector<5x1xf32> to vector<5x5xf32>
    %33 = arith.subf %29, %32 : vector<5x5xf32>
    %34 = math.exp %33 : vector<5x5xf32>
    %cst_15 = arith.constant dense<0.000000e+00> : vector<5xf32>
    %35 = vector.multi_reduction <add>, %34, %cst_15 [1] : vector<5x5xf32> to vector<5xf32>
    %36 = vector.shape_cast %35 : vector<5xf32> to vector<5x1xf32>
    %37 = tpu.reciprocal %36 {approx = true} : vector<5x1xf32> -> vector<5x1xf32>
    %38 = vector.broadcast %37 : vector<5x1xf32> to vector<5x5xf32>
    %39 = arith.mulf %34, %38 : vector<5x5xf32>
    %40 = arith.truncf %39 : vector<5x5xf32> to vector<5x5xbf16>
    %cst_16 = arith.constant dense<0.000000e+00> : vector<5x32xf32>
    %41 = tpu.matmul %40, %26, %cst_16 {dimension_numbers = #tpu.dot_dimension_numbers<[1], [0], [0], [1], [0, 0, 1, 1], [], []>} : vector<5x5xbf16>, vector<5x32xbf16>, vector<5x32xf32> -> vector<5x32xf32>
    %42 = vector.extract_strided_slice %1 {offsets = [0, 64], sizes = [5, 32], strides = [1, 1]} : vector<5x128xbf16> to vector<5x32xbf16>
    %43 = vector.extract_strided_slice %3 {offsets = [0, 64], sizes = [5, 32], strides = [1, 1]} : vector<5x128xbf16> to vector<5x32xbf16>
    %44 = vector.extract_strided_slice %5 {offsets = [0, 64], sizes = [5, 32], strides = [1, 1]} : vector<5x128xbf16> to vector<5x32xbf16>
    %cst_17 = arith.constant dense<0.000000e+00> : vector<5x5xf32>
    %45 = tpu.matmul %42, %43, %cst_17 {dimension_numbers = #tpu.dot_dimension_numbers<[1], [1], [0], [0], [0, 0, 1, 0], [], []>} : vector<5x32xbf16>, vector<5x32xbf16>, vector<5x5xf32> -> vector<5x5xf32>
    %cst_18 = arith.constant 0.176776692 : f32
    %46 = vector.broadcast %cst_18 : f32 to vector<5x5xf32>
    %47 = arith.mulf %45, %46 : vector<5x5xf32>
    %cst_19 = arith.constant dense<0xFF800000> : vector<5xf32>
    %48 = vector.multi_reduction <maximumf>, %47, %cst_19 [1] : vector<5x5xf32> to vector<5xf32>
    %49 = vector.shape_cast %48 : vector<5xf32> to vector<5x1xf32>
    %50 = vector.broadcast %49 : vector<5x1xf32> to vector<5x5xf32>
    %51 = arith.subf %47, %50 : vector<5x5xf32>
    %52 = math.exp %51 : vector<5x5xf32>
    %cst_20 = arith.constant dense<0.000000e+00> : vector<5xf32>
    %53 = vector.multi_reduction <add>, %52, %cst_20 [1] : vector<5x5xf32> to vector<5xf32>
    %54 = vector.shape_cast %53 : vector<5xf32> to vector<5x1xf32>
    %55 = tpu.reciprocal %54 {approx = true} : vector<5x1xf32> -> vector<5x1xf32>
    %56 = vector.broadcast %55 : vector<5x1xf32> to vector<5x5xf32>
    %57 = arith.mulf %52, %56 : vector<5x5xf32>
    %58 = arith.truncf %57 : vector<5x5xf32> to vector<5x5xbf16>
    %cst_21 = arith.constant dense<0.000000e+00> : vector<5x32xf32>
    %59 = tpu.matmul %58, %44, %cst_21 {dimension_numbers = #tpu.dot_dimension_numbers<[1], [0], [0], [1], [0, 0, 1, 1], [], []>} : vector<5x5xbf16>, vector<5x32xbf16>, vector<5x32xf32> -> vector<5x32xf32>
    %60 = vector.extract_strided_slice %1 {offsets = [0, 96], sizes = [5, 32], strides = [1, 1]} : vector<5x128xbf16> to vector<5x32xbf16>
    %61 = vector.extract_strided_slice %3 {offsets = [0, 96], sizes = [5, 32], strides = [1, 1]} : vector<5x128xbf16> to vector<5x32xbf16>
    %62 = vector.extract_strided_slice %5 {offsets = [0, 96], sizes = [5, 32], strides = [1, 1]} : vector<5x128xbf16> to vector<5x32xbf16>
    %cst_22 = arith.constant dense<0.000000e+00> : vector<5x5xf32>
    %63 = tpu.matmul %60, %61, %cst_22 {dimension_numbers = #tpu.dot_dimension_numbers<[1], [1], [0], [0], [0, 0, 1, 0], [], []>} : vector<5x32xbf16>, vector<5x32xbf16>, vector<5x5xf32> -> vector<5x5xf32>
    %cst_23 = arith.constant 0.176776692 : f32
    %64 = vector.broadcast %cst_23 : f32 to vector<5x5xf32>
    %65 = arith.mulf %63, %64 : vector<5x5xf32>
    %cst_24 = arith.constant dense<0xFF800000> : vector<5xf32>
    %66 = vector.multi_reduction <maximumf>, %65, %cst_24 [1] : vector<5x5xf32> to vector<5xf32>
    %67 = vector.shape_cast %66 : vector<5xf32> to vector<5x1xf32>
    %68 = vector.broadcast %67 : vector<5x1xf32> to vector<5x5xf32>
    %69 = arith.subf %65, %68 : vector<5x5xf32>
    %70 = math.exp %69 : vector<5x5xf32>
    %cst_25 = arith.constant dense<0.000000e+00> : vector<5xf32>
    %71 = vector.multi_reduction <add>, %70, %cst_25 [1] : vector<5x5xf32> to vector<5xf32>
    %72 = vector.shape_cast %71 : vector<5xf32> to vector<5x1xf32>
    %73 = tpu.reciprocal %72 {approx = true} : vector<5x1xf32> -> vector<5x1xf32>
    %74 = vector.broadcast %73 : vector<5x1xf32> to vector<5x5xf32>
    %75 = arith.mulf %70, %74 : vector<5x5xf32>
    %76 = arith.truncf %75 : vector<5x5xf32> to vector<5x5xbf16>
    %cst_26 = arith.constant dense<0.000000e+00> : vector<5x32xf32>
    %77 = tpu.matmul %76, %62, %cst_26 {dimension_numbers = #tpu.dot_dimension_numbers<[1], [0], [0], [1], [0, 0, 1, 1], [], []>} : vector<5x5xbf16>, vector<5x32xbf16>, vector<5x32xf32> -> vector<5x32xf32>
    %78 = tpu.concatenate %23, %41, %59, %77 in 1 : vector<5x32xf32>, vector<5x32xf32>, vector<5x32xf32>, vector<5x32xf32> -> vector<5x128xf32>
    %79 = arith.truncf %78 : vector<5x128xf32> to vector<5x128xbf16>
    %c0_27 = arith.constant 0 : index
    %c0_28 = arith.constant 0 : index
    %c0_29 = arith.constant 0 : index
    %80 = vector.load %arg4[%c0_27, %c0_28, %c0_29] : memref<1x5x128xbf16, #tpu.memory_space<vmem>>, vector<1x5x128xbf16>
    %81 = vector.shape_cast %80 : vector<1x5x128xbf16> to vector<5x128xbf16>
    %82 = vector.shape_cast %79 : vector<5x128xbf16> to vector<1x5x128xbf16>
    tpu.vector_store %arg4[%c0_27, %c0_28, %c0_29], %82 {strides = array<i32>} : memref<1x5x128xbf16, #tpu.memory_space<vmem>>, vector<1x5x128xbf16>,
    return
  }
  func.func @transform_0(%arg0: i32) -> (i32, i32, i32) {
    %c0_i32 = arith.constant 0 : i32
    %c0_i32_0 = arith.constant 0 : i32
    %c0_i32_1 = arith.constant 0 : i32
    return %arg0, %c0_i32, %c0_i32_0 : i32, i32, i32
  }
  func.func @transform_1(%arg0: i32) -> (i32, i32, i32) {
    %c0_i32 = arith.constant 0 : i32
    %c1_i32 = arith.constant 1 : i32
    %c0_i32_0 = arith.constant 0 : i32
    return %arg0, %c0_i32, %c1_i32 : i32, i32, i32
  }
  func.func @transform_2(%arg0: i32) -> (i32, i32, i32) {
    %c0_i32 = arith.constant 0 : i32
    %c2_i32 = arith.constant 2 : i32
    %c0_i32_0 = arith.constant 0 : i32
    return %arg0, %c0_i32, %c2_i32 : i32, i32, i32
  }
  func.func @transform_3(%arg0: i32) -> (i32, i32, i32) {
    %c0_i32 = arith.constant 0 : i32
    %c0_i32_0 = arith.constant 0 : i32
    %c0_i32_1 = arith.constant 0 : i32
    return %arg0, %c0_i32, %c0_i32_0 : i32, i32, i32
  }
}

module attributes {stable_mosaic.version = 11 : i64} {
  func.func @_mm_kernel(%arg0: i32, %arg1: i32, %arg2: i32, %arg3: memref<80x128xbf16, #tpu.memory_space<vmem>>, %arg4: memref<128x128xbf16, #tpu.memory_space<vmem>>, %arg5: memref<1x128xf32, #tpu.memory_space<vmem>>, %arg6: memref<80x128xf32, #tpu.memory_space<vmem>>, %arg7: memref<80x128xf32, #tpu.memory_space<vmem>>) attributes {dimension_semantics = [#tpu.dimension_semantics<parallel>, #tpu.dimension_semantics<parallel>, #tpu.dimension_semantics<arbitrary>], iteration_bounds = array<i64: 1, 1, 1>, scalar_prefetch = 0 : i64, scratch_operands = 0 : i64, tpu.core_type = #tpu.core_type<tc>, window_params = [{transform_indices = @transform_0, window_bounds = array<i64: 80, 128>}, {transform_indices = @transform_1, window_bounds = array<i64: 128, 128>}, {transform_indices = @transform_2, window_bounds = array<i64: 1, 128>}, {transform_indices = @transform_3, window_bounds = array<i64: 80, 128>}, {transform_indices = @transform_4, window_bounds = array<i64: 80, 128>}]} {
    %c0 = arith.constant 0 : index
    %c0_0 = arith.constant 0 : index
    %0 = vector.load %arg3[%c0, %c0_0] : memref<80x128xbf16, #tpu.memory_space<vmem>>, vector<80x128xbf16>
    %c0_1 = arith.constant 0 : index
    %c0_2 = arith.constant 0 : index
    %1 = vector.load %arg4[%c0_1, %c0_2] : memref<128x128xbf16, #tpu.memory_space<vmem>>, vector<128x128xbf16>
    %cst = arith.constant dense<0.000000e+00> : vector<80x128xf32>
    %2 = tpu.matmul %0, %1, %cst {dimension_numbers = #tpu.dot_dimension_numbers<[1], [0], [0], [1], [0, 0, 1, 1], [], []>} : vector<80x128xbf16>, vector<128x128xbf16>, vector<80x128xf32> -> vector<80x128xf32>
    %c0_3 = arith.constant 0 : index
    %c0_4 = arith.constant 0 : index
    %3 = vector.load %arg5[%c0_3, %c0_4] : memref<1x128xf32, #tpu.memory_space<vmem>>, vector<1x128xf32>
    %4 = vector.broadcast %3 : vector<1x128xf32> to vector<80x128xf32>
    %5 = arith.addf %2, %4 : vector<80x128xf32>
    %c0_5 = arith.constant 0 : index
    %c0_6 = arith.constant 0 : index
    %6 = vector.load %arg6[%c0_5, %c0_6] : memref<80x128xf32, #tpu.memory_space<vmem>>, vector<80x128xf32>
    %7 = arith.addf %5, %6 : vector<80x128xf32>
    %c0_7 = arith.constant 0 : index
    %c0_8 = arith.constant 0 : index
    %8 = vector.load %arg7[%c0_7, %c0_8] : memref<80x128xf32, #tpu.memory_space<vmem>>, vector<80x128xf32>
    tpu.vector_store %arg7[%c0_7, %c0_8], %7 {strides = array<i32>} : memref<80x128xf32, #tpu.memory_space<vmem>>, vector<80x128xf32>,
    return
  }
  func.func @transform_0(%arg0: i32, %arg1: i32, %arg2: i32) -> (i32, i32) {
    %c0_i32 = arith.constant 0 : i32
    return %arg0, %arg2 : i32, i32
  }
  func.func @transform_1(%arg0: i32, %arg1: i32, %arg2: i32) -> (i32, i32) {
    %c0_i32 = arith.constant 0 : i32
    return %arg2, %arg1 : i32, i32
  }
  func.func @transform_2(%arg0: i32, %arg1: i32, %arg2: i32) -> (i32, i32) {
    %c0_i32 = arith.constant 0 : i32
    %c0_i32_0 = arith.constant 0 : i32
    return %c0_i32, %arg1 : i32, i32
  }
  func.func @transform_3(%arg0: i32, %arg1: i32, %arg2: i32) -> (i32, i32) {
    %c0_i32 = arith.constant 0 : i32
    return %arg0, %arg1 : i32, i32
  }
  func.func @transform_4(%arg0: i32, %arg1: i32, %arg2: i32) -> (i32, i32) {
    %c0_i32 = arith.constant 0 : i32
    return %arg0, %arg1 : i32, i32
  }
}

module attributes {stable_mosaic.version = 11 : i64} {
  func.func @_mm_kernel(%arg0: i32, %arg1: i32, %arg2: i32, %arg3: memref<80x128xf32, #tpu.memory_space<vmem>>, %arg4: memref<128x256xbf16, #tpu.memory_space<vmem>>, %arg5: memref<1x256xf32, #tpu.memory_space<vmem>>, %arg6: memref<1x128xf32, #tpu.memory_space<vmem>>, %arg7: memref<1x128xf32, #tpu.memory_space<vmem>>, %arg8: memref<80x256xbf16, #tpu.memory_space<vmem>>) attributes {dimension_semantics = [#tpu.dimension_semantics<parallel>, #tpu.dimension_semantics<parallel>, #tpu.dimension_semantics<arbitrary>], iteration_bounds = array<i64: 1, 1, 1>, scalar_prefetch = 0 : i64, scratch_operands = 0 : i64, tpu.core_type = #tpu.core_type<tc>, window_params = [{transform_indices = @transform_0, window_bounds = array<i64: 80, 128>}, {transform_indices = @transform_1, window_bounds = array<i64: 128, 256>}, {transform_indices = @transform_2, window_bounds = array<i64: 1, 256>}, {transform_indices = @transform_3, window_bounds = array<i64: 1, 128>}, {transform_indices = @transform_4, window_bounds = array<i64: 1, 128>}, {transform_indices = @transform_5, window_bounds = array<i64: 80, 256>}]} {
    %c0 = arith.constant 0 : index
    %c0_0 = arith.constant 0 : index
    %0 = vector.load %arg3[%c0, %c0_0] : memref<80x128xf32, #tpu.memory_space<vmem>>, vector<80x128xf32>
    %cst = arith.constant dense<0.000000e+00> : vector<80xf32>
    %1 = vector.multi_reduction <add>, %0, %cst [1] : vector<80x128xf32> to vector<80xf32>
    %2 = vector.shape_cast %1 : vector<80xf32> to vector<80x1xf32>
    %cst_1 = arith.constant 1.280000e+02 : f32
    %3 = vector.broadcast %cst_1 : f32 to vector<80x1xf32>
    %4 = arith.divf %2, %3 : vector<80x1xf32>
    %5 = arith.mulf %0, %0 : vector<80x128xf32>
    %cst_2 = arith.constant dense<0.000000e+00> : vector<80xf32>
    %6 = vector.multi_reduction <add>, %5, %cst_2 [1] : vector<80x128xf32> to vector<80xf32>
    %7 = vector.shape_cast %6 : vector<80xf32> to vector<80x1xf32>
    %cst_3 = arith.constant 1.280000e+02 : f32
    %8 = vector.broadcast %cst_3 : f32 to vector<80x1xf32>
    %9 = arith.divf %7, %8 : vector<80x1xf32>
    %10 = arith.mulf %4, %4 : vector<80x1xf32>
    %11 = arith.subf %9, %10 : vector<80x1xf32>
    %12 = vector.broadcast %4 : vector<80x1xf32> to vector<80x128xf32>
    %13 = arith.subf %0, %12 : vector<80x128xf32>
    %cst_4 = arith.constant 9.99999974E-6 : f32
    %14 = vector.broadcast %cst_4 : f32 to vector<80x1xf32>
    %15 = arith.addf %11, %14 : vector<80x1xf32>
    %16 = math.rsqrt %15 : vector<80x1xf32>
    %17 = vector.broadcast %16 : vector<80x1xf32> to vector<80x128xf32>
    %18 = arith.mulf %13, %17 : vector<80x128xf32>
    %c0_5 = arith.constant 0 : index
    %c0_6 = arith.constant 0 : index
    %19 = vector.load %arg6[%c0_5, %c0_6] : memref<1x128xf32, #tpu.memory_space<vmem>>, vector<1x128xf32>
    %20 = vector.broadcast %19 : vector<1x128xf32> to vector<80x128xf32>
    %21 = arith.mulf %18, %20 : vector<80x128xf32>
    %c0_7 = arith.constant 0 : index
    %c0_8 = arith.constant 0 : index
    %22 = vector.load %arg7[%c0_7, %c0_8] : memref<1x128xf32, #tpu.memory_space<vmem>>, vector<1x128xf32>
    %23 = vector.broadcast %22 : vector<1x128xf32> to vector<80x128xf32>
    %24 = arith.addf %21, %23 : vector<80x128xf32>
    %25 = arith.truncf %24 : vector<80x128xf32> to vector<80x128xbf16>
    %c0_9 = arith.constant 0 : index
    %c0_10 = arith.constant 0 : index
    %26 = vector.load %arg4[%c0_9, %c0_10] : memref<128x256xbf16, #tpu.memory_space<vmem>>, vector<128x256xbf16>
    %cst_11 = arith.constant dense<0.000000e+00> : vector<80x256xf32>
    %27 = tpu.matmul %25, %26, %cst_11 {dimension_numbers = #tpu.dot_dimension_numbers<[1], [0], [0], [1], [0, 0, 1, 1], [], []>} : vector<80x128xbf16>, vector<128x256xbf16>, vector<80x256xf32> -> vector<80x256xf32>
    %c0_12 = arith.constant 0 : index
    %c0_13 = arith.constant 0 : index
    %28 = vector.load %arg5[%c0_12, %c0_13] : memref<1x256xf32, #tpu.memory_space<vmem>>, vector<1x256xf32>
    %29 = vector.broadcast %28 : vector<1x256xf32> to vector<80x256xf32>
    %30 = arith.addf %27, %29 : vector<80x256xf32>
    %31 = arith.mulf %30, %30 : vector<80x256xf32>
    %32 = arith.mulf %30, %31 : vector<80x256xf32>
    %cst_14 = arith.constant 4.471500e-02 : f32
    %33 = vector.broadcast %cst_14 : f32 to vector<80x256xf32>
    %34 = arith.mulf %33, %32 : vector<80x256xf32>
    %35 = arith.addf %30, %34 : vector<80x256xf32>
    %cst_15 = arith.constant 0.797884583 : f32
    %36 = vector.broadcast %cst_15 : f32 to vector<80x256xf32>
    %37 = arith.mulf %36, %35 : vector<80x256xf32>
    %38 = math.tanh %37 : vector<80x256xf32>
    %cst_16 = arith.constant 1.000000e+00 : f32
    %39 = vector.broadcast %cst_16 : f32 to vector<80x256xf32>
    %40 = arith.addf %39, %38 : vector<80x256xf32>
    %cst_17 = arith.constant 5.000000e-01 : f32
    %41 = vector.broadcast %cst_17 : f32 to vector<80x256xf32>
    %42 = arith.mulf %41, %40 : vector<80x256xf32>
    %43 = arith.mulf %30, %42 : vector<80x256xf32>
    %44 = arith.truncf %43 : vector<80x256xf32> to vector<80x256xbf16>
    %c0_18 = arith.constant 0 : index
    %c0_19 = arith.constant 0 : index
    %45 = vector.load %arg8[%c0_18, %c0_19] : memref<80x256xbf16, #tpu.memory_space<vmem>>, vector<80x256xbf16>
    tpu.vector_store %arg8[%c0_18, %c0_19], %44 {strides = array<i32>} : memref<80x256xbf16, #tpu.memory_space<vmem>>, vector<80x256xbf16>,
    return
  }
  func.func @transform_0(%arg0: i32, %arg1: i32, %arg2: i32) -> (i32, i32) {
    %c0_i32 = arith.constant 0 : i32
    return %arg0, %arg2 : i32, i32
  }
  func.func @transform_1(%arg0: i32, %arg1: i32, %arg2: i32) -> (i32, i32) {
    %c0_i32 = arith.constant 0 : i32
    return %arg2, %arg1 : i32, i32
  }
  func.func @transform_2(%arg0: i32, %arg1: i32, %arg2: i32) -> (i32, i32) {
    %c0_i32 = arith.constant 0 : i32
    %c0_i32_0 = arith.constant 0 : i32
    return %c0_i32, %arg1 : i32, i32
  }
  func.func @transform_3(%arg0: i32, %arg1: i32, %arg2: i32) -> (i32, i32) {
    %c0_i32 = arith.constant 0 : i32
    %c0_i32_0 = arith.constant 0 : i32
    return %c0_i32, %arg2 : i32, i32
  }
  func.func @transform_4(%arg0: i32, %arg1: i32, %arg2: i32) -> (i32, i32) {
    %c0_i32 = arith.constant 0 : i32
    %c0_i32_0 = arith.constant 0 : i32
    return %c0_i32, %arg2 : i32, i32
  }
  func.func @transform_5(%arg0: i32, %arg1: i32, %arg2: i32) -> (i32, i32) {
    %c0_i32 = arith.constant 0 : i32
    return %arg0, %arg1 : i32, i32
  }
}

module attributes {stable_mosaic.version = 11 : i64} {
  func.func @_mm_kernel(%arg0: i32, %arg1: i32, %arg2: i32, %arg3: memref<80x256xbf16, #tpu.memory_space<vmem>>, %arg4: memref<256x128xbf16, #tpu.memory_space<vmem>>, %arg5: memref<1x128xf32, #tpu.memory_space<vmem>>, %arg6: memref<80x128xf32, #tpu.memory_space<vmem>>, %arg7: memref<80x128xf32, #tpu.memory_space<vmem>>) attributes {dimension_semantics = [#tpu.dimension_semantics<parallel>, #tpu.dimension_semantics<parallel>, #tpu.dimension_semantics<arbitrary>], iteration_bounds = array<i64: 1, 1, 1>, scalar_prefetch = 0 : i64, scratch_operands = 0 : i64, tpu.core_type = #tpu.core_type<tc>, window_params = [{transform_indices = @transform_0, window_bounds = array<i64: 80, 256>}, {transform_indices = @transform_1, window_bounds = array<i64: 256, 128>}, {transform_indices = @transform_2, window_bounds = array<i64: 1, 128>}, {transform_indices = @transform_3, window_bounds = array<i64: 80, 128>}, {transform_indices = @transform_4, window_bounds = array<i64: 80, 128>}]} {
    %c0 = arith.constant 0 : index
    %c0_0 = arith.constant 0 : index
    %0 = vector.load %arg3[%c0, %c0_0] : memref<80x256xbf16, #tpu.memory_space<vmem>>, vector<80x256xbf16>
    %c0_1 = arith.constant 0 : index
    %c0_2 = arith.constant 0 : index
    %1 = vector.load %arg4[%c0_1, %c0_2] : memref<256x128xbf16, #tpu.memory_space<vmem>>, vector<256x128xbf16>
    %cst = arith.constant dense<0.000000e+00> : vector<80x128xf32>
    %2 = tpu.matmul %0, %1, %cst {dimension_numbers = #tpu.dot_dimension_numbers<[1], [0], [0], [1], [0, 0, 1, 1], [], []>} : vector<80x256xbf16>, vector<256x128xbf16>, vector<80x128xf32> -> vector<80x128xf32>
    %c0_3 = arith.constant 0 : index
    %c0_4 = arith.constant 0 : index
    %3 = vector.load %arg5[%c0_3, %c0_4] : memref<1x128xf32, #tpu.memory_space<vmem>>, vector<1x128xf32>
    %4 = vector.broadcast %3 : vector<1x128xf32> to vector<80x128xf32>
    %5 = arith.addf %2, %4 : vector<80x128xf32>
    %c0_5 = arith.constant 0 : index
    %c0_6 = arith.constant 0 : index
    %6 = vector.load %arg6[%c0_5, %c0_6] : memref<80x128xf32, #tpu.memory_space<vmem>>, vector<80x128xf32>
    %7 = arith.addf %5, %6 : vector<80x128xf32>
    %c0_7 = arith.constant 0 : index
    %c0_8 = arith.constant 0 : index
    %8 = vector.load %arg7[%c0_7, %c0_8] : memref<80x128xf32, #tpu.memory_space<vmem>>, vector<80x128xf32>
    tpu.vector_store %arg7[%c0_7, %c0_8], %7 {strides = array<i32>} : memref<80x128xf32, #tpu.memory_space<vmem>>, vector<80x128xf32>,
    return
  }
  func.func @transform_0(%arg0: i32, %arg1: i32, %arg2: i32) -> (i32, i32) {
    %c0_i32 = arith.constant 0 : i32
    return %arg0, %arg2 : i32, i32
  }
  func.func @transform_1(%arg0: i32, %arg1: i32, %arg2: i32) -> (i32, i32) {
    %c0_i32 = arith.constant 0 : i32
    return %arg2, %arg1 : i32, i32
  }
  func.func @transform_2(%arg0: i32, %arg1: i32, %arg2: i32) -> (i32, i32) {
    %c0_i32 = arith.constant 0 : i32
    %c0_i32_0 = arith.constant 0 : i32
    return %c0_i32, %arg1 : i32, i32
  }
  func.func @transform_3(%arg0: i32, %arg1: i32, %arg2: i32) -> (i32, i32) {
    %c0_i32 = arith.constant 0 : i32
    return %arg0, %arg1 : i32, i32
  }
  func.func @transform_4(%arg0: i32, %arg1: i32, %arg2: i32) -> (i32, i32) {
    %c0_i32 = arith.constant 0 : i32
    return %arg0, %arg1 : i32, i32
  }
}

module attributes {stable_mosaic.version = 11 : i64} {
  func.func @_layernorm_kernel(%arg0: i32, %arg1: memref<80x128xf32, #tpu.memory_space<vmem>>, %arg2: memref<1x128xf32, #tpu.memory_space<vmem>>, %arg3: memref<1x128xf32, #tpu.memory_space<vmem>>, %arg4: memref<80x128xf32, #tpu.memory_space<vmem>>) attributes {dimension_semantics = [#tpu.dimension_semantics<parallel>], iteration_bounds = array<i64: 1>, scalar_prefetch = 0 : i64, scratch_operands = 0 : i64, tpu.core_type = #tpu.core_type<tc>, window_params = [{transform_indices = @transform_0, window_bounds = array<i64: 80, 128>}, {pipeline_mode = #tpu.pipeline_mode<synchronous>, transform_indices = @transform_1, window_bounds = array<i64: 1, 128>}, {pipeline_mode = #tpu.pipeline_mode<synchronous>, transform_indices = @transform_2, window_bounds = array<i64: 1, 128>}, {transform_indices = @transform_3, window_bounds = array<i64: 80, 128>}]} {
    %c0 = arith.constant 0 : index
    %c0_0 = arith.constant 0 : index
    %0 = vector.load %arg1[%c0, %c0_0] : memref<80x128xf32, #tpu.memory_space<vmem>>, vector<80x128xf32>
    %cst = arith.constant dense<0.000000e+00> : vector<80xf32>
    %1 = vector.multi_reduction <add>, %0, %cst [1] : vector<80x128xf32> to vector<80xf32>
    %2 = vector.shape_cast %1 : vector<80xf32> to vector<80x1xf32>
    %cst_1 = arith.constant 1.280000e+02 : f32
    %3 = vector.broadcast %cst_1 : f32 to vector<80x1xf32>
    %4 = arith.divf %2, %3 : vector<80x1xf32>
    %5 = vector.broadcast %4 : vector<80x1xf32> to vector<80x128xf32>
    %6 = arith.subf %0, %5 : vector<80x128xf32>
    %7 = arith.mulf %6, %6 : vector<80x128xf32>
    %cst_2 = arith.constant dense<0.000000e+00> : vector<80xf32>
    %8 = vector.multi_reduction <add>, %7, %cst_2 [1] : vector<80x128xf32> to vector<80xf32>
    %9 = vector.shape_cast %8 : vector<80xf32> to vector<80x1xf32>
    %cst_3 = arith.constant 1.280000e+02 : f32
    %10 = vector.broadcast %cst_3 : f32 to vector<80x1xf32>
    %11 = arith.divf %9, %10 : vector<80x1xf32>
    %12 = vector.broadcast %4 : vector<80x1xf32> to vector<80x128xf32>
    %13 = arith.subf %0, %12 : vector<80x128xf32>
    %cst_4 = arith.constant 9.99999974E-6 : f32
    %14 = vector.broadcast %cst_4 : f32 to vector<80x1xf32>
    %15 = arith.addf %11, %14 : vector<80x1xf32>
    %16 = math.rsqrt %15 : vector<80x1xf32>
    %17 = vector.broadcast %16 : vector<80x1xf32> to vector<80x128xf32>
    %18 = arith.mulf %13, %17 : vector<80x128xf32>
    %c0_5 = arith.constant 0 : index
    %c0_6 = arith.constant 0 : index
    %19 = vector.load %arg2[%c0_5, %c0_6] : memref<1x128xf32, #tpu.memory_space<vmem>>, vector<1x128xf32>
    %20 = vector.broadcast %19 : vector<1x128xf32> to vector<80x128xf32>
    %21 = arith.mulf %18, %20 : vector<80x128xf32>
    %c0_7 = arith.constant 0 : index
    %c0_8 = arith.constant 0 : index
    %22 = vector.load %arg3[%c0_7, %c0_8] : memref<1x128xf32, #tpu.memory_space<vmem>>, vector<1x128xf32>
    %23 = vector.broadcast %22 : vector<1x128xf32> to vector<80x128xf32>
    %24 = arith.addf %21, %23 : vector<80x128xf32>
    %c0_9 = arith.constant 0 : index
    %c0_10 = arith.constant 0 : index
    %25 = vector.load %arg4[%c0_9, %c0_10] : memref<80x128xf32, #tpu.memory_space<vmem>>, vector<80x128xf32>
    tpu.vector_store %arg4[%c0_9, %c0_10], %24 {strides = array<i32>} : memref<80x128xf32, #tpu.memory_space<vmem>>, vector<80x128xf32>,
    return
  }
  func.func @transform_0(%arg0: i32) -> (i32, i32) {
    %c0_i32 = arith.constant 0 : i32
    %c0_i32_0 = arith.constant 0 : i32
    return %arg0, %c0_i32 : i32, i32
  }
  func.func @transform_1(%arg0: i32) -> (i32, i32) {
    %c0_i32 = arith.constant 0 : i32
    %c0_i32_0 = arith.constant 0 : i32
    %c0_i32_1 = arith.constant 0 : i32
    return %c0_i32, %c0_i32_0 : i32, i32
  }
  func.func @transform_2(%arg0: i32) -> (i32, i32) {
    %c0_i32 = arith.constant 0 : i32
    %c0_i32_0 = arith.constant 0 : i32
    %c0_i32_1 = arith.constant 0 : i32
    return %c0_i32, %c0_i32_0 : i32, i32
  }
  func.func @transform_3(%arg0: i32) -> (i32, i32) {
    %c0_i32 = arith.constant 0 : i32
    %c0_i32_0 = arith.constant 0 : i32
    return %arg0, %c0_i32 : i32, i32
  }
}

module attributes {stable_mosaic.version = 11 : i64} {
  func.func @_mm_kernel(%arg0: i32, %arg1: i32, %arg2: i32, %arg3: memref<32x128xf32, #tpu.memory_space<vmem>>, %arg4: memref<128x384xbf16, #tpu.memory_space<vmem>>, %arg5: memref<1x384xf32, #tpu.memory_space<vmem>>, %arg6: memref<1x128xf32, #tpu.memory_space<vmem>>, %arg7: memref<1x128xf32, #tpu.memory_space<vmem>>, %arg8: memref<32x384xbf16, #tpu.memory_space<vmem>>) attributes {dimension_semantics = [#tpu.dimension_semantics<parallel>, #tpu.dimension_semantics<parallel>, #tpu.dimension_semantics<arbitrary>], iteration_bounds = array<i64: 1, 1, 1>, scalar_prefetch = 0 : i64, scratch_operands = 0 : i64, tpu.core_type = #tpu.core_type<tc>, window_params = [{transform_indices = @transform_0, window_bounds = array<i64: 32, 128>}, {transform_indices = @transform_1, window_bounds = array<i64: 128, 384>}, {transform_indices = @transform_2, window_bounds = array<i64: 1, 384>}, {transform_indices = @transform_3, window_bounds = array<i64: 1, 128>}, {transform_indices = @transform_4, window_bounds = array<i64: 1, 128>}, {transform_indices = @transform_5, window_bounds = array<i64: 32, 384>}]} {
    %c0 = arith.constant 0 : index
    %c0_0 = arith.constant 0 : index
    %0 = vector.load %arg3[%c0, %c0_0] : memref<32x128xf32, #tpu.memory_space<vmem>>, vector<32x128xf32>
    %cst = arith.constant dense<0.000000e+00> : vector<32xf32>
    %1 = vector.multi_reduction <add>, %0, %cst [1] : vector<32x128xf32> to vector<32xf32>
    %2 = vector.shape_cast %1 : vector<32xf32> to vector<32x1xf32>
    %cst_1 = arith.constant 1.280000e+02 : f32
    %3 = vector.broadcast %cst_1 : f32 to vector<32x1xf32>
    %4 = arith.divf %2, %3 : vector<32x1xf32>
    %5 = arith.mulf %0, %0 : vector<32x128xf32>
    %cst_2 = arith.constant dense<0.000000e+00> : vector<32xf32>
    %6 = vector.multi_reduction <add>, %5, %cst_2 [1] : vector<32x128xf32> to vector<32xf32>
    %7 = vector.shape_cast %6 : vector<32xf32> to vector<32x1xf32>
    %cst_3 = arith.constant 1.280000e+02 : f32
    %8 = vector.broadcast %cst_3 : f32 to vector<32x1xf32>
    %9 = arith.divf %7, %8 : vector<32x1xf32>
    %10 = arith.mulf %4, %4 : vector<32x1xf32>
    %11 = arith.subf %9, %10 : vector<32x1xf32>
    %12 = vector.broadcast %4 : vector<32x1xf32> to vector<32x128xf32>
    %13 = arith.subf %0, %12 : vector<32x128xf32>
    %cst_4 = arith.constant 9.99999974E-6 : f32
    %14 = vector.broadcast %cst_4 : f32 to vector<32x1xf32>
    %15 = arith.addf %11, %14 : vector<32x1xf32>
    %16 = math.rsqrt %15 : vector<32x1xf32>
    %17 = vector.broadcast %16 : vector<32x1xf32> to vector<32x128xf32>
    %18 = arith.mulf %13, %17 : vector<32x128xf32>
    %c0_5 = arith.constant 0 : index
    %c0_6 = arith.constant 0 : index
    %19 = vector.load %arg6[%c0_5, %c0_6] : memref<1x128xf32, #tpu.memory_space<vmem>>, vector<1x128xf32>
    %20 = vector.broadcast %19 : vector<1x128xf32> to vector<32x128xf32>
    %21 = arith.mulf %18, %20 : vector<32x128xf32>
    %c0_7 = arith.constant 0 : index
    %c0_8 = arith.constant 0 : index
    %22 = vector.load %arg7[%c0_7, %c0_8] : memref<1x128xf32, #tpu.memory_space<vmem>>, vector<1x128xf32>
    %23 = vector.broadcast %22 : vector<1x128xf32> to vector<32x128xf32>
    %24 = arith.addf %21, %23 : vector<32x128xf32>
    %25 = arith.truncf %24 : vector<32x128xf32> to vector<32x128xbf16>
    %c0_9 = arith.constant 0 : index
    %c0_10 = arith.constant 0 : index
    %26 = vector.load %arg4[%c0_9, %c0_10] : memref<128x384xbf16, #tpu.memory_space<vmem>>, vector<128x384xbf16>
    %cst_11 = arith.constant dense<0.000000e+00> : vector<32x384xf32>
    %27 = tpu.matmul %25, %26, %cst_11 {dimension_numbers = #tpu.dot_dimension_numbers<[1], [0], [0], [1], [0, 0, 1, 1], [], []>} : vector<32x128xbf16>, vector<128x384xbf16>, vector<32x384xf32> -> vector<32x384xf32>
    %c0_12 = arith.constant 0 : index
    %c0_13 = arith.constant 0 : index
    %28 = vector.load %arg5[%c0_12, %c0_13] : memref<1x384xf32, #tpu.memory_space<vmem>>, vector<1x384xf32>
    %29 = vector.broadcast %28 : vector<1x384xf32> to vector<32x384xf32>
    %30 = arith.addf %27, %29 : vector<32x384xf32>
    %31 = arith.truncf %30 : vector<32x384xf32> to vector<32x384xbf16>
    %c0_14 = arith.constant 0 : index
    %c0_15 = arith.constant 0 : index
    %32 = vector.load %arg8[%c0_14, %c0_15] : memref<32x384xbf16, #tpu.memory_space<vmem>>, vector<32x384xbf16>
    tpu.vector_store %arg8[%c0_14, %c0_15], %31 {strides = array<i32>} : memref<32x384xbf16, #tpu.memory_space<vmem>>, vector<32x384xbf16>,
    return
  }
  func.func @transform_0(%arg0: i32, %arg1: i32, %arg2: i32) -> (i32, i32) {
    %c0_i32 = arith.constant 0 : i32
    return %arg0, %arg2 : i32, i32
  }
  func.func @transform_1(%arg0: i32, %arg1: i32, %arg2: i32) -> (i32, i32) {
    %c0_i32 = arith.constant 0 : i32
    return %arg2, %arg1 : i32, i32
  }
  func.func @transform_2(%arg0: i32, %arg1: i32, %arg2: i32) -> (i32, i32) {
    %c0_i32 = arith.constant 0 : i32
    %c0_i32_0 = arith.constant 0 : i32
    return %c0_i32, %arg1 : i32, i32
  }
  func.func @transform_3(%arg0: i32, %arg1: i32, %arg2: i32) -> (i32, i32) {
    %c0_i32 = arith.constant 0 : i32
    %c0_i32_0 = arith.constant 0 : i32
    return %c0_i32, %arg2 : i32, i32
  }
  func.func @transform_4(%arg0: i32, %arg1: i32, %arg2: i32) -> (i32, i32) {
    %c0_i32 = arith.constant 0 : i32
    %c0_i32_0 = arith.constant 0 : i32
    return %c0_i32, %arg2 : i32, i32
  }
  func.func @transform_5(%arg0: i32, %arg1: i32, %arg2: i32) -> (i32, i32) {
    %c0_i32 = arith.constant 0 : i32
    return %arg0, %arg1 : i32, i32
  }
}

module attributes {stable_mosaic.version = 11 : i64} {
  func.func @_attn_kernel(%arg0: i32, %arg1: memref<1x9x128xbf16, #tpu.memory_space<vmem>>, %arg2: memref<1x9x128xbf16, #tpu.memory_space<vmem>>, %arg3: memref<1x9x128xbf16, #tpu.memory_space<vmem>>, %arg4: memref<1x1x9xf32, #tpu.memory_space<vmem>>, %arg5: memref<1x9x128xbf16, #tpu.memory_space<vmem>>) attributes {dimension_semantics = [#tpu.dimension_semantics<parallel>], iteration_bounds = array<i64: 2>, scalar_prefetch = 0 : i64, scratch_operands = 0 : i64, tpu.core_type = #tpu.core_type<tc>, window_params = [{transform_indices = @transform_0, window_bounds = array<i64: 1, 9, 128>}, {transform_indices = @transform_1, window_bounds = array<i64: 1, 9, 128>}, {transform_indices = @transform_2, window_bounds = array<i64: 1, 9, 128>}, {transform_indices = @transform_3, window_bounds = array<i64: 1, 1, 9>}, {transform_indices = @transform_4, window_bounds = array<i64: 1, 9, 128>}]} {
    %c0 = arith.constant 0 : index
    %c0_0 = arith.constant 0 : index
    %c0_1 = arith.constant 0 : index
    %0 = vector.load %arg1[%c0, %c0_0, %c0_1] : memref<1x9x128xbf16, #tpu.memory_space<vmem>>, vector<1x9x128xbf16>
    %1 = vector.shape_cast %0 : vector<1x9x128xbf16> to vector<9x128xbf16>
    %c0_2 = arith.constant 0 : index
    %c0_3 = arith.constant 0 : index
    %c0_4 = arith.constant 0 : index
    %2 = vector.load %arg2[%c0_2, %c0_3, %c0_4] : memref<1x9x128xbf16, #tpu.memory_space<vmem>>, vector<1x9x128xbf16>
    %3 = vector.shape_cast %2 : vector<1x9x128xbf16> to vector<9x128xbf16>
    %c0_5 = arith.constant 0 : index
    %c0_6 = arith.constant 0 : index
    %c0_7 = arith.constant 0 : index
    %4 = vector.load %arg3[%c0_5, %c0_6, %c0_7] : memref<1x9x128xbf16, #tpu.memory_space<vmem>>, vector<1x9x128xbf16>
    %5 = vector.shape_cast %4 : vector<1x9x128xbf16> to vector<9x128xbf16>
    %6 = vector.extract_strided_slice %1 {offsets = [0, 0], sizes = [9, 32], strides = [1, 1]} : vector<9x128xbf16> to vector<9x32xbf16>
    %7 = vector.extract_strided_slice %3 {offsets = [0, 0], sizes = [9, 32], strides = [1, 1]} : vector<9x128xbf16> to vector<9x32xbf16>
    %8 = vector.extract_strided_slice %5 {offsets = [0, 0], sizes = [9, 32], strides = [1, 1]} : vector<9x128xbf16> to vector<9x32xbf16>
    %cst = arith.constant dense<0.000000e+00> : vector<9x9xf32>
    %9 = tpu.matmul %6, %7, %cst {dimension_numbers = #tpu.dot_dimension_numbers<[1], [1], [0], [0], [0, 0, 1, 0], [], []>} : vector<9x32xbf16>, vector<9x32xbf16>, vector<9x9xf32> -> vector<9x9xf32>
    %cst_8 = arith.constant 0.176776692 : f32
    %10 = vector.broadcast %cst_8 : f32 to vector<9x9xf32>
    %11 = arith.mulf %9, %10 : vector<9x9xf32>
    %c0_9 = arith.constant 0 : index
    %c0_10 = arith.constant 0 : index
    %c0_11 = arith.constant 0 : index
    %12 = vector.load %arg4[%c0_9, %c0_10, %c0_11] : memref<1x1x9xf32, #tpu.memory_space<vmem>>, vector<1x1x9xf32>
    %13 = vector.shape_cast %12 : vector<1x1x9xf32> to vector<1x9xf32>
    %14 = vector.broadcast %13 : vector<1x9xf32> to vector<9x9xf32>
    %15 = arith.addf %11, %14 : vector<9x9xf32>
    %cst_12 = arith.constant dense<0xFF800000> : vector<9xf32>
    %16 = vector.multi_reduction <maximumf>, %15, %cst_12 [1] : vector<9x9xf32> to vector<9xf32>
    %17 = vector.shape_cast %16 : vector<9xf32> to vector<9x1xf32>
    %18 = vector.broadcast %17 : vector<9x1xf32> to vector<9x9xf32>
    %19 = arith.subf %15, %18 : vector<9x9xf32>
    %20 = math.exp %19 : vector<9x9xf32>
    %cst_13 = arith.constant dense<0.000000e+00> : vector<9xf32>
    %21 = vector.multi_reduction <add>, %20, %cst_13 [1] : vector<9x9xf32> to vector<9xf32>
    %22 = vector.shape_cast %21 : vector<9xf32> to vector<9x1xf32>
    %23 = tpu.reciprocal %22 {approx = true} : vector<9x1xf32> -> vector<9x1xf32>
    %24 = vector.broadcast %23 : vector<9x1xf32> to vector<9x9xf32>
    %25 = arith.mulf %20, %24 : vector<9x9xf32>
    %26 = arith.truncf %25 : vector<9x9xf32> to vector<9x9xbf16>
    %cst_14 = arith.constant dense<0.000000e+00> : vector<9x32xf32>
    %27 = tpu.matmul %26, %8, %cst_14 {dimension_numbers = #tpu.dot_dimension_numbers<[1], [0], [0], [1], [0, 0, 1, 1], [], []>} : vector<9x9xbf16>, vector<9x32xbf16>, vector<9x32xf32> -> vector<9x32xf32>
    %28 = vector.extract_strided_slice %1 {offsets = [0, 32], sizes = [9, 32], strides = [1, 1]} : vector<9x128xbf16> to vector<9x32xbf16>
    %29 = vector.extract_strided_slice %3 {offsets = [0, 32], sizes = [9, 32], strides = [1, 1]} : vector<9x128xbf16> to vector<9x32xbf16>
    %30 = vector.extract_strided_slice %5 {offsets = [0, 32], sizes = [9, 32], strides = [1, 1]} : vector<9x128xbf16> to vector<9x32xbf16>
    %cst_15 = arith.constant dense<0.000000e+00> : vector<9x9xf32>
    %31 = tpu.matmul %28, %29, %cst_15 {dimension_numbers = #tpu.dot_dimension_numbers<[1], [1], [0], [0], [0, 0, 1, 0], [], []>} : vector<9x32xbf16>, vector<9x32xbf16>, vector<9x9xf32> -> vector<9x9xf32>
    %cst_16 = arith.constant 0.176776692 : f32
    %32 = vector.broadcast %cst_16 : f32 to vector<9x9xf32>
    %33 = arith.mulf %31, %32 : vector<9x9xf32>
    %c0_17 = arith.constant 0 : index
    %c0_18 = arith.constant 0 : index
    %c0_19 = arith.constant 0 : index
    %34 = vector.load %arg4[%c0_17, %c0_18, %c0_19] : memref<1x1x9xf32, #tpu.memory_space<vmem>>, vector<1x1x9xf32>
    %35 = vector.shape_cast %34 : vector<1x1x9xf32> to vector<1x9xf32>
    %36 = vector.broadcast %35 : vector<1x9xf32> to vector<9x9xf32>
    %37 = arith.addf %33, %36 : vector<9x9xf32>
    %cst_20 = arith.constant dense<0xFF800000> : vector<9xf32>
    %38 = vector.multi_reduction <maximumf>, %37, %cst_20 [1] : vector<9x9xf32> to vector<9xf32>
    %39 = vector.shape_cast %38 : vector<9xf32> to vector<9x1xf32>
    %40 = vector.broadcast %39 : vector<9x1xf32> to vector<9x9xf32>
    %41 = arith.subf %37, %40 : vector<9x9xf32>
    %42 = math.exp %41 : vector<9x9xf32>
    %cst_21 = arith.constant dense<0.000000e+00> : vector<9xf32>
    %43 = vector.multi_reduction <add>, %42, %cst_21 [1] : vector<9x9xf32> to vector<9xf32>
    %44 = vector.shape_cast %43 : vector<9xf32> to vector<9x1xf32>
    %45 = tpu.reciprocal %44 {approx = true} : vector<9x1xf32> -> vector<9x1xf32>
    %46 = vector.broadcast %45 : vector<9x1xf32> to vector<9x9xf32>
    %47 = arith.mulf %42, %46 : vector<9x9xf32>
    %48 = arith.truncf %47 : vector<9x9xf32> to vector<9x9xbf16>
    %cst_22 = arith.constant dense<0.000000e+00> : vector<9x32xf32>
    %49 = tpu.matmul %48, %30, %cst_22 {dimension_numbers = #tpu.dot_dimension_numbers<[1], [0], [0], [1], [0, 0, 1, 1], [], []>} : vector<9x9xbf16>, vector<9x32xbf16>, vector<9x32xf32> -> vector<9x32xf32>
    %50 = vector.extract_strided_slice %1 {offsets = [0, 64], sizes = [9, 32], strides = [1, 1]} : vector<9x128xbf16> to vector<9x32xbf16>
    %51 = vector.extract_strided_slice %3 {offsets = [0, 64], sizes = [9, 32], strides = [1, 1]} : vector<9x128xbf16> to vector<9x32xbf16>
    %52 = vector.extract_strided_slice %5 {offsets = [0, 64], sizes = [9, 32], strides = [1, 1]} : vector<9x128xbf16> to vector<9x32xbf16>
    %cst_23 = arith.constant dense<0.000000e+00> : vector<9x9xf32>
    %53 = tpu.matmul %50, %51, %cst_23 {dimension_numbers = #tpu.dot_dimension_numbers<[1], [1], [0], [0], [0, 0, 1, 0], [], []>} : vector<9x32xbf16>, vector<9x32xbf16>, vector<9x9xf32> -> vector<9x9xf32>
    %cst_24 = arith.constant 0.176776692 : f32
    %54 = vector.broadcast %cst_24 : f32 to vector<9x9xf32>
    %55 = arith.mulf %53, %54 : vector<9x9xf32>
    %c0_25 = arith.constant 0 : index
    %c0_26 = arith.constant 0 : index
    %c0_27 = arith.constant 0 : index
    %56 = vector.load %arg4[%c0_25, %c0_26, %c0_27] : memref<1x1x9xf32, #tpu.memory_space<vmem>>, vector<1x1x9xf32>
    %57 = vector.shape_cast %56 : vector<1x1x9xf32> to vector<1x9xf32>
    %58 = vector.broadcast %57 : vector<1x9xf32> to vector<9x9xf32>
    %59 = arith.addf %55, %58 : vector<9x9xf32>
    %cst_28 = arith.constant dense<0xFF800000> : vector<9xf32>
    %60 = vector.multi_reduction <maximumf>, %59, %cst_28 [1] : vector<9x9xf32> to vector<9xf32>
    %61 = vector.shape_cast %60 : vector<9xf32> to vector<9x1xf32>
    %62 = vector.broadcast %61 : vector<9x1xf32> to vector<9x9xf32>
    %63 = arith.subf %59, %62 : vector<9x9xf32>
    %64 = math.exp %63 : vector<9x9xf32>
    %cst_29 = arith.constant dense<0.000000e+00> : vector<9xf32>
    %65 = vector.multi_reduction <add>, %64, %cst_29 [1] : vector<9x9xf32> to vector<9xf32>
    %66 = vector.shape_cast %65 : vector<9xf32> to vector<9x1xf32>
    %67 = tpu.reciprocal %66 {approx = true} : vector<9x1xf32> -> vector<9x1xf32>
    %68 = vector.broadcast %67 : vector<9x1xf32> to vector<9x9xf32>
    %69 = arith.mulf %64, %68 : vector<9x9xf32>
    %70 = arith.truncf %69 : vector<9x9xf32> to vector<9x9xbf16>
    %cst_30 = arith.constant dense<0.000000e+00> : vector<9x32xf32>
    %71 = tpu.matmul %70, %52, %cst_30 {dimension_numbers = #tpu.dot_dimension_numbers<[1], [0], [0], [1], [0, 0, 1, 1], [], []>} : vector<9x9xbf16>, vector<9x32xbf16>, vector<9x32xf32> -> vector<9x32xf32>
    %72 = vector.extract_strided_slice %1 {offsets = [0, 96], sizes = [9, 32], strides = [1, 1]} : vector<9x128xbf16> to vector<9x32xbf16>
    %73 = vector.extract_strided_slice %3 {offsets = [0, 96], sizes = [9, 32], strides = [1, 1]} : vector<9x128xbf16> to vector<9x32xbf16>
    %74 = vector.extract_strided_slice %5 {offsets = [0, 96], sizes = [9, 32], strides = [1, 1]} : vector<9x128xbf16> to vector<9x32xbf16>
    %cst_31 = arith.constant dense<0.000000e+00> : vector<9x9xf32>
    %75 = tpu.matmul %72, %73, %cst_31 {dimension_numbers = #tpu.dot_dimension_numbers<[1], [1], [0], [0], [0, 0, 1, 0], [], []>} : vector<9x32xbf16>, vector<9x32xbf16>, vector<9x9xf32> -> vector<9x9xf32>
    %cst_32 = arith.constant 0.176776692 : f32
    %76 = vector.broadcast %cst_32 : f32 to vector<9x9xf32>
    %77 = arith.mulf %75, %76 : vector<9x9xf32>
    %c0_33 = arith.constant 0 : index
    %c0_34 = arith.constant 0 : index
    %c0_35 = arith.constant 0 : index
    %78 = vector.load %arg4[%c0_33, %c0_34, %c0_35] : memref<1x1x9xf32, #tpu.memory_space<vmem>>, vector<1x1x9xf32>
    %79 = vector.shape_cast %78 : vector<1x1x9xf32> to vector<1x9xf32>
    %80 = vector.broadcast %79 : vector<1x9xf32> to vector<9x9xf32>
    %81 = arith.addf %77, %80 : vector<9x9xf32>
    %cst_36 = arith.constant dense<0xFF800000> : vector<9xf32>
    %82 = vector.multi_reduction <maximumf>, %81, %cst_36 [1] : vector<9x9xf32> to vector<9xf32>
    %83 = vector.shape_cast %82 : vector<9xf32> to vector<9x1xf32>
    %84 = vector.broadcast %83 : vector<9x1xf32> to vector<9x9xf32>
    %85 = arith.subf %81, %84 : vector<9x9xf32>
    %86 = math.exp %85 : vector<9x9xf32>
    %cst_37 = arith.constant dense<0.000000e+00> : vector<9xf32>
    %87 = vector.multi_reduction <add>, %86, %cst_37 [1] : vector<9x9xf32> to vector<9xf32>
    %88 = vector.shape_cast %87 : vector<9xf32> to vector<9x1xf32>
    %89 = tpu.reciprocal %88 {approx = true} : vector<9x1xf32> -> vector<9x1xf32>
    %90 = vector.broadcast %89 : vector<9x1xf32> to vector<9x9xf32>
    %91 = arith.mulf %86, %90 : vector<9x9xf32>
    %92 = arith.truncf %91 : vector<9x9xf32> to vector<9x9xbf16>
    %cst_38 = arith.constant dense<0.000000e+00> : vector<9x32xf32>
    %93 = tpu.matmul %92, %74, %cst_38 {dimension_numbers = #tpu.dot_dimension_numbers<[1], [0], [0], [1], [0, 0, 1, 1], [], []>} : vector<9x9xbf16>, vector<9x32xbf16>, vector<9x32xf32> -> vector<9x32xf32>
    %94 = tpu.concatenate %27, %49, %71, %93 in 1 : vector<9x32xf32>, vector<9x32xf32>, vector<9x32xf32>, vector<9x32xf32> -> vector<9x128xf32>
    %95 = arith.truncf %94 : vector<9x128xf32> to vector<9x128xbf16>
    %c0_39 = arith.constant 0 : index
    %c0_40 = arith.constant 0 : index
    %c0_41 = arith.constant 0 : index
    %96 = vector.load %arg5[%c0_39, %c0_40, %c0_41] : memref<1x9x128xbf16, #tpu.memory_space<vmem>>, vector<1x9x128xbf16>
    %97 = vector.shape_cast %96 : vector<1x9x128xbf16> to vector<9x128xbf16>
    %98 = vector.shape_cast %95 : vector<9x128xbf16> to vector<1x9x128xbf16>
    tpu.vector_store %arg5[%c0_39, %c0_40, %c0_41], %98 {strides = array<i32>} : memref<1x9x128xbf16, #tpu.memory_space<vmem>>, vector<1x9x128xbf16>,
    return
  }
  func.func @transform_0(%arg0: i32) -> (i32, i32, i32) {
    %c0_i32 = arith.constant 0 : i32
    %c0_i32_0 = arith.constant 0 : i32
    %c0_i32_1 = arith.constant 0 : i32
    return %arg0, %c0_i32, %c0_i32_0 : i32, i32, i32
  }
  func.func @transform_1(%arg0: i32) -> (i32, i32, i32) {
    %c0_i32 = arith.constant 0 : i32
    %c1_i32 = arith.constant 1 : i32
    %c0_i32_0 = arith.constant 0 : i32
    return %arg0, %c0_i32, %c1_i32 : i32, i32, i32
  }
  func.func @transform_2(%arg0: i32) -> (i32, i32, i32) {
    %c0_i32 = arith.constant 0 : i32
    %c2_i32 = arith.constant 2 : i32
    %c0_i32_0 = arith.constant 0 : i32
    return %arg0, %c0_i32, %c2_i32 : i32, i32, i32
  }
  func.func @transform_3(%arg0: i32) -> (i32, i32, i32) {
    %c0_i32 = arith.constant 0 : i32
    %c0_i32_0 = arith.constant 0 : i32
    %c0_i32_1 = arith.constant 0 : i32
    return %arg0, %c0_i32, %c0_i32_0 : i32, i32, i32
  }
  func.func @transform_4(%arg0: i32) -> (i32, i32, i32) {
    %c0_i32 = arith.constant 0 : i32
    %c0_i32_0 = arith.constant 0 : i32
    %c0_i32_1 = arith.constant 0 : i32
    return %arg0, %c0_i32, %c0_i32_0 : i32, i32, i32
  }
}

module attributes {stable_mosaic.version = 11 : i64} {
  func.func @_mm_kernel(%arg0: i32, %arg1: i32, %arg2: i32, %arg3: memref<32x128xbf16, #tpu.memory_space<vmem>>, %arg4: memref<128x128xbf16, #tpu.memory_space<vmem>>, %arg5: memref<1x128xf32, #tpu.memory_space<vmem>>, %arg6: memref<32x128xf32, #tpu.memory_space<vmem>>, %arg7: memref<32x128xf32, #tpu.memory_space<vmem>>) attributes {dimension_semantics = [#tpu.dimension_semantics<parallel>, #tpu.dimension_semantics<parallel>, #tpu.dimension_semantics<arbitrary>], iteration_bounds = array<i64: 1, 1, 1>, scalar_prefetch = 0 : i64, scratch_operands = 0 : i64, tpu.core_type = #tpu.core_type<tc>, window_params = [{transform_indices = @transform_0, window_bounds = array<i64: 32, 128>}, {transform_indices = @transform_1, window_bounds = array<i64: 128, 128>}, {transform_indices = @transform_2, window_bounds = array<i64: 1, 128>}, {transform_indices = @transform_3, window_bounds = array<i64: 32, 128>}, {transform_indices = @transform_4, window_bounds = array<i64: 32, 128>}]} {
    %c0 = arith.constant 0 : index
    %c0_0 = arith.constant 0 : index
    %0 = vector.load %arg3[%c0, %c0_0] : memref<32x128xbf16, #tpu.memory_space<vmem>>, vector<32x128xbf16>
    %c0_1 = arith.constant 0 : index
    %c0_2 = arith.constant 0 : index
    %1 = vector.load %arg4[%c0_1, %c0_2] : memref<128x128xbf16, #tpu.memory_space<vmem>>, vector<128x128xbf16>
    %cst = arith.constant dense<0.000000e+00> : vector<32x128xf32>
    %2 = tpu.matmul %0, %1, %cst {dimension_numbers = #tpu.dot_dimension_numbers<[1], [0], [0], [1], [0, 0, 1, 1], [], []>} : vector<32x128xbf16>, vector<128x128xbf16>, vector<32x128xf32> -> vector<32x128xf32>
    %c0_3 = arith.constant 0 : index
    %c0_4 = arith.constant 0 : index
    %3 = vector.load %arg5[%c0_3, %c0_4] : memref<1x128xf32, #tpu.memory_space<vmem>>, vector<1x128xf32>
    %4 = vector.broadcast %3 : vector<1x128xf32> to vector<32x128xf32>
    %5 = arith.addf %2, %4 : vector<32x128xf32>
    %c0_5 = arith.constant 0 : index
    %c0_6 = arith.constant 0 : index
    %6 = vector.load %arg6[%c0_5, %c0_6] : memref<32x128xf32, #tpu.memory_space<vmem>>, vector<32x128xf32>
    %7 = arith.addf %5, %6 : vector<32x128xf32>
    %c0_7 = arith.constant 0 : index
    %c0_8 = arith.constant 0 : index
    %8 = vector.load %arg7[%c0_7, %c0_8] : memref<32x128xf32, #tpu.memory_space<vmem>>, vector<32x128xf32>
    tpu.vector_store %arg7[%c0_7, %c0_8], %7 {strides = array<i32>} : memref<32x128xf32, #tpu.memory_space<vmem>>, vector<32x128xf32>,
    return
  }
  func.func @transform_0(%arg0: i32, %arg1: i32, %arg2: i32) -> (i32, i32) {
    %c0_i32 = arith.constant 0 : i32
    return %arg0, %arg2 : i32, i32
  }
  func.func @transform_1(%arg0: i32, %arg1: i32, %arg2: i32) -> (i32, i32) {
    %c0_i32 = arith.constant 0 : i32
    return %arg2, %arg1 : i32, i32
  }
  func.func @transform_2(%arg0: i32, %arg1: i32, %arg2: i32) -> (i32, i32) {
    %c0_i32 = arith.constant 0 : i32
    %c0_i32_0 = arith.constant 0 : i32
    return %c0_i32, %arg1 : i32, i32
  }
  func.func @transform_3(%arg0: i32, %arg1: i32, %arg2: i32) -> (i32, i32) {
    %c0_i32 = arith.constant 0 : i32
    return %arg0, %arg1 : i32, i32
  }
  func.func @transform_4(%arg0: i32, %arg1: i32, %arg2: i32) -> (i32, i32) {
    %c0_i32 = arith.constant 0 : i32
    return %arg0, %arg1 : i32, i32
  }
}

module attributes {stable_mosaic.version = 11 : i64} {
  func.func @_mm_kernel(%arg0: i32, %arg1: i32, %arg2: i32, %arg3: memref<32x128xf32, #tpu.memory_space<vmem>>, %arg4: memref<128x256xbf16, #tpu.memory_space<vmem>>, %arg5: memref<1x256xf32, #tpu.memory_space<vmem>>, %arg6: memref<1x128xf32, #tpu.memory_space<vmem>>, %arg7: memref<1x128xf32, #tpu.memory_space<vmem>>, %arg8: memref<32x256xbf16, #tpu.memory_space<vmem>>) attributes {dimension_semantics = [#tpu.dimension_semantics<parallel>, #tpu.dimension_semantics<parallel>, #tpu.dimension_semantics<arbitrary>], iteration_bounds = array<i64: 1, 1, 1>, scalar_prefetch = 0 : i64, scratch_operands = 0 : i64, tpu.core_type = #tpu.core_type<tc>, window_params = [{transform_indices = @transform_0, window_bounds = array<i64: 32, 128>}, {transform_indices = @transform_1, window_bounds = array<i64: 128, 256>}, {transform_indices = @transform_2, window_bounds = array<i64: 1, 256>}, {transform_indices = @transform_3, window_bounds = array<i64: 1, 128>}, {transform_indices = @transform_4, window_bounds = array<i64: 1, 128>}, {transform_indices = @transform_5, window_bounds = array<i64: 32, 256>}]} {
    %c0 = arith.constant 0 : index
    %c0_0 = arith.constant 0 : index
    %0 = vector.load %arg3[%c0, %c0_0] : memref<32x128xf32, #tpu.memory_space<vmem>>, vector<32x128xf32>
    %cst = arith.constant dense<0.000000e+00> : vector<32xf32>
    %1 = vector.multi_reduction <add>, %0, %cst [1] : vector<32x128xf32> to vector<32xf32>
    %2 = vector.shape_cast %1 : vector<32xf32> to vector<32x1xf32>
    %cst_1 = arith.constant 1.280000e+02 : f32
    %3 = vector.broadcast %cst_1 : f32 to vector<32x1xf32>
    %4 = arith.divf %2, %3 : vector<32x1xf32>
    %5 = arith.mulf %0, %0 : vector<32x128xf32>
    %cst_2 = arith.constant dense<0.000000e+00> : vector<32xf32>
    %6 = vector.multi_reduction <add>, %5, %cst_2 [1] : vector<32x128xf32> to vector<32xf32>
    %7 = vector.shape_cast %6 : vector<32xf32> to vector<32x1xf32>
    %cst_3 = arith.constant 1.280000e+02 : f32
    %8 = vector.broadcast %cst_3 : f32 to vector<32x1xf32>
    %9 = arith.divf %7, %8 : vector<32x1xf32>
    %10 = arith.mulf %4, %4 : vector<32x1xf32>
    %11 = arith.subf %9, %10 : vector<32x1xf32>
    %12 = vector.broadcast %4 : vector<32x1xf32> to vector<32x128xf32>
    %13 = arith.subf %0, %12 : vector<32x128xf32>
    %cst_4 = arith.constant 9.99999974E-6 : f32
    %14 = vector.broadcast %cst_4 : f32 to vector<32x1xf32>
    %15 = arith.addf %11, %14 : vector<32x1xf32>
    %16 = math.rsqrt %15 : vector<32x1xf32>
    %17 = vector.broadcast %16 : vector<32x1xf32> to vector<32x128xf32>
    %18 = arith.mulf %13, %17 : vector<32x128xf32>
    %c0_5 = arith.constant 0 : index
    %c0_6 = arith.constant 0 : index
    %19 = vector.load %arg6[%c0_5, %c0_6] : memref<1x128xf32, #tpu.memory_space<vmem>>, vector<1x128xf32>
    %20 = vector.broadcast %19 : vector<1x128xf32> to vector<32x128xf32>
    %21 = arith.mulf %18, %20 : vector<32x128xf32>
    %c0_7 = arith.constant 0 : index
    %c0_8 = arith.constant 0 : index
    %22 = vector.load %arg7[%c0_7, %c0_8] : memref<1x128xf32, #tpu.memory_space<vmem>>, vector<1x128xf32>
    %23 = vector.broadcast %22 : vector<1x128xf32> to vector<32x128xf32>
    %24 = arith.addf %21, %23 : vector<32x128xf32>
    %25 = arith.truncf %24 : vector<32x128xf32> to vector<32x128xbf16>
    %c0_9 = arith.constant 0 : index
    %c0_10 = arith.constant 0 : index
    %26 = vector.load %arg4[%c0_9, %c0_10] : memref<128x256xbf16, #tpu.memory_space<vmem>>, vector<128x256xbf16>
    %cst_11 = arith.constant dense<0.000000e+00> : vector<32x256xf32>
    %27 = tpu.matmul %25, %26, %cst_11 {dimension_numbers = #tpu.dot_dimension_numbers<[1], [0], [0], [1], [0, 0, 1, 1], [], []>} : vector<32x128xbf16>, vector<128x256xbf16>, vector<32x256xf32> -> vector<32x256xf32>
    %c0_12 = arith.constant 0 : index
    %c0_13 = arith.constant 0 : index
    %28 = vector.load %arg5[%c0_12, %c0_13] : memref<1x256xf32, #tpu.memory_space<vmem>>, vector<1x256xf32>
    %29 = vector.broadcast %28 : vector<1x256xf32> to vector<32x256xf32>
    %30 = arith.addf %27, %29 : vector<32x256xf32>
    %31 = arith.mulf %30, %30 : vector<32x256xf32>
    %32 = arith.mulf %30, %31 : vector<32x256xf32>
    %cst_14 = arith.constant 4.471500e-02 : f32
    %33 = vector.broadcast %cst_14 : f32 to vector<32x256xf32>
    %34 = arith.mulf %33, %32 : vector<32x256xf32>
    %35 = arith.addf %30, %34 : vector<32x256xf32>
    %cst_15 = arith.constant 0.797884583 : f32
    %36 = vector.broadcast %cst_15 : f32 to vector<32x256xf32>
    %37 = arith.mulf %36, %35 : vector<32x256xf32>
    %38 = math.tanh %37 : vector<32x256xf32>
    %cst_16 = arith.constant 1.000000e+00 : f32
    %39 = vector.broadcast %cst_16 : f32 to vector<32x256xf32>
    %40 = arith.addf %39, %38 : vector<32x256xf32>
    %cst_17 = arith.constant 5.000000e-01 : f32
    %41 = vector.broadcast %cst_17 : f32 to vector<32x256xf32>
    %42 = arith.mulf %41, %40 : vector<32x256xf32>
    %43 = arith.mulf %30, %42 : vector<32x256xf32>
    %44 = arith.truncf %43 : vector<32x256xf32> to vector<32x256xbf16>
    %c0_18 = arith.constant 0 : index
    %c0_19 = arith.constant 0 : index
    %45 = vector.load %arg8[%c0_18, %c0_19] : memref<32x256xbf16, #tpu.memory_space<vmem>>, vector<32x256xbf16>
    tpu.vector_store %arg8[%c0_18, %c0_19], %44 {strides = array<i32>} : memref<32x256xbf16, #tpu.memory_space<vmem>>, vector<32x256xbf16>,
    return
  }
  func.func @transform_0(%arg0: i32, %arg1: i32, %arg2: i32) -> (i32, i32) {
    %c0_i32 = arith.constant 0 : i32
    return %arg0, %arg2 : i32, i32
  }
  func.func @transform_1(%arg0: i32, %arg1: i32, %arg2: i32) -> (i32, i32) {
    %c0_i32 = arith.constant 0 : i32
    return %arg2, %arg1 : i32, i32
  }
  func.func @transform_2(%arg0: i32, %arg1: i32, %arg2: i32) -> (i32, i32) {
    %c0_i32 = arith.constant 0 : i32
    %c0_i32_0 = arith.constant 0 : i32
    return %c0_i32, %arg1 : i32, i32
  }
  func.func @transform_3(%arg0: i32, %arg1: i32, %arg2: i32) -> (i32, i32) {
    %c0_i32 = arith.constant 0 : i32
    %c0_i32_0 = arith.constant 0 : i32
    return %c0_i32, %arg2 : i32, i32
  }
  func.func @transform_4(%arg0: i32, %arg1: i32, %arg2: i32) -> (i32, i32) {
    %c0_i32 = arith.constant 0 : i32
    %c0_i32_0 = arith.constant 0 : i32
    return %c0_i32, %arg2 : i32, i32
  }
  func.func @transform_5(%arg0: i32, %arg1: i32, %arg2: i32) -> (i32, i32) {
    %c0_i32 = arith.constant 0 : i32
    return %arg0, %arg1 : i32, i32
  }
}

module attributes {stable_mosaic.version = 11 : i64} {
  func.func @_mm_kernel(%arg0: i32, %arg1: i32, %arg2: i32, %arg3: memref<32x256xbf16, #tpu.memory_space<vmem>>, %arg4: memref<256x128xbf16, #tpu.memory_space<vmem>>, %arg5: memref<1x128xf32, #tpu.memory_space<vmem>>, %arg6: memref<32x128xf32, #tpu.memory_space<vmem>>, %arg7: memref<32x128xf32, #tpu.memory_space<vmem>>) attributes {dimension_semantics = [#tpu.dimension_semantics<parallel>, #tpu.dimension_semantics<parallel>, #tpu.dimension_semantics<arbitrary>], iteration_bounds = array<i64: 1, 1, 1>, scalar_prefetch = 0 : i64, scratch_operands = 0 : i64, tpu.core_type = #tpu.core_type<tc>, window_params = [{transform_indices = @transform_0, window_bounds = array<i64: 32, 256>}, {transform_indices = @transform_1, window_bounds = array<i64: 256, 128>}, {transform_indices = @transform_2, window_bounds = array<i64: 1, 128>}, {transform_indices = @transform_3, window_bounds = array<i64: 32, 128>}, {transform_indices = @transform_4, window_bounds = array<i64: 32, 128>}]} {
    %c0 = arith.constant 0 : index
    %c0_0 = arith.constant 0 : index
    %0 = vector.load %arg3[%c0, %c0_0] : memref<32x256xbf16, #tpu.memory_space<vmem>>, vector<32x256xbf16>
    %c0_1 = arith.constant 0 : index
    %c0_2 = arith.constant 0 : index
    %1 = vector.load %arg4[%c0_1, %c0_2] : memref<256x128xbf16, #tpu.memory_space<vmem>>, vector<256x128xbf16>
    %cst = arith.constant dense<0.000000e+00> : vector<32x128xf32>
    %2 = tpu.matmul %0, %1, %cst {dimension_numbers = #tpu.dot_dimension_numbers<[1], [0], [0], [1], [0, 0, 1, 1], [], []>} : vector<32x256xbf16>, vector<256x128xbf16>, vector<32x128xf32> -> vector<32x128xf32>
    %c0_3 = arith.constant 0 : index
    %c0_4 = arith.constant 0 : index
    %3 = vector.load %arg5[%c0_3, %c0_4] : memref<1x128xf32, #tpu.memory_space<vmem>>, vector<1x128xf32>
    %4 = vector.broadcast %3 : vector<1x128xf32> to vector<32x128xf32>
    %5 = arith.addf %2, %4 : vector<32x128xf32>
    %c0_5 = arith.constant 0 : index
    %c0_6 = arith.constant 0 : index
    %6 = vector.load %arg6[%c0_5, %c0_6] : memref<32x128xf32, #tpu.memory_space<vmem>>, vector<32x128xf32>
    %7 = arith.addf %5, %6 : vector<32x128xf32>
    %c0_7 = arith.constant 0 : index
    %c0_8 = arith.constant 0 : index
    %8 = vector.load %arg7[%c0_7, %c0_8] : memref<32x128xf32, #tpu.memory_space<vmem>>, vector<32x128xf32>
    tpu.vector_store %arg7[%c0_7, %c0_8], %7 {strides = array<i32>} : memref<32x128xf32, #tpu.memory_space<vmem>>, vector<32x128xf32>,
    return
  }
  func.func @transform_0(%arg0: i32, %arg1: i32, %arg2: i32) -> (i32, i32) {
    %c0_i32 = arith.constant 0 : i32
    return %arg0, %arg2 : i32, i32
  }
  func.func @transform_1(%arg0: i32, %arg1: i32, %arg2: i32) -> (i32, i32) {
    %c0_i32 = arith.constant 0 : i32
    return %arg2, %arg1 : i32, i32
  }
  func.func @transform_2(%arg0: i32, %arg1: i32, %arg2: i32) -> (i32, i32) {
    %c0_i32 = arith.constant 0 : i32
    %c0_i32_0 = arith.constant 0 : i32
    return %c0_i32, %arg1 : i32, i32
  }
  func.func @transform_3(%arg0: i32, %arg1: i32, %arg2: i32) -> (i32, i32) {
    %c0_i32 = arith.constant 0 : i32
    return %arg0, %arg1 : i32, i32
  }
  func.func @transform_4(%arg0: i32, %arg1: i32, %arg2: i32) -> (i32, i32) {
    %c0_i32 = arith.constant 0 : i32
    return %arg0, %arg1 : i32, i32
  }
}

module attributes {stable_mosaic.version = 11 : i64} {
  func.func @_layernorm_kernel(%arg0: i32, %arg1: memref<24x128xf32, #tpu.memory_space<vmem>>, %arg2: memref<1x128xf32, #tpu.memory_space<vmem>>, %arg3: memref<1x128xf32, #tpu.memory_space<vmem>>, %arg4: memref<24x128xf32, #tpu.memory_space<vmem>>) attributes {dimension_semantics = [#tpu.dimension_semantics<parallel>], iteration_bounds = array<i64: 1>, scalar_prefetch = 0 : i64, scratch_operands = 0 : i64, tpu.core_type = #tpu.core_type<tc>, window_params = [{transform_indices = @transform_0, window_bounds = array<i64: 24, 128>}, {pipeline_mode = #tpu.pipeline_mode<synchronous>, transform_indices = @transform_1, window_bounds = array<i64: 1, 128>}, {pipeline_mode = #tpu.pipeline_mode<synchronous>, transform_indices = @transform_2, window_bounds = array<i64: 1, 128>}, {transform_indices = @transform_3, window_bounds = array<i64: 24, 128>}]} {
    %c0 = arith.constant 0 : index
    %c0_0 = arith.constant 0 : index
    %0 = vector.load %arg1[%c0, %c0_0] : memref<24x128xf32, #tpu.memory_space<vmem>>, vector<24x128xf32>
    %cst = arith.constant dense<0.000000e+00> : vector<24xf32>
    %1 = vector.multi_reduction <add>, %0, %cst [1] : vector<24x128xf32> to vector<24xf32>
    %2 = vector.shape_cast %1 : vector<24xf32> to vector<24x1xf32>
    %cst_1 = arith.constant 1.280000e+02 : f32
    %3 = vector.broadcast %cst_1 : f32 to vector<24x1xf32>
    %4 = arith.divf %2, %3 : vector<24x1xf32>
    %5 = vector.broadcast %4 : vector<24x1xf32> to vector<24x128xf32>
    %6 = arith.subf %0, %5 : vector<24x128xf32>
    %7 = arith.mulf %6, %6 : vector<24x128xf32>
    %cst_2 = arith.constant dense<0.000000e+00> : vector<24xf32>
    %8 = vector.multi_reduction <add>, %7, %cst_2 [1] : vector<24x128xf32> to vector<24xf32>
    %9 = vector.shape_cast %8 : vector<24xf32> to vector<24x1xf32>
    %cst_3 = arith.constant 1.280000e+02 : f32
    %10 = vector.broadcast %cst_3 : f32 to vector<24x1xf32>
    %11 = arith.divf %9, %10 : vector<24x1xf32>
    %12 = vector.broadcast %4 : vector<24x1xf32> to vector<24x128xf32>
    %13 = arith.subf %0, %12 : vector<24x128xf32>
    %cst_4 = arith.constant 9.99999974E-6 : f32
    %14 = vector.broadcast %cst_4 : f32 to vector<24x1xf32>
    %15 = arith.addf %11, %14 : vector<24x1xf32>
    %16 = math.rsqrt %15 : vector<24x1xf32>
    %17 = vector.broadcast %16 : vector<24x1xf32> to vector<24x128xf32>
    %18 = arith.mulf %13, %17 : vector<24x128xf32>
    %c0_5 = arith.constant 0 : index
    %c0_6 = arith.constant 0 : index
    %19 = vector.load %arg2[%c0_5, %c0_6] : memref<1x128xf32, #tpu.memory_space<vmem>>, vector<1x128xf32>
    %20 = vector.broadcast %19 : vector<1x128xf32> to vector<24x128xf32>
    %21 = arith.mulf %18, %20 : vector<24x128xf32>
    %c0_7 = arith.constant 0 : index
    %c0_8 = arith.constant 0 : index
    %22 = vector.load %arg3[%c0_7, %c0_8] : memref<1x128xf32, #tpu.memory_space<vmem>>, vector<1x128xf32>
    %23 = vector.broadcast %22 : vector<1x128xf32> to vector<24x128xf32>
    %24 = arith.addf %21, %23 : vector<24x128xf32>
    %c0_9 = arith.constant 0 : index
    %c0_10 = arith.constant 0 : index
    %25 = vector.load %arg4[%c0_9, %c0_10] : memref<24x128xf32, #tpu.memory_space<vmem>>, vector<24x128xf32>
    tpu.vector_store %arg4[%c0_9, %c0_10], %24 {strides = array<i32>} : memref<24x128xf32, #tpu.memory_space<vmem>>, vector<24x128xf32>,
    return
  }
  func.func @transform_0(%arg0: i32) -> (i32, i32) {
    %c0_i32 = arith.constant 0 : i32
    %c0_i32_0 = arith.constant 0 : i32
    return %arg0, %c0_i32 : i32, i32
  }
  func.func @transform_1(%arg0: i32) -> (i32, i32) {
    %c0_i32 = arith.constant 0 : i32
    %c0_i32_0 = arith.constant 0 : i32
    %c0_i32_1 = arith.constant 0 : i32
    return %c0_i32, %c0_i32_0 : i32, i32
  }
  func.func @transform_2(%arg0: i32) -> (i32, i32) {
    %c0_i32 = arith.constant 0 : i32
    %c0_i32_0 = arith.constant 0 : i32
    %c0_i32_1 = arith.constant 0 : i32
    return %c0_i32, %c0_i32_0 : i32, i32
  }
  func.func @transform_3(%arg0: i32) -> (i32, i32) {
    %c0_i32 = arith.constant 0 : i32
    %c0_i32_0 = arith.constant 0 : i32
    return %arg0, %c0_i32 : i32, i32
  }
}

module attributes {stable_mosaic.version = 11 : i64} {
  func.func @_l2norm_kernel(%arg0: i32, %arg1: memref<16x128xf32, #tpu.memory_space<vmem>>, %arg2: memref<16x128xf32, #tpu.memory_space<vmem>>) attributes {dimension_semantics = [#tpu.dimension_semantics<parallel>], iteration_bounds = array<i64: 1>, scalar_prefetch = 0 : i64, scratch_operands = 0 : i64, tpu.core_type = #tpu.core_type<tc>, window_params = [{transform_indices = @transform_0, window_bounds = array<i64: 16, 128>}, {transform_indices = @transform_1, window_bounds = array<i64: 16, 128>}]} {
    %c0 = arith.constant 0 : index
    %c0_0 = arith.constant 0 : index
    %0 = vector.load %arg1[%c0, %c0_0] : memref<16x128xf32, #tpu.memory_space<vmem>>, vector<16x128xf32>
    %1 = arith.mulf %0, %0 : vector<16x128xf32>
    %cst = arith.constant dense<0.000000e+00> : vector<16xf32>
    %2 = vector.multi_reduction <add>, %1, %cst [1] : vector<16x128xf32> to vector<16xf32>
    %3 = vector.shape_cast %2 : vector<16xf32> to vector<16x1xf32>
    %4 = math.sqrt %3 : vector<16x1xf32>
    %cst_1 = arith.constant 9.99999996E-13 : f32
    %5 = vector.broadcast %cst_1 : f32 to vector<16x1xf32>
    %6 = arith.maximumf %4, %5 : vector<16x1xf32>
    %7 = vector.broadcast %6 : vector<16x1xf32> to vector<16x128xf32>
    %8 = arith.divf %0, %7 : vector<16x128xf32>
    %c0_2 = arith.constant 0 : index
    %c0_3 = arith.constant 0 : index
    %9 = vector.load %arg2[%c0_2, %c0_3] : memref<16x128xf32, #tpu.memory_space<vmem>>, vector<16x128xf32>
    tpu.vector_store %arg2[%c0_2, %c0_3], %8 {strides = array<i32>} : memref<16x128xf32, #tpu.memory_space<vmem>>, vector<16x128xf32>,
    return
  }
  func.func @transform_0(%arg0: i32) -> (i32, i32) {
    %c0_i32 = arith.constant 0 : i32
    %c0_i32_0 = arith.constant 0 : i32
    return %arg0, %c0_i32 : i32, i32
  }
  func.func @transform_1(%arg0: i32) -> (i32, i32) {
    %c0_i32 = arith.constant 0 : i32
    %c0_i32_0 = arith.constant 0 : i32
    return %arg0, %c0_i32 : i32, i32
  }
}

module attributes {stable_mosaic.version = 11 : i64} {
  func.func @_l2norm_kernel(%arg0: i32, %arg1: memref<8x128xf32, #tpu.memory_space<vmem>>, %arg2: memref<8x128xf32, #tpu.memory_space<vmem>>) attributes {dimension_semantics = [#tpu.dimension_semantics<parallel>], iteration_bounds = array<i64: 1>, scalar_prefetch = 0 : i64, scratch_operands = 0 : i64, tpu.core_type = #tpu.core_type<tc>, window_params = [{transform_indices = @transform_0, window_bounds = array<i64: 8, 128>}, {transform_indices = @transform_1, window_bounds = array<i64: 8, 128>}]} {
    %c0 = arith.constant 0 : index
    %c0_0 = arith.constant 0 : index
    %0 = vector.load %arg1[%c0, %c0_0] : memref<8x128xf32, #tpu.memory_space<vmem>>, vector<8x128xf32>
    %1 = arith.mulf %0, %0 : vector<8x128xf32>
    %cst = arith.constant dense<0.000000e+00> : vector<8xf32>
    %2 = vector.multi_reduction <add>, %1, %cst [1] : vector<8x128xf32> to vector<8xf32>
    %3 = vector.shape_cast %2 : vector<8xf32> to vector<8x1xf32>
    %4 = math.sqrt %3 : vector<8x1xf32>
    %cst_1 = arith.constant 9.99999996E-13 : f32
    %5 = vector.broadcast %cst_1 : f32 to vector<8x1xf32>
    %6 = arith.maximumf %4, %5 : vector<8x1xf32>
    %7 = vector.broadcast %6 : vector<8x1xf32> to vector<8x128xf32>
    %8 = arith.divf %0, %7 : vector<8x128xf32>
    %c0_2 = arith.constant 0 : index
    %c0_3 = arith.constant 0 : index
    %9 = vector.load %arg2[%c0_2, %c0_3] : memref<8x128xf32, #tpu.memory_space<vmem>>, vector<8x128xf32>
    tpu.vector_store %arg2[%c0_2, %c0_3], %8 {strides = array<i32>} : memref<8x128xf32, #tpu.memory_space<vmem>>, vector<8x128xf32>,
    return
  }
  func.func @transform_0(%arg0: i32) -> (i32, i32) {
    %c0_i32 = arith.constant 0 : i32
    %c0_i32_0 = arith.constant 0 : i32
    return %arg0, %c0_i32 : i32, i32
  }
  func.func @transform_1(%arg0: i32) -> (i32, i32) {
    %c0_i32 = arith.constant 0 : i32
    %c0_i32_0 = arith.constant 0 : i32
    return %arg0, %c0_i32 : i32, i32
  }
}

</mosaic_0001>

<llo_original>
// kernel: video_expert_forward.15
$region0: #{video_expert_forward.15}
  #allocation0 [shape = 'u32[]', space=smem, size = 0x4, offset = 0x4, fixed_abs, tag = 'smem constant byte address 0x4 - core index']
  #allocation1 [shape = 'u32[72,128]{1,0:T(1,128)}', space=vmem, size = 0x9000, scoped, tag = 'internal scratch']
  %s0 = inlined_call_operand.vmem [shape: f32[64,256], index: 0, kind: input, shape index: {}]
  %s1 = inlined_call_operand.vmem [shape: bf16[256,128], index: 1, kind: input, shape index: {}]
  %s2 = inlined_call_operand.vmem [shape: f32[1,128], index: 2, kind: input, shape index: {}]
  %s3 = inlined_call_operand.vmem [shape: f32[64,128], index: 3, kind: output, shape index: {}]
  %s4 = sld [smem:[#allocation0]]
  $region22: #{video_expert_forward.15} parent=0
    _
  %s6 = ssub.s32 1, %s4
  %s7 = scalar_select 0, %s6, %s4
  // Predicated region
  $region2: #{video_expert_forward.15} parent=0 // pred_check
    _
  $region3: #{video_expert_forward.15} parent=0 // pred_check_branch
    %9 = sbr.rel (0) target = $region5
  $region4: #{video_expert_forward.15} parent=0 // pred_region
    _
  $region5: #{video_expert_forward.15} parent=0 // pred_fallthru
    _
  // Predicated region
  $region6: #{video_expert_forward.15} parent=0 // pred_check
    _
  $region7: #{video_expert_forward.15} parent=0 // pred_check_branch
    %11 = sbr.rel (0) target = $region9
  $region8: #{video_expert_forward.15} parent=0 // pred_region
    _
  $region9: #{video_expert_forward.15} parent=0 // pred_fallthru
    _
  // Predicated region
  $region10: #{video_expert_forward.15} parent=0 // pred_check
    _
  $region11: #{video_expert_forward.15} parent=0 // pred_check_branch
    %13 = sbr.rel (0) target = $region13
  $region12: #{video_expert_forward.15} parent=0 // pred_region
    _
  $region13: #{video_expert_forward.15} parent=0 // pred_fallthru
    _
  %v14 = vld [vmem:[%s0] sm:$0xff]
  %v15 = vld [vmem:[%s0 + $0x8] sm:$0xff]
  %v16 = vld [vmem:[%s0 + $0x10] sm:$0xff]
  %v17 = vld [vmem:[%s0 + $0x18] sm:$0xff]
  %v18 = vld [vmem:[%s0 + $0x20] sm:$0xff]
  %v19 = vld [vmem:[%s0 + $0x28] sm:$0xff]
  %v20 = vld [vmem:[%s0 + $0x30] sm:$0xff]
  %v21 = vld [vmem:[%s0 + $0x38] sm:$0xff]
  %v22 = vld [vmem:[%s0 + $0x40] sm:$0xff]
  %v23 = vld [vmem:[%s0 + $0x48] sm:$0xff]
  %v24 = vld [vmem:[%s0 + $0x50] sm:$0xff]
  %v25 = vld [vmem:[%s0 + $0x58] sm:$0xff]
  %v26 = vld [vmem:[%s0 + $0x60] sm:$0xff]
  %v27 = vld [vmem:[%s0 + $0x68] sm:$0xff]
  %v28 = vld [vmem:[%s0 + $0x70] sm:$0xff]
  %v29 = vld [vmem:[%s0 + $0x78] sm:$0xff]
  %v30 = vpack.c.bf16 %v16, %v14
  %v31 = vpack.c.bf16 %v17, %v15
  %v32 = vpack.c.bf16 %v20, %v18
  %v33 = vpack.c.bf16 %v21, %v19
  %v34 = vpack.c.bf16 %v24, %v22
  %v35 = vpack.c.bf16 %v25, %v23
  %v36 = vpack.c.bf16 %v28, %v26
  %v37 = vpack.c.bf16 %v29, %v27
  %v38 = vld [vmem:[%s1] sm:$0xf]
  %v39 = vld [vmem:[%s1 + $0x4] sm:$0xf]
  %v40 = vld [vmem:[%s1 + $0x8] sm:$0xf]
  %v41 = vld [vmem:[%s1 + $0xc] sm:$0xf]
  %v42 = vld [vmem:[%s1 + $0x10] sm:$0xf]
  %v43 = vld [vmem:[%s1 + $0x14] sm:$0xf]
  %v44 = vld [vmem:[%s1 + $0x18] sm:$0xf]
  %v45 = vld [vmem:[%s1 + $0x1c] sm:$0xf]
  %v46 = vld [vmem:[%s1 + $0x20] sm:$0xf]
  %v47 = vld [vmem:[%s1 + $0x24] sm:$0xf]
  %v48 = vld [vmem:[%s1 + $0x28] sm:$0xf]
  %v49 = vld [vmem:[%s1 + $0x2c] sm:$0xf]
  %v50 = vld [vmem:[%s1 + $0x30] sm:$0xf]
  %v51 = vld [vmem:[%s1 + $0x34] sm:$0xf]
  %v52 = vld [vmem:[%s1 + $0x38] sm:$0xf]
  %v53 = vld [vmem:[%s1 + $0x3c] sm:$0xf]
  %v54 = vld [vmem:[%s1 + $0x40] sm:$0xf]
  %v55 = vld [vmem:[%s1 + $0x44] sm:$0xf]
  %v56 = vld [vmem:[%s1 + $0x48] sm:$0xf]
  %v57 = vld [vmem:[%s1 + $0x4c] sm:$0xf]
  %v58 = vld [vmem:[%s1 + $0x50] sm:$0xf]
  %v59 = vld [vmem:[%s1 + $0x54] sm:$0xf]
  %v60 = vld [vmem:[%s1 + $0x58] sm:$0xf]
  %v61 = vld [vmem:[%s1 + $0x5c] sm:$0xf]
  %v62 = vld [vmem:[%s1 + $0x60] sm:$0xf]
  %v63 = vld [vmem:[%s1 + $0x64] sm:$0xf]
  %v64 = vld [vmem:[%s1 + $0x68] sm:$0xf]
  %v65 = vld [vmem:[%s1 + $0x6c] sm:$0xf]
  %v66 = vld [vmem:[%s1 + $0x70] sm:$0xf]
  %v67 = vld [vmem:[%s1 + $0x74] sm:$0xf]
  %v68 = vld [vmem:[%s1 + $0x78] sm:$0xf]
  %v69 = vld [vmem:[%s1 + $0x7c] sm:$0xf]
  %v70 = vld [vmem:[%s2] sm:$0x1]
  %v72 = vperm.slane %v70, 0
  %v106 = vunpack.c.l.b16 %v38
  %v107 = vunpack.c.l.b16 %v39
  %v108 = vunpack.c.l.b16 %v40
  %v109 = vunpack.c.l.b16 %v41
  %v110 = vunpack.c.l.b16 %v42
  %v111 = vunpack.c.l.b16 %v43
  %v112 = vunpack.c.l.b16 %v44
  %v113 = vunpack.c.l.b16 %v45
  %v114 = vunpack.c.l.b16 %v46
  %v115 = vunpack.c.l.b16 %v47
  %v116 = vunpack.c.l.b16 %v48
  %v117 = vunpack.c.l.b16 %v49
  %v118 = vunpack.c.l.b16 %v50
  %v119 = vunpack.c.l.b16 %v51
  %v120 = vunpack.c.l.b16 %v52
  %v121 = vunpack.c.l.b16 %v53
  %v122 = vunpack.c.l.b16 %v54
  %v123 = vunpack.c.l.b16 %v55
  %v124 = vunpack.c.l.b16 %v56
  %v125 = vunpack.c.l.b16 %v57
  %v126 = vunpack.c.l.b16 %v58
  %v127 = vunpack.c.l.b16 %v59
  %v128 = vunpack.c.l.b16 %v60
  %v129 = vunpack.c.l.b16 %v61
  %v130 = vunpack.c.l.b16 %v62
  %v131 = vunpack.c.l.b16 %v63
  %v132 = vunpack.c.l.b16 %v64
  %v133 = vunpack.c.l.b16 %v65
  %v134 = vunpack.c.l.b16 %v66
  %v135 = vunpack.c.l.b16 %v67
  %v136 = vunpack.c.l.b16 %v68
  %v137 = vunpack.c.l.b16 %v69
  %v138 = vpack.c.b16 %v107, %v106
  %v139 = vpack.c.b16 %v109, %v108
  %v140 = vpack.c.b16 %v111, %v110
  %v141 = vpack.c.b16 %v113, %v112
  %v142 = vpack.c.b16 %v115, %v114
  %v143 = vpack.c.b16 %v117, %v116
  %v144 = vpack.c.b16 %v119, %v118
  %v145 = vpack.c.b16 %v121, %v120
  %v146 = vpack.c.b16 %v123, %v122
  %v147 = vpack.c.b16 %v125, %v124
  %v148 = vpack.c.b16 %v127, %v126
  %v149 = vpack.c.b16 %v129, %v128
  %v150 = vpack.c.b16 %v131, %v130
  %v151 = vpack.c.b16 %v133, %v132
  %v152 = vpack.c.b16 %v135, %v134
  %v153 = vpack.c.b16 %v137, %v136
  %170 = vmatpush.bf16.msra.mxu0 %v145
  %171 = vmatpush.bf16.msra.mxu0 %v144
  %172 = vmatpush.bf16.msra.mxu0 %v143
  %173 = vmatpush.bf16.msra.mxu0 %v142
  %174 = vmatpush.bf16.msra.mxu0 %v141
  %175 = vmatpush.bf16.msra.mxu0 %v140
  %176 = vmatpush.bf16.msra.mxu0 %v139
  %177 = vmatpush.bf16.msra.mxu0 %v138
  %178 = vmatmul.bf16.gmra.mxu0 %v30
  %v179 = vpop.f32.mrf.mxu0
  %v180 = vadd.f32 %v72, %v179
  %v181 = vpop.f32.mrf.mxu0
  %v182 = vadd.f32 %v72, %v181
  %183 = vmatmul.bf16.gmra.mxu0 %v32
  %v184 = vpop.f32.mrf.mxu0
  %v185 = vadd.f32 %v72, %v184
  %v186 = vpop.f32.mrf.mxu0
  %v187 = vadd.f32 %v72, %v186
  %188 = vmatmul.bf16.gmra.mxu0 %v34
  %v189 = vpop.f32.mrf.mxu0
  %v190 = vadd.f32 %v72, %v189
  %v191 = vpop.f32.mrf.mxu0
  %v192 = vadd.f32 %v72, %v191
  %193 = vmatmul.bf16.gmra.mxu0 %v36
  %v194 = vpop.f32.mrf.mxu0
  %v195 = vadd.f32 %v72, %v194
  %v196 = vpop.f32.mrf.mxu0
  %v197 = vadd.f32 %v72, %v196
  %198 = vdwg.mxu0
  %199 = vmatpush.bf16.msra.mxu0 %v153
  %200 = vmatpush.bf16.msra.mxu0 %v152
  %201 = vmatpush.bf16.msra.mxu0 %v151
  %202 = vmatpush.bf16.msra.mxu0 %v150
  %203 = vmatpush.bf16.msra.mxu0 %v149
  %204 = vmatpush.bf16.msra.mxu0 %v148
  %205 = vmatpush.bf16.msra.mxu0 %v147
  %206 = vmatpush.bf16.msra.mxu0 %v146
  %207 = vmatmul.bf16.gmra.mxu0 %v31
  %v208 = vpop.f32.mrf.mxu0
  %v209 = vadd.f32 %v180, %v208
  %v210 = vpop.f32.mrf.mxu0
  %v211 = vadd.f32 %v182, %v210
  %212 = vmatmul.bf16.gmra.mxu0 %v33
  %v213 = vpop.f32.mrf.mxu0
  %v214 = vadd.f32 %v185, %v213
  %v215 = vpop.f32.mrf.mxu0
  %v216 = vadd.f32 %v187, %v215
  %217 = vmatmul.bf16.gmra.mxu0 %v35
  %v218 = vpop.f32.mrf.mxu0
  %v219 = vadd.f32 %v190, %v218
  %v220 = vpop.f32.mrf.mxu0
  %v221 = vadd.f32 %v192, %v220
  %222 = vmatmul.bf16.gmra.mxu0 %v37
  %v223 = vpop.f32.mrf.mxu0
  %v224 = vadd.f32 %v195, %v223
  %v225 = vpop.f32.mrf.mxu0
  %v226 = vadd.f32 %v197, %v225
  %227 = vdwg.mxu0
  %228 = vst [vmem:[%s3] sm:$0xff] %v209
  %229 = vst [vmem:[%s3 + $0x8] sm:$0xff] %v211
  %230 = vst [vmem:[%s3 + $0x10] sm:$0xff] %v214
  %231 = vst [vmem:[%s3 + $0x18] sm:$0xff] %v216
  %232 = vst [vmem:[%s3 + $0x20] sm:$0xff] %v219
  %233 = vst [vmem:[%s3 + $0x28] sm:$0xff] %v221
  %234 = vst [vmem:[%s3 + $0x30] sm:$0xff] %v224
  %235 = vst [vmem:[%s3 + $0x38] sm:$0xff] %v226
  // Predicated region
  $region14: #{video_expert_forward.15} parent=0 // pred_check
    _
  $region15: #{video_expert_forward.15} parent=0 // pred_check_branch
    %237 = sbr.rel (0) target = $region17
  $region16: #{video_expert_forward.15} parent=0 // pred_region
    _
  $region17: #{video_expert_forward.15} parent=0 // pred_fallthru
    _
  // Predicated region
  $region18: #{video_expert_forward.15} parent=0 // pred_check
    _
  $region19: #{video_expert_forward.15} parent=0 // pred_check_branch
    %239 = sbr.rel (0) target = $region21
  $region20: #{video_expert_forward.15} parent=0 // pred_region
    _
  $region21: #{video_expert_forward.15} parent=0 // pred_fallthru
    _

// kernel: video_expert_forward.16
$region0: #{video_expert_forward.16}
  #allocation0 [shape = 'u32[]', space=smem, size = 0x4, offset = 0x4, fixed_abs, tag = 'smem constant byte address 0x4 - core index']
  #allocation1 [shape = 'u32[72,128]{1,0:T(1,128)}', space=vmem, size = 0x9000, scoped, tag = 'internal scratch']
  %s0 = inlined_call_operand.vmem [shape: f32[80,128], index: 0, kind: input, shape index: {}]
  %s1 = inlined_call_operand.vmem [shape: bf16[128,384], index: 1, kind: input, shape index: {}]
  %s2 = inlined_call_operand.vmem [shape: f32[1,384], index: 2, kind: input, shape index: {}]
  %s3 = inlined_call_operand.vmem [shape: f32[1,128], index: 3, kind: input, shape index: {}]
  %s4 = inlined_call_operand.vmem [shape: f32[1,128], index: 4, kind: input, shape index: {}]
  %s5 = inlined_call_operand.vmem [shape: bf16[80,384], index: 5, kind: output, shape index: {}]
  %s6 = sld [smem:[#allocation0]]
  $region30: #{video_expert_forward.16} parent=0
    _
  %s8 = ssub.s32 1, %s6
  %s9 = scalar_select 0, %s8, %s6
  // Predicated region
  $region2: #{video_expert_forward.16} parent=0 // pred_check
    _
  $region3: #{video_expert_forward.16} parent=0 // pred_check_branch
    %11 = sbr.rel (0) target = $region5
  $region4: #{video_expert_forward.16} parent=0 // pred_region
    _
  $region5: #{video_expert_forward.16} parent=0 // pred_fallthru
    _
  // Predicated region
  $region6: #{video_expert_forward.16} parent=0 // pred_check
    _
  $region7: #{video_expert_forward.16} parent=0 // pred_check_branch
    %13 = sbr.rel (0) target = $region9
  $region8: #{video_expert_forward.16} parent=0 // pred_region
    _
  $region9: #{video_expert_forward.16} parent=0 // pred_fallthru
    _
  // Predicated region
  $region10: #{video_expert_forward.16} parent=0 // pred_check
    _
  $region11: #{video_expert_forward.16} parent=0 // pred_check_branch
    %15 = sbr.rel (0) target = $region13
  $region12: #{video_expert_forward.16} parent=0 // pred_region
    _
  $region13: #{video_expert_forward.16} parent=0 // pred_fallthru
    _
  // Predicated region
  $region14: #{video_expert_forward.16} parent=0 // pred_check
    _
  $region15: #{video_expert_forward.16} parent=0 // pred_check_branch
    %17 = sbr.rel (0) target = $region17
  $region16: #{video_expert_forward.16} parent=0 // pred_region
    _
  $region17: #{video_expert_forward.16} parent=0 // pred_fallthru
    _
  // Predicated region
  $region18: #{video_expert_forward.16} parent=0 // pred_check
    _
  $region19: #{video_expert_forward.16} parent=0 // pred_check_branch
    %19 = sbr.rel (0) target = $region21
  $region20: #{video_expert_forward.16} parent=0 // pred_region
    _
  $region21: #{video_expert_forward.16} parent=0 // pred_fallthru
    _
  %v20 = vld [vmem:[%s0] sm:$0xff]
  %v21 = vld [vmem:[%s0 + $0x8] sm:$0xff]
  %v22 = vld [vmem:[%s0 + $0x10] sm:$0xff]
  %v23 = vld [vmem:[%s0 + $0x18] sm:$0xff]
  %v24 = vld [vmem:[%s0 + $0x20] sm:$0xff]
  %v25 = vld [vmem:[%s0 + $0x28] sm:$0xff]
  %v26 = vld [vmem:[%s0 + $0x30] sm:$0xff]
  %v27 = vld [vmem:[%s0 + $0x38] sm:$0xff]
  %v28 = vld [vmem:[%s0 + $0x40] sm:$0xff]
  %v29 = vld [vmem:[%s0 + $0x48] sm:$0xff]
  %30 = vadd.xlane.f32.xlu0 %v20
  %v31 = vpop.xlane.xlu0 %30
  %32 = vadd.xlane.f32.xlu0 %v21
  %v33 = vpop.xlane.xlu0 %32
  %34 = vadd.xlane.f32.xlu0 %v22
  %v35 = vpop.xlane.xlu0 %34
  %36 = vadd.xlane.f32.xlu0 %v23
  %v37 = vpop.xlane.xlu0 %36
  %38 = vadd.xlane.f32.xlu0 %v24
  %v39 = vpop.xlane.xlu0 %38
  %40 = vadd.xlane.f32.xlu0 %v25
  %v41 = vpop.xlane.xlu0 %40
  %42 = vadd.xlane.f32.xlu0 %v26
  %v43 = vpop.xlane.xlu0 %42
  %44 = vadd.xlane.f32.xlu0 %v27
  %v45 = vpop.xlane.xlu0 %44
  %46 = vadd.xlane.f32.xlu0 %v28
  %v47 = vpop.xlane.xlu0 %46
  %48 = vadd.xlane.f32.xlu0 %v29
  %v49 = vpop.xlane.xlu0 %48
  %v50 = vrcp.pop 128.0
  %v51 = vmul.f32 128.0, %v50
  %v52 = vsub.f32 1.0, %v51
  %v53 = vmul.f32 %v50, %v52
  %v54 = vadd.f32 %v50, %v53
  %vm55 = vweird.f32 %v50
  %v56 = vsel %vm55, %v50, %v54
  %v57 = vmul.f32 %v31, %v56
  %v58 = vmul.f32 %v33, %v56
  %v59 = vmul.f32 %v35, %v56
  %v60 = vmul.f32 %v37, %v56
  %v61 = vmul.f32 %v39, %v56
  %v62 = vmul.f32 %v41, %v56
  %v63 = vmul.f32 %v43, %v56
  %v64 = vmul.f32 %v45, %v56
  %v65 = vmul.f32 %v47, %v56
  %v66 = vmul.f32 %v49, %v56
  %v67 = vmul.f32 %v20, %v20
  %v68 = vmul.f32 %v21, %v21
  %v69 = vmul.f32 %v22, %v22
  %v70 = vmul.f32 %v23, %v23
  %v71 = vmul.f32 %v24, %v24
  %v72 = vmul.f32 %v25, %v25
  %v73 = vmul.f32 %v26, %v26
  %v74 = vmul.f32 %v27, %v27
  %v75 = vmul.f32 %v28, %v28
  %v76 = vmul.f32 %v29, %v29
  %77 = vadd.xlane.f32.xlu0 %v67
  %v78 = vpop.xlane.xlu0 %77
  %79 = vadd.xlane.f32.xlu0 %v68
  %v80 = vpop.xlane.xlu0 %79
  %81 = vadd.xlane.f32.xlu0 %v69
  %v82 = vpop.xlane.xlu0 %81
  %83 = vadd.xlane.f32.xlu0 %v70
  %v84 = vpop.xlane.xlu0 %83
  %85 = vadd.xlane.f32.xlu0 %v71
  %v86 = vpop.xlane.xlu0 %85
  %87 = vadd.xlane.f32.xlu0 %v72
  %v88 = vpop.xlane.xlu0 %87
  %89 = vadd.xlane.f32.xlu0 %v73
  %v90 = vpop.xlane.xlu0 %89
  %91 = vadd.xlane.f32.xlu0 %v74
  %v92 = vpop.xlane.xlu0 %91
  %93 = vadd.xlane.f32.xlu0 %v75
  %v94 = vpop.xlane.xlu0 %93
  %95 = vadd.xlane.f32.xlu0 %v76
  %v96 = vpop.xlane.xlu0 %95
  %v97 = vmul.f32 %v78, %v56
  %v98 = vmul.f32 %v80, %v56
  %v99 = vmul.f32 %v82, %v56
  %v100 = vmul.f32 %v84, %v56
  %v101 = vmul.f32 %v86, %v56
  %v102 = vmul.f32 %v88, %v56
  %v103 = vmul.f32 %v90, %v56
  %v104 = vmul.f32 %v92, %v56
  %v105 = vmul.f32 %v94, %v56
  %v106 = vmul.f32 %v96, %v56
  %v107 = vmul.f32 %v57, %v57
  %v108 = vmul.f32 %v58, %v58
  %v109 = vmul.f32 %v59, %v59
  %v110 = vmul.f32 %v60, %v60
  %v111 = vmul.f32 %v61, %v61
  %v112 = vmul.f32 %v62, %v62
  %v113 = vmul.f32 %v63, %v63
  %v114 = vmul.f32 %v64, %v64
  %v115 = vmul.f32 %v65, %v65
  %v116 = vmul.f32 %v66, %v66
  %v117 = vsub.f32 %v97, %v107
  %v118 = vsub.f32 %v98, %v108
  %v119 = vsub.f32 %v99, %v109
  %v120 = vsub.f32 %v100, %v110
  %v121 = vsub.f32 %v101, %v111
  %v122 = vsub.f32 %v102, %v112
  %v123 = vsub.f32 %v103, %v113
  %v124 = vsub.f32 %v104, %v114
  %v125 = vsub.f32 %v105, %v115
  %v126 = vsub.f32 %v106, %v116
  %v127 = vsub.f32 %v20, %v57
  %v128 = vsub.f32 %v21, %v58
  %v129 = vsub.f32 %v22, %v59
  %v130 = vsub.f32 %v23, %v60
  %v131 = vsub.f32 %v24, %v61
  %v132 = vsub.f32 %v25, %v62
  %v133 = vsub.f32 %v26, %v63
  %v134 = vsub.f32 %v27, %v64
  %v135 = vsub.f32 %v28, %v65
  %v136 = vsub.f32 %v29, %v66
  %v137 = vadd.f32 %v117, 1e-05
  %v138 = vadd.f32 %v118, 1e-05
  %v139 = vadd.f32 %v119, 1e-05
  %v140 = vadd.f32 %v120, 1e-05
  %v141 = vadd.f32 %v121, 1e-05
  %v142 = vadd.f32 %v122, 1e-05
  %v143 = vadd.f32 %v123, 1e-05
  %v144 = vadd.f32 %v124, 1e-05
  %v145 = vadd.f32 %v125, 1e-05
  %v146 = vadd.f32 %v126, 1e-05
  %v147 = vrsqrt.pop %v137
  %v148 = vmul.f32 %v147, %v137
  %v149 = vmul.f32 %v148, %v147
  %v150 = vmul.f32 0.5, %v149
  %v151 = vsub.f32 1.5, %v150
  %v152 = vmul.f32 %v147, %v151
  %vm153 = vweird.f32 %v137
  %vm154 = vweird.f32 %v147
  %vm155 = vmor %vm153, %vm154
  %v156 = vsel %vm155, %v147, %v152
  %v157 = vrsqrt.pop %v138
  %v158 = vmul.f32 %v157, %v138
  %v159 = vmul.f32 %v158, %v157
  %v160 = vmul.f32 0.5, %v159
  %v161 = vsub.f32 1.5, %v160
  %v162 = vmul.f32 %v157, %v161
  %vm163 = vweird.f32 %v138
  %vm164 = vweird.f32 %v157
  %vm165 = vmor %vm163, %vm164
  %v166 = vsel %vm165, %v157, %v162
  %v167 = vrsqrt.pop %v139
  %v168 = vmul.f32 %v167, %v139
  %v169 = vmul.f32 %v168, %v167
  %v170 = vmul.f32 0.5, %v169
  %v171 = vsub.f32 1.5, %v170
  %v172 = vmul.f32 %v167, %v171
  %vm173 = vweird.f32 %v139
  %vm174 = vweird.f32 %v167
  %vm175 = vmor %vm173, %vm174
  %v176 = vsel %vm175, %v167, %v172
  %v177 = vrsqrt.pop %v140
  %v178 = vmul.f32 %v177, %v140
  %v179 = vmul.f32 %v178, %v177
  %v180 = vmul.f32 0.5, %v179
  %v181 = vsub.f32 1.5, %v180
  %v182 = vmul.f32 %v177, %v181
  %vm183 = vweird.f32 %v140
  %vm184 = vweird.f32 %v177
  %vm185 = vmor %vm183, %vm184
  %v186 = vsel %vm185, %v177, %v182
  %v187 = vrsqrt.pop %v141
  %v188 = vmul.f32 %v187, %v141
  %v189 = vmul.f32 %v188, %v187
  %v190 = vmul.f32 0.5, %v189
  %v191 = vsub.f32 1.5, %v190
  %v192 = vmul.f32 %v187, %v191
  %vm193 = vweird.f32 %v141
  %vm194 = vweird.f32 %v187
  %vm195 = vmor %vm193, %vm194
  %v196 = vsel %vm195, %v187, %v192
  %v197 = vrsqrt.pop %v142
  %v198 = vmul.f32 %v197, %v142
  %v199 = vmul.f32 %v198, %v197
  %v200 = vmul.f32 0.5, %v199
  %v201 = vsub.f32 1.5, %v200
  %v202 = vmul.f32 %v197, %v201
  %vm203 = vweird.f32 %v142
  %vm204 = vweird.f32 %v197
  %vm205 = vmor %vm203, %vm204
  %v206 = vsel %vm205, %v197, %v202
  %v207 = vrsqrt.pop %v143
  %v208 = vmul.f32 %v207, %v143
  %v209 = vmul.f32 %v208, %v207
  %v210 = vmul.f32 0.5, %v209
  %v211 = vsub.f32 1.5, %v210
  %v212 = vmul.f32 %v207, %v211
  %vm213 = vweird.f32 %v143
  %vm214 = vweird.f32 %v207
  %vm215 = vmor %vm213, %vm214
  %v216 = vsel %vm215, %v207, %v212
  %v217 = vrsqrt.pop %v144
  %v218 = vmul.f32 %v217, %v144
  %v219 = vmul.f32 %v218, %v217
  %v220 = vmul.f32 0.5, %v219
  %v221 = vsub.f32 1.5, %v220
  %v222 = vmul.f32 %v217, %v221
  %vm223 = vweird.f32 %v144
  %vm224 = vweird.f32 %v217
  %vm225 = vmor %vm223, %vm224
  %v226 = vsel %vm225, %v217, %v222
  %v227 = vrsqrt.pop %v145
  %v228 = vmul.f32 %v227, %v145
  %v229 = vmul.f32 %v228, %v227
  %v230 = vmul.f32 0.5, %v229
  %v231 = vsub.f32 1.5, %v230
  %v232 = vmul.f32 %v227, %v231
  %vm233 = vweird.f32 %v145
  %vm234 = vweird.f32 %v227
  %vm235 = vmor %vm233, %vm234
  %v236 = vsel %vm235, %v227, %v232
  %v237 = vrsqrt.pop %v146
  %v238 = vmul.f32 %v237, %v146
  %v239 = vmul.f32 %v238, %v237
  %v240 = vmul.f32 0.5, %v239
  %v241 = vsub.f32 1.5, %v240
  %v242 = vmul.f32 %v237, %v241
  %vm243 = vweird.f32 %v146
  %vm244 = vweird.f32 %v237
  %vm245 = vmor %vm243, %vm244
  %v246 = vsel %vm245, %v237, %v242
  %v247 = vmul.f32 %v127, %v156
  %v248 = vmul.f32 %v128, %v166
  %v249 = vmul.f32 %v129, %v176
  %v250 = vmul.f32 %v130, %v186
  %v251 = vmul.f32 %v131, %v196
  %v252 = vmul.f32 %v132, %v206
  %v253 = vmul.f32 %v133, %v216
  %v254 = vmul.f32 %v134, %v226
  %v255 = vmul.f32 %v135, %v236
  %v256 = vmul.f32 %v136, %v246
  %v257 = vld [vmem:[%s3] sm:$0x1]
  %v259 = vperm.slane %v257, 0
  %v261 = vmul.f32 %v247, %v259
  %v262 = vmul.f32 %v248, %v259
  %v263 = vmul.f32 %v249, %v259
  %v264 = vmul.f32 %v250, %v259
  %v265 = vmul.f32 %v251, %v259
  %v266 = vmul.f32 %v252, %v259
  %v267 = vmul.f32 %v253, %v259
  %v268 = vmul.f32 %v254, %v259
  %v269 = vmul.f32 %v255, %v259
  %v270 = vmul.f32 %v256, %v259
  %v271 = vld [vmem:[%s4] sm:$0x1]
  %v273 = vperm.slane %v271, 0
  %v275 = vadd.f32 %v261, %v273
  %v276 = vadd.f32 %v262, %v273
  %v277 = vadd.f32 %v263, %v273
  %v278 = vadd.f32 %v264, %v273
  %v279 = vadd.f32 %v265, %v273
  %v280 = vadd.f32 %v266, %v273
  %v281 = vadd.f32 %v267, %v273
  %v282 = vadd.f32 %v268, %v273
  %v283 = vadd.f32 %v269, %v273
  %v284 = vadd.f32 %v270, %v273
  %v285 = vpack.c.bf16 %v276, %v275
  %v286 = vpack.c.bf16 %v278, %v277
  %v287 = vpack.c.bf16 %v280, %v279
  %v288 = vpack.c.bf16 %v282, %v281
  %v289 = vpack.c.bf16 %v284, %v283
  %v290 = vld [vmem:[%s1] sm:$0xff]
  %v291 = vld [vmem:[%s1 + $0x8] sm:$0xf]
  %v292 = vld [vmem:[%s1 + $0xc] sm:$0xff]
  %v293 = vld [vmem:[%s1 + $0x14] sm:$0xf]
  %v294 = vld [vmem:[%s1 + $0x18] sm:$0xff]
  %v295 = vld [vmem:[%s1 + $0x20] sm:$0xf]
  %v296 = vld [vmem:[%s1 + $0x24] sm:$0xff]
  %v297 = vld [vmem:[%s1 + $0x2c] sm:$0xf]
  %v298 = vld [vmem:[%s1 + $0x30] sm:$0xff]
  %v299 = vld [vmem:[%s1 + $0x38] sm:$0xf]
  %v300 = vld [vmem:[%s1 + $0x3c] sm:$0xff]
  %v301 = vld [vmem:[%s1 + $0x44] sm:$0xf]
  %v302 = vld [vmem:[%s1 + $0x48] sm:$0xff]
  %v303 = vld [vmem:[%s1 + $0x50] sm:$0xf]
  %v304 = vld [vmem:[%s1 + $0x54] sm:$0xff]
  %v305 = vld [vmem:[%s1 + $0x5c] sm:$0xf]
  %v306 = vld [vmem:[%s1 + $0x60] sm:$0xff]
  %v307 = vld [vmem:[%s1 + $0x68] sm:$0xf]
  %v308 = vld [vmem:[%s1 + $0x6c] sm:$0xff]
  %v309 = vld [vmem:[%s1 + $0x74] sm:$0xf]
  %v310 = vld [vmem:[%s1 + $0x78] sm:$0xff]
  %v311 = vld [vmem:[%s1 + $0x80] sm:$0xf]
  %v312 = vld [vmem:[%s1 + $0x84] sm:$0xff]
  %v313 = vld [vmem:[%s1 + $0x8c] sm:$0xf]
  %v314 = vld [vmem:[%s1 + $0x90] sm:$0xff]
  %v315 = vld [vmem:[%s1 + $0x98] sm:$0xf]
  %v316 = vld [vmem:[%s1 + $0x9c] sm:$0xff]
  %v317 = vld [vmem:[%s1 + $0xa4] sm:$0xf]
  %v318 = vld [vmem:[%s1 + $0xa8] sm:$0xff]
  %v319 = vld [vmem:[%s1 + $0xb0] sm:$0xf]
  %v320 = vld [vmem:[%s1 + $0xb4] sm:$0xff]
  %v321 = vld [vmem:[%s1 + $0xbc] sm:$0xf]
  %v322 = vld [vmem:[%s2] sm:$0x7]
  %v324 = vperm.slane %v322, 0
  %v325 = vperm.slane %v322, 1
  %v326 = vperm.slane %v322, 2
  %v362 = vunpack.c.l.b16 %v290
  %v363 = vunpack.c.h.b16 %v290
  %v364 = vunpack.c.l.b16 %v291
  %v365 = vunpack.c.l.b16 %v292
  %v366 = vunpack.c.h.b16 %v292
  %v367 = vunpack.c.l.b16 %v293
  %v368 = vunpack.c.l.b16 %v294
  %v369 = vunpack.c.h.b16 %v294
  %v370 = vunpack.c.l.b16 %v295
  %v371 = vunpack.c.l.b16 %v296
  %v372 = vunpack.c.h.b16 %v296
  %v373 = vunpack.c.l.b16 %v297
  %v374 = vunpack.c.l.b16 %v298
  %v375 = vunpack.c.h.b16 %v298
  %v376 = vunpack.c.l.b16 %v299
  %v377 = vunpack.c.l.b16 %v300
  %v378 = vunpack.c.h.b16 %v300
  %v379 = vunpack.c.l.b16 %v301
  %v380 = vunpack.c.l.b16 %v302
  %v381 = vunpack.c.h.b16 %v302
  %v382 = vunpack.c.l.b16 %v303
  %v383 = vunpack.c.l.b16 %v304
  %v384 = vunpack.c.h.b16 %v304
  %v385 = vunpack.c.l.b16 %v305
  %v386 = vunpack.c.l.b16 %v306
  %v387 = vunpack.c.h.b16 %v306
  %v388 = vunpack.c.l.b16 %v307
  %v389 = vunpack.c.l.b16 %v308
  %v390 = vunpack.c.h.b16 %v308
  %v391 = vunpack.c.l.b16 %v309
  %v392 = vunpack.c.l.b16 %v310
  %v393 = vunpack.c.h.b16 %v310
  %v394 = vunpack.c.l.b16 %v311
  %v395 = vunpack.c.l.b16 %v312
  %v396 = vunpack.c.h.b16 %v312
  %v397 = vunpack.c.l.b16 %v313
  %v398 = vunpack.c.l.b16 %v314
  %v399 = vunpack.c.h.b16 %v314
  %v400 = vunpack.c.l.b16 %v315
  %v401 = vunpack.c.l.b16 %v316
  %v402 = vunpack.c.h.b16 %v316
  %v403 = vunpack.c.l.b16 %v317
  %v404 = vunpack.c.l.b16 %v318
  %v405 = vunpack.c.h.b16 %v318
  %v406 = vunpack.c.l.b16 %v319
  %v407 = vunpack.c.l.b16 %v320
  %v408 = vunpack.c.h.b16 %v320
  %v409 = vunpack.c.l.b16 %v321
  %v410 = vpack.c.b16 %v365, %v362
  %v411 = vpack.c.b16 %v366, %v363
  %v412 = vpack.c.b16 %v367, %v364
  %v413 = vpack.c.b16 %v371, %v368
  %v414 = vpack.c.b16 %v372, %v369
  %v415 = vpack.c.b16 %v373, %v370
  %v416 = vpack.c.b16 %v377, %v374
  %v417 = vpack.c.b16 %v378, %v375
  %v418 = vpack.c.b16 %v379, %v376
  %v419 = vpack.c.b16 %v383, %v380
  %v420 = vpack.c.b16 %v384, %v381
  %v421 = vpack.c.b16 %v385, %v382
  %v422 = vpack.c.b16 %v389, %v386
  %v423 = vpack.c.b16 %v390, %v387
  %v424 = vpack.c.b16 %v391, %v388
  %v425 = vpack.c.b16 %v395, %v392
  %v426 = vpack.c.b16 %v396, %v393
  %v427 = vpack.c.b16 %v397, %v394
  %v428 = vpack.c.b16 %v401, %v398
  %v429 = vpack.c.b16 %v402, %v399
  %v430 = vpack.c.b16 %v403, %v400
  %v431 = vpack.c.b16 %v407, %v404
  %v432 = vpack.c.b16 %v408, %v405
  %v433 = vpack.c.b16 %v409, %v406
  %458 = vmatpush.bf16.msra.mxu0 %v431
  %459 = vmatpush.bf16.msra.mxu0 %v428
  %460 = vmatpush.bf16.msra.mxu0 %v425
  %461 = vmatpush.bf16.msra.mxu0 %v422
  %462 = vmatpush.bf16.msra.mxu0 %v419
  %463 = vmatpush.bf16.msra.mxu0 %v416
  %464 = vmatpush.bf16.msra.mxu0 %v413
  %465 = vmatpush.bf16.msra.mxu0 %v410
  %466 = vmatmul.bf16.gmra.mxu0 %v285
  %v467 = vpop.f32.mrf.mxu0
  %v468 = vadd.f32 %v324, %v467
  %v469 = vpop.f32.mrf.mxu0
  %v470 = vadd.f32 %v324, %v469
  %471 = vmatmul.bf16.gmra.mxu0 %v286
  %v472 = vpop.f32.mrf.mxu0
  %v473 = vadd.f32 %v324, %v472
  %v474 = vpop.f32.mrf.mxu0
  %v475 = vadd.f32 %v324, %v474
  %476 = vmatmul.bf16.gmra.mxu0 %v287
  %v477 = vpop.f32.mrf.mxu0
  %v478 = vadd.f32 %v324, %v477
  %v479 = vpop.f32.mrf.mxu0
  %v480 = vadd.f32 %v324, %v479
  %481 = vmatmul.bf16.gmra.mxu0 %v288
  %v482 = vpop.f32.mrf.mxu0
  %v483 = vadd.f32 %v324, %v482
  %v484 = vpop.f32.mrf.mxu0
  %v485 = vadd.f32 %v324, %v484
  %486 = vmatmul.bf16.gmra.mxu0 %v289
  %v487 = vpop.f32.mrf.mxu0
  %v488 = vadd.f32 %v324, %v487
  %v489 = vpop.f32.mrf.mxu0
  %v490 = vadd.f32 %v324, %v489
  %491 = vdwg.mxu0
  %492 = vmatpush.bf16.msra.mxu0 %v432
  %493 = vmatpush.bf16.msra.mxu0 %v429
  %494 = vmatpush.bf16.msra.mxu0 %v426
  %495 = vmatpush.bf16.msra.mxu0 %v423
  %496 = vmatpush.bf16.msra.mxu0 %v420
  %497 = vmatpush.bf16.msra.mxu0 %v417
  %498 = vmatpush.bf16.msra.mxu0 %v414
  %499 = vmatpush.bf16.msra.mxu0 %v411
  %500 = vmatmul.bf16.gmra.mxu0 %v285
  %v501 = vpop.f32.mrf.mxu0
  %v502 = vadd.f32 %v325, %v501
  %v503 = vpop.f32.mrf.mxu0
  %v504 = vadd.f32 %v325, %v503
  %505 = vmatmul.bf16.gmra.mxu0 %v286
  %v506 = vpop.f32.mrf.mxu0
  %v507 = vadd.f32 %v325, %v506
  %v508 = vpop.f32.mrf.mxu0
  %v509 = vadd.f32 %v325, %v508
  %510 = vmatmul.bf16.gmra.mxu0 %v287
  %v511 = vpop.f32.mrf.mxu0
  %v512 = vadd.f32 %v325, %v511
  %v513 = vpop.f32.mrf.mxu0
  %v514 = vadd.f32 %v325, %v513
  %515 = vmatmul.bf16.gmra.mxu0 %v288
  %v516 = vpop.f32.mrf.mxu0
  %v517 = vadd.f32 %v325, %v516
  %v518 = vpop.f32.mrf.mxu0
  %v519 = vadd.f32 %v325, %v518
  %520 = vmatmul.bf16.gmra.mxu0 %v289
  %v521 = vpop.f32.mrf.mxu0
  %v522 = vadd.f32 %v325, %v521
  %v523 = vpop.f32.mrf.mxu0
  %v524 = vadd.f32 %v325, %v523
  %525 = vdwg.mxu0
  %526 = vmatpush.bf16.msra.mxu0 %v433
  %527 = vmatpush.bf16.msra.mxu0 %v430
  %528 = vmatpush.bf16.msra.mxu0 %v427
  %529 = vmatpush.bf16.msra.mxu0 %v424
  %530 = vmatpush.bf16.msra.mxu0 %v421
  %531 = vmatpush.bf16.msra.mxu0 %v418
  %532 = vmatpush.bf16.msra.mxu0 %v415
  %533 = vmatpush.bf16.msra.mxu0 %v412
  %534 = vmatmul.bf16.gmra.mxu0 %v285
  %v535 = vpop.f32.mrf.mxu0
  %v536 = vadd.f32 %v326, %v535
  %v537 = vpop.f32.mrf.mxu0
  %v538 = vadd.f32 %v326, %v537
  %539 = vmatmul.bf16.gmra.mxu0 %v286
  %v540 = vpop.f32.mrf.mxu0
  %v541 = vadd.f32 %v326, %v540
  %v542 = vpop.f32.mrf.mxu0
  %v543 = vadd.f32 %v326, %v542
  %544 = vmatmul.bf16.gmra.mxu0 %v287
  %v545 = vpop.f32.mrf.mxu0
  %v546 = vadd.f32 %v326, %v545
  %v547 = vpop.f32.mrf.mxu0
  %v548 = vadd.f32 %v326, %v547
  %549 = vmatmul.bf16.gmra.mxu0 %v288
  %v550 = vpop.f32.mrf.mxu0
  %v551 = vadd.f32 %v326, %v550
  %v552 = vpop.f32.mrf.mxu0
  %v553 = vadd.f32 %v326, %v552
  %554 = vmatmul.bf16.gmra.mxu0 %v289
  %v555 = vpop.f32.mrf.mxu0
  %v556 = vadd.f32 %v326, %v555
  %v557 = vpop.f32.mrf.mxu0
  %v558 = vadd.f32 %v326, %v557
  %559 = vdwg.mxu0
  %v560 = vpack.c.bf16 %v502, %v468
  %v561 = vpack.c.bf16 %v536, %v536
  %v562 = vpack.c.bf16 %v504, %v470
  %v563 = vpack.c.bf16 %v538, %v538
  %v564 = vpack.c.bf16 %v507, %v473
  %v565 = vpack.c.bf16 %v541, %v541
  %v566 = vpack.c.bf16 %v509, %v475
  %v567 = vpack.c.bf16 %v543, %v543
  %v568 = vpack.c.bf16 %v512, %v478
  %v569 = vpack.c.bf16 %v546, %v546
  %v570 = vpack.c.bf16 %v514, %v480
  %v571 = vpack.c.bf16 %v548, %v548
  %v572 = vpack.c.bf16 %v517, %v483
  %v573 = vpack.c.bf16 %v551, %v551
  %v574 = vpack.c.bf16 %v519, %v485
  %v575 = vpack.c.bf16 %v553, %v553
  %v576 = vpack.c.bf16 %v522, %v488
  %v577 = vpack.c.bf16 %v556, %v556
  %v578 = vpack.c.bf16 %v524, %v490
  %v579 = vpack.c.bf16 %v558, %v558
  %580 = vst [vmem:[%s5] sm:$0xff] %v560
  %581 = vst [vmem:[%s5 + $0x8] sm:$0xf] %v561
  %582 = vst [vmem:[%s5 + $0xc] sm:$0xff] %v562
  %583 = vst [vmem:[%s5 + $0x14] sm:$0xf] %v563
  %584 = vst [vmem:[%s5 + $0x18] sm:$0xff] %v564
  %585 = vst [vmem:[%s5 + $0x20] sm:$0xf] %v565
  %586 = vst [vmem:[%s5 + $0x24] sm:$0xff] %v566
  %587 = vst [vmem:[%s5 + $0x2c] sm:$0xf] %v567
  %588 = vst [vmem:[%s5 + $0x30] sm:$0xff] %v568
  %589 = vst [vmem:[%s5 + $0x38] sm:$0xf] %v569
  %590 = vst [vmem:[%s5 + $0x3c] sm:$0xff] %v570
  %591 = vst [vmem:[%s5 + $0x44] sm:$0xf] %v571
  %592 = vst [vmem:[%s5 + $0x48] sm:$0xff] %v572
  %593 = vst [vmem:[%s5 + $0x50] sm:$0xf] %v573
  %594 = vst [vmem:[%s5 + $0x54] sm:$0xff] %v574
  %595 = vst [vmem:[%s5 + $0x5c] sm:$0xf] %v575
  %596 = vst [vmem:[%s5 + $0x60] sm:$0xff] %v576
  %597 = vst [vmem:[%s5 + $0x68] sm:$0xf] %v577
  %598 = vst [vmem:[%s5 + $0x6c] sm:$0xff] %v578
  %599 = vst [vmem:[%s5 + $0x74] sm:$0xf] %v579
  // Predicated region
  $region22: #{video_expert_forward.16} parent=0 // pred_check
    _
  $region23: #{video_expert_forward.16} parent=0 // pred_check_branch
    %601 = sbr.rel (0) target = $region25
  $region24: #{video_expert_forward.16} parent=0 // pred_region
    _
  $region25: #{video_expert_forward.16} parent=0 // pred_fallthru
    _
  // Predicated region
  $region26: #{video_expert_forward.16} parent=0 // pred_check
    _
  $region27: #{video_expert_forward.16} parent=0 // pred_check_branch
    %603 = sbr.rel (0) target = $region29
  $region28: #{video_expert_forward.16} parent=0 // pred_region
    _
  $region29: #{video_expert_forward.16} parent=0 // pred_fallthru
    _

// kernel: video_expert_forward.17
$region0: #{video_expert_forward.17}
  #allocation0 [shape = 'u32[]', space=smem, size = 0x4, offset = 0x4, fixed_abs, tag = 'smem constant byte address 0x4 - core index']
  #allocation1 [shape = 'u32[72,128]{1,0:T(1,128)}', space=vmem, size = 0x9000, scoped, tag = 'internal scratch']
  %s0 = inlined_call_operand.vmem [shape: bf16[16,5,384], index: 0, kind: input, shape index: {}, may-alias: {0,1,2}]
  %s1 = inlined_call_operand.vmem [shape: bf16[16,5,384], index: 1, kind: input, shape index: {}, may-alias: {0,1,2}]
  %s2 = inlined_call_operand.vmem [shape: bf16[16,5,384], index: 2, kind: input, shape index: {}, may-alias: {0,1,2}]
  %s3 = inlined_call_operand.vmem [shape: bf16[16,5,128], index: 3, kind: output, shape index: {}]
  %s4 = sld [smem:[#allocation0]]
  $region45: #{video_expert_forward.17} parent=0
    _
  %s6 = ssub.s32 1, %s4
  %s7 = scalar_select 0, %s6, %s4
  loop: start=0, step=1, limit=18
  $region2: #{video_expert_forward.17} parent=0 // loop_pre_header
    _
  $region3: #{video_expert_forward.17} parent=0 // loop_header
    %s9 = sphi 0, %s13
    %p10 = scmp.ge.s32.totalorder %s9, 18
    %s19 = sphi 0, %s21
    %s22 = sphi 0, %s19
    %s23 = sphi 0, %s22
    %s39 = sphi 0, %s23
    %s45 = sphi 0, %s47
    %s48 = sphi 0, %s45
    %s49 = sphi 0, %s48
    %s65 = sphi 0, %s49
    %s71 = sphi 0, %s73
    %s74 = sphi 0, %s71
    %s75 = sphi 0, %s74
    %s91 = sphi 0, %s75
    %s97 = sphi 0, %s99
    %s100 = sphi 0, %s97
    %s101 = sphi 0, %s100
    %s117 = sphi 0, %s101
  $region4: #{video_expert_forward.17} parent=0 // loop_header_branch
    %12 = sbr.rel (%p10) target = $region8
  $region5: #{video_expert_forward.17} parent=0 // loop_body
    %s14 = ssub.s32 %s9, 1
    %s15 = ssub.s32 %s9, 2
    %s16 = sadd.s32 %s9, 1
    %s17 = ssub.s32 %s9, %s16
    %p18 = scmp.eq.s32.totalorder %s17, 0
    %s20 = sadd.s32 %s19, 1
    %s21 = scalar_select %p18, %s19, %s20
    %p24 = pneg %p18
    %p25 = scmp.eq.s32.totalorder %s9, 15
    %p26 = por %p24, %p25
    %p27 = scmp.ne.s32.totalorder %s19, %s22
    %p28 = scmp.eq.s32.totalorder %s9, 0
    %p29 = por %p27, %p28
    %p30 = scmp.ne.s32.totalorder %s19, %s22
    %p31 = scmp.eq.s32.totalorder %s14, 15
    %p32 = por %p30, %p31
    %p33 = scmp.ne.s32.totalorder %s22, %s23
    %p34 = scmp.eq.s32.totalorder %s14, 0
    %p35 = por %p33, %p34
    %p36 = scmp.ne.s32.totalorder %s22, %s23
    %p37 = scmp.eq.s32.totalorder %s15, 15
    %p38 = por %p36, %p37
    %p40 = scmp.ne.s32.totalorder %s23, %s39
    %p41 = scmp.eq.s32.totalorder %s15, 0
    %p42 = por %p40, %p41
    %s43 = ssub.s32 %s9, %s16
    %p44 = scmp.eq.s32.totalorder %s43, 0
    %s46 = sadd.s32 %s45, 1
    %s47 = scalar_select %p44, %s45, %s46
    %p50 = pneg %p44
    %p51 = scmp.eq.s32.totalorder %s9, 15
    %p52 = por %p50, %p51
    %p53 = scmp.ne.s32.totalorder %s45, %s48
    %p54 = scmp.eq.s32.totalorder %s9, 0
    %p55 = por %p53, %p54
    %p56 = scmp.ne.s32.totalorder %s45, %s48
    %p57 = scmp.eq.s32.totalorder %s14, 15
    %p58 = por %p56, %p57
    %p59 = scmp.ne.s32.totalorder %s48, %s49
    %p60 = scmp.eq.s32.totalorder %s14, 0
    %p61 = por %p59, %p60
    %p62 = scmp.ne.s32.totalorder %s48, %s49
    %p63 = scmp.eq.s32.totalorder %s15, 15
    %p64 = por %p62, %p63
    %p66 = scmp.ne.s32.totalorder %s49, %s65
    %p67 = scmp.eq.s32.totalorder %s15, 0
    %p68 = por %p66, %p67
    %s69 = ssub.s32 %s9, %s16
    %p70 = scmp.eq.s32.totalorder %s69, 0
    %s72 = sadd.s32 %s71, 1
    %s73 = scalar_select %p70, %s71, %s72
    %p76 = pneg %p70
    %p77 = scmp.eq.s32.totalorder %s9, 15
    %p78 = por %p76, %p77
    %p79 = scmp.ne.s32.totalorder %s71, %s74
    %p80 = scmp.eq.s32.totalorder %s9, 0
    %p81 = por %p79, %p80
    %p82 = scmp.ne.s32.totalorder %s71, %s74
    %p83 = scmp.eq.s32.totalorder %s14, 15
    %p84 = por %p82, %p83
    %p85 = scmp.ne.s32.totalorder %s74, %s75
    %p86 = scmp.eq.s32.totalorder %s14, 0
    %p87 = por %p85, %p86
    %p88 = scmp.ne.s32.totalorder %s74, %s75
    %p89 = scmp.eq.s32.totalorder %s15, 15
    %p90 = por %p88, %p89
    %p92 = scmp.ne.s32.totalorder %s75, %s91
    %p93 = scmp.eq.s32.totalorder %s15, 0
    %p94 = por %p92, %p93
    %s95 = ssub.s32 %s9, %s16
    %p96 = scmp.eq.s32.totalorder %s95, 0
    %s98 = sadd.s32 %s97, 1
    %s99 = scalar_select %p96, %s97, %s98
    %p102 = pneg %p96
    %p103 = scmp.eq.s32.totalorder %s9, 15
    %p104 = por %p102, %p103
    %p105 = scmp.ne.s32.totalorder %s97, %s100
    %p106 = scmp.eq.s32.totalorder %s9, 0
    %p107 = por %p105, %p106
    %p108 = scmp.ne.s32.totalorder %s97, %s100
    %p109 = scmp.eq.s32.totalorder %s14, 15
    %p110 = por %p108, %p109
    %p111 = scmp.ne.s32.totalorder %s100, %s101
    %p112 = scmp.eq.s32.totalorder %s14, 0
    %p113 = por %p111, %p112
    %p114 = scmp.ne.s32.totalorder %s100, %s101
    %p115 = scmp.eq.s32.totalorder %s15, 15
    %p116 = por %p114, %p115
    %p118 = scmp.ne.s32.totalorder %s101, %s117
    %p119 = scmp.eq.s32.totalorder %s15, 0
    %p120 = por %p118, %p119
    %p121 = scmp.le.s32.totalorder 1, %s9
    %p122 = scmp.lt.s32.totalorder %s9, 17
    %p123 = pnand %p121, %p122
    %p124 = pneg %p123
    // Predicated region
    $region9: #{video_expert_forward.17} parent=5 // pred_check
      _
    $region10: #{video_expert_forward.17} parent=5 // pred_check_branch
      %126 = sbr.rel (%p123) target = $region12
    $region11: #{video_expert_forward.17} parent=5 // pred_region
      %s127 = ssub.s32 %s9, 1
    $region12: #{video_expert_forward.17} parent=5 // pred_fallthru
      _
    %p128 = scmp.lt.s32.totalorder %s9, 16
    // Predicated region
    $region13: #{video_expert_forward.17} parent=5 // pred_check
      %p129 = pneg %p128
    $region14: #{video_expert_forward.17} parent=5 // pred_check_branch
      %131 = sbr.rel (%p129) target = $region16
    $region15: #{video_expert_forward.17} parent=5 // pred_region
      // Predicated region
      $region17: #{video_expert_forward.17} parent=15 // pred_check
        %p132 = pneg %p29
      $region18: #{video_expert_forward.17} parent=15 // pred_check_branch
        %134 = sbr.rel (%p132) target = $region20
      $region19: #{video_expert_forward.17} parent=15 // pred_region
        %p135 = scmp.lt.s32.totalorder %s9, 15
        %s136 = scalar_select %p135, %s9, 15
        %s137 = smul.addr %s136, 3
        %s138 = smul.addr %s137, 4
        %s139 = scalar_lea.vmem %s0, %s138
      $region20: #{video_expert_forward.17} parent=15 // pred_fallthru
        _
      // Predicated region
      $region21: #{video_expert_forward.17} parent=15 // pred_check
        %p140 = pneg %p55
      $region22: #{video_expert_forward.17} parent=15 // pred_check_branch
        %142 = sbr.rel (%p140) target = $region24
      $region23: #{video_expert_forward.17} parent=15 // pred_region
        %p143 = scmp.lt.s32.totalorder %s9, 15
        %s144 = scalar_select %p143, %s9, 15
        %s145 = smul.addr %s144, 3
        %s146 = sadd.s32 1, %s145
        %s147 = smul.addr %s146, 4
        %s148 = scalar_lea.vmem %s1, %s147
      $region24: #{video_expert_forward.17} parent=15 // pred_fallthru
        _
      // Predicated region
      $region25: #{video_expert_forward.17} parent=15 // pred_check
        %p149 = pneg %p81
      $region26: #{video_expert_forward.17} parent=15 // pred_check_branch
        %151 = sbr.rel (%p149) target = $region28
      $region27: #{video_expert_forward.17} parent=15 // pred_region
        %p152 = scmp.lt.s32.totalorder %s9, 15
        %s153 = scalar_select %p152, %s9, 15
        %s154 = smul.addr %s153, 3
        %s155 = sadd.s32 2, %s154
        %s156 = smul.addr %s155, 4
        %s157 = scalar_lea.vmem %s2, %s156
      $region28: #{video_expert_forward.17} parent=15 // pred_fallthru
        _
    $region16: #{video_expert_forward.17} parent=5 // pred_fallthru
      _
    %p158 = scmp.le.s32.totalorder 1, %s9
    %p159 = scmp.lt.s32.totalorder %s9, 17
    %p160 = pnand %p158, %p159
    %p161 = pneg %p160
    // Predicated region
    $region29: #{video_expert_forward.17} parent=5 // pred_check
      _
    $region30: #{video_expert_forward.17} parent=5 // pred_check_branch
      %163 = sbr.rel (%p160) target = $region32
    $region31: #{video_expert_forward.17} parent=5 // pred_region
      %s164 = ssub.s32 %s9, 1
      %p165 = scmp.lt.s32.totalorder %s14, 15
      %s166 = scalar_select %p165, %s14, 15
      %s167 = smul.addr %s166, 3
      %s168 = smul.addr %s167, 4
      %s169 = scalar_lea.vmem %s0, %s168
      %p170 = pneg %p35
      %p171 = pneg %p32
      %p172 = scmp.lt.s32.totalorder %s14, 15
      %s173 = scalar_select %p172, %s14, 15
      %s174 = smul.addr %s173, 3
      %s175 = sadd.s32 1, %s174
      %s176 = smul.addr %s175, 4
      %s177 = scalar_lea.vmem %s1, %s176
      %p178 = pneg %p61
      %p179 = pneg %p58
      %p180 = scmp.lt.s32.totalorder %s14, 15
      %s181 = scalar_select %p180, %s14, 15
      %s182 = smul.addr %s181, 3
      %s183 = sadd.s32 2, %s182
      %s184 = smul.addr %s183, 4
      %s185 = scalar_lea.vmem %s2, %s184
      %p186 = pneg %p87
      %p187 = pneg %p84
      %p188 = pneg %p113
      %p189 = pneg %p110
      %p190 = scmp.lt.s32.totalorder %s14, 15
      %s191 = scalar_select %p190, %s14, 15
      %s192 = smul.addr %s191, 4
      %s193 = scalar_lea.vmem %s3, %s192
      %p194 = scmp.lt.s32.totalorder %s14, 15
      %s195 = scalar_select %p194, %s14, 15
      %s196 = smul.addr %s195, 3
      %s197 = smul.addr %s196, 4
      %s198 = scalar_lea.vmem %s0, %s197
      %p199 = scmp.lt.s32.totalorder %s14, 15
      %s200 = scalar_select %p199, %s14, 15
      %s201 = smul.addr %s200, 3
      %s202 = sadd.s32 1, %s201
      %s203 = smul.addr %s202, 4
      %s204 = scalar_lea.vmem %s1, %s203
      %p205 = scmp.lt.s32.totalorder %s14, 15
      %s206 = scalar_select %p205, %s14, 15
      %s207 = smul.addr %s206, 3
      %s208 = sadd.s32 2, %s207
      %s209 = smul.addr %s208, 4
      %s210 = scalar_lea.vmem %s2, %s209
      %p211 = scmp.lt.s32.totalorder %s14, 15
      %s212 = scalar_select %p211, %s14, 15
      %s213 = smul.addr %s212, 4
      %s214 = scalar_lea.vmem %s3, %s213
      %v216 = vld [vmem:[%s198] sm:$0x7]
      %v217 = vld [vmem:[%s204] sm:$0x7]
      %v218 = vld [vmem:[%s210] sm:$0x7]
      %vm219 = vcmask 261120
      %v221 = vsel %vm219, %v216, 0
      %v224 = vsel %vm219, %v217, 0
      %226 = vmatpush.bf16.xpose.msra.mxu0 0
      %227 = vmatpush.bf16.xpose.msra.mxu0 0
      %228 = vmatpush.bf16.xpose.msra.mxu0 0
      %229 = vmatpush.bf16.xpose.msra.mxu0 0
      %230 = vmatpush.bf16.xpose.msra.mxu0 0
      %231 = vmatpush.bf16.xpose.msra.mxu0 0
      %232 = vmatpush.bf16.xpose.msra.mxu0 0
      %233 = vmatpush.bf16.xpose.msra.mxu0 %v224
      %234 = vmatmul.bf16.gmra.mxu0 %v221
      %v235 = vpop.f32.mrf.mxu0
      %v236 = vadd.f32 0.0, %v235
      %v237 = vpop.f32.mrf.mxu0
      %238 = vdwg.mxu0
      %v239 = vmul.f32 %v236, 0.17677669
      %vm240 = vcmask 36864
      %v241 = vsel %vm240, %v239, -inf
      %242 = vmax.xlane.f32.xlu0 %v241
      %v243 = vpop.xlane.xlu0 %242
      %v244 = vsub.f32 %v239, %v243
      %v245 = vmul.f32 %v244, 1.442695
      %v246 = vpow.pop %v245
      %v247 = vsel %vm240, %v246, 0.0
      %248 = vadd.xlane.f32.xlu0 %v247
      %v249 = vpop.xlane.xlu0 %248
      %v250 = vrcp.pop %v249
      %v251 = vmul.f32 %v246, %v250
      %v252 = vpack.c.bf16 %v251, %v251
      %vm253 = vcmask 39936
      %v255 = vsel %vm253, %v252, 0
      %vm257 = vcmask 1041408
      %vm258 = vcmask 1042432
      %v259 = vsel %vm257, 4294967295, 65535
      %v260 = vsel %vm258, %v259, 0
      %v262 = vand.u32 %v218, %v260
      %264 = vmatpush.bf16.msra.mxu0 0
      %265 = vmatpush.bf16.msra.mxu0 0
      %266 = vmatpush.bf16.msra.mxu0 0
      %267 = vmatpush.bf16.msra.mxu0 0
      %268 = vmatpush.bf16.msra.mxu0 0
      %269 = vmatpush.bf16.msra.mxu0 0
      %270 = vmatpush.bf16.msra.mxu0 0
      %271 = vmatpush.bf16.msra.mxu0 %v262
      %272 = vmatmul.bf16.gmra.mxu0 %v255
      %v273 = vpop.f32.mrf.mxu0
      %v274 = vadd.f32 0.0, %v273
      %v275 = vpop.f32.mrf.mxu0
      %276 = vdwg.mxu0
      %v278 = vunpack.c.l.b16 %v216
      %v279 = vpack.c.b16 %v278, %v278
      %280 = vrot.lane.b32.xlu0 %v279, 96
      %v281 = vpop.permute.xlu0 %280
      %v283 = vunpack.c.l.b16 %v217
      %v284 = vpack.c.b16 %v283, %v283
      %285 = vrot.lane.b32.xlu0 %v284, 96
      %v286 = vpop.permute.xlu0 %285
      %v288 = vsel %vm219, %v281, 0
      %v291 = vsel %vm219, %v286, 0
      %293 = vmatpush.bf16.xpose.msra.mxu0 0
      %294 = vmatpush.bf16.xpose.msra.mxu0 0
      %295 = vmatpush.bf16.xpose.msra.mxu0 0
      %296 = vmatpush.bf16.xpose.msra.mxu0 0
      %297 = vmatpush.bf16.xpose.msra.mxu0 0
      %298 = vmatpush.bf16.xpose.msra.mxu0 0
      %299 = vmatpush.bf16.xpose.msra.mxu0 0
      %300 = vmatpush.bf16.xpose.msra.mxu0 %v291
      %301 = vmatmul.bf16.gmra.mxu0 %v288
      %v302 = vpop.f32.mrf.mxu0
      %v303 = vadd.f32 0.0, %v302
      %v304 = vpop.f32.mrf.mxu0
      %305 = vdwg.mxu0
      %v306 = vmul.f32 %v303, 0.17677669
      %v307 = vsel %vm240, %v306, -inf
      %308 = vmax.xlane.f32.xlu0 %v307
      %v309 = vpop.xlane.xlu0 %308
      %v310 = vsub.f32 %v306, %v309
      %v311 = vmul.f32 %v310, 1.442695
      %v312 = vpow.pop %v311
      %v313 = vsel %vm240, %v312, 0.0
      %314 = vadd.xlane.f32.xlu0 %v313
      %v315 = vpop.xlane.xlu0 %314
      %v316 = vrcp.pop %v315
      %v317 = vmul.f32 %v312, %v316
      %v318 = vpack.c.bf16 %v317, %v317
      %v320 = vunpack.c.l.b16 %v218
      %v321 = vpack.c.b16 %v320, %v320
      %322 = vrot.lane.b32.xlu0 %v321, 96
      %v323 = vpop.permute.xlu0 %322
      %v325 = vsel %vm253, %v318, 0
      %v328 = vand.u32 %v323, %v260
      %330 = vmatpush.bf16.msra.mxu0 0
      %331 = vmatpush.bf16.msra.mxu0 0
      %332 = vmatpush.bf16.msra.mxu0 0
      %333 = vmatpush.bf16.msra.mxu0 0
      %334 = vmatpush.bf16.msra.mxu0 0
      %335 = vmatpush.bf16.msra.mxu0 0
      %336 = vmatpush.bf16.msra.mxu0 0
      %337 = vmatpush.bf16.msra.mxu0 %v328
      %338 = vmatmul.bf16.gmra.mxu0 %v325
      %v339 = vpop.f32.mrf.mxu0
      %v340 = vadd.f32 0.0, %v339
      %v341 = vpop.f32.mrf.mxu0
      %342 = vdwg.mxu0
      %343 = vrot.lane.b32.xlu0 %v279, 64
      %v344 = vpop.permute.xlu0 %343
      %345 = vrot.lane.b32.xlu0 %v284, 64
      %v346 = vpop.permute.xlu0 %345
      %v348 = vsel %vm219, %v344, 0
      %v351 = vsel %vm219, %v346, 0
      %353 = vmatpush.bf16.xpose.msra.mxu0 0
      %354 = vmatpush.bf16.xpose.msra.mxu0 0
      %355 = vmatpush.bf16.xpose.msra.mxu0 0
      %356 = vmatpush.bf16.xpose.msra.mxu0 0
      %357 = vmatpush.bf16.xpose.msra.mxu0 0
      %358 = vmatpush.bf16.xpose.msra.mxu0 0
      %359 = vmatpush.bf16.xpose.msra.mxu0 0
      %360 = vmatpush.bf16.xpose.msra.mxu0 %v351
      %361 = vmatmul.bf16.gmra.mxu0 %v348
      %v362 = vpop.f32.mrf.mxu0
      %v363 = vadd.f32 0.0, %v362
      %v364 = vpop.f32.mrf.mxu0
      %365 = vdwg.mxu0
      %v366 = vmul.f32 %v363, 0.17677669
      %v367 = vsel %vm240, %v366, -inf
      %368 = vmax.xlane.f32.xlu0 %v367
      %v369 = vpop.xlane.xlu0 %368
      %v370 = vsub.f32 %v366, %v369
      %v371 = vmul.f32 %v370, 1.442695
      %v372 = vpow.pop %v371
      %v373 = vsel %vm240, %v372, 0.0
      %374 = vadd.xlane.f32.xlu0 %v373
      %v375 = vpop.xlane.xlu0 %374
      %v376 = vrcp.pop %v375
      %v377 = vmul.f32 %v372, %v376
      %v378 = vpack.c.bf16 %v377, %v377
      %379 = vrot.lane.b32.xlu0 %v321, 64
      %v380 = vpop.permute.xlu0 %379
      %v382 = vsel %vm253, %v378, 0
      %v385 = vand.u32 %v380, %v260
      %387 = vmatpush.bf16.msra.mxu0 0
      %388 = vmatpush.bf16.msra.mxu0 0
      %389 = vmatpush.bf16.msra.mxu0 0
      %390 = vmatpush.bf16.msra.mxu0 0
      %391 = vmatpush.bf16.msra.mxu0 0
      %392 = vmatpush.bf16.msra.mxu0 0
      %393 = vmatpush.bf16.msra.mxu0 0
      %394 = vmatpush.bf16.msra.mxu0 %v385
      %395 = vmatmul.bf16.gmra.mxu0 %v382
      %v396 = vpop.f32.mrf.mxu0
      %v397 = vadd.f32 0.0, %v396
      %v398 = vpop.f32.mrf.mxu0
      %399 = vdwg.mxu0
      %400 = vrot.lane.b32.xlu0 %v279, 32
      %v401 = vpop.permute.xlu0 %400
      %402 = vrot.lane.b32.xlu0 %v284, 32
      %v403 = vpop.permute.xlu0 %402
      %v405 = vsel %vm219, %v401, 0
      %v408 = vsel %vm219, %v403, 0
      %410 = vmatpush.bf16.xpose.msra.mxu0 0
      %411 = vmatpush.bf16.xpose.msra.mxu0 0
      %412 = vmatpush.bf16.xpose.msra.mxu0 0
      %413 = vmatpush.bf16.xpose.msra.mxu0 0
      %414 = vmatpush.bf16.xpose.msra.mxu0 0
      %415 = vmatpush.bf16.xpose.msra.mxu0 0
      %416 = vmatpush.bf16.xpose.msra.mxu0 0
      %417 = vmatpush.bf16.xpose.msra.mxu0 %v408
      %418 = vmatmul.bf16.gmra.mxu0 %v405
      %v419 = vpop.f32.mrf.mxu0
      %v420 = vadd.f32 0.0, %v419
      %v421 = vpop.f32.mrf.mxu0
      %422 = vdwg.mxu0
      %v423 = vmul.f32 %v420, 0.17677669
      %v424 = vsel %vm240, %v423, -inf
      %425 = vmax.xlane.f32.xlu0 %v424
      %v426 = vpop.xlane.xlu0 %425
      %v427 = vsub.f32 %v423, %v426
      %v428 = vmul.f32 %v427, 1.442695
      %v429 = vpow.pop %v428
      %v430 = vsel %vm240, %v429, 0.0
      %431 = vadd.xlane.f32.xlu0 %v430
      %v432 = vpop.xlane.xlu0 %431
      %v433 = vrcp.pop %v432
      %v434 = vmul.f32 %v429, %v433
      %v435 = vpack.c.bf16 %v434, %v434
      %436 = vrot.lane.b32.xlu0 %v321, 32
      %v437 = vpop.permute.xlu0 %436
      %v439 = vsel %vm253, %v435, 0
      %v442 = vand.u32 %v437, %v260
      %444 = vmatpush.bf16.msra.mxu0 0
      %445 = vmatpush.bf16.msra.mxu0 0
      %446 = vmatpush.bf16.msra.mxu0 0
      %447 = vmatpush.bf16.msra.mxu0 0
      %448 = vmatpush.bf16.msra.mxu0 0
      %449 = vmatpush.bf16.msra.mxu0 0
      %450 = vmatpush.bf16.msra.mxu0 0
      %451 = vmatpush.bf16.msra.mxu0 %v442
      %452 = vmatmul.bf16.gmra.mxu0 %v439
      %v453 = vpop.f32.mrf.mxu0
      %v454 = vadd.f32 0.0, %v453
      %v455 = vpop.f32.mrf.mxu0
      %456 = vdwg.mxu0
      %458 = vrot.lane.b32.xlu0 %v340, 32
      %v459 = vpop.permute.xlu0 %458
      %462 = vrot.lane.b32.xlu0 %v397, 64
      %v463 = vpop.permute.xlu0 %462
      %466 = vrot.lane.b32.xlu0 %v454, 96
      %v467 = vpop.permute.xlu0 %466
      %v469 = vsel %vm219, %v274, %v459
      %vm470 = vcmask 523264
      %v471 = vsel %vm470, %v469, %v463
      %vm472 = vcmask 785408
      %v473 = vsel %vm472, %v471, %v467
      %v474 = vpack.c.bf16 %v473, %v473
      %vm475 = vcmask 1042432
      %vm476 = vsmask.f32 2304
      %vm477 = vmand %vm475, %vm476
      %v478 = vld [vmem:[%s214] sm:$0x7]
      %v479 = vsel %vm477, %v474, %v478
      %480 = vst [vmem:[%s214] sm:$0x7] %v479
      %p481 = scmp.lt.s32.totalorder %s14, 15
      %s482 = scalar_select %p481, %s14, 15
      %s483 = smul.addr %s482, 4
      %s484 = scalar_lea.vmem %s3, %s483
      // Predicated region
      $region33: #{video_expert_forward.17} parent=31 // pred_check
        %p485 = pneg %p110
      $region34: #{video_expert_forward.17} parent=31 // pred_check_branch
        %487 = sbr.rel (%p485) target = $region36
      $region35: #{video_expert_forward.17} parent=31 // pred_region
        _
      $region36: #{video_expert_forward.17} parent=31 // pred_fallthru
        _
    $region32: #{video_expert_forward.17} parent=5 // pred_fallthru
      _
    %p488 = scmp.le.s32.totalorder 2, %s9
    // Predicated region
    $region37: #{video_expert_forward.17} parent=5 // pred_check
      %p489 = pneg %p488
    $region38: #{video_expert_forward.17} parent=5 // pred_check_branch
      %491 = sbr.rel (%p489) target = $region40
    $region39: #{video_expert_forward.17} parent=5 // pred_region
      %s492 = ssub.s32 %s9, 2
      // Predicated region
      $region41: #{video_expert_forward.17} parent=39 // pred_check
        %p493 = pneg %p116
      $region42: #{video_expert_forward.17} parent=39 // pred_check_branch
        %495 = sbr.rel (%p493) target = $region44
      $region43: #{video_expert_forward.17} parent=39 // pred_region
        %p496 = scmp.lt.s32.totalorder %s15, 15
        %s497 = scalar_select %p496, %s15, 15
        %s498 = smul.addr %s497, 4
        %s499 = scalar_lea.vmem %s3, %s498
      $region44: #{video_expert_forward.17} parent=39 // pred_fallthru
        _
    $region40: #{video_expert_forward.17} parent=5 // pred_fallthru
      _
  $region6: #{video_expert_forward.17} parent=0 // loop_footer
    %s13 = sadd.s32 1, %s9
  $region7: #{video_expert_forward.17} parent=0 // loop_footer_branch
    %8 = sbr.rel target = $region3
  $region8: #{video_expert_forward.17} parent=0 // loop_exit
    _

// kernel: video_expert_forward.18
$region0: #{video_expert_forward.18}
  #allocation0 [shape = 'u32[]', space=smem, size = 0x4, offset = 0x4, fixed_abs, tag = 'smem constant byte address 0x4 - core index']
  #allocation1 [shape = 'u32[72,128]{1,0:T(1,128)}', space=vmem, size = 0x9000, scoped, tag = 'internal scratch']
  %s0 = inlined_call_operand.vmem [shape: bf16[80,128], index: 0, kind: input, shape index: {}]
  %s1 = inlined_call_operand.vmem [shape: bf16[128,128], index: 1, kind: input, shape index: {}]
  %s2 = inlined_call_operand.vmem [shape: f32[1,128], index: 2, kind: input, shape index: {}]
  %s3 = inlined_call_operand.vmem [shape: f32[80,128], index: 3, kind: input, shape index: {}]
  %s4 = inlined_call_operand.vmem [shape: f32[80,128], index: 4, kind: output, shape index: {}]
  %s5 = sld [smem:[#allocation0]]
  $region26: #{video_expert_forward.18} parent=0
    _
  %s7 = ssub.s32 1, %s5
  %s8 = scalar_select 0, %s7, %s5
  // Predicated region
  $region2: #{video_expert_forward.18} parent=0 // pred_check
    _
  $region3: #{video_expert_forward.18} parent=0 // pred_check_branch
    %10 = sbr.rel (0) target = $region5
  $region4: #{video_expert_forward.18} parent=0 // pred_region
    _
  $region5: #{video_expert_forward.18} parent=0 // pred_fallthru
    _
  // Predicated region
  $region6: #{video_expert_forward.18} parent=0 // pred_check
    _
  $region7: #{video_expert_forward.18} parent=0 // pred_check_branch
    %12 = sbr.rel (0) target = $region9
  $region8: #{video_expert_forward.18} parent=0 // pred_region
    _
  $region9: #{video_expert_forward.18} parent=0 // pred_fallthru
    _
  // Predicated region
  $region10: #{video_expert_forward.18} parent=0 // pred_check
    _
  $region11: #{video_expert_forward.18} parent=0 // pred_check_branch
    %14 = sbr.rel (0) target = $region13
  $region12: #{video_expert_forward.18} parent=0 // pred_region
    _
  $region13: #{video_expert_forward.18} parent=0 // pred_fallthru
    _
  // Predicated region
  $region14: #{video_expert_forward.18} parent=0 // pred_check
    _
  $region15: #{video_expert_forward.18} parent=0 // pred_check_branch
    %16 = sbr.rel (0) target = $region17
  $region16: #{video_expert_forward.18} parent=0 // pred_region
    _
  $region17: #{video_expert_forward.18} parent=0 // pred_fallthru
    _
  %v17 = vld [vmem:[%s0] sm:$0xf]
  %v18 = vld [vmem:[%s0 + $0x4] sm:$0xf]
  %v19 = vld [vmem:[%s0 + $0x8] sm:$0xf]
  %v20 = vld [vmem:[%s0 + $0xc] sm:$0xf]
  %v21 = vld [vmem:[%s0 + $0x10] sm:$0xf]
  %v22 = vld [vmem:[%s0 + $0x14] sm:$0xf]
  %v23 = vld [vmem:[%s0 + $0x18] sm:$0xf]
  %v24 = vld [vmem:[%s0 + $0x1c] sm:$0xf]
  %v25 = vld [vmem:[%s0 + $0x20] sm:$0xf]
  %v26 = vld [vmem:[%s0 + $0x24] sm:$0xf]
  %v27 = vld [vmem:[%s1] sm:$0xf]
  %v28 = vld [vmem:[%s1 + $0x4] sm:$0xf]
  %v29 = vld [vmem:[%s1 + $0x8] sm:$0xf]
  %v30 = vld [vmem:[%s1 + $0xc] sm:$0xf]
  %v31 = vld [vmem:[%s1 + $0x10] sm:$0xf]
  %v32 = vld [vmem:[%s1 + $0x14] sm:$0xf]
  %v33 = vld [vmem:[%s1 + $0x18] sm:$0xf]
  %v34 = vld [vmem:[%s1 + $0x1c] sm:$0xf]
  %v35 = vld [vmem:[%s1 + $0x20] sm:$0xf]
  %v36 = vld [vmem:[%s1 + $0x24] sm:$0xf]
  %v37 = vld [vmem:[%s1 + $0x28] sm:$0xf]
  %v38 = vld [vmem:[%s1 + $0x2c] sm:$0xf]
  %v39 = vld [vmem:[%s1 + $0x30] sm:$0xf]
  %v40 = vld [vmem:[%s1 + $0x34] sm:$0xf]
  %v41 = vld [vmem:[%s1 + $0x38] sm:$0xf]
  %v42 = vld [vmem:[%s1 + $0x3c] sm:$0xf]
  %v43 = vld [vmem:[%s2] sm:$0x1]
  %v45 = vperm.slane %v43, 0
  %v57 = vunpack.c.l.b16 %v17
  %v58 = vunpack.c.l.b16 %v18
  %v59 = vunpack.c.l.b16 %v19
  %v60 = vunpack.c.l.b16 %v20
  %v61 = vunpack.c.l.b16 %v21
  %v62 = vunpack.c.l.b16 %v22
  %v63 = vunpack.c.l.b16 %v23
  %v64 = vunpack.c.l.b16 %v24
  %v65 = vunpack.c.l.b16 %v25
  %v66 = vunpack.c.l.b16 %v26
  %v67 = vpack.c.b16 %v58, %v57
  %v68 = vpack.c.b16 %v60, %v59
  %v69 = vpack.c.b16 %v62, %v61
  %v70 = vpack.c.b16 %v64, %v63
  %v71 = vpack.c.b16 %v66, %v65
  %v93 = vunpack.c.l.b16 %v27
  %v94 = vunpack.c.l.b16 %v28
  %v95 = vunpack.c.l.b16 %v29
  %v96 = vunpack.c.l.b16 %v30
  %v97 = vunpack.c.l.b16 %v31
  %v98 = vunpack.c.l.b16 %v32
  %v99 = vunpack.c.l.b16 %v33
  %v100 = vunpack.c.l.b16 %v34
  %v101 = vunpack.c.l.b16 %v35
  %v102 = vunpack.c.l.b16 %v36
  %v103 = vunpack.c.l.b16 %v37
  %v104 = vunpack.c.l.b16 %v38
  %v105 = vunpack.c.l.b16 %v39
  %v106 = vunpack.c.l.b16 %v40
  %v107 = vunpack.c.l.b16 %v41
  %v108 = vunpack.c.l.b16 %v42
  %v109 = vpack.c.b16 %v94, %v93
  %v110 = vpack.c.b16 %v96, %v95
  %v111 = vpack.c.b16 %v98, %v97
  %v112 = vpack.c.b16 %v100, %v99
  %v113 = vpack.c.b16 %v102, %v101
  %v114 = vpack.c.b16 %v104, %v103
  %v115 = vpack.c.b16 %v106, %v105
  %v116 = vpack.c.b16 %v108, %v107
  %125 = vmatpush.bf16.msra.mxu0 %v116
  %126 = vmatpush.bf16.msra.mxu0 %v115
  %127 = vmatpush.bf16.msra.mxu0 %v114
  %128 = vmatpush.bf16.msra.mxu0 %v113
  %129 = vmatpush.bf16.msra.mxu0 %v112
  %130 = vmatpush.bf16.msra.mxu0 %v111
  %131 = vmatpush.bf16.msra.mxu0 %v110
  %132 = vmatpush.bf16.msra.mxu0 %v109
  %133 = vmatmul.bf16.gmra.mxu0 %v67
  %v134 = vpop.f32.mrf.mxu0
  %v135 = vadd.f32 %v45, %v134
  %v136 = vpop.f32.mrf.mxu0
  %v137 = vadd.f32 %v45, %v136
  %138 = vmatmul.bf16.gmra.mxu0 %v68
  %v139 = vpop.f32.mrf.mxu0
  %v140 = vadd.f32 %v45, %v139
  %v141 = vpop.f32.mrf.mxu0
  %v142 = vadd.f32 %v45, %v141
  %143 = vmatmul.bf16.gmra.mxu0 %v69
  %v144 = vpop.f32.mrf.mxu0
  %v145 = vadd.f32 %v45, %v144
  %v146 = vpop.f32.mrf.mxu0
  %v147 = vadd.f32 %v45, %v146
  %148 = vmatmul.bf16.gmra.mxu0 %v70
  %v149 = vpop.f32.mrf.mxu0
  %v150 = vadd.f32 %v45, %v149
  %v151 = vpop.f32.mrf.mxu0
  %v152 = vadd.f32 %v45, %v151
  %153 = vmatmul.bf16.gmra.mxu0 %v71
  %v154 = vpop.f32.mrf.mxu0
  %v155 = vadd.f32 %v45, %v154
  %v156 = vpop.f32.mrf.mxu0
  %v157 = vadd.f32 %v45, %v156
  %158 = vdwg.mxu0
  %v159 = vld [vmem:[%s3] sm:$0xff]
  %v160 = vld [vmem:[%s3 + $0x8] sm:$0xff]
  %v161 = vld [vmem:[%s3 + $0x10] sm:$0xff]
  %v162 = vld [vmem:[%s3 + $0x18] sm:$0xff]
  %v163 = vld [vmem:[%s3 + $0x20] sm:$0xff]
  %v164 = vld [vmem:[%s3 + $0x28] sm:$0xff]
  %v165 = vld [vmem:[%s3 + $0x30] sm:$0xff]
  %v166 = vld [vmem:[%s3 + $0x38] sm:$0xff]
  %v167 = vld [vmem:[%s3 + $0x40] sm:$0xff]
  %v168 = vld [vmem:[%s3 + $0x48] sm:$0xff]
  %v169 = vadd.f32 %v135, %v159
  %v170 = vadd.f32 %v137, %v160
  %v171 = vadd.f32 %v140, %v161
  %v172 = vadd.f32 %v142, %v162
  %v173 = vadd.f32 %v145, %v163
  %v174 = vadd.f32 %v147, %v164
  %v175 = vadd.f32 %v150, %v165
  %v176 = vadd.f32 %v152, %v166
  %v177 = vadd.f32 %v155, %v167
  %v178 = vadd.f32 %v157, %v168
  %179 = vst [vmem:[%s4] sm:$0xff] %v169
  %180 = vst [vmem:[%s4 + $0x8] sm:$0xff] %v170
  %181 = vst [vmem:[%s4 + $0x10] sm:$0xff] %v171
  %182 = vst [vmem:[%s4 + $0x18] sm:$0xff] %v172
  %183 = vst [vmem:[%s4 + $0x20] sm:$0xff] %v173
  %184 = vst [vmem:[%s4 + $0x28] sm:$0xff] %v174
  %185 = vst [vmem:[%s4 + $0x30] sm:$0xff] %v175
  %186 = vst [vmem:[%s4 + $0x38] sm:$0xff] %v176
  %187 = vst [vmem:[%s4 + $0x40] sm:$0xff] %v177
  %188 = vst [vmem:[%s4 + $0x48] sm:$0xff] %v178
  // Predicated region
  $region18: #{video_expert_forward.18} parent=0 // pred_check
    _
  $region19: #{video_expert_forward.18} parent=0 // pred_check_branch
    %190 = sbr.rel (0) target = $region21
  $region20: #{video_expert_forward.18} parent=0 // pred_region
    _
  $region21: #{video_expert_forward.18} parent=0 // pred_fallthru
    _
  // Predicated region
  $region22: #{video_expert_forward.18} parent=0 // pred_check
    _
  $region23: #{video_expert_forward.18} parent=0 // pred_check_branch
    %192 = sbr.rel (0) target = $region25
  $region24: #{video_expert_forward.18} parent=0 // pred_region
    _
  $region25: #{video_expert_forward.18} parent=0 // pred_fallthru
    _

// kernel: video_expert_forward.19
$region0: #{video_expert_forward.19}
  #allocation0 [shape = 'u32[]', space=smem, size = 0x4, offset = 0x4, fixed_abs, tag = 'smem constant byte address 0x4 - core index']
  #allocation1 [shape = 'u32[72,128]{1,0:T(1,128)}', space=vmem, size = 0x9000, scoped, tag = 'internal scratch']
  %s0 = inlined_call_operand.vmem [shape: f32[80,128], index: 0, kind: input, shape index: {}]
  %s1 = inlined_call_operand.vmem [shape: bf16[128,256], index: 1, kind: input, shape index: {}]
  %s2 = inlined_call_operand.vmem [shape: f32[1,256], index: 2, kind: input, shape index: {}]
  %s3 = inlined_call_operand.vmem [shape: f32[1,128], index: 3, kind: input, shape index: {}]
  %s4 = inlined_call_operand.vmem [shape: f32[1,128], index: 4, kind: input, shape index: {}]
  %s5 = inlined_call_operand.vmem [shape: bf16[80,256], index: 5, kind: output, shape index: {}]
  %s6 = sld [smem:[#allocation0]]
  $region30: #{video_expert_forward.19} parent=0
    _
  %s8 = ssub.s32 1, %s6
  %s9 = scalar_select 0, %s8, %s6
  // Predicated region
  $region2: #{video_expert_forward.19} parent=0 // pred_check
    _
  $region3: #{video_expert_forward.19} parent=0 // pred_check_branch
    %11 = sbr.rel (0) target = $region5
  $region4: #{video_expert_forward.19} parent=0 // pred_region
    _
  $region5: #{video_expert_forward.19} parent=0 // pred_fallthru
    _
  // Predicated region
  $region6: #{video_expert_forward.19} parent=0 // pred_check
    _
  $region7: #{video_expert_forward.19} parent=0 // pred_check_branch
    %13 = sbr.rel (0) target = $region9
  $region8: #{video_expert_forward.19} parent=0 // pred_region
    _
  $region9: #{video_expert_forward.19} parent=0 // pred_fallthru
    _
  // Predicated region
  $region10: #{video_expert_forward.19} parent=0 // pred_check
    _
  $region11: #{video_expert_forward.19} parent=0 // pred_check_branch
    %15 = sbr.rel (0) target = $region13
  $region12: #{video_expert_forward.19} parent=0 // pred_region
    _
  $region13: #{video_expert_forward.19} parent=0 // pred_fallthru
    _
  // Predicated region
  $region14: #{video_expert_forward.19} parent=0 // pred_check
    _
  $region15: #{video_expert_forward.19} parent=0 // pred_check_branch
    %17 = sbr.rel (0) target = $region17
  $region16: #{video_expert_forward.19} parent=0 // pred_region
    _
  $region17: #{video_expert_forward.19} parent=0 // pred_fallthru
    _
  // Predicated region
  $region18: #{video_expert_forward.19} parent=0 // pred_check
    _
  $region19: #{video_expert_forward.19} parent=0 // pred_check_branch
    %19 = sbr.rel (0) target = $region21
  $region20: #{video_expert_forward.19} parent=0 // pred_region
    _
  $region21: #{video_expert_forward.19} parent=0 // pred_fallthru
    _
  %v20 = vld [vmem:[%s0] sm:$0xff]
  %v21 = vld [vmem:[%s0 + $0x8] sm:$0xff]
  %v22 = vld [vmem:[%s0 + $0x10] sm:$0xff]
  %v23 = vld [vmem:[%s0 + $0x18] sm:$0xff]
  %v24 = vld [vmem:[%s0 + $0x20] sm:$0xff]
  %v25 = vld [vmem:[%s0 + $0x28] sm:$0xff]
  %v26 = vld [vmem:[%s0 + $0x30] sm:$0xff]
  %v27 = vld [vmem:[%s0 + $0x38] sm:$0xff]
  %v28 = vld [vmem:[%s0 + $0x40] sm:$0xff]
  %v29 = vld [vmem:[%s0 + $0x48] sm:$0xff]
  %30 = vadd.xlane.f32.xlu0 %v20
  %v31 = vpop.xlane.xlu0 %30
  %32 = vadd.xlane.f32.xlu0 %v21
  %v33 = vpop.xlane.xlu0 %32
  %34 = vadd.xlane.f32.xlu0 %v22
  %v35 = vpop.xlane.xlu0 %34
  %36 = vadd.xlane.f32.xlu0 %v23
  %v37 = vpop.xlane.xlu0 %36
  %38 = vadd.xlane.f32.xlu0 %v24
  %v39 = vpop.xlane.xlu0 %38
  %40 = vadd.xlane.f32.xlu0 %v25
  %v41 = vpop.xlane.xlu0 %40
  %42 = vadd.xlane.f32.xlu0 %v26
  %v43 = vpop.xlane.xlu0 %42
  %44 = vadd.xlane.f32.xlu0 %v27
  %v45 = vpop.xlane.xlu0 %44
  %46 = vadd.xlane.f32.xlu0 %v28
  %v47 = vpop.xlane.xlu0 %46
  %48 = vadd.xlane.f32.xlu0 %v29
  %v49 = vpop.xlane.xlu0 %48
  %v50 = vrcp.pop 128.0
  %v51 = vmul.f32 128.0, %v50
  %v52 = vsub.f32 1.0, %v51
  %v53 = vmul.f32 %v50, %v52
  %v54 = vadd.f32 %v50, %v53
  %vm55 = vweird.f32 %v50
  %v56 = vsel %vm55, %v50, %v54
  %v57 = vmul.f32 %v31, %v56
  %v58 = vmul.f32 %v33, %v56
  %v59 = vmul.f32 %v35, %v56
  %v60 = vmul.f32 %v37, %v56
  %v61 = vmul.f32 %v39, %v56
  %v62 = vmul.f32 %v41, %v56
  %v63 = vmul.f32 %v43, %v56
  %v64 = vmul.f32 %v45, %v56
  %v65 = vmul.f32 %v47, %v56
  %v66 = vmul.f32 %v49, %v56
  %v67 = vmul.f32 %v20, %v20
  %v68 = vmul.f32 %v21, %v21
  %v69 = vmul.f32 %v22, %v22
  %v70 = vmul.f32 %v23, %v23
  %v71 = vmul.f32 %v24, %v24
  %v72 = vmul.f32 %v25, %v25
  %v73 = vmul.f32 %v26, %v26
  %v74 = vmul.f32 %v27, %v27
  %v75 = vmul.f32 %v28, %v28
  %v76 = vmul.f32 %v29, %v29
  %77 = vadd.xlane.f32.xlu0 %v67
  %v78 = vpop.xlane.xlu0 %77
  %79 = vadd.xlane.f32.xlu0 %v68
  %v80 = vpop.xlane.xlu0 %79
  %81 = vadd.xlane.f32.xlu0 %v69
  %v82 = vpop.xlane.xlu0 %81
  %83 = vadd.xlane.f32.xlu0 %v70
  %v84 = vpop.xlane.xlu0 %83
  %85 = vadd.xlane.f32.xlu0 %v71
  %v86 = vpop.xlane.xlu0 %85
  %87 = vadd.xlane.f32.xlu0 %v72
  %v88 = vpop.xlane.xlu0 %87
  %89 = vadd.xlane.f32.xlu0 %v73
  %v90 = vpop.xlane.xlu0 %89
  %91 = vadd.xlane.f32.xlu0 %v74
  %v92 = vpop.xlane.xlu0 %91
  %93 = vadd.xlane.f32.xlu0 %v75
  %v94 = vpop.xlane.xlu0 %93
  %95 = vadd.xlane.f32.xlu0 %v76
  %v96 = vpop.xlane.xlu0 %95
  %v97 = vmul.f32 %v78, %v56
  %v98 = vmul.f32 %v80, %v56
  %v99 = vmul.f32 %v82, %v56
  %v100 = vmul.f32 %v84, %v56
  %v101 = vmul.f32 %v86, %v56
  %v102 = vmul.f32 %v88, %v56
  %v103 = vmul.f32 %v90, %v56
  %v104 = vmul.f32 %v92, %v56
  %v105 = vmul.f32 %v94, %v56
  %v106 = vmul.f32 %v96, %v56
  %v107 = vmul.f32 %v57, %v57
  %v108 = vmul.f32 %v58, %v58
  %v109 = vmul.f32 %v59, %v59
  %v110 = vmul.f32 %v60, %v60
  %v111 = vmul.f32 %v61, %v61
  %v112 = vmul.f32 %v62, %v62
  %v113 = vmul.f32 %v63, %v63
  %v114 = vmul.f32 %v64, %v64
  %v115 = vmul.f32 %v65, %v65
  %v116 = vmul.f32 %v66, %v66
  %v117 = vsub.f32 %v97, %v107
  %v118 = vsub.f32 %v98, %v108
  %v119 = vsub.f32 %v99, %v109
  %v120 = vsub.f32 %v100, %v110
  %v121 = vsub.f32 %v101, %v111
  %v122 = vsub.f32 %v102, %v112
  %v123 = vsub.f32 %v103, %v113
  %v124 = vsub.f32 %v104, %v114
  %v125 = vsub.f32 %v105, %v115
  %v126 = vsub.f32 %v106, %v116
  %v127 = vsub.f32 %v20, %v57
  %v128 = vsub.f32 %v21, %v58
  %v129 = vsub.f32 %v22, %v59
  %v130 = vsub.f32 %v23, %v60
  %v131 = vsub.f32 %v24, %v61
  %v132 = vsub.f32 %v25, %v62
  %v133 = vsub.f32 %v26, %v63
  %v134 = vsub.f32 %v27, %v64
  %v135 = vsub.f32 %v28, %v65
  %v136 = vsub.f32 %v29, %v66
  %v137 = vadd.f32 %v117, 1e-05
  %v138 = vadd.f32 %v118, 1e-05
  %v139 = vadd.f32 %v119, 1e-05
  %v140 = vadd.f32 %v120, 1e-05
  %v141 = vadd.f32 %v121, 1e-05
  %v142 = vadd.f32 %v122, 1e-05
  %v143 = vadd.f32 %v123, 1e-05
  %v144 = vadd.f32 %v124, 1e-05
  %v145 = vadd.f32 %v125, 1e-05
  %v146 = vadd.f32 %v126, 1e-05
  %v147 = vrsqrt.pop %v137
  %v148 = vmul.f32 %v147, %v137
  %v149 = vmul.f32 %v148, %v147
  %v150 = vmul.f32 0.5, %v149
  %v151 = vsub.f32 1.5, %v150
  %v152 = vmul.f32 %v147, %v151
  %vm153 = vweird.f32 %v137
  %vm154 = vweird.f32 %v147
  %vm155 = vmor %vm153, %vm154
  %v156 = vsel %vm155, %v147, %v152
  %v157 = vrsqrt.pop %v138
  %v158 = vmul.f32 %v157, %v138
  %v159 = vmul.f32 %v158, %v157
  %v160 = vmul.f32 0.5, %v159
  %v161 = vsub.f32 1.5, %v160
  %v162 = vmul.f32 %v157, %v161
  %vm163 = vweird.f32 %v138
  %vm164 = vweird.f32 %v157
  %vm165 = vmor %vm163, %vm164
  %v166 = vsel %vm165, %v157, %v162
  %v167 = vrsqrt.pop %v139
  %v168 = vmul.f32 %v167, %v139
  %v169 = vmul.f32 %v168, %v167
  %v170 = vmul.f32 0.5, %v169
  %v171 = vsub.f32 1.5, %v170
  %v172 = vmul.f32 %v167, %v171
  %vm173 = vweird.f32 %v139
  %vm174 = vweird.f32 %v167
  %vm175 = vmor %vm173, %vm174
  %v176 = vsel %vm175, %v167, %v172
  %v177 = vrsqrt.pop %v140
  %v178 = vmul.f32 %v177, %v140
  %v179 = vmul.f32 %v178, %v177
  %v180 = vmul.f32 0.5, %v179
  %v181 = vsub.f32 1.5, %v180
  %v182 = vmul.f32 %v177, %v181
  %vm183 = vweird.f32 %v140
  %vm184 = vweird.f32 %v177
  %vm185 = vmor %vm183, %vm184
  %v186 = vsel %vm185, %v177, %v182
  %v187 = vrsqrt.pop %v141
  %v188 = vmul.f32 %v187, %v141
  %v189 = vmul.f32 %v188, %v187
  %v190 = vmul.f32 0.5, %v189
  %v191 = vsub.f32 1.5, %v190
  %v192 = vmul.f32 %v187, %v191
  %vm193 = vweird.f32 %v141
  %vm194 = vweird.f32 %v187
  %vm195 = vmor %vm193, %vm194
  %v196 = vsel %vm195, %v187, %v192
  %v197 = vrsqrt.pop %v142
  %v198 = vmul.f32 %v197, %v142
  %v199 = vmul.f32 %v198, %v197
  %v200 = vmul.f32 0.5, %v199
  %v201 = vsub.f32 1.5, %v200
  %v202 = vmul.f32 %v197, %v201
  %vm203 = vweird.f32 %v142
  %vm204 = vweird.f32 %v197
  %vm205 = vmor %vm203, %vm204
  %v206 = vsel %vm205, %v197, %v202
  %v207 = vrsqrt.pop %v143
  %v208 = vmul.f32 %v207, %v143
  %v209 = vmul.f32 %v208, %v207
  %v210 = vmul.f32 0.5, %v209
  %v211 = vsub.f32 1.5, %v210
  %v212 = vmul.f32 %v207, %v211
  %vm213 = vweird.f32 %v143
  %vm214 = vweird.f32 %v207
  %vm215 = vmor %vm213, %vm214
  %v216 = vsel %vm215, %v207, %v212
  %v217 = vrsqrt.pop %v144
  %v218 = vmul.f32 %v217, %v144
  %v219 = vmul.f32 %v218, %v217
  %v220 = vmul.f32 0.5, %v219
  %v221 = vsub.f32 1.5, %v220
  %v222 = vmul.f32 %v217, %v221
  %vm223 = vweird.f32 %v144
  %vm224 = vweird.f32 %v217
  %vm225 = vmor %vm223, %vm224
  %v226 = vsel %vm225, %v217, %v222
  %v227 = vrsqrt.pop %v145
  %v228 = vmul.f32 %v227, %v145
  %v229 = vmul.f32 %v228, %v227
  %v230 = vmul.f32 0.5, %v229
  %v231 = vsub.f32 1.5, %v230
  %v232 = vmul.f32 %v227, %v231
  %vm233 = vweird.f32 %v145
  %vm234 = vweird.f32 %v227
  %vm235 = vmor %vm233, %vm234
  %v236 = vsel %vm235, %v227, %v232
  %v237 = vrsqrt.pop %v146
  %v238 = vmul.f32 %v237, %v146
  %v239 = vmul.f32 %v238, %v237
  %v240 = vmul.f32 0.5, %v239
  %v241 = vsub.f32 1.5, %v240
  %v242 = vmul.f32 %v237, %v241
  %vm243 = vweird.f32 %v146
  %vm244 = vweird.f32 %v237
  %vm245 = vmor %vm243, %vm244
  %v246 = vsel %vm245, %v237, %v242
  %v247 = vmul.f32 %v127, %v156
  %v248 = vmul.f32 %v128, %v166
  %v249 = vmul.f32 %v129, %v176
  %v250 = vmul.f32 %v130, %v186
  %v251 = vmul.f32 %v131, %v196
  %v252 = vmul.f32 %v132, %v206
  %v253 = vmul.f32 %v133, %v216
  %v254 = vmul.f32 %v134, %v226
  %v255 = vmul.f32 %v135, %v236
  %v256 = vmul.f32 %v136, %v246
  %v257 = vld [vmem:[%s3] sm:$0x1]
  %v259 = vperm.slane %v257, 0
  %v261 = vmul.f32 %v247, %v259
  %v262 = vmul.f32 %v248, %v259
  %v263 = vmul.f32 %v249, %v259
  %v264 = vmul.f32 %v250, %v259
  %v265 = vmul.f32 %v251, %v259
  %v266 = vmul.f32 %v252, %v259
  %v267 = vmul.f32 %v253, %v259
  %v268 = vmul.f32 %v254, %v259
  %v269 = vmul.f32 %v255, %v259
  %v270 = vmul.f32 %v256, %v259
  %v271 = vld [vmem:[%s4] sm:$0x1]
  %v273 = vperm.slane %v271, 0
  %v275 = vadd.f32 %v261, %v273
  %v276 = vadd.f32 %v262, %v273
  %v277 = vadd.f32 %v263, %v273
  %v278 = vadd.f32 %v264, %v273
  %v279 = vadd.f32 %v265, %v273
  %v280 = vadd.f32 %v266, %v273
  %v281 = vadd.f32 %v267, %v273
  %v282 = vadd.f32 %v268, %v273
  %v283 = vadd.f32 %v269, %v273
  %v284 = vadd.f32 %v270, %v273
  %v285 = vpack.c.bf16 %v276, %v275
  %v286 = vpack.c.bf16 %v278, %v277
  %v287 = vpack.c.bf16 %v280, %v279
  %v288 = vpack.c.bf16 %v282, %v281
  %v289 = vpack.c.bf16 %v284, %v283
  %v290 = vld [vmem:[%s1] sm:$0xff]
  %v291 = vld [vmem:[%s1 + $0x8] sm:$0xff]
  %v292 = vld [vmem:[%s1 + $0x10] sm:$0xff]
  %v293 = vld [vmem:[%s1 + $0x18] sm:$0xff]
  %v294 = vld [vmem:[%s1 + $0x20] sm:$0xff]
  %v295 = vld [vmem:[%s1 + $0x28] sm:$0xff]
  %v296 = vld [vmem:[%s1 + $0x30] sm:$0xff]
  %v297 = vld [vmem:[%s1 + $0x38] sm:$0xff]
  %v298 = vld [vmem:[%s1 + $0x40] sm:$0xff]
  %v299 = vld [vmem:[%s1 + $0x48] sm:$0xff]
  %v300 = vld [vmem:[%s1 + $0x50] sm:$0xff]
  %v301 = vld [vmem:[%s1 + $0x58] sm:$0xff]
  %v302 = vld [vmem:[%s1 + $0x60] sm:$0xff]
  %v303 = vld [vmem:[%s1 + $0x68] sm:$0xff]
  %v304 = vld [vmem:[%s1 + $0x70] sm:$0xff]
  %v305 = vld [vmem:[%s1 + $0x78] sm:$0xff]
  %v306 = vld [vmem:[%s2] sm:$0x3]
  %v308 = vperm.slane %v306, 0
  %v309 = vperm.slane %v306, 1
  %v328 = vunpack.c.l.b16 %v290
  %v329 = vunpack.c.h.b16 %v290
  %v330 = vunpack.c.l.b16 %v291
  %v331 = vunpack.c.h.b16 %v291
  %v332 = vunpack.c.l.b16 %v292
  %v333 = vunpack.c.h.b16 %v292
  %v334 = vunpack.c.l.b16 %v293
  %v335 = vunpack.c.h.b16 %v293
  %v336 = vunpack.c.l.b16 %v294
  %v337 = vunpack.c.h.b16 %v294
  %v338 = vunpack.c.l.b16 %v295
  %v339 = vunpack.c.h.b16 %v295
  %v340 = vunpack.c.l.b16 %v296
  %v341 = vunpack.c.h.b16 %v296
  %v342 = vunpack.c.l.b16 %v297
  %v343 = vunpack.c.h.b16 %v297
  %v344 = vunpack.c.l.b16 %v298
  %v345 = vunpack.c.h.b16 %v298
  %v346 = vunpack.c.l.b16 %v299
  %v347 = vunpack.c.h.b16 %v299
  %v348 = vunpack.c.l.b16 %v300
  %v349 = vunpack.c.h.b16 %v300
  %v350 = vunpack.c.l.b16 %v301
  %v351 = vunpack.c.h.b16 %v301
  %v352 = vunpack.c.l.b16 %v302
  %v353 = vunpack.c.h.b16 %v302
  %v354 = vunpack.c.l.b16 %v303
  %v355 = vunpack.c.h.b16 %v303
  %v356 = vunpack.c.l.b16 %v304
  %v357 = vunpack.c.h.b16 %v304
  %v358 = vunpack.c.l.b16 %v305
  %v359 = vunpack.c.h.b16 %v305
  %v360 = vpack.c.b16 %v330, %v328
  %v361 = vpack.c.b16 %v331, %v329
  %v362 = vpack.c.b16 %v334, %v332
  %v363 = vpack.c.b16 %v335, %v333
  %v364 = vpack.c.b16 %v338, %v336
  %v365 = vpack.c.b16 %v339, %v337
  %v366 = vpack.c.b16 %v342, %v340
  %v367 = vpack.c.b16 %v343, %v341
  %v368 = vpack.c.b16 %v346, %v344
  %v369 = vpack.c.b16 %v347, %v345
  %v370 = vpack.c.b16 %v350, %v348
  %v371 = vpack.c.b16 %v351, %v349
  %v372 = vpack.c.b16 %v354, %v352
  %v373 = vpack.c.b16 %v355, %v353
  %v374 = vpack.c.b16 %v358, %v356
  %v375 = vpack.c.b16 %v359, %v357
  %392 = vmatpush.bf16.msra.mxu0 %v374
  %393 = vmatpush.bf16.msra.mxu0 %v372
  %394 = vmatpush.bf16.msra.mxu0 %v370
  %395 = vmatpush.bf16.msra.mxu0 %v368
  %396 = vmatpush.bf16.msra.mxu0 %v366
  %397 = vmatpush.bf16.msra.mxu0 %v364
  %398 = vmatpush.bf16.msra.mxu0 %v362
  %399 = vmatpush.bf16.msra.mxu0 %v360
  %400 = vmatmul.bf16.gmra.mxu0 %v285
  %v401 = vpop.f32.mrf.mxu0
  %v402 = vadd.f32 %v308, %v401
  %v403 = vpop.f32.mrf.mxu0
  %v404 = vadd.f32 %v308, %v403
  %405 = vmatmul.bf16.gmra.mxu0 %v286
  %v406 = vpop.f32.mrf.mxu0
  %v407 = vadd.f32 %v308, %v406
  %v408 = vpop.f32.mrf.mxu0
  %v409 = vadd.f32 %v308, %v408
  %410 = vmatmul.bf16.gmra.mxu0 %v287
  %v411 = vpop.f32.mrf.mxu0
  %v412 = vadd.f32 %v308, %v411
  %v413 = vpop.f32.mrf.mxu0
  %v414 = vadd.f32 %v308, %v413
  %415 = vmatmul.bf16.gmra.mxu0 %v288
  %v416 = vpop.f32.mrf.mxu0
  %v417 = vadd.f32 %v308, %v416
  %v418 = vpop.f32.mrf.mxu0
  %v419 = vadd.f32 %v308, %v418
  %420 = vmatmul.bf16.gmra.mxu0 %v289
  %v421 = vpop.f32.mrf.mxu0
  %v422 = vadd.f32 %v308, %v421
  %v423 = vpop.f32.mrf.mxu0
  %v424 = vadd.f32 %v308, %v423
  %425 = vdwg.mxu0
  %426 = vmatpush.bf16.msra.mxu0 %v375
  %427 = vmatpush.bf16.msra.mxu0 %v373
  %428 = vmatpush.bf16.msra.mxu0 %v371
  %429 = vmatpush.bf16.msra.mxu0 %v369
  %430 = vmatpush.bf16.msra.mxu0 %v367
  %431 = vmatpush.bf16.msra.mxu0 %v365
  %432 = vmatpush.bf16.msra.mxu0 %v363
  %433 = vmatpush.bf16.msra.mxu0 %v361
  %434 = vmatmul.bf16.gmra.mxu0 %v285
  %v435 = vpop.f32.mrf.mxu0
  %v436 = vadd.f32 %v309, %v435
  %v437 = vpop.f32.mrf.mxu0
  %v438 = vadd.f32 %v309, %v437
  %439 = vmatmul.bf16.gmra.mxu0 %v286
  %v440 = vpop.f32.mrf.mxu0
  %v441 = vadd.f32 %v309, %v440
  %v442 = vpop.f32.mrf.mxu0
  %v443 = vadd.f32 %v309, %v442
  %444 = vmatmul.bf16.gmra.mxu0 %v287
  %v445 = vpop.f32.mrf.mxu0
  %v446 = vadd.f32 %v309, %v445
  %v447 = vpop.f32.mrf.mxu0
  %v448 = vadd.f32 %v309, %v447
  %449 = vmatmul.bf16.gmra.mxu0 %v288
  %v450 = vpop.f32.mrf.mxu0
  %v451 = vadd.f32 %v309, %v450
  %v452 = vpop.f32.mrf.mxu0
  %v453 = vadd.f32 %v309, %v452
  %454 = vmatmul.bf16.gmra.mxu0 %v289
  %v455 = vpop.f32.mrf.mxu0
  %v456 = vadd.f32 %v309, %v455
  %v457 = vpop.f32.mrf.mxu0
  %v458 = vadd.f32 %v309, %v457
  %459 = vdwg.mxu0
  %v460 = vmul.f32 %v402, %v402
  %v461 = vmul.f32 %v436, %v436
  %v462 = vmul.f32 %v404, %v404
  %v463 = vmul.f32 %v438, %v438
  %v464 = vmul.f32 %v407, %v407
  %v465 = vmul.f32 %v441, %v441
  %v466 = vmul.f32 %v409, %v409
  %v467 = vmul.f32 %v443, %v443
  %v468 = vmul.f32 %v412, %v412
  %v469 = vmul.f32 %v446, %v446
  %v470 = vmul.f32 %v414, %v414
  %v471 = vmul.f32 %v448, %v448
  %v472 = vmul.f32 %v417, %v417
  %v473 = vmul.f32 %v451, %v451
  %v474 = vmul.f32 %v419, %v419
  %v475 = vmul.f32 %v453, %v453
  %v476 = vmul.f32 %v422, %v422
  %v477 = vmul.f32 %v456, %v456
  %v478 = vmul.f32 %v424, %v424
  %v479 = vmul.f32 %v458, %v458
  %v480 = vmul.f32 %v402, %v460
  %v481 = vmul.f32 %v436, %v461
  %v482 = vmul.f32 %v404, %v462
  %v483 = vmul.f32 %v438, %v463
  %v484 = vmul.f32 %v407, %v464
  %v485 = vmul.f32 %v441, %v465
  %v486 = vmul.f32 %v409, %v466
  %v487 = vmul.f32 %v443, %v467
  %v488 = vmul.f32 %v412, %v468
  %v489 = vmul.f32 %v446, %v469
  %v490 = vmul.f32 %v414, %v470
  %v491 = vmul.f32 %v448, %v471
  %v492 = vmul.f32 %v417, %v472
  %v493 = vmul.f32 %v451, %v473
  %v494 = vmul.f32 %v419, %v474
  %v495 = vmul.f32 %v453, %v475
  %v496 = vmul.f32 %v422, %v476
  %v497 = vmul.f32 %v456, %v477
  %v498 = vmul.f32 %v424, %v478
  %v499 = vmul.f32 %v458, %v479
  %v500 = vmul.f32 %v480, 0.044715
  %v501 = vmul.f32 %v481, 0.044715
  %v502 = vmul.f32 %v482, 0.044715
  %v503 = vmul.f32 %v483, 0.044715
  %v504 = vmul.f32 %v484, 0.044715
  %v505 = vmul.f32 %v485, 0.044715
  %v506 = vmul.f32 %v486, 0.044715
  %v507 = vmul.f32 %v487, 0.044715
  %v508 = vmul.f32 %v488, 0.044715
  %v509 = vmul.f32 %v489, 0.044715
  %v510 = vmul.f32 %v490, 0.044715
  %v511 = vmul.f32 %v491, 0.044715
  %v512 = vmul.f32 %v492, 0.044715
  %v513 = vmul.f32 %v493, 0.044715
  %v514 = vmul.f32 %v494, 0.044715
  %v515 = vmul.f32 %v495, 0.044715
  %v516 = vmul.f32 %v496, 0.044715
  %v517 = vmul.f32 %v497, 0.044715
  %v518 = vmul.f32 %v498, 0.044715
  %v519 = vmul.f32 %v499, 0.044715
  %v520 = vadd.f32 %v402, %v500
  %v521 = vadd.f32 %v436, %v501
  %v522 = vadd.f32 %v404, %v502
  %v523 = vadd.f32 %v438, %v503
  %v524 = vadd.f32 %v407, %v504
  %v525 = vadd.f32 %v441, %v505
  %v526 = vadd.f32 %v409, %v506
  %v527 = vadd.f32 %v443, %v507
  %v528 = vadd.f32 %v412, %v508
  %v529 = vadd.f32 %v446, %v509
  %v530 = vadd.f32 %v414, %v510
  %v531 = vadd.f32 %v448, %v511
  %v532 = vadd.f32 %v417, %v512
  %v533 = vadd.f32 %v451, %v513
  %v534 = vadd.f32 %v419, %v514
  %v535 = vadd.f32 %v453, %v515
  %v536 = vadd.f32 %v422, %v516
  %v537 = vadd.f32 %v456, %v517
  %v538 = vadd.f32 %v424, %v518
  %v539 = vadd.f32 %v458, %v519
  %v540 = vmul.f32 %v520, 0.7978846
  %v541 = vmul.f32 %v521, 0.7978846
  %v542 = vmul.f32 %v522, 0.7978846
  %v543 = vmul.f32 %v523, 0.7978846
  %v544 = vmul.f32 %v524, 0.7978846
  %v545 = vmul.f32 %v525, 0.7978846
  %v546 = vmul.f32 %v526, 0.7978846
  %v547 = vmul.f32 %v527, 0.7978846
  %v548 = vmul.f32 %v528, 0.7978846
  %v549 = vmul.f32 %v529, 0.7978846
  %v550 = vmul.f32 %v530, 0.7978846
  %v551 = vmul.f32 %v531, 0.7978846
  %v552 = vmul.f32 %v532, 0.7978846
  %v553 = vmul.f32 %v533, 0.7978846
  %v554 = vmul.f32 %v534, 0.7978846
  %v555 = vmul.f32 %v535, 0.7978846
  %v556 = vmul.f32 %v536, 0.7978846
  %v557 = vmul.f32 %v537, 0.7978846
  %v558 = vmul.f32 %v538, 0.7978846
  %v559 = vmul.f32 %v539, 0.7978846
  %v560 = vtanh.pop %v540
  %v561 = vtanh.pop %v541
  %v562 = vtanh.pop %v542
  %v563 = vtanh.pop %v543
  %v564 = vtanh.pop %v544
  %v565 = vtanh.pop %v545
  %v566 = vtanh.pop %v546
  %v567 = vtanh.pop %v547
  %v568 = vtanh.pop %v548
  %v569 = vtanh.pop %v549
  %v570 = vtanh.pop %v550
  %v571 = vtanh.pop %v551
  %v572 = vtanh.pop %v552
  %v573 = vtanh.pop %v553
  %v574 = vtanh.pop %v554
  %v575 = vtanh.pop %v555
  %v576 = vtanh.pop %v556
  %v577 = vtanh.pop %v557
  %v578 = vtanh.pop %v558
  %v579 = vtanh.pop %v559
  %v580 = vadd.f32 %v560, 1.0
  %v581 = vadd.f32 %v561, 1.0
  %v582 = vadd.f32 %v562, 1.0
  %v583 = vadd.f32 %v563, 1.0
  %v584 = vadd.f32 %v564, 1.0
  %v585 = vadd.f32 %v565, 1.0
  %v586 = vadd.f32 %v566, 1.0
  %v587 = vadd.f32 %v567, 1.0
  %v588 = vadd.f32 %v568, 1.0
  %v589 = vadd.f32 %v569, 1.0
  %v590 = vadd.f32 %v570, 1.0
  %v591 = vadd.f32 %v571, 1.0
  %v592 = vadd.f32 %v572, 1.0
  %v593 = vadd.f32 %v573, 1.0
  %v594 = vadd.f32 %v574, 1.0
  %v595 = vadd.f32 %v575, 1.0
  %v596 = vadd.f32 %v576, 1.0
  %v597 = vadd.f32 %v577, 1.0
  %v598 = vadd.f32 %v578, 1.0
  %v599 = vadd.f32 %v579, 1.0
  %v600 = vmul.f32 %v580, 0.5
  %v601 = vmul.f32 %v581, 0.5
  %v602 = vmul.f32 %v582, 0.5
  %v603 = vmul.f32 %v583, 0.5
  %v604 = vmul.f32 %v584, 0.5
  %v605 = vmul.f32 %v585, 0.5
  %v606 = vmul.f32 %v586, 0.5
  %v607 = vmul.f32 %v587, 0.5
  %v608 = vmul.f32 %v588, 0.5
  %v609 = vmul.f32 %v589, 0.5
  %v610 = vmul.f32 %v590, 0.5
  %v611 = vmul.f32 %v591, 0.5
  %v612 = vmul.f32 %v592, 0.5
  %v613 = vmul.f32 %v593, 0.5
  %v614 = vmul.f32 %v594, 0.5
  %v615 = vmul.f32 %v595, 0.5
  %v616 = vmul.f32 %v596, 0.5
  %v617 = vmul.f32 %v597, 0.5
  %v618 = vmul.f32 %v598, 0.5
  %v619 = vmul.f32 %v599, 0.5
  %v620 = vmul.f32 %v402, %v600
  %v621 = vmul.f32 %v436, %v601
  %v622 = vmul.f32 %v404, %v602
  %v623 = vmul.f32 %v438, %v603
  %v624 = vmul.f32 %v407, %v604
  %v625 = vmul.f32 %v441, %v605
  %v626 = vmul.f32 %v409, %v606
  %v627 = vmul.f32 %v443, %v607
  %v628 = vmul.f32 %v412, %v608
  %v629 = vmul.f32 %v446, %v609
  %v630 = vmul.f32 %v414, %v610
  %v631 = vmul.f32 %v448, %v611
  %v632 = vmul.f32 %v417, %v612
  %v633 = vmul.f32 %v451, %v613
  %v634 = vmul.f32 %v419, %v614
  %v635 = vmul.f32 %v453, %v615
  %v636 = vmul.f32 %v422, %v616
  %v637 = vmul.f32 %v456, %v617
  %v638 = vmul.f32 %v424, %v618
  %v639 = vmul.f32 %v458, %v619
  %v640 = vpack.c.bf16 %v621, %v620
  %v641 = vpack.c.bf16 %v623, %v622
  %v642 = vpack.c.bf16 %v625, %v624
  %v643 = vpack.c.bf16 %v627, %v626
  %v644 = vpack.c.bf16 %v629, %v628
  %v645 = vpack.c.bf16 %v631, %v630
  %v646 = vpack.c.bf16 %v633, %v632
  %v647 = vpack.c.bf16 %v635, %v634
  %v648 = vpack.c.bf16 %v637, %v636
  %v649 = vpack.c.bf16 %v639, %v638
  %650 = vst [vmem:[%s5] sm:$0xff] %v640
  %651 = vst [vmem:[%s5 + $0x8] sm:$0xff] %v641
  %652 = vst [vmem:[%s5 + $0x10] sm:$0xff] %v642
  %653 = vst [vmem:[%s5 + $0x18] sm:$0xff] %v643
  %654 = vst [vmem:[%s5 + $0x20] sm:$0xff] %v644
  %655 = vst [vmem:[%s5 + $0x28] sm:$0xff] %v645
  %656 = vst [vmem:[%s5 + $0x30] sm:$0xff] %v646
  %657 = vst [vmem:[%s5 + $0x38] sm:$0xff] %v647
  %658 = vst [vmem:[%s5 + $0x40] sm:$0xff] %v648
  %659 = vst [vmem:[%s5 + $0x48] sm:$0xff] %v649
  // Predicated region
  $region22: #{video_expert_forward.19} parent=0 // pred_check
    _
  $region23: #{video_expert_forward.19} parent=0 // pred_check_branch
    %661 = sbr.rel (0) target = $region25
  $region24: #{video_expert_forward.19} parent=0 // pred_region
    _
  $region25: #{video_expert_forward.19} parent=0 // pred_fallthru
    _
  // Predicated region
  $region26: #{video_expert_forward.19} parent=0 // pred_check
    _
  $region27: #{video_expert_forward.19} parent=0 // pred_check_branch
    %663 = sbr.rel (0) target = $region29
  $region28: #{video_expert_forward.19} parent=0 // pred_region
    _
  $region29: #{video_expert_forward.19} parent=0 // pred_fallthru
    _

// kernel: video_expert_forward.20
$region0: #{video_expert_forward.20}
  #allocation0 [shape = 'u32[]', space=smem, size = 0x4, offset = 0x4, fixed_abs, tag = 'smem constant byte address 0x4 - core index']
  #allocation1 [shape = 'u32[72,128]{1,0:T(1,128)}', space=vmem, size = 0x9000, scoped, tag = 'internal scratch']
  %s0 = inlined_call_operand.vmem [shape: bf16[80,256], index: 0, kind: input, shape index: {}]
  %s1 = inlined_call_operand.vmem [shape: bf16[256,128], index: 1, kind: input, shape index: {}]
  %s2 = inlined_call_operand.vmem [shape: f32[1,128], index: 2, kind: input, shape index: {}]
  %s3 = inlined_call_operand.vmem [shape: f32[80,128], index: 3, kind: input, shape index: {}]
  %s4 = inlined_call_operand.vmem [shape: f32[80,128], index: 4, kind: output, shape index: {}]
  %s5 = sld [smem:[#allocation0]]
  $region26: #{video_expert_forward.20} parent=0
    _
  %s7 = ssub.s32 1, %s5
  %s8 = scalar_select 0, %s7, %s5
  // Predicated region
  $region2: #{video_expert_forward.20} parent=0 // pred_check
    _
  $region3: #{video_expert_forward.20} parent=0 // pred_check_branch
    %10 = sbr.rel (0) target = $region5
  $region4: #{video_expert_forward.20} parent=0 // pred_region
    _
  $region5: #{video_expert_forward.20} parent=0 // pred_fallthru
    _
  // Predicated region
  $region6: #{video_expert_forward.20} parent=0 // pred_check
    _
  $region7: #{video_expert_forward.20} parent=0 // pred_check_branch
    %12 = sbr.rel (0) target = $region9
  $region8: #{video_expert_forward.20} parent=0 // pred_region
    _
  $region9: #{video_expert_forward.20} parent=0 // pred_fallthru
    _
  // Predicated region
  $region10: #{video_expert_forward.20} parent=0 // pred_check
    _
  $region11: #{video_expert_forward.20} parent=0 // pred_check_branch
    %14 = sbr.rel (0) target = $region13
  $region12: #{video_expert_forward.20} parent=0 // pred_region
    _
  $region13: #{video_expert_forward.20} parent=0 // pred_fallthru
    _
  // Predicated region
  $region14: #{video_expert_forward.20} parent=0 // pred_check
    _
  $region15: #{video_expert_forward.20} parent=0 // pred_check_branch
    %16 = sbr.rel (0) target = $region17
  $region16: #{video_expert_forward.20} parent=0 // pred_region
    _
  $region17: #{video_expert_forward.20} parent=0 // pred_fallthru
    _
  %v17 = vld [vmem:[%s0] sm:$0xff]
  %v18 = vld [vmem:[%s0 + $0x8] sm:$0xff]
  %v19 = vld [vmem:[%s0 + $0x10] sm:$0xff]
  %v20 = vld [vmem:[%s0 + $0x18] sm:$0xff]
  %v21 = vld [vmem:[%s0 + $0x20] sm:$0xff]
  %v22 = vld [vmem:[%s0 + $0x28] sm:$0xff]
  %v23 = vld [vmem:[%s0 + $0x30] sm:$0xff]
  %v24 = vld [vmem:[%s0 + $0x38] sm:$0xff]
  %v25 = vld [vmem:[%s0 + $0x40] sm:$0xff]
  %v26 = vld [vmem:[%s0 + $0x48] sm:$0xff]
  %v27 = vld [vmem:[%s1] sm:$0xf]
  %v28 = vld [vmem:[%s1 + $0x4] sm:$0xf]
  %v29 = vld [vmem:[%s1 + $0x8] sm:$0xf]
  %v30 = vld [vmem:[%s1 + $0xc] sm:$0xf]
  %v31 = vld [vmem:[%s1 + $0x10] sm:$0xf]
  %v32 = vld [vmem:[%s1 + $0x14] sm:$0xf]
  %v33 = vld [vmem:[%s1 + $0x18] sm:$0xf]
  %v34 = vld [vmem:[%s1 + $0x1c] sm:$0xf]
  %v35 = vld [vmem:[%s1 + $0x20] sm:$0xf]
  %v36 = vld [vmem:[%s1 + $0x24] sm:$0xf]
  %v37 = vld [vmem:[%s1 + $0x28] sm:$0xf]
  %v38 = vld [vmem:[%s1 + $0x2c] sm:$0xf]
  %v39 = vld [vmem:[%s1 + $0x30] sm:$0xf]
  %v40 = vld [vmem:[%s1 + $0x34] sm:$0xf]
  %v41 = vld [vmem:[%s1 + $0x38] sm:$0xf]
  %v42 = vld [vmem:[%s1 + $0x3c] sm:$0xf]
  %v43 = vld [vmem:[%s1 + $0x40] sm:$0xf]
  %v44 = vld [vmem:[%s1 + $0x44] sm:$0xf]
  %v45 = vld [vmem:[%s1 + $0x48] sm:$0xf]
  %v46 = vld [vmem:[%s1 + $0x4c] sm:$0xf]
  %v47 = vld [vmem:[%s1 + $0x50] sm:$0xf]
  %v48 = vld [vmem:[%s1 + $0x54] sm:$0xf]
  %v49 = vld [vmem:[%s1 + $0x58] sm:$0xf]
  %v50 = vld [vmem:[%s1 + $0x5c] sm:$0xf]
  %v51 = vld [vmem:[%s1 + $0x60] sm:$0xf]
  %v52 = vld [vmem:[%s1 + $0x64] sm:$0xf]
  %v53 = vld [vmem:[%s1 + $0x68] sm:$0xf]
  %v54 = vld [vmem:[%s1 + $0x6c] sm:$0xf]
  %v55 = vld [vmem:[%s1 + $0x70] sm:$0xf]
  %v56 = vld [vmem:[%s1 + $0x74] sm:$0xf]
  %v57 = vld [vmem:[%s1 + $0x78] sm:$0xf]
  %v58 = vld [vmem:[%s1 + $0x7c] sm:$0xf]
  %v59 = vld [vmem:[%s2] sm:$0x1]
  %v61 = vperm.slane %v59, 0
  %v73 = vunpack.c.l.b16 %v17
  %v74 = vunpack.c.h.b16 %v17
  %v75 = vunpack.c.l.b16 %v18
  %v76 = vunpack.c.h.b16 %v18
  %v77 = vunpack.c.l.b16 %v19
  %v78 = vunpack.c.h.b16 %v19
  %v79 = vunpack.c.l.b16 %v20
  %v80 = vunpack.c.h.b16 %v20
  %v81 = vunpack.c.l.b16 %v21
  %v82 = vunpack.c.h.b16 %v21
  %v83 = vunpack.c.l.b16 %v22
  %v84 = vunpack.c.h.b16 %v22
  %v85 = vunpack.c.l.b16 %v23
  %v86 = vunpack.c.h.b16 %v23
  %v87 = vunpack.c.l.b16 %v24
  %v88 = vunpack.c.h.b16 %v24
  %v89 = vunpack.c.l.b16 %v25
  %v90 = vunpack.c.h.b16 %v25
  %v91 = vunpack.c.l.b16 %v26
  %v92 = vunpack.c.h.b16 %v26
  %v93 = vpack.c.b16 %v75, %v73
  %v94 = vpack.c.b16 %v76, %v74
  %v95 = vpack.c.b16 %v79, %v77
  %v96 = vpack.c.b16 %v80, %v78
  %v97 = vpack.c.b16 %v83, %v81
  %v98 = vpack.c.b16 %v84, %v82
  %v99 = vpack.c.b16 %v87, %v85
  %v100 = vpack.c.b16 %v88, %v86
  %v101 = vpack.c.b16 %v91, %v89
  %v102 = vpack.c.b16 %v92, %v90
  %v145 = vunpack.c.l.b16 %v27
  %v146 = vunpack.c.l.b16 %v28
  %v147 = vunpack.c.l.b16 %v29
  %v148 = vunpack.c.l.b16 %v30
  %v149 = vunpack.c.l.b16 %v31
  %v150 = vunpack.c.l.b16 %v32
  %v151 = vunpack.c.l.b16 %v33
  %v152 = vunpack.c.l.b16 %v34
  %v153 = vunpack.c.l.b16 %v35
  %v154 = vunpack.c.l.b16 %v36
  %v155 = vunpack.c.l.b16 %v37
  %v156 = vunpack.c.l.b16 %v38
  %v157 = vunpack.c.l.b16 %v39
  %v158 = vunpack.c.l.b16 %v40
  %v159 = vunpack.c.l.b16 %v41
  %v160 = vunpack.c.l.b16 %v42
  %v161 = vunpack.c.l.b16 %v43
  %v162 = vunpack.c.l.b16 %v44
  %v163 = vunpack.c.l.b16 %v45
  %v164 = vunpack.c.l.b16 %v46
  %v165 = vunpack.c.l.b16 %v47
  %v166 = vunpack.c.l.b16 %v48
  %v167 = vunpack.c.l.b16 %v49
  %v168 = vunpack.c.l.b16 %v50
  %v169 = vunpack.c.l.b16 %v51
  %v170 = vunpack.c.l.b16 %v52
  %v171 = vunpack.c.l.b16 %v53
  %v172 = vunpack.c.l.b16 %v54
  %v173 = vunpack.c.l.b16 %v55
  %v174 = vunpack.c.l.b16 %v56
  %v175 = vunpack.c.l.b16 %v57
  %v176 = vunpack.c.l.b16 %v58
  %v177 = vpack.c.b16 %v146, %v145
  %v178 = vpack.c.b16 %v148, %v147
  %v179 = vpack.c.b16 %v150, %v149
  %v180 = vpack.c.b16 %v152, %v151
  %v181 = vpack.c.b16 %v154, %v153
  %v182 = vpack.c.b16 %v156, %v155
  %v183 = vpack.c.b16 %v158, %v157
  %v184 = vpack.c.b16 %v160, %v159
  %v185 = vpack.c.b16 %v162, %v161
  %v186 = vpack.c.b16 %v164, %v163
  %v187 = vpack.c.b16 %v166, %v165
  %v188 = vpack.c.b16 %v168, %v167
  %v189 = vpack.c.b16 %v170, %v169
  %v190 = vpack.c.b16 %v172, %v171
  %v191 = vpack.c.b16 %v174, %v173
  %v192 = vpack.c.b16 %v176, %v175
  %209 = vmatpush.bf16.msra.mxu0 %v184
  %210 = vmatpush.bf16.msra.mxu0 %v183
  %211 = vmatpush.bf16.msra.mxu0 %v182
  %212 = vmatpush.bf16.msra.mxu0 %v181
  %213 = vmatpush.bf16.msra.mxu0 %v180
  %214 = vmatpush.bf16.msra.mxu0 %v179
  %215 = vmatpush.bf16.msra.mxu0 %v178
  %216 = vmatpush.bf16.msra.mxu0 %v177
  %217 = vmatmul.bf16.gmra.mxu0 %v93
  %v218 = vpop.f32.mrf.mxu0
  %v219 = vadd.f32 %v61, %v218
  %v220 = vpop.f32.mrf.mxu0
  %v221 = vadd.f32 %v61, %v220
  %222 = vmatmul.bf16.gmra.mxu0 %v95
  %v223 = vpop.f32.mrf.mxu0
  %v224 = vadd.f32 %v61, %v223
  %v225 = vpop.f32.mrf.mxu0
  %v226 = vadd.f32 %v61, %v225
  %227 = vmatmul.bf16.gmra.mxu0 %v97
  %v228 = vpop.f32.mrf.mxu0
  %v229 = vadd.f32 %v61, %v228
  %v230 = vpop.f32.mrf.mxu0
  %v231 = vadd.f32 %v61, %v230
  %232 = vmatmul.bf16.gmra.mxu0 %v99
  %v233 = vpop.f32.mrf.mxu0
  %v234 = vadd.f32 %v61, %v233
  %v235 = vpop.f32.mrf.mxu0
  %v236 = vadd.f32 %v61, %v235
  %237 = vmatmul.bf16.gmra.mxu0 %v101
  %v238 = vpop.f32.mrf.mxu0
  %v239 = vadd.f32 %v61, %v238
  %v240 = vpop.f32.mrf.mxu0
  %v241 = vadd.f32 %v61, %v240
  %242 = vdwg.mxu0
  %243 = vmatpush.bf16.msra.mxu0 %v192
  %244 = vmatpush.bf16.msra.mxu0 %v191
  %245 = vmatpush.bf16.msra.mxu0 %v190
  %246 = vmatpush.bf16.msra.mxu0 %v189
  %247 = vmatpush.bf16.msra.mxu0 %v188
  %248 = vmatpush.bf16.msra.mxu0 %v187
  %249 = vmatpush.bf16.msra.mxu0 %v186
  %250 = vmatpush.bf16.msra.mxu0 %v185
  %251 = vmatmul.bf16.gmra.mxu0 %v94
  %v252 = vpop.f32.mrf.mxu0
  %v253 = vadd.f32 %v219, %v252
  %v254 = vpop.f32.mrf.mxu0
  %v255 = vadd.f32 %v221, %v254
  %256 = vmatmul.bf16.gmra.mxu0 %v96
  %v257 = vpop.f32.mrf.mxu0
  %v258 = vadd.f32 %v224, %v257
  %v259 = vpop.f32.mrf.mxu0
  %v260 = vadd.f32 %v226, %v259
  %261 = vmatmul.bf16.gmra.mxu0 %v98
  %v262 = vpop.f32.mrf.mxu0
  %v263 = vadd.f32 %v229, %v262
  %v264 = vpop.f32.mrf.mxu0
  %v265 = vadd.f32 %v231, %v264
  %266 = vmatmul.bf16.gmra.mxu0 %v100
  %v267 = vpop.f32.mrf.mxu0
  %v268 = vadd.f32 %v234, %v267
  %v269 = vpop.f32.mrf.mxu0
  %v270 = vadd.f32 %v236, %v269
  %271 = vmatmul.bf16.gmra.mxu0 %v102
  %v272 = vpop.f32.mrf.mxu0
  %v273 = vadd.f32 %v239, %v272
  %v274 = vpop.f32.mrf.mxu0
  %v275 = vadd.f32 %v241, %v274
  %276 = vdwg.mxu0
  %v277 = vld [vmem:[%s3] sm:$0xff]
  %v278 = vld [vmem:[%s3 + $0x8] sm:$0xff]
  %v279 = vld [vmem:[%s3 + $0x10] sm:$0xff]
  %v280 = vld [vmem:[%s3 + $0x18] sm:$0xff]
  %v281 = vld [vmem:[%s3 + $0x20] sm:$0xff]
  %v282 = vld [vmem:[%s3 + $0x28] sm:$0xff]
  %v283 = vld [vmem:[%s3 + $0x30] sm:$0xff]
  %v284 = vld [vmem:[%s3 + $0x38] sm:$0xff]
  %v285 = vld [vmem:[%s3 + $0x40] sm:$0xff]
  %v286 = vld [vmem:[%s3 + $0x48] sm:$0xff]
  %v287 = vadd.f32 %v253, %v277
  %v288 = vadd.f32 %v255, %v278
  %v289 = vadd.f32 %v258, %v279
  %v290 = vadd.f32 %v260, %v280
  %v291 = vadd.f32 %v263, %v281
  %v292 = vadd.f32 %v265, %v282
  %v293 = vadd.f32 %v268, %v283
  %v294 = vadd.f32 %v270, %v284
  %v295 = vadd.f32 %v273, %v285
  %v296 = vadd.f32 %v275, %v286
  %297 = vst [vmem:[%s4] sm:$0xff] %v287
  %298 = vst [vmem:[%s4 + $0x8] sm:$0xff] %v288
  %299 = vst [vmem:[%s4 + $0x10] sm:$0xff] %v289
  %300 = vst [vmem:[%s4 + $0x18] sm:$0xff] %v290
  %301 = vst [vmem:[%s4 + $0x20] sm:$0xff] %v291
  %302 = vst [vmem:[%s4 + $0x28] sm:$0xff] %v292
  %303 = vst [vmem:[%s4 + $0x30] sm:$0xff] %v293
  %304 = vst [vmem:[%s4 + $0x38] sm:$0xff] %v294
  %305 = vst [vmem:[%s4 + $0x40] sm:$0xff] %v295
  %306 = vst [vmem:[%s4 + $0x48] sm:$0xff] %v296
  // Predicated region
  $region18: #{video_expert_forward.20} parent=0 // pred_check
    _
  $region19: #{video_expert_forward.20} parent=0 // pred_check_branch
    %308 = sbr.rel (0) target = $region21
  $region20: #{video_expert_forward.20} parent=0 // pred_region
    _
  $region21: #{video_expert_forward.20} parent=0 // pred_fallthru
    _
  // Predicated region
  $region22: #{video_expert_forward.20} parent=0 // pred_check
    _
  $region23: #{video_expert_forward.20} parent=0 // pred_check_branch
    %310 = sbr.rel (0) target = $region25
  $region24: #{video_expert_forward.20} parent=0 // pred_region
    _
  $region25: #{video_expert_forward.20} parent=0 // pred_fallthru
    _

// kernel: video_expert_forward.21
$region0: #{video_expert_forward.21}
  #allocation0 [shape = 'u32[]', space=smem, size = 0x4, offset = 0x4, fixed_abs, tag = 'smem constant byte address 0x4 - core index']
  #allocation1 [shape = 'u32[72,128]{1,0:T(1,128)}', space=vmem, size = 0x9000, scoped, tag = 'internal scratch']
  %s0 = inlined_call_operand.vmem [shape: f32[80,128], index: 0, kind: input, shape index: {}]
  %s1 = inlined_call_operand.vmem [shape: f32[1,128], index: 1, kind: input, shape index: {}]
  %s2 = inlined_call_operand.vmem [shape: f32[1,128], index: 2, kind: input, shape index: {}]
  %s3 = inlined_call_operand.vmem [shape: f32[80,128], index: 3, kind: output, shape index: {}]
  %s4 = sld [smem:[#allocation0]]
  $region22: #{video_expert_forward.21} parent=0
    _
  %s6 = ssub.s32 1, %s4
  %s7 = scalar_select 0, %s6, %s4
  // Predicated region
  $region2: #{video_expert_forward.21} parent=0 // pred_check
    _
  $region3: #{video_expert_forward.21} parent=0 // pred_check_branch
    %9 = sbr.rel (0) target = $region5
  $region4: #{video_expert_forward.21} parent=0 // pred_region
    _
  $region5: #{video_expert_forward.21} parent=0 // pred_fallthru
    _
  // Predicated region
  $region6: #{video_expert_forward.21} parent=0 // pred_check
    _
  $region7: #{video_expert_forward.21} parent=0 // pred_check_branch
    %11 = sbr.rel (0) target = $region9
  $region8: #{video_expert_forward.21} parent=0 // pred_region
    _
  $region9: #{video_expert_forward.21} parent=0 // pred_fallthru
    _
  // Predicated region
  $region10: #{video_expert_forward.21} parent=0 // pred_check
    _
  $region11: #{video_expert_forward.21} parent=0 // pred_check_branch
    %13 = sbr.rel (0) target = $region13
  $region12: #{video_expert_forward.21} parent=0 // pred_region
    _
  $region13: #{video_expert_forward.21} parent=0 // pred_fallthru
    _
  %v14 = vld [vmem:[%s0] sm:$0xff]
  %v15 = vld [vmem:[%s0 + $0x8] sm:$0xff]
  %v16 = vld [vmem:[%s0 + $0x10] sm:$0xff]
  %v17 = vld [vmem:[%s0 + $0x18] sm:$0xff]
  %v18 = vld [vmem:[%s0 + $0x20] sm:$0xff]
  %v19 = vld [vmem:[%s0 + $0x28] sm:$0xff]
  %v20 = vld [vmem:[%s0 + $0x30] sm:$0xff]
  %v21 = vld [vmem:[%s0 + $0x38] sm:$0xff]
  %v22 = vld [vmem:[%s0 + $0x40] sm:$0xff]
  %v23 = vld [vmem:[%s0 + $0x48] sm:$0xff]
  %24 = vadd.xlane.f32.xlu0 %v14
  %v25 = vpop.xlane.xlu0 %24
  %26 = vadd.xlane.f32.xlu0 %v15
  %v27 = vpop.xlane.xlu0 %26
  %28 = vadd.xlane.f32.xlu0 %v16
  %v29 = vpop.xlane.xlu0 %28
  %30 = vadd.xlane.f32.xlu0 %v17
  %v31 = vpop.xlane.xlu0 %30
  %32 = vadd.xlane.f32.xlu0 %v18
  %v33 = vpop.xlane.xlu0 %32
  %34 = vadd.xlane.f32.xlu0 %v19
  %v35 = vpop.xlane.xlu0 %34
  %36 = vadd.xlane.f32.xlu0 %v20
  %v37 = vpop.xlane.xlu0 %36
  %38 = vadd.xlane.f32.xlu0 %v21
  %v39 = vpop.xlane.xlu0 %38
  %40 = vadd.xlane.f32.xlu0 %v22
  %v41 = vpop.xlane.xlu0 %40
  %42 = vadd.xlane.f32.xlu0 %v23
  %v43 = vpop.xlane.xlu0 %42
  %v44 = vrcp.pop 128.0
  %v45 = vmul.f32 128.0, %v44
  %v46 = vsub.f32 1.0, %v45
  %v47 = vmul.f32 %v44, %v46
  %v48 = vadd.f32 %v44, %v47
  %vm49 = vweird.f32 %v44
  %v50 = vsel %vm49, %v44, %v48
  %v51 = vmul.f32 %v25, %v50
  %v52 = vmul.f32 %v27, %v50
  %v53 = vmul.f32 %v29, %v50
  %v54 = vmul.f32 %v31, %v50
  %v55 = vmul.f32 %v33, %v50
  %v56 = vmul.f32 %v35, %v50
  %v57 = vmul.f32 %v37, %v50
  %v58 = vmul.f32 %v39, %v50
  %v59 = vmul.f32 %v41, %v50
  %v60 = vmul.f32 %v43, %v50
  %v61 = vsub.f32 %v14, %v51
  %v62 = vsub.f32 %v15, %v52
  %v63 = vsub.f32 %v16, %v53
  %v64 = vsub.f32 %v17, %v54
  %v65 = vsub.f32 %v18, %v55
  %v66 = vsub.f32 %v19, %v56
  %v67 = vsub.f32 %v20, %v57
  %v68 = vsub.f32 %v21, %v58
  %v69 = vsub.f32 %v22, %v59
  %v70 = vsub.f32 %v23, %v60
  %v71 = vmul.f32 %v61, %v61
  %v72 = vmul.f32 %v62, %v62
  %v73 = vmul.f32 %v63, %v63
  %v74 = vmul.f32 %v64, %v64
  %v75 = vmul.f32 %v65, %v65
  %v76 = vmul.f32 %v66, %v66
  %v77 = vmul.f32 %v67, %v67
  %v78 = vmul.f32 %v68, %v68
  %v79 = vmul.f32 %v69, %v69
  %v80 = vmul.f32 %v70, %v70
  %81 = vadd.xlane.f32.xlu0 %v71
  %v82 = vpop.xlane.xlu0 %81
  %83 = vadd.xlane.f32.xlu0 %v72
  %v84 = vpop.xlane.xlu0 %83
  %85 = vadd.xlane.f32.xlu0 %v73
  %v86 = vpop.xlane.xlu0 %85
  %87 = vadd.xlane.f32.xlu0 %v74
  %v88 = vpop.xlane.xlu0 %87
  %89 = vadd.xlane.f32.xlu0 %v75
  %v90 = vpop.xlane.xlu0 %89
  %91 = vadd.xlane.f32.xlu0 %v76
  %v92 = vpop.xlane.xlu0 %91
  %93 = vadd.xlane.f32.xlu0 %v77
  %v94 = vpop.xlane.xlu0 %93
  %95 = vadd.xlane.f32.xlu0 %v78
  %v96 = vpop.xlane.xlu0 %95
  %97 = vadd.xlane.f32.xlu0 %v79
  %v98 = vpop.xlane.xlu0 %97
  %99 = vadd.xlane.f32.xlu0 %v80
  %v100 = vpop.xlane.xlu0 %99
  %v101 = vmul.f32 %v82, %v50
  %v102 = vmul.f32 %v84, %v50
  %v103 = vmul.f32 %v86, %v50
  %v104 = vmul.f32 %v88, %v50
  %v105 = vmul.f32 %v90, %v50
  %v106 = vmul.f32 %v92, %v50
  %v107 = vmul.f32 %v94, %v50
  %v108 = vmul.f32 %v96, %v50
  %v109 = vmul.f32 %v98, %v50
  %v110 = vmul.f32 %v100, %v50
  %v111 = vadd.f32 %v101, 1e-05
  %v112 = vadd.f32 %v102, 1e-05
  %v113 = vadd.f32 %v103, 1e-05
  %v114 = vadd.f32 %v104, 1e-05
  %v115 = vadd.f32 %v105, 1e-05
  %v116 = vadd.f32 %v106, 1e-05
  %v117 = vadd.f32 %v107, 1e-05
  %v118 = vadd.f32 %v108, 1e-05
  %v119 = vadd.f32 %v109, 1e-05
  %v120 = vadd.f32 %v110, 1e-05
  %v121 = vrsqrt.pop %v111
  %v122 = vmul.f32 %v121, %v111
  %v123 = vmul.f32 %v122, %v121
  %v124 = vmul.f32 0.5, %v123
  %v125 = vsub.f32 1.5, %v124
  %v126 = vmul.f32 %v121, %v125
  %vm127 = vweird.f32 %v111
  %vm128 = vweird.f32 %v121
  %vm129 = vmor %vm127, %vm128
  %v130 = vsel %vm129, %v121, %v126
  %v131 = vrsqrt.pop %v112
  %v132 = vmul.f32 %v131, %v112
  %v133 = vmul.f32 %v132, %v131
  %v134 = vmul.f32 0.5, %v133
  %v135 = vsub.f32 1.5, %v134
  %v136 = vmul.f32 %v131, %v135
  %vm137 = vweird.f32 %v112
  %vm138 = vweird.f32 %v131
  %vm139 = vmor %vm137, %vm138
  %v140 = vsel %vm139, %v131, %v136
  %v141 = vrsqrt.pop %v113
  %v142 = vmul.f32 %v141, %v113
  %v143 = vmul.f32 %v142, %v141
  %v144 = vmul.f32 0.5, %v143
  %v145 = vsub.f32 1.5, %v144
  %v146 = vmul.f32 %v141, %v145
  %vm147 = vweird.f32 %v113
  %vm148 = vweird.f32 %v141
  %vm149 = vmor %vm147, %vm148
  %v150 = vsel %vm149, %v141, %v146
  %v151 = vrsqrt.pop %v114
  %v152 = vmul.f32 %v151, %v114
  %v153 = vmul.f32 %v152, %v151
  %v154 = vmul.f32 0.5, %v153
  %v155 = vsub.f32 1.5, %v154
  %v156 = vmul.f32 %v151, %v155
  %vm157 = vweird.f32 %v114
  %vm158 = vweird.f32 %v151
  %vm159 = vmor %vm157, %vm158
  %v160 = vsel %vm159, %v151, %v156
  %v161 = vrsqrt.pop %v115
  %v162 = vmul.f32 %v161, %v115
  %v163 = vmul.f32 %v162, %v161
  %v164 = vmul.f32 0.5, %v163
  %v165 = vsub.f32 1.5, %v164
  %v166 = vmul.f32 %v161, %v165
  %vm167 = vweird.f32 %v115
  %vm168 = vweird.f32 %v161
  %vm169 = vmor %vm167, %vm168
  %v170 = vsel %vm169, %v161, %v166
  %v171 = vrsqrt.pop %v116
  %v172 = vmul.f32 %v171, %v116
  %v173 = vmul.f32 %v172, %v171
  %v174 = vmul.f32 0.5, %v173
  %v175 = vsub.f32 1.5, %v174
  %v176 = vmul.f32 %v171, %v175
  %vm177 = vweird.f32 %v116
  %vm178 = vweird.f32 %v171
  %vm179 = vmor %vm177, %vm178
  %v180 = vsel %vm179, %v171, %v176
  %v181 = vrsqrt.pop %v117
  %v182 = vmul.f32 %v181, %v117
  %v183 = vmul.f32 %v182, %v181
  %v184 = vmul.f32 0.5, %v183
  %v185 = vsub.f32 1.5, %v184
  %v186 = vmul.f32 %v181, %v185
  %vm187 = vweird.f32 %v117
  %vm188 = vweird.f32 %v181
  %vm189 = vmor %vm187, %vm188
  %v190 = vsel %vm189, %v181, %v186
  %v191 = vrsqrt.pop %v118
  %v192 = vmul.f32 %v191, %v118
  %v193 = vmul.f32 %v192, %v191
  %v194 = vmul.f32 0.5, %v193
  %v195 = vsub.f32 1.5, %v194
  %v196 = vmul.f32 %v191, %v195
  %vm197 = vweird.f32 %v118
  %vm198 = vweird.f32 %v191
  %vm199 = vmor %vm197, %vm198
  %v200 = vsel %vm199, %v191, %v196
  %v201 = vrsqrt.pop %v119
  %v202 = vmul.f32 %v201, %v119
  %v203 = vmul.f32 %v202, %v201
  %v204 = vmul.f32 0.5, %v203
  %v205 = vsub.f32 1.5, %v204
  %v206 = vmul.f32 %v201, %v205
  %vm207 = vweird.f32 %v119
  %vm208 = vweird.f32 %v201
  %vm209 = vmor %vm207, %vm208
  %v210 = vsel %vm209, %v201, %v206
  %v211 = vrsqrt.pop %v120
  %v212 = vmul.f32 %v211, %v120
  %v213 = vmul.f32 %v212, %v211
  %v214 = vmul.f32 0.5, %v213
  %v215 = vsub.f32 1.5, %v214
  %v216 = vmul.f32 %v211, %v215
  %vm217 = vweird.f32 %v120
  %vm218 = vweird.f32 %v211
  %vm219 = vmor %vm217, %vm218
  %v220 = vsel %vm219, %v211, %v216
  %v221 = vmul.f32 %v61, %v130
  %v222 = vmul.f32 %v62, %v140
  %v223 = vmul.f32 %v63, %v150
  %v224 = vmul.f32 %v64, %v160
  %v225 = vmul.f32 %v65, %v170
  %v226 = vmul.f32 %v66, %v180
  %v227 = vmul.f32 %v67, %v190
  %v228 = vmul.f32 %v68, %v200
  %v229 = vmul.f32 %v69, %v210
  %v230 = vmul.f32 %v70, %v220
  %v231 = vld [vmem:[%s1] sm:$0x1]
  %v233 = vperm.slane %v231, 0
  %v235 = vmul.f32 %v221, %v233
  %v236 = vmul.f32 %v222, %v233
  %v237 = vmul.f32 %v223, %v233
  %v238 = vmul.f32 %v224, %v233
  %v239 = vmul.f32 %v225, %v233
  %v240 = vmul.f32 %v226, %v233
  %v241 = vmul.f32 %v227, %v233
  %v242 = vmul.f32 %v228, %v233
  %v243 = vmul.f32 %v229, %v233
  %v244 = vmul.f32 %v230, %v233
  %v245 = vld [vmem:[%s2] sm:$0x1]
  %v247 = vperm.slane %v245, 0
  %v249 = vadd.f32 %v235, %v247
  %v250 = vadd.f32 %v236, %v247
  %v251 = vadd.f32 %v237, %v247
  %v252 = vadd.f32 %v238, %v247
  %v253 = vadd.f32 %v239, %v247
  %v254 = vadd.f32 %v240, %v247
  %v255 = vadd.f32 %v241, %v247
  %v256 = vadd.f32 %v242, %v247
  %v257 = vadd.f32 %v243, %v247
  %v258 = vadd.f32 %v244, %v247
  %259 = vst [vmem:[%s3] sm:$0xff] %v249
  %260 = vst [vmem:[%s3 + $0x8] sm:$0xff] %v250
  %261 = vst [vmem:[%s3 + $0x10] sm:$0xff] %v251
  %262 = vst [vmem:[%s3 + $0x18] sm:$0xff] %v252
  %263 = vst [vmem:[%s3 + $0x20] sm:$0xff] %v253
  %264 = vst [vmem:[%s3 + $0x28] sm:$0xff] %v254
  %265 = vst [vmem:[%s3 + $0x30] sm:$0xff] %v255
  %266 = vst [vmem:[%s3 + $0x38] sm:$0xff] %v256
  %267 = vst [vmem:[%s3 + $0x40] sm:$0xff] %v257
  %268 = vst [vmem:[%s3 + $0x48] sm:$0xff] %v258
  // Predicated region
  $region14: #{video_expert_forward.21} parent=0 // pred_check
    _
  $region15: #{video_expert_forward.21} parent=0 // pred_check_branch
    %270 = sbr.rel (0) target = $region17
  $region16: #{video_expert_forward.21} parent=0 // pred_region
    _
  $region17: #{video_expert_forward.21} parent=0 // pred_fallthru
    _
  // Predicated region
  $region18: #{video_expert_forward.21} parent=0 // pred_check
    _
  $region19: #{video_expert_forward.21} parent=0 // pred_check_branch
    %272 = sbr.rel (0) target = $region21
  $region20: #{video_expert_forward.21} parent=0 // pred_region
    _
  $region21: #{video_expert_forward.21} parent=0 // pred_fallthru
    _

// kernel: video_expert_forward.22
$region0: #{video_expert_forward.22}
  #allocation0 [shape = 'u32[]', space=smem, size = 0x4, offset = 0x4, fixed_abs, tag = 'smem constant byte address 0x4 - core index']
  #allocation1 [shape = 'u32[72,128]{1,0:T(1,128)}', space=vmem, size = 0x9000, scoped, tag = 'internal scratch']
  %s0 = inlined_call_operand.vmem [shape: f32[32,128], index: 0, kind: input, shape index: {}]
  %s1 = inlined_call_operand.vmem [shape: bf16[128,384], index: 1, kind: input, shape index: {}]
  %s2 = inlined_call_operand.vmem [shape: f32[1,384], index: 2, kind: input, shape index: {}]
  %s3 = inlined_call_operand.vmem [shape: f32[1,128], index: 3, kind: input, shape index: {}]
  %s4 = inlined_call_operand.vmem [shape: f32[1,128], index: 4, kind: input, shape index: {}]
  %s5 = inlined_call_operand.vmem [shape: bf16[32,384], index: 5, kind: output, shape index: {}]
  %s6 = sld [smem:[#allocation0]]
  $region30: #{video_expert_forward.22} parent=0
    _
  %s8 = ssub.s32 1, %s6
  %s9 = scalar_select 0, %s8, %s6
  // Predicated region
  $region2: #{video_expert_forward.22} parent=0 // pred_check
    _
  $region3: #{video_expert_forward.22} parent=0 // pred_check_branch
    %11 = sbr.rel (0) target = $region5
  $region4: #{video_expert_forward.22} parent=0 // pred_region
    _
  $region5: #{video_expert_forward.22} parent=0 // pred_fallthru
    _
  // Predicated region
  $region6: #{video_expert_forward.22} parent=0 // pred_check
    _
  $region7: #{video_expert_forward.22} parent=0 // pred_check_branch
    %13 = sbr.rel (0) target = $region9
  $region8: #{video_expert_forward.22} parent=0 // pred_region
    _
  $region9: #{video_expert_forward.22} parent=0 // pred_fallthru
    _
  // Predicated region
  $region10: #{video_expert_forward.22} parent=0 // pred_check
    _
  $region11: #{video_expert_forward.22} parent=0 // pred_check_branch
    %15 = sbr.rel (0) target = $region13
  $region12: #{video_expert_forward.22} parent=0 // pred_region
    _
  $region13: #{video_expert_forward.22} parent=0 // pred_fallthru
    _
  // Predicated region
  $region14: #{video_expert_forward.22} parent=0 // pred_check
    _
  $region15: #{video_expert_forward.22} parent=0 // pred_check_branch
    %17 = sbr.rel (0) target = $region17
  $region16: #{video_expert_forward.22} parent=0 // pred_region
    _
  $region17: #{video_expert_forward.22} parent=0 // pred_fallthru
    _
  // Predicated region
  $region18: #{video_expert_forward.22} parent=0 // pred_check
    _
  $region19: #{video_expert_forward.22} parent=0 // pred_check_branch
    %19 = sbr.rel (0) target = $region21
  $region20: #{video_expert_forward.22} parent=0 // pred_region
    _
  $region21: #{video_expert_forward.22} parent=0 // pred_fallthru
    _
  %v20 = vld [vmem:[%s0] sm:$0xff]
  %v21 = vld [vmem:[%s0 + $0x8] sm:$0xff]
  %v22 = vld [vmem:[%s0 + $0x10] sm:$0xff]
  %v23 = vld [vmem:[%s0 + $0x18] sm:$0xff]
  %24 = vadd.xlane.f32.xlu0 %v20
  %v25 = vpop.xlane.xlu0 %24
  %26 = vadd.xlane.f32.xlu0 %v21
  %v27 = vpop.xlane.xlu0 %26
  %28 = vadd.xlane.f32.xlu0 %v22
  %v29 = vpop.xlane.xlu0 %28
  %30 = vadd.xlane.f32.xlu0 %v23
  %v31 = vpop.xlane.xlu0 %30
  %v32 = vrcp.pop 128.0
  %v33 = vmul.f32 128.0, %v32
  %v34 = vsub.f32 1.0, %v33
  %v35 = vmul.f32 %v32, %v34
  %v36 = vadd.f32 %v32, %v35
  %vm37 = vweird.f32 %v32
  %v38 = vsel %vm37, %v32, %v36
  %v39 = vmul.f32 %v25, %v38
  %v40 = vmul.f32 %v27, %v38
  %v41 = vmul.f32 %v29, %v38
  %v42 = vmul.f32 %v31, %v38
  %v43 = vmul.f32 %v20, %v20
  %v44 = vmul.f32 %v21, %v21
  %v45 = vmul.f32 %v22, %v22
  %v46 = vmul.f32 %v23, %v23
  %47 = vadd.xlane.f32.xlu0 %v43
  %v48 = vpop.xlane.xlu0 %47
  %49 = vadd.xlane.f32.xlu0 %v44
  %v50 = vpop.xlane.xlu0 %49
  %51 = vadd.xlane.f32.xlu0 %v45
  %v52 = vpop.xlane.xlu0 %51
  %53 = vadd.xlane.f32.xlu0 %v46
  %v54 = vpop.xlane.xlu0 %53
  %v55 = vmul.f32 %v48, %v38
  %v56 = vmul.f32 %v50, %v38
  %v57 = vmul.f32 %v52, %v38
  %v58 = vmul.f32 %v54, %v38
  %v59 = vmul.f32 %v39, %v39
  %v60 = vmul.f32 %v40, %v40
  %v61 = vmul.f32 %v41, %v41
  %v62 = vmul.f32 %v42, %v42
  %v63 = vsub.f32 %v55, %v59
  %v64 = vsub.f32 %v56, %v60
  %v65 = vsub.f32 %v57, %v61
  %v66 = vsub.f32 %v58, %v62
  %v67 = vsub.f32 %v20, %v39
  %v68 = vsub.f32 %v21, %v40
  %v69 = vsub.f32 %v22, %v41
  %v70 = vsub.f32 %v23, %v42
  %v71 = vadd.f32 %v63, 1e-05
  %v72 = vadd.f32 %v64, 1e-05
  %v73 = vadd.f32 %v65, 1e-05
  %v74 = vadd.f32 %v66, 1e-05
  %v75 = vrsqrt.pop %v71
  %v76 = vmul.f32 %v75, %v71
  %v77 = vmul.f32 %v76, %v75
  %v78 = vmul.f32 0.5, %v77
  %v79 = vsub.f32 1.5, %v78
  %v80 = vmul.f32 %v75, %v79
  %vm81 = vweird.f32 %v71
  %vm82 = vweird.f32 %v75
  %vm83 = vmor %vm81, %vm82
  %v84 = vsel %vm83, %v75, %v80
  %v85 = vrsqrt.pop %v72
  %v86 = vmul.f32 %v85, %v72
  %v87 = vmul.f32 %v86, %v85
  %v88 = vmul.f32 0.5, %v87
  %v89 = vsub.f32 1.5, %v88
  %v90 = vmul.f32 %v85, %v89
  %vm91 = vweird.f32 %v72
  %vm92 = vweird.f32 %v85
  %vm93 = vmor %vm91, %vm92
  %v94 = vsel %vm93, %v85, %v90
  %v95 = vrsqrt.pop %v73
  %v96 = vmul.f32 %v95, %v73
  %v97 = vmul.f32 %v96, %v95
  %v98 = vmul.f32 0.5, %v97
  %v99 = vsub.f32 1.5, %v98
  %v100 = vmul.f32 %v95, %v99
  %vm101 = vweird.f32 %v73
  %vm102 = vweird.f32 %v95
  %vm103 = vmor %vm101, %vm102
  %v104 = vsel %vm103, %v95, %v100
  %v105 = vrsqrt.pop %v74
  %v106 = vmul.f32 %v105, %v74
  %v107 = vmul.f32 %v106, %v105
  %v108 = vmul.f32 0.5, %v107
  %v109 = vsub.f32 1.5, %v108
  %v110 = vmul.f32 %v105, %v109
  %vm111 = vweird.f32 %v74
  %vm112 = vweird.f32 %v105
  %vm113 = vmor %vm111, %vm112
  %v114 = vsel %vm113, %v105, %v110
  %v115 = vmul.f32 %v67, %v84
  %v116 = vmul.f32 %v68, %v94
  %v117 = vmul.f32 %v69, %v104
  %v118 = vmul.f32 %v70, %v114
  %v119 = vld [vmem:[%s3] sm:$0x1]
  %v121 = vperm.slane %v119, 0
  %v123 = vmul.f32 %v115, %v121
  %v124 = vmul.f32 %v116, %v121
  %v125 = vmul.f32 %v117, %v121
  %v126 = vmul.f32 %v118, %v121
  %v127 = vld [vmem:[%s4] sm:$0x1]
  %v129 = vperm.slane %v127, 0
  %v131 = vadd.f32 %v123, %v129
  %v132 = vadd.f32 %v124, %v129
  %v133 = vadd.f32 %v125, %v129
  %v134 = vadd.f32 %v126, %v129
  %v135 = vpack.c.bf16 %v132, %v131
  %v136 = vpack.c.bf16 %v134, %v133
  %v137 = vld [vmem:[%s1] sm:$0xff]
  %v138 = vld [vmem:[%s1 + $0x8] sm:$0xf]
  %v139 = vld [vmem:[%s1 + $0xc] sm:$0xff]
  %v140 = vld [vmem:[%s1 + $0x14] sm:$0xf]
  %v141 = vld [vmem:[%s1 + $0x18] sm:$0xff]
  %v142 = vld [vmem:[%s1 + $0x20] sm:$0xf]
  %v143 = vld [vmem:[%s1 + $0x24] sm:$0xff]
  %v144 = vld [vmem:[%s1 + $0x2c] sm:$0xf]
  %v145 = vld [vmem:[%s1 + $0x30] sm:$0xff]
  %v146 = vld [vmem:[%s1 + $0x38] sm:$0xf]
  %v147 = vld [vmem:[%s1 + $0x3c] sm:$0xff]
  %v148 = vld [vmem:[%s1 + $0x44] sm:$0xf]
  %v149 = vld [vmem:[%s1 + $0x48] sm:$0xff]
  %v150 = vld [vmem:[%s1 + $0x50] sm:$0xf]
  %v151 = vld [vmem:[%s1 + $0x54] sm:$0xff]
  %v152 = vld [vmem:[%s1 + $0x5c] sm:$0xf]
  %v153 = vld [vmem:[%s1 + $0x60] sm:$0xff]
  %v154 = vld [vmem:[%s1 + $0x68] sm:$0xf]
  %v155 = vld [vmem:[%s1 + $0x6c] sm:$0xff]
  %v156 = vld [vmem:[%s1 + $0x74] sm:$0xf]
  %v157 = vld [vmem:[%s1 + $0x78] sm:$0xff]
  %v158 = vld [vmem:[%s1 + $0x80] sm:$0xf]
  %v159 = vld [vmem:[%s1 + $0x84] sm:$0xff]
  %v160 = vld [vmem:[%s1 + $0x8c] sm:$0xf]
  %v161 = vld [vmem:[%s1 + $0x90] sm:$0xff]
  %v162 = vld [vmem:[%s1 + $0x98] sm:$0xf]
  %v163 = vld [vmem:[%s1 + $0x9c] sm:$0xff]
  %v164 = vld [vmem:[%s1 + $0xa4] sm:$0xf]
  %v165 = vld [vmem:[%s1 + $0xa8] sm:$0xff]
  %v166 = vld [vmem:[%s1 + $0xb0] sm:$0xf]
  %v167 = vld [vmem:[%s1 + $0xb4] sm:$0xff]
  %v168 = vld [vmem:[%s1 + $0xbc] sm:$0xf]
  %v169 = vld [vmem:[%s2] sm:$0x7]
  %v171 = vperm.slane %v169, 0
  %v172 = vperm.slane %v169, 1
  %v173 = vperm.slane %v169, 2
  %v209 = vunpack.c.l.b16 %v137
  %v210 = vunpack.c.h.b16 %v137
  %v211 = vunpack.c.l.b16 %v138
  %v212 = vunpack.c.l.b16 %v139
  %v213 = vunpack.c.h.b16 %v139
  %v214 = vunpack.c.l.b16 %v140
  %v215 = vunpack.c.l.b16 %v141
  %v216 = vunpack.c.h.b16 %v141
  %v217 = vunpack.c.l.b16 %v142
  %v218 = vunpack.c.l.b16 %v143
  %v219 = vunpack.c.h.b16 %v143
  %v220 = vunpack.c.l.b16 %v144
  %v221 = vunpack.c.l.b16 %v145
  %v222 = vunpack.c.h.b16 %v145
  %v223 = vunpack.c.l.b16 %v146
  %v224 = vunpack.c.l.b16 %v147
  %v225 = vunpack.c.h.b16 %v147
  %v226 = vunpack.c.l.b16 %v148
  %v227 = vunpack.c.l.b16 %v149
  %v228 = vunpack.c.h.b16 %v149
  %v229 = vunpack.c.l.b16 %v150
  %v230 = vunpack.c.l.b16 %v151
  %v231 = vunpack.c.h.b16 %v151
  %v232 = vunpack.c.l.b16 %v152
  %v233 = vunpack.c.l.b16 %v153
  %v234 = vunpack.c.h.b16 %v153
  %v235 = vunpack.c.l.b16 %v154
  %v236 = vunpack.c.l.b16 %v155
  %v237 = vunpack.c.h.b16 %v155
  %v238 = vunpack.c.l.b16 %v156
  %v239 = vunpack.c.l.b16 %v157
  %v240 = vunpack.c.h.b16 %v157
  %v241 = vunpack.c.l.b16 %v158
  %v242 = vunpack.c.l.b16 %v159
  %v243 = vunpack.c.h.b16 %v159
  %v244 = vunpack.c.l.b16 %v160
  %v245 = vunpack.c.l.b16 %v161
  %v246 = vunpack.c.h.b16 %v161
  %v247 = vunpack.c.l.b16 %v162
  %v248 = vunpack.c.l.b16 %v163
  %v249 = vunpack.c.h.b16 %v163
  %v250 = vunpack.c.l.b16 %v164
  %v251 = vunpack.c.l.b16 %v165
  %v252 = vunpack.c.h.b16 %v165
  %v253 = vunpack.c.l.b16 %v166
  %v254 = vunpack.c.l.b16 %v167
  %v255 = vunpack.c.h.b16 %v167
  %v256 = vunpack.c.l.b16 %v168
  %v257 = vpack.c.b16 %v212, %v209
  %v258 = vpack.c.b16 %v213, %v210
  %v259 = vpack.c.b16 %v214, %v211
  %v260 = vpack.c.b16 %v218, %v215
  %v261 = vpack.c.b16 %v219, %v216
  %v262 = vpack.c.b16 %v220, %v217
  %v263 = vpack.c.b16 %v224, %v221
  %v264 = vpack.c.b16 %v225, %v222
  %v265 = vpack.c.b16 %v226, %v223
  %v266 = vpack.c.b16 %v230, %v227
  %v267 = vpack.c.b16 %v231, %v228
  %v268 = vpack.c.b16 %v232, %v229
  %v269 = vpack.c.b16 %v236, %v233
  %v270 = vpack.c.b16 %v237, %v234
  %v271 = vpack.c.b16 %v238, %v235
  %v272 = vpack.c.b16 %v242, %v239
  %v273 = vpack.c.b16 %v243, %v240
  %v274 = vpack.c.b16 %v244, %v241
  %v275 = vpack.c.b16 %v248, %v245
  %v276 = vpack.c.b16 %v249, %v246
  %v277 = vpack.c.b16 %v250, %v247
  %v278 = vpack.c.b16 %v254, %v251
  %v279 = vpack.c.b16 %v255, %v252
  %v280 = vpack.c.b16 %v256, %v253
  %305 = vmatpush.bf16.msra.mxu0 %v278
  %306 = vmatpush.bf16.msra.mxu0 %v275
  %307 = vmatpush.bf16.msra.mxu0 %v272
  %308 = vmatpush.bf16.msra.mxu0 %v269
  %309 = vmatpush.bf16.msra.mxu0 %v266
  %310 = vmatpush.bf16.msra.mxu0 %v263
  %311 = vmatpush.bf16.msra.mxu0 %v260
  %312 = vmatpush.bf16.msra.mxu0 %v257
  %313 = vmatmul.bf16.gmra.mxu0 %v135
  %v314 = vpop.f32.mrf.mxu0
  %v315 = vadd.f32 %v171, %v314
  %v316 = vpop.f32.mrf.mxu0
  %v317 = vadd.f32 %v171, %v316
  %318 = vmatmul.bf16.gmra.mxu0 %v136
  %v319 = vpop.f32.mrf.mxu0
  %v320 = vadd.f32 %v171, %v319
  %v321 = vpop.f32.mrf.mxu0
  %v322 = vadd.f32 %v171, %v321
  %323 = vdwg.mxu0
  %324 = vmatpush.bf16.msra.mxu0 %v279
  %325 = vmatpush.bf16.msra.mxu0 %v276
  %326 = vmatpush.bf16.msra.mxu0 %v273
  %327 = vmatpush.bf16.msra.mxu0 %v270
  %328 = vmatpush.bf16.msra.mxu0 %v267
  %329 = vmatpush.bf16.msra.mxu0 %v264
  %330 = vmatpush.bf16.msra.mxu0 %v261
  %331 = vmatpush.bf16.msra.mxu0 %v258
  %332 = vmatmul.bf16.gmra.mxu0 %v135
  %v333 = vpop.f32.mrf.mxu0
  %v334 = vadd.f32 %v172, %v333
  %v335 = vpop.f32.mrf.mxu0
  %v336 = vadd.f32 %v172, %v335
  %337 = vmatmul.bf16.gmra.mxu0 %v136
  %v338 = vpop.f32.mrf.mxu0
  %v339 = vadd.f32 %v172, %v338
  %v340 = vpop.f32.mrf.mxu0
  %v341 = vadd.f32 %v172, %v340
  %342 = vdwg.mxu0
  %343 = vmatpush.bf16.msra.mxu0 %v280
  %344 = vmatpush.bf16.msra.mxu0 %v277
  %345 = vmatpush.bf16.msra.mxu0 %v274
  %346 = vmatpush.bf16.msra.mxu0 %v271
  %347 = vmatpush.bf16.msra.mxu0 %v268
  %348 = vmatpush.bf16.msra.mxu0 %v265
  %349 = vmatpush.bf16.msra.mxu0 %v262
  %350 = vmatpush.bf16.msra.mxu0 %v259
  %351 = vmatmul.bf16.gmra.mxu0 %v135
  %v352 = vpop.f32.mrf.mxu0
  %v353 = vadd.f32 %v173, %v352
  %v354 = vpop.f32.mrf.mxu0
  %v355 = vadd.f32 %v173, %v354
  %356 = vmatmul.bf16.gmra.mxu0 %v136
  %v357 = vpop.f32.mrf.mxu0
  %v358 = vadd.f32 %v173, %v357
  %v359 = vpop.f32.mrf.mxu0
  %v360 = vadd.f32 %v173, %v359
  %361 = vdwg.mxu0
  %v362 = vpack.c.bf16 %v334, %v315
  %v363 = vpack.c.bf16 %v353, %v353
  %v364 = vpack.c.bf16 %v336, %v317
  %v365 = vpack.c.bf16 %v355, %v355
  %v366 = vpack.c.bf16 %v339, %v320
  %v367 = vpack.c.bf16 %v358, %v358
  %v368 = vpack.c.bf16 %v341, %v322
  %v369 = vpack.c.bf16 %v360, %v360
  %370 = vst [vmem:[%s5] sm:$0xff] %v362
  %371 = vst [vmem:[%s5 + $0x8] sm:$0xf] %v363
  %372 = vst [vmem:[%s5 + $0xc] sm:$0xff] %v364
  %373 = vst [vmem:[%s5 + $0x14] sm:$0xf] %v365
  %374 = vst [vmem:[%s5 + $0x18] sm:$0xff] %v366
  %375 = vst [vmem:[%s5 + $0x20] sm:$0xf] %v367
  %376 = vst [vmem:[%s5 + $0x24] sm:$0xff] %v368
  %377 = vst [vmem:[%s5 + $0x2c] sm:$0xf] %v369
  // Predicated region
  $region22: #{video_expert_forward.22} parent=0 // pred_check
    _
  $region23: #{video_expert_forward.22} parent=0 // pred_check_branch
    %379 = sbr.rel (0) target = $region25
  $region24: #{video_expert_forward.22} parent=0 // pred_region
    _
  $region25: #{video_expert_forward.22} parent=0 // pred_fallthru
    _
  // Predicated region
  $region26: #{video_expert_forward.22} parent=0 // pred_check
    _
  $region27: #{video_expert_forward.22} parent=0 // pred_check_branch
    %381 = sbr.rel (0) target = $region29
  $region28: #{video_expert_forward.22} parent=0 // pred_region
    _
  $region29: #{video_expert_forward.22} parent=0 // pred_fallthru
    _

// kernel: video_expert_forward.24
$region0: #{video_expert_forward.24}
  #allocation0 [shape = 'u32[]', space=smem, size = 0x4, offset = 0x4, fixed_abs, tag = 'smem constant byte address 0x4 - core index']
  #allocation1 [shape = 'u32[72,128]{1,0:T(1,128)}', space=vmem, size = 0x9000, scoped, tag = 'internal scratch']
  %s0 = inlined_call_operand.vmem [shape: bf16[32,128], index: 0, kind: input, shape index: {}]
  %s1 = inlined_call_operand.vmem [shape: bf16[128,128], index: 1, kind: input, shape index: {}]
  %s2 = inlined_call_operand.vmem [shape: f32[1,128], index: 2, kind: input, shape index: {}]
  %s3 = inlined_call_operand.vmem [shape: f32[32,128], index: 3, kind: input, shape index: {}]
  %s4 = inlined_call_operand.vmem [shape: f32[32,128], index: 4, kind: output, shape index: {}]
  %s5 = sld [smem:[#allocation0]]
  $region26: #{video_expert_forward.24} parent=0
    _
  %s7 = ssub.s32 1, %s5
  %s8 = scalar_select 0, %s7, %s5
  // Predicated region
  $region2: #{video_expert_forward.24} parent=0 // pred_check
    _
  $region3: #{video_expert_forward.24} parent=0 // pred_check_branch
    %10 = sbr.rel (0) target = $region5
  $region4: #{video_expert_forward.24} parent=0 // pred_region
    _
  $region5: #{video_expert_forward.24} parent=0 // pred_fallthru
    _
  // Predicated region
  $region6: #{video_expert_forward.24} parent=0 // pred_check
    _
  $region7: #{video_expert_forward.24} parent=0 // pred_check_branch
    %12 = sbr.rel (0) target = $region9
  $region8: #{video_expert_forward.24} parent=0 // pred_region
    _
  $region9: #{video_expert_forward.24} parent=0 // pred_fallthru
    _
  // Predicated region
  $region10: #{video_expert_forward.24} parent=0 // pred_check
    _
  $region11: #{video_expert_forward.24} parent=0 // pred_check_branch
    %14 = sbr.rel (0) target = $region13
  $region12: #{video_expert_forward.24} parent=0 // pred_region
    _
  $region13: #{video_expert_forward.24} parent=0 // pred_fallthru
    _
  // Predicated region
  $region14: #{video_expert_forward.24} parent=0 // pred_check
    _
  $region15: #{video_expert_forward.24} parent=0 // pred_check_branch
    %16 = sbr.rel (0) target = $region17
  $region16: #{video_expert_forward.24} parent=0 // pred_region
    _
  $region17: #{video_expert_forward.24} parent=0 // pred_fallthru
    _
  %v17 = vld [vmem:[%s0] sm:$0xf]
  %v18 = vld [vmem:[%s0 + $0x4] sm:$0xf]
  %v19 = vld [vmem:[%s0 + $0x8] sm:$0xf]
  %v20 = vld [vmem:[%s0 + $0xc] sm:$0xf]
  %v21 = vld [vmem:[%s1] sm:$0xf]
  %v22 = vld [vmem:[%s1 + $0x4] sm:$0xf]
  %v23 = vld [vmem:[%s1 + $0x8] sm:$0xf]
  %v24 = vld [vmem:[%s1 + $0xc] sm:$0xf]
  %v25 = vld [vmem:[%s1 + $0x10] sm:$0xf]
  %v26 = vld [vmem:[%s1 + $0x14] sm:$0xf]
  %v27 = vld [vmem:[%s1 + $0x18] sm:$0xf]
  %v28 = vld [vmem:[%s1 + $0x1c] sm:$0xf]
  %v29 = vld [vmem:[%s1 + $0x20] sm:$0xf]
  %v30 = vld [vmem:[%s1 + $0x24] sm:$0xf]
  %v31 = vld [vmem:[%s1 + $0x28] sm:$0xf]
  %v32 = vld [vmem:[%s1 + $0x2c] sm:$0xf]
  %v33 = vld [vmem:[%s1 + $0x30] sm:$0xf]
  %v34 = vld [vmem:[%s1 + $0x34] sm:$0xf]
  %v35 = vld [vmem:[%s1 + $0x38] sm:$0xf]
  %v36 = vld [vmem:[%s1 + $0x3c] sm:$0xf]
  %v37 = vld [vmem:[%s2] sm:$0x1]
  %v39 = vperm.slane %v37, 0
  %v45 = vunpack.c.l.b16 %v17
  %v46 = vunpack.c.l.b16 %v18
  %v47 = vunpack.c.l.b16 %v19
  %v48 = vunpack.c.l.b16 %v20
  %v49 = vpack.c.b16 %v46, %v45
  %v50 = vpack.c.b16 %v48, %v47
  %v69 = vunpack.c.l.b16 %v21
  %v70 = vunpack.c.l.b16 %v22
  %v71 = vunpack.c.l.b16 %v23
  %v72 = vunpack.c.l.b16 %v24
  %v73 = vunpack.c.l.b16 %v25
  %v74 = vunpack.c.l.b16 %v26
  %v75 = vunpack.c.l.b16 %v27
  %v76 = vunpack.c.l.b16 %v28
  %v77 = vunpack.c.l.b16 %v29
  %v78 = vunpack.c.l.b16 %v30
  %v79 = vunpack.c.l.b16 %v31
  %v80 = vunpack.c.l.b16 %v32
  %v81 = vunpack.c.l.b16 %v33
  %v82 = vunpack.c.l.b16 %v34
  %v83 = vunpack.c.l.b16 %v35
  %v84 = vunpack.c.l.b16 %v36
  %v85 = vpack.c.b16 %v70, %v69
  %v86 = vpack.c.b16 %v72, %v71
  %v87 = vpack.c.b16 %v74, %v73
  %v88 = vpack.c.b16 %v76, %v75
  %v89 = vpack.c.b16 %v78, %v77
  %v90 = vpack.c.b16 %v80, %v79
  %v91 = vpack.c.b16 %v82, %v81
  %v92 = vpack.c.b16 %v84, %v83
  %101 = vmatpush.bf16.msra.mxu0 %v92
  %102 = vmatpush.bf16.msra.mxu0 %v91
  %103 = vmatpush.bf16.msra.mxu0 %v90
  %104 = vmatpush.bf16.msra.mxu0 %v89
  %105 = vmatpush.bf16.msra.mxu0 %v88
  %106 = vmatpush.bf16.msra.mxu0 %v87
  %107 = vmatpush.bf16.msra.mxu0 %v86
  %108 = vmatpush.bf16.msra.mxu0 %v85
  %109 = vmatmul.bf16.gmra.mxu0 %v49
  %v110 = vpop.f32.mrf.mxu0
  %v111 = vadd.f32 %v39, %v110
  %v112 = vpop.f32.mrf.mxu0
  %v113 = vadd.f32 %v39, %v112
  %114 = vmatmul.bf16.gmra.mxu0 %v50
  %v115 = vpop.f32.mrf.mxu0
  %v116 = vadd.f32 %v39, %v115
  %v117 = vpop.f32.mrf.mxu0
  %v118 = vadd.f32 %v39, %v117
  %119 = vdwg.mxu0
  %v120 = vld [vmem:[%s3] sm:$0xff]
  %v121 = vld [vmem:[%s3 + $0x8] sm:$0xff]
  %v122 = vld [vmem:[%s3 + $0x10] sm:$0xff]
  %v123 = vld [vmem:[%s3 + $0x18] sm:$0xff]
  %v124 = vadd.f32 %v111, %v120
  %v125 = vadd.f32 %v113, %v121
  %v126 = vadd.f32 %v116, %v122
  %v127 = vadd.f32 %v118, %v123
  %128 = vst [vmem:[%s4] sm:$0xff] %v124
  %129 = vst [vmem:[%s4 + $0x8] sm:$0xff] %v125
  %130 = vst [vmem:[%s4 + $0x10] sm:$0xff] %v126
  %131 = vst [vmem:[%s4 + $0x18] sm:$0xff] %v127
  // Predicated region
  $region18: #{video_expert_forward.24} parent=0 // pred_check
    _
  $region19: #{video_expert_forward.24} parent=0 // pred_check_branch
    %133 = sbr.rel (0) target = $region21
  $region20: #{video_expert_forward.24} parent=0 // pred_region
    _
  $region21: #{video_expert_forward.24} parent=0 // pred_fallthru
    _
  // Predicated region
  $region22: #{video_expert_forward.24} parent=0 // pred_check
    _
  $region23: #{video_expert_forward.24} parent=0 // pred_check_branch
    %135 = sbr.rel (0) target = $region25
  $region24: #{video_expert_forward.24} parent=0 // pred_region
    _
  $region25: #{video_expert_forward.24} parent=0 // pred_fallthru
    _

// kernel: video_expert_forward.23
$region0: #{video_expert_forward.23}
  #allocation0 [shape = 'u32[]', space=smem, size = 0x4, offset = 0x4, fixed_abs, tag = 'smem constant byte address 0x4 - core index']
  #allocation1 [shape = 'u32[72,128]{1,0:T(1,128)}', space=vmem, size = 0x9000, scoped, tag = 'internal scratch']
  %s0 = inlined_call_operand.vmem [shape: bf16[2,9,384], index: 0, kind: input, shape index: {}, may-alias: {0,1,2}]
  %s1 = inlined_call_operand.vmem [shape: bf16[2,9,384], index: 1, kind: input, shape index: {}, may-alias: {0,1,2}]
  %s2 = inlined_call_operand.vmem [shape: bf16[2,9,384], index: 2, kind: input, shape index: {}, may-alias: {0,1,2}]
  %s3 = inlined_call_operand.vmem [shape: f32[2,1,9], index: 3, kind: input, shape index: {}]
  %s4 = inlined_call_operand.vmem [shape: bf16[2,9,128], index: 4, kind: output, shape index: {}]
  %s5 = sld [smem:[#allocation0]]
  $region172: #{video_expert_forward.23} parent=0
    _
  %s7 = ssub.s32 1, %s5
  %s8 = scalar_select 0, %s7, %s5
  $region1: #{video_expert_forward.23} parent=0
    #allocation2 [shape = 'u8[8192]{0}', space=vmem, size = 0x2000, scoped, tag = 'input window, operand 0']
    #allocation3 [shape = 'u8[8192]{0}', space=vmem, size = 0x2000, scoped, tag = 'input window, operand 1']
    #allocation4 [shape = 'u8[8192]{0}', space=vmem, size = 0x2000, scoped, tag = 'input window, operand 2']
    loop: start=0, step=1, limit=4
    $region2: #{video_expert_forward.23} parent=1 // loop_pre_header
      _
    $region3: #{video_expert_forward.23} parent=1 // loop_header
      %s10 = sphi 0, %s14
      %p11 = scmp.ge.s32.totalorder %s10, 4
      %s20 = sphi 0, %s22
      %s23 = sphi 0, %s20
      %s24 = sphi 0, %s23
      %s40 = sphi 0, %s24
      %s46 = sphi 0, %s48
      %s49 = sphi 0, %s46
      %s50 = sphi 0, %s49
      %s66 = sphi 0, %s50
      %s72 = sphi 0, %s74
      %s75 = sphi 0, %s72
      %s76 = sphi 0, %s75
      %s92 = sphi 0, %s76
      %s98 = sphi 0, %s100
      %s101 = sphi 0, %s98
      %s102 = sphi 0, %s101
      %s118 = sphi 0, %s102
      %s124 = sphi 0, %s126
      %s127 = sphi 0, %s124
      %s128 = sphi 0, %s127
      %s144 = sphi 0, %s128
    $region4: #{video_expert_forward.23} parent=1 // loop_header_branch
      %13 = sbr.rel (%p11) target = $region8
    $region5: #{video_expert_forward.23} parent=1 // loop_body
      %s15 = ssub.s32 %s10, 1
      %s16 = ssub.s32 %s10, 2
      %s17 = sadd.s32 %s10, 1
      %s18 = ssub.s32 %s10, %s17
      %p19 = scmp.eq.s32.totalorder %s18, 0
      %s21 = sadd.s32 %s20, 1
      %s22 = scalar_select %p19, %s20, %s21
      %p25 = pneg %p19
      %p26 = scmp.eq.s32.totalorder %s10, 1
      %p27 = por %p25, %p26
      %p28 = scmp.ne.s32.totalorder %s20, %s23
      %p29 = scmp.eq.s32.totalorder %s10, 0
      %p30 = por %p28, %p29
      %p31 = scmp.ne.s32.totalorder %s20, %s23
      %p32 = scmp.eq.s32.totalorder %s15, 1
      %p33 = por %p31, %p32
      %p34 = scmp.ne.s32.totalorder %s23, %s24
      %p35 = scmp.eq.s32.totalorder %s15, 0
      %p36 = por %p34, %p35
      %p37 = scmp.ne.s32.totalorder %s23, %s24
      %p38 = scmp.eq.s32.totalorder %s16, 1
      %p39 = por %p37, %p38
      %p41 = scmp.ne.s32.totalorder %s24, %s40
      %p42 = scmp.eq.s32.totalorder %s16, 0
      %p43 = por %p41, %p42
      %s44 = ssub.s32 %s10, %s17
      %p45 = scmp.eq.s32.totalorder %s44, 0
      %s47 = sadd.s32 %s46, 1
      %s48 = scalar_select %p45, %s46, %s47
      %p51 = pneg %p45
      %p52 = scmp.eq.s32.totalorder %s10, 1
      %p53 = por %p51, %p52
      %p54 = scmp.ne.s32.totalorder %s46, %s49
      %p55 = scmp.eq.s32.totalorder %s10, 0
      %p56 = por %p54, %p55
      %p57 = scmp.ne.s32.totalorder %s46, %s49
      %p58 = scmp.eq.s32.totalorder %s15, 1
      %p59 = por %p57, %p58
      %p60 = scmp.ne.s32.totalorder %s49, %s50
      %p61 = scmp.eq.s32.totalorder %s15, 0
      %p62 = por %p60, %p61
      %p63 = scmp.ne.s32.totalorder %s49, %s50
      %p64 = scmp.eq.s32.totalorder %s16, 1
      %p65 = por %p63, %p64
      %p67 = scmp.ne.s32.totalorder %s50, %s66
      %p68 = scmp.eq.s32.totalorder %s16, 0
      %p69 = por %p67, %p68
      %s70 = ssub.s32 %s10, %s17
      %p71 = scmp.eq.s32.totalorder %s70, 0
      %s73 = sadd.s32 %s72, 1
      %s74 = scalar_select %p71, %s72, %s73
      %p77 = pneg %p71
      %p78 = scmp.eq.s32.totalorder %s10, 1
      %p79 = por %p77, %p78
      %p80 = scmp.ne.s32.totalorder %s72, %s75
      %p81 = scmp.eq.s32.totalorder %s10, 0
      %p82 = por %p80, %p81
      %p83 = scmp.ne.s32.totalorder %s72, %s75
      %p84 = scmp.eq.s32.totalorder %s15, 1
      %p85 = por %p83, %p84
      %p86 = scmp.ne.s32.totalorder %s75, %s76
      %p87 = scmp.eq.s32.totalorder %s15, 0
      %p88 = por %p86, %p87
      %p89 = scmp.ne.s32.totalorder %s75, %s76
      %p90 = scmp.eq.s32.totalorder %s16, 1
      %p91 = por %p89, %p90
      %p93 = scmp.ne.s32.totalorder %s76, %s92
      %p94 = scmp.eq.s32.totalorder %s16, 0
      %p95 = por %p93, %p94
      %s96 = ssub.s32 %s10, %s17
      %p97 = scmp.eq.s32.totalorder %s96, 0
      %s99 = sadd.s32 %s98, 1
      %s100 = scalar_select %p97, %s98, %s99
      %p103 = pneg %p97
      %p104 = scmp.eq.s32.totalorder %s10, 1
      %p105 = por %p103, %p104
      %p106 = scmp.ne.s32.totalorder %s98, %s101
      %p107 = scmp.eq.s32.totalorder %s10, 0
      %p108 = por %p106, %p107
      %p109 = scmp.ne.s32.totalorder %s98, %s101
      %p110 = scmp.eq.s32.totalorder %s15, 1
      %p111 = por %p109, %p110
      %p112 = scmp.ne.s32.totalorder %s101, %s102
      %p113 = scmp.eq.s32.totalorder %s15, 0
      %p114 = por %p112, %p113
      %p115 = scmp.ne.s32.totalorder %s101, %s102
      %p116 = scmp.eq.s32.totalorder %s16, 1
      %p117 = por %p115, %p116
      %p119 = scmp.ne.s32.totalorder %s102, %s118
      %p120 = scmp.eq.s32.totalorder %s16, 0
      %p121 = por %p119, %p120
      %s122 = ssub.s32 %s10, %s17
      %p123 = scmp.eq.s32.totalorder %s122, 0
      %s125 = sadd.s32 %s124, 1
      %s126 = scalar_select %p123, %s124, %s125
      %p129 = pneg %p123
      %p130 = scmp.eq.s32.totalorder %s10, 1
      %p131 = por %p129, %p130
      %p132 = scmp.ne.s32.totalorder %s124, %s127
      %p133 = scmp.eq.s32.totalorder %s10, 0
      %p134 = por %p132, %p133
      %p135 = scmp.ne.s32.totalorder %s124, %s127
      %p136 = scmp.eq.s32.totalorder %s15, 1
      %p137 = por %p135, %p136
      %p138 = scmp.ne.s32.totalorder %s127, %s128
      %p139 = scmp.eq.s32.totalorder %s15, 0
      %p140 = por %p138, %p139
      %p141 = scmp.ne.s32.totalorder %s127, %s128
      %p142 = scmp.eq.s32.totalorder %s16, 1
      %p143 = por %p141, %p142
      %p145 = scmp.ne.s32.totalorder %s128, %s144
      %p146 = scmp.eq.s32.totalorder %s16, 0
      %p147 = por %p145, %p146
      %p148 = scmp.le.s32.totalorder 1, %s10
      %p149 = scmp.lt.s32.totalorder %s10, 3
      %p150 = pnand %p148, %p149
      %p151 = pneg %p150
      // Predicated region
      $region9: #{video_expert_forward.23} parent=5 // pred_check
        _
      $region10: #{video_expert_forward.23} parent=5 // pred_check_branch
        %153 = sbr.rel (%p150) target = $region12
      $region11: #{video_expert_forward.23} parent=5 // pred_region
        %s154 = ssub.s32 %s10, 1
      $region12: #{video_expert_forward.23} parent=5 // pred_fallthru
        _
      %p155 = scmp.lt.s32.totalorder %s10, 2
      // Predicated region
      $region13: #{video_expert_forward.23} parent=5 // pred_check
        %p156 = pneg %p155
      $region14: #{video_expert_forward.23} parent=5 // pred_check_branch
        %158 = sbr.rel (%p156) target = $region16
      $region15: #{video_expert_forward.23} parent=5 // pred_region
        // Predicated region
        $region17: #{video_expert_forward.23} parent=15 // pred_check
          %p159 = pneg %p30
        $region18: #{video_expert_forward.23} parent=15 // pred_check_branch
          %161 = sbr.rel (%p159) target = $region20
        $region19: #{video_expert_forward.23} parent=15 // pred_region
          %s162 = sand.u32 %s20, 1
          %s163 = sand.u32 %s20, 1
          %s164 = smul.addr %s163, 8
          %s165 = scalar_lea.vmem [#allocation2], %s164
          %s166 = smul.addr %s10, 6
          %s167 = smul.addr %s166, 4
          %s168 = scalar_lea.vmem %s0, %s167
          // Predicated region
          $region21: #{video_expert_forward.23} parent=19 // pred_check
            _
          $region22: #{video_expert_forward.23} parent=19 // pred_check_branch
            %170 = sbr.rel (0) target = $region24
          $region23: #{video_expert_forward.23} parent=19 // pred_region
            // Predicated region
            $region25: #{video_expert_forward.23} parent=23 // pred_check
              _
            $region26: #{video_expert_forward.23} parent=23 // pred_check_branch
              %172 = sbr.rel target = $region28
            $region27: #{video_expert_forward.23} parent=23 // pred_region
              // Predicated region
              $region40: #{video_expert_forward.23} parent=27 // pred_check
                _
              $region41: #{video_expert_forward.23} parent=27 // pred_check_branch
                %190 = sbr.rel (0) target = $region43
              $region42: #{video_expert_forward.23} parent=27 // pred_region
                loop: start=0, step=1, limit=1
                $region44: #{video_expert_forward.23} parent=42 // loop_pre_header
                  _
                $region45: #{video_expert_forward.23} parent=42 // loop_header
                  %s192 = sphi 0, %s196
                  %p193 = scmp.ge.s32.totalorder %s192, 1
                  %s197 = sphi %s168, %s168
                  %s198 = sphi %s165, %s165
                $region46: #{video_expert_forward.23} parent=42 // loop_header_branch
                  %195 = sbr.rel (%p193) target = $region50
                $region47: #{video_expert_forward.23} parent=42 // loop_body
                  _
                $region48: #{video_expert_forward.23} parent=42 // loop_footer
                  %s196 = sadd.s32 1, %s192
                $region49: #{video_expert_forward.23} parent=42 // loop_footer_branch
                  %191 = sbr.rel target = $region45
                $region50: #{video_expert_forward.23} parent=42 // loop_exit
                  _
                %s200 = ssub.s32 16, 1
                loop: start=0, step=1, limit=1
                $region51: #{video_expert_forward.23} parent=42 // loop_pre_header
                  _
                $region52: #{video_expert_forward.23} parent=42 // loop_header
                  %s202 = sphi 0, %s206
                  %p203 = scmp.ge.s32.totalorder %s202, 1
                  %s207 = sphi %s168, %s168
                  %s208 = sphi %s165, %s165
                $region53: #{video_expert_forward.23} parent=42 // loop_header_branch
                  %205 = sbr.rel (%p203) target = $region57
                $region54: #{video_expert_forward.23} parent=42 // loop_body
                  %v209 = vld [vmem:[%s207] sm:%s200]
                  %210 = vst [vmem:[%s208] sm:%s200] %v209
                  %v211 = vld [vmem:[%s207 + $0xc] sm:%s200]
                  %212 = vst [vmem:[%s208 + $0x4] sm:%s200] %v211
                $region55: #{video_expert_forward.23} parent=42 // loop_footer
                  %s206 = sadd.s32 1, %s202
                $region56: #{video_expert_forward.23} parent=42 // loop_footer_branch
                  %201 = sbr.rel target = $region52
                $region57: #{video_expert_forward.23} parent=42 // loop_exit
                  _
              $region43: #{video_expert_forward.23} parent=27 // pred_fallthru
                _
            $region28: #{video_expert_forward.23} parent=23 // pred_fallthru
              _
            // Predicated region
            $region29: #{video_expert_forward.23} parent=23 // pred_check
              _
            $region30: #{video_expert_forward.23} parent=23 // pred_check_branch
              %174 = sbr.rel (0) target = $region32
            $region31: #{video_expert_forward.23} parent=23 // pred_region
              %s176 = ssub.s32 16, 1
              loop: start=0, step=1, limit=1
              $region33: #{video_expert_forward.23} parent=31 // loop_pre_header
                _
              $region34: #{video_expert_forward.23} parent=31 // loop_header
                %s178 = sphi 0, %s182
                %p179 = scmp.ge.s32.totalorder %s178, 1
                %s183 = sphi %s168, %s168
                %s184 = sphi %s165, %s165
              $region35: #{video_expert_forward.23} parent=31 // loop_header_branch
                %181 = sbr.rel (%p179) target = $region39
              $region36: #{video_expert_forward.23} parent=31 // loop_body
                %v185 = vld [vmem:[%s183] sm:%s176]
                %186 = vst [vmem:[%s184] sm:%s176] %v185
                %v187 = vld [vmem:[%s183 + $0xc] sm:%s176]
                %188 = vst [vmem:[%s184 + $0x4] sm:%s176] %v187
              $region37: #{video_expert_forward.23} parent=31 // loop_footer
                %s182 = sadd.s32 1, %s178
              $region38: #{video_expert_forward.23} parent=31 // loop_footer_branch
                %177 = sbr.rel target = $region34
              $region39: #{video_expert_forward.23} parent=31 // loop_exit
                _
            $region32: #{video_expert_forward.23} parent=23 // pred_fallthru
              _
          $region24: #{video_expert_forward.23} parent=19 // pred_fallthru
            _
          %213 = vnop
        $region20: #{video_expert_forward.23} parent=15 // pred_fallthru
          _
        // Predicated region
        $region58: #{video_expert_forward.23} parent=15 // pred_check
          %p214 = pneg %p56
        $region59: #{video_expert_forward.23} parent=15 // pred_check_branch
          %216 = sbr.rel (%p214) target = $region61
        $region60: #{video_expert_forward.23} parent=15 // pred_region
          %s217 = sand.u32 %s46, 1
          %s218 = sand.u32 %s46, 1
          %s219 = smul.addr %s218, 8
          %s220 = scalar_lea.vmem [#allocation3], %s219
          %s221 = smul.addr %s10, 6
          %s222 = sadd.s32 1, %s221
          %s223 = smul.addr %s222, 4
          %s224 = scalar_lea.vmem %s1, %s223
          // Predicated region
          $region62: #{video_expert_forward.23} parent=60 // pred_check
            _
          $region63: #{video_expert_forward.23} parent=60 // pred_check_branch
            %226 = sbr.rel (0) target = $region65
          $region64: #{video_expert_forward.23} parent=60 // pred_region
            // Predicated region
            $region66: #{video_expert_forward.23} parent=64 // pred_check
              _
            $region67: #{video_expert_forward.23} parent=64 // pred_check_branch
              %228 = sbr.rel target = $region69
            $region68: #{video_expert_forward.23} parent=64 // pred_region
              // Predicated region
              $region81: #{video_expert_forward.23} parent=68 // pred_check
                _
              $region82: #{video_expert_forward.23} parent=68 // pred_check_branch
                %246 = sbr.rel (0) target = $region84
              $region83: #{video_expert_forward.23} parent=68 // pred_region
                loop: start=0, step=1, limit=1
                $region85: #{video_expert_forward.23} parent=83 // loop_pre_header
                  _
                $region86: #{video_expert_forward.23} parent=83 // loop_header
                  %s248 = sphi 0, %s252
                  %p249 = scmp.ge.s32.totalorder %s248, 1
                  %s253 = sphi %s224, %s224
                  %s254 = sphi %s220, %s220
                $region87: #{video_expert_forward.23} parent=83 // loop_header_branch
                  %251 = sbr.rel (%p249) target = $region91
                $region88: #{video_expert_forward.23} parent=83 // loop_body
                  _
                $region89: #{video_expert_forward.23} parent=83 // loop_footer
                  %s252 = sadd.s32 1, %s248
                $region90: #{video_expert_forward.23} parent=83 // loop_footer_branch
                  %247 = sbr.rel target = $region86
                $region91: #{video_expert_forward.23} parent=83 // loop_exit
                  _
                %s256 = ssub.s32 16, 1
                loop: start=0, step=1, limit=1
                $region92: #{video_expert_forward.23} parent=83 // loop_pre_header
                  _
                $region93: #{video_expert_forward.23} parent=83 // loop_header
                  %s258 = sphi 0, %s262
                  %p259 = scmp.ge.s32.totalorder %s258, 1
                  %s263 = sphi %s224, %s224
                  %s264 = sphi %s220, %s220
                $region94: #{video_expert_forward.23} parent=83 // loop_header_branch
                  %261 = sbr.rel (%p259) target = $region98
                $region95: #{video_expert_forward.23} parent=83 // loop_body
                  %v265 = vld [vmem:[%s263] sm:%s256]
                  %266 = vst [vmem:[%s264] sm:%s256] %v265
                  %v267 = vld [vmem:[%s263 + $0xc] sm:%s256]
                  %268 = vst [vmem:[%s264 + $0x4] sm:%s256] %v267
                $region96: #{video_expert_forward.23} parent=83 // loop_footer
                  %s262 = sadd.s32 1, %s258
                $region97: #{video_expert_forward.23} parent=83 // loop_footer_branch
                  %257 = sbr.rel target = $region93
                $region98: #{video_expert_forward.23} parent=83 // loop_exit
                  _
              $region84: #{video_expert_forward.23} parent=68 // pred_fallthru
                _
            $region69: #{video_expert_forward.23} parent=64 // pred_fallthru
              _
            // Predicated region
            $region70: #{video_expert_forward.23} parent=64 // pred_check
              _
            $region71: #{video_expert_forward.23} parent=64 // pred_check_branch
              %230 = sbr.rel (0) target = $region73
            $region72: #{video_expert_forward.23} parent=64 // pred_region
              %s232 = ssub.s32 16, 1
              loop: start=0, step=1, limit=1
              $region74: #{video_expert_forward.23} parent=72 // loop_pre_header
                _
              $region75: #{video_expert_forward.23} parent=72 // loop_header
                %s234 = sphi 0, %s238
                %p235 = scmp.ge.s32.totalorder %s234, 1
                %s239 = sphi %s224, %s224
                %s240 = sphi %s220, %s220
              $region76: #{video_expert_forward.23} parent=72 // loop_header_branch
                %237 = sbr.rel (%p235) target = $region80
              $region77: #{video_expert_forward.23} parent=72 // loop_body
                %v241 = vld [vmem:[%s239] sm:%s232]
                %242 = vst [vmem:[%s240] sm:%s232] %v241
                %v243 = vld [vmem:[%s239 + $0xc] sm:%s232]
                %244 = vst [vmem:[%s240 + $0x4] sm:%s232] %v243
              $region78: #{video_expert_forward.23} parent=72 // loop_footer
                %s238 = sadd.s32 1, %s234
              $region79: #{video_expert_forward.23} parent=72 // loop_footer_branch
                %233 = sbr.rel target = $region75
              $region80: #{video_expert_forward.23} parent=72 // loop_exit
                _
            $region73: #{video_expert_forward.23} parent=64 // pred_fallthru
              _
          $region65: #{video_expert_forward.23} parent=60 // pred_fallthru
            _
          %269 = vnop
        $region61: #{video_expert_forward.23} parent=15 // pred_fallthru
          _
        // Predicated region
        $region99: #{video_expert_forward.23} parent=15 // pred_check
          %p270 = pneg %p82
        $region100: #{video_expert_forward.23} parent=15 // pred_check_branch
          %272 = sbr.rel (%p270) target = $region102
        $region101: #{video_expert_forward.23} parent=15 // pred_region
          %s273 = sand.u32 %s72, 1
          %s274 = sand.u32 %s72, 1
          %s275 = smul.addr %s274, 8
          %s276 = scalar_lea.vmem [#allocation4], %s275
          %s277 = smul.addr %s10, 6
          %s278 = sadd.s32 2, %s277
          %s279 = smul.addr %s278, 4
          %s280 = scalar_lea.vmem %s2, %s279
          // Predicated region
          $region103: #{video_expert_forward.23} parent=101 // pred_check
            _
          $region104: #{video_expert_forward.23} parent=101 // pred_check_branch
            %282 = sbr.rel (0) target = $region106
          $region105: #{video_expert_forward.23} parent=101 // pred_region
            // Predicated region
            $region107: #{video_expert_forward.23} parent=105 // pred_check
              _
            $region108: #{video_expert_forward.23} parent=105 // pred_check_branch
              %284 = sbr.rel target = $region110
            $region109: #{video_expert_forward.23} parent=105 // pred_region
              // Predicated region
              $region122: #{video_expert_forward.23} parent=109 // pred_check
                _
              $region123: #{video_expert_forward.23} parent=109 // pred_check_branch
                %302 = sbr.rel (0) target = $region125
              $region124: #{video_expert_forward.23} parent=109 // pred_region
                loop: start=0, step=1, limit=1
                $region126: #{video_expert_forward.23} parent=124 // loop_pre_header
                  _
                $region127: #{video_expert_forward.23} parent=124 // loop_header
                  %s304 = sphi 0, %s308
                  %p305 = scmp.ge.s32.totalorder %s304, 1
                  %s309 = sphi %s280, %s280
                  %s310 = sphi %s276, %s276
                $region128: #{video_expert_forward.23} parent=124 // loop_header_branch
                  %307 = sbr.rel (%p305) target = $region132
                $region129: #{video_expert_forward.23} parent=124 // loop_body
                  _
                $region130: #{video_expert_forward.23} parent=124 // loop_footer
                  %s308 = sadd.s32 1, %s304
                $region131: #{video_expert_forward.23} parent=124 // loop_footer_branch
                  %303 = sbr.rel target = $region127
                $region132: #{video_expert_forward.23} parent=124 // loop_exit
                  _
                %s312 = ssub.s32 16, 1
                loop: start=0, step=1, limit=1
                $region133: #{video_expert_forward.23} parent=124 // loop_pre_header
                  _
                $region134: #{video_expert_forward.23} parent=124 // loop_header
                  %s314 = sphi 0, %s318
                  %p315 = scmp.ge.s32.totalorder %s314, 1
                  %s319 = sphi %s280, %s280
                  %s320 = sphi %s276, %s276
                $region135: #{video_expert_forward.23} parent=124 // loop_header_branch
                  %317 = sbr.rel (%p315) target = $region139
                $region136: #{video_expert_forward.23} parent=124 // loop_body
                  %v321 = vld [vmem:[%s319] sm:%s312]
                  %322 = vst [vmem:[%s320] sm:%s312] %v321
                  %v323 = vld [vmem:[%s319 + $0xc] sm:%s312]
                  %324 = vst [vmem:[%s320 + $0x4] sm:%s312] %v323
                $region137: #{video_expert_forward.23} parent=124 // loop_footer
                  %s318 = sadd.s32 1, %s314
                $region138: #{video_expert_forward.23} parent=124 // loop_footer_branch
                  %313 = sbr.rel target = $region134
                $region139: #{video_expert_forward.23} parent=124 // loop_exit
                  _
              $region125: #{video_expert_forward.23} parent=109 // pred_fallthru
                _
            $region110: #{video_expert_forward.23} parent=105 // pred_fallthru
              _
            // Predicated region
            $region111: #{video_expert_forward.23} parent=105 // pred_check
              _
            $region112: #{video_expert_forward.23} parent=105 // pred_check_branch
              %286 = sbr.rel (0) target = $region114
            $region113: #{video_expert_forward.23} parent=105 // pred_region
              %s288 = ssub.s32 16, 1
              loop: start=0, step=1, limit=1
              $region115: #{video_expert_forward.23} parent=113 // loop_pre_header
                _
              $region116: #{video_expert_forward.23} parent=113 // loop_header
                %s290 = sphi 0, %s294
                %p291 = scmp.ge.s32.totalorder %s290, 1
                %s295 = sphi %s280, %s280
                %s296 = sphi %s276, %s276
              $region117: #{video_expert_forward.23} parent=113 // loop_header_branch
                %293 = sbr.rel (%p291) target = $region121
              $region118: #{video_expert_forward.23} parent=113 // loop_body
                %v297 = vld [vmem:[%s295] sm:%s288]
                %298 = vst [vmem:[%s296] sm:%s288] %v297
                %v299 = vld [vmem:[%s295 + $0xc] sm:%s288]
                %300 = vst [vmem:[%s296 + $0x4] sm:%s288] %v299
              $region119: #{video_expert_forward.23} parent=113 // loop_footer
                %s294 = sadd.s32 1, %s290
              $region120: #{video_expert_forward.23} parent=113 // loop_footer_branch
                %289 = sbr.rel target = $region116
              $region121: #{video_expert_forward.23} parent=113 // loop_exit
                _
            $region114: #{video_expert_forward.23} parent=105 // pred_fallthru
              _
          $region106: #{video_expert_forward.23} parent=101 // pred_fallthru
            _
          %325 = vnop
        $region102: #{video_expert_forward.23} parent=15 // pred_fallthru
          _
        // Predicated region
        $region140: #{video_expert_forward.23} parent=15 // pred_check
          %p326 = pneg %p108
        $region141: #{video_expert_forward.23} parent=15 // pred_check_branch
          %328 = sbr.rel (%p326) target = $region143
        $region142: #{video_expert_forward.23} parent=15 // pred_region
          %p329 = scmp.lt.s32.totalorder %s10, 1
          %s330 = scalar_select %p329, %s10, 1
          %s331 = scalar_lea.vmem %s3, %s330
        $region143: #{video_expert_forward.23} parent=15 // pred_fallthru
          _
      $region16: #{video_expert_forward.23} parent=5 // pred_fallthru
        _
      %p332 = scmp.le.s32.totalorder 1, %s10
      %p333 = scmp.lt.s32.totalorder %s10, 3
      %p334 = pnand %p332, %p333
      %p335 = pneg %p334
      // Predicated region
      $region144: #{video_expert_forward.23} parent=5 // pred_check
        _
      $region145: #{video_expert_forward.23} parent=5 // pred_check_branch
        %337 = sbr.rel (%p334) target = $region147
      $region146: #{video_expert_forward.23} parent=5 // pred_region
        %s338 = ssub.s32 %s10, 1
        %s339 = sand.u32 %s23, 1
        %s340 = sand.u32 %s23, 1
        %s341 = smul.addr %s340, 8
        %s342 = scalar_lea.vmem [#allocation2], %s341
        // Predicated region
        $region148: #{video_expert_forward.23} parent=146 // pred_check
          %p343 = pneg %p36
        $region149: #{video_expert_forward.23} parent=146 // pred_check_branch
          %345 = sbr.rel (%p343) target = $region151
        $region150: #{video_expert_forward.23} parent=146 // pred_region
          _
        $region151: #{video_expert_forward.23} parent=146 // pred_fallthru
          _
        %s346 = sand.u32 %s49, 1
        %s347 = sand.u32 %s49, 1
        %s348 = smul.addr %s347, 8
        %s349 = scalar_lea.vmem [#allocation3], %s348
        // Predicated region
        $region152: #{video_expert_forward.23} parent=146 // pred_check
          %p350 = pneg %p62
        $region153: #{video_expert_forward.23} parent=146 // pred_check_branch
          %352 = sbr.rel (%p350) target = $region155
        $region154: #{video_expert_forward.23} parent=146 // pred_region
          _
        $region155: #{video_expert_forward.23} parent=146 // pred_fallthru
          _
        %s353 = sand.u32 %s75, 1
        %s354 = sand.u32 %s75, 1
        %s355 = smul.addr %s354, 8
        %s356 = scalar_lea.vmem [#allocation4], %s355
        // Predicated region
        $region156: #{video_expert_forward.23} parent=146 // pred_check
          %p357 = pneg %p88
        $region157: #{video_expert_forward.23} parent=146 // pred_check_branch
          %359 = sbr.rel (%p357) target = $region159
        $region158: #{video_expert_forward.23} parent=146 // pred_region
          _
        $region159: #{video_expert_forward.23} parent=146 // pred_fallthru
          _
        %s360 = sand.u32 %s23, 1
        %s361 = sand.u32 %s23, 1
        %s362 = smul.addr %s361, 8
        %s363 = scalar_lea.vmem [#allocation2], %s362
        %p364 = pneg %p36
        %p365 = pneg %p33
        %s366 = sand.u32 %s49, 1
        %s367 = sand.u32 %s49, 1
        %s368 = smul.addr %s367, 8
        %s369 = scalar_lea.vmem [#allocation3], %s368
        %p370 = pneg %p62
        %p371 = pneg %p59
        %s372 = sand.u32 %s75, 1
        %s373 = sand.u32 %s75, 1
        %s374 = smul.addr %s373, 8
        %s375 = scalar_lea.vmem [#allocation4], %s374
        %p376 = pneg %p88
        %p377 = pneg %p85
        %p378 = scmp.lt.s32.totalorder %s15, 1
        %s379 = scalar_select %p378, %s15, 1
        %s380 = scalar_lea.vmem %s3, %s379
        %p381 = pneg %p114
        %p382 = pneg %p111
        %p383 = pneg %p140
        %p384 = pneg %p137
        %p385 = scmp.lt.s32.totalorder %s15, 1
        %s386 = scalar_select %p385, %s15, 1
        %s387 = smul.addr %s386, 2
        %s388 = smul.addr %s387, 4
        %s389 = scalar_lea.vmem %s4, %s388
        %p390 = scmp.lt.s32.totalorder %s15, 1
        %s391 = scalar_select %p390, %s15, 1
        %s392 = scalar_lea.vmem %s3, %s391
        %p393 = scmp.lt.s32.totalorder %s15, 1
        %s394 = scalar_select %p393, %s15, 1
        %s395 = smul.addr %s394, 2
        %s396 = smul.addr %s395, 4
        %s397 = scalar_lea.vmem %s4, %s396
        %v399 = vld [vmem:[%s342] sm:$0xf]
        %v400 = vld [vmem:[%s342 + $0x4] sm:$0x1]
        %v401 = vld [vmem:[%s349] sm:$0xf]
        %v402 = vld [vmem:[%s349 + $0x4] sm:$0x1]
        %v403 = vld [vmem:[%s356] sm:$0xf]
        %v404 = vld [vmem:[%s356 + $0x4] sm:$0x1]
        %v407 = vunpack.c.l.b16 %v399
        %v408 = vunpack.c.l.b16 %v400
        %v409 = vpack.c.b16 %v408, %v407
        %v412 = vunpack.c.l.b16 %v401
        %v413 = vunpack.c.l.b16 %v402
        %v414 = vpack.c.b16 %v413, %v412
        %vm415 = vcmask 261120
        %v417 = vsel %vm415, %v409, 0
        %v420 = vsel %vm415, %v414, 0
        %422 = vmatpush.bf16.xpose.msra.mxu0 0
        %423 = vmatpush.bf16.xpose.msra.mxu0 0
        %424 = vmatpush.bf16.xpose.msra.mxu0 0
        %425 = vmatpush.bf16.xpose.msra.mxu0 0
        %426 = vmatpush.bf16.xpose.msra.mxu0 0
        %427 = vmatpush.bf16.xpose.msra.mxu0 0
        %428 = vmatpush.bf16.xpose.msra.mxu0 0
        %429 = vmatpush.bf16.xpose.msra.mxu0 %v420
        %430 = vmatmul.bf16.gmra.mxu0 %v417
        %v431 = vpop.f32.mrf.mxu0
        %v432 = vadd.f32 0.0, %v431
        %v433 = vpop.f32.mrf.mxu0
        %v434 = vadd.f32 0.0, %v433
        %435 = vdwg.mxu0
        %v436 = vmul.f32 %v432, 0.17677669
        %v437 = vmul.f32 %v434, 0.17677669
        %v438 = vld [vmem:[%s392] sm:$0x1]
        %v440 = vperm.slane %v438, 0
        %v442 = vadd.f32 %v436, %v440
        %v443 = vadd.f32 %v437, %v440
        %vm444 = vcmask 72704
        %v445 = vsel %vm444, %v442, -inf
        %446 = vmax.xlane.f32.xlu0 %v445
        %v447 = vpop.xlane.xlu0 %446
        %vm448 = vcmask 65536
        %v449 = vsel %vm448, %v443, -inf
        %450 = vmax.xlane.f32.xlu0 %v449
        %v451 = vpop.xlane.xlu0 %450
        %v452 = vsub.f32 %v442, %v447
        %v453 = vsub.f32 %v443, %v451
        %v454 = vmul.f32 %v452, 1.442695
        %v455 = vpow.pop %v454
        %v456 = vmul.f32 %v453, 1.442695
        %v457 = vpow.pop %v456
        %v458 = vsel %vm444, %v455, 0.0
        %459 = vadd.xlane.f32.xlu0 %v458
        %v460 = vpop.xlane.xlu0 %459
        %v461 = vsel %vm448, %v457, 0.0
        %462 = vadd.xlane.f32.xlu0 %v461
        %v463 = vpop.xlane.xlu0 %462
        %v464 = vrcp.pop %v460
        %v465 = vrcp.pop %v463
        %v466 = vmul.f32 %v455, %v464
        %v467 = vmul.f32 %v457, %v465
        %v468 = vpack.c.bf16 %v467, %v466
        %v471 = vunpack.c.l.b16 %v403
        %v472 = vunpack.c.l.b16 %v404
        %v473 = vpack.c.b16 %v472, %v471
        %v475 = vsel %vm444, %v468, 0
        %vm477 = vcmask 1043456
        %vm478 = vcmask 1044480
        %v479 = vsel %vm477, 4294967295, 65535
        %v480 = vsel %vm478, %v479, 0
        %v482 = vand.u32 %v473, %v480
        %484 = vmatpush.bf16.msra.mxu0 0
        %485 = vmatpush.bf16.msra.mxu0 0
        %486 = vmatpush.bf16.msra.mxu0 0
        %487 = vmatpush.bf16.msra.mxu0 0
        %488 = vmatpush.bf16.msra.mxu0 0
        %489 = vmatpush.bf16.msra.mxu0 0
        %490 = vmatpush.bf16.msra.mxu0 0
        %491 = vmatpush.bf16.msra.mxu0 %v482
        %492 = vmatmul.bf16.gmra.mxu0 %v475
        %v493 = vpop.f32.mrf.mxu0
        %v494 = vadd.f32 0.0, %v493
        %v495 = vpop.f32.mrf.mxu0
        %v496 = vadd.f32 0.0, %v495
        %497 = vdwg.mxu0
        %498 = vrot.lane.b32.xlu0 %v409, 96
        %v499 = vpop.permute.xlu0 %498
        %500 = vrot.lane.b32.xlu0 %v414, 96
        %v501 = vpop.permute.xlu0 %500
        %v503 = vsel %vm415, %v499, 0
        %v506 = vsel %vm415, %v501, 0
        %508 = vmatpush.bf16.xpose.msra.mxu0 0
        %509 = vmatpush.bf16.xpose.msra.mxu0 0
        %510 = vmatpush.bf16.xpose.msra.mxu0 0
        %511 = vmatpush.bf16.xpose.msra.mxu0 0
        %512 = vmatpush.bf16.xpose.msra.mxu0 0
        %513 = vmatpush.bf16.xpose.msra.mxu0 0
        %514 = vmatpush.bf16.xpose.msra.mxu0 0
        %515 = vmatpush.bf16.xpose.msra.mxu0 %v506
        %516 = vmatmul.bf16.gmra.mxu0 %v503
        %v517 = vpop.f32.mrf.mxu0
        %v518 = vadd.f32 0.0, %v517
        %v519 = vpop.f32.mrf.mxu0
        %v520 = vadd.f32 0.0, %v519
        %521 = vdwg.mxu0
        %v522 = vmul.f32 %v518, 0.17677669
        %v523 = vmul.f32 %v520, 0.17677669
        %v524 = vadd.f32 %v522, %v440
        %v525 = vadd.f32 %v523, %v440
        %v526 = vsel %vm444, %v524, -inf
        %527 = vmax.xlane.f32.xlu0 %v526
        %v528 = vpop.xlane.xlu0 %527
        %v529 = vsel %vm448, %v525, -inf
        %530 = vmax.xlane.f32.xlu0 %v529
        %v531 = vpop.xlane.xlu0 %530
        %v532 = vsub.f32 %v524, %v528
        %v533 = vsub.f32 %v525, %v531
        %v534 = vmul.f32 %v532, 1.442695
        %v535 = vpow.pop %v534
        %v536 = vmul.f32 %v533, 1.442695
        %v537 = vpow.pop %v536
        %v538 = vsel %vm444, %v535, 0.0
        %539 = vadd.xlane.f32.xlu0 %v538
        %v540 = vpop.xlane.xlu0 %539
        %v541 = vsel %vm448, %v537, 0.0
        %542 = vadd.xlane.f32.xlu0 %v541
        %v543 = vpop.xlane.xlu0 %542
        %v544 = vrcp.pop %v540
        %v545 = vrcp.pop %v543
        %v546 = vmul.f32 %v535, %v544
        %v547 = vmul.f32 %v537, %v545
        %v548 = vpack.c.bf16 %v547, %v546
        %549 = vrot.lane.b32.xlu0 %v473, 96
        %v550 = vpop.permute.xlu0 %549
        %v552 = vsel %vm444, %v548, 0
        %v555 = vand.u32 %v550, %v480
        %557 = vmatpush.bf16.msra.mxu0 0
        %558 = vmatpush.bf16.msra.mxu0 0
        %559 = vmatpush.bf16.msra.mxu0 0
        %560 = vmatpush.bf16.msra.mxu0 0
        %561 = vmatpush.bf16.msra.mxu0 0
        %562 = vmatpush.bf16.msra.mxu0 0
        %563 = vmatpush.bf16.msra.mxu0 0
        %564 = vmatpush.bf16.msra.mxu0 %v555
        %565 = vmatmul.bf16.gmra.mxu0 %v552
        %v566 = vpop.f32.mrf.mxu0
        %v567 = vadd.f32 0.0, %v566
        %v568 = vpop.f32.mrf.mxu0
        %v569 = vadd.f32 0.0, %v568
        %570 = vdwg.mxu0
        %571 = vrot.lane.b32.xlu0 %v409, 64
        %v572 = vpop.permute.xlu0 %571
        %573 = vrot.lane.b32.xlu0 %v414, 64
        %v574 = vpop.permute.xlu0 %573
        %v576 = vsel %vm415, %v572, 0
        %v579 = vsel %vm415, %v574, 0
        %581 = vmatpush.bf16.xpose.msra.mxu0 0
        %582 = vmatpush.bf16.xpose.msra.mxu0 0
        %583 = vmatpush.bf16.xpose.msra.mxu0 0
        %584 = vmatpush.bf16.xpose.msra.mxu0 0
        %585 = vmatpush.bf16.xpose.msra.mxu0 0
        %586 = vmatpush.bf16.xpose.msra.mxu0 0
        %587 = vmatpush.bf16.xpose.msra.mxu0 0
        %588 = vmatpush.bf16.xpose.msra.mxu0 %v579
        %589 = vmatmul.bf16.gmra.mxu0 %v576
        %v590 = vpop.f32.mrf.mxu0
        %v591 = vadd.f32 0.0, %v590
        %v592 = vpop.f32.mrf.mxu0
        %v593 = vadd.f32 0.0, %v592
        %594 = vdwg.mxu0
        %v595 = vmul.f32 %v591, 0.17677669
        %v596 = vmul.f32 %v593, 0.17677669
        %v597 = vadd.f32 %v595, %v440
        %v598 = vadd.f32 %v596, %v440
        %v599 = vsel %vm444, %v597, -inf
        %600 = vmax.xlane.f32.xlu0 %v599
        %v601 = vpop.xlane.xlu0 %600
        %v602 = vsel %vm448, %v598, -inf
        %603 = vmax.xlane.f32.xlu0 %v602
        %v604 = vpop.xlane.xlu0 %603
        %v605 = vsub.f32 %v597, %v601
        %v606 = vsub.f32 %v598, %v604
        %v607 = vmul.f32 %v605, 1.442695
        %v608 = vpow.pop %v607
        %v609 = vmul.f32 %v606, 1.442695
        %v610 = vpow.pop %v609
        %v611 = vsel %vm444, %v608, 0.0
        %612 = vadd.xlane.f32.xlu0 %v611
        %v613 = vpop.xlane.xlu0 %612
        %v614 = vsel %vm448, %v610, 0.0
        %615 = vadd.xlane.f32.xlu0 %v614
        %v616 = vpop.xlane.xlu0 %615
        %v617 = vrcp.pop %v613
        %v618 = vrcp.pop %v616
        %v619 = vmul.f32 %v608, %v617
        %v620 = vmul.f32 %v610, %v618
        %v621 = vpack.c.bf16 %v620, %v619
        %622 = vrot.lane.b32.xlu0 %v473, 64
        %v623 = vpop.permute.xlu0 %622
        %v625 = vsel %vm444, %v621, 0
        %v628 = vand.u32 %v623, %v480
        %630 = vmatpush.bf16.msra.mxu0 0
        %631 = vmatpush.bf16.msra.mxu0 0
        %632 = vmatpush.bf16.msra.mxu0 0
        %633 = vmatpush.bf16.msra.mxu0 0
        %634 = vmatpush.bf16.msra.mxu0 0
        %635 = vmatpush.bf16.msra.mxu0 0
        %636 = vmatpush.bf16.msra.mxu0 0
        %637 = vmatpush.bf16.msra.mxu0 %v628
        %638 = vmatmul.bf16.gmra.mxu0 %v625
        %v639 = vpop.f32.mrf.mxu0
        %v640 = vadd.f32 0.0, %v639
        %v641 = vpop.f32.mrf.mxu0
        %v642 = vadd.f32 0.0, %v641
        %643 = vdwg.mxu0
        %644 = vrot.lane.b32.xlu0 %v409, 32
        %v645 = vpop.permute.xlu0 %644
        %646 = vrot.lane.b32.xlu0 %v414, 32
        %v647 = vpop.permute.xlu0 %646
        %v649 = vsel %vm415, %v645, 0
        %v652 = vsel %vm415, %v647, 0
        %654 = vmatpush.bf16.xpose.msra.mxu0 0
        %655 = vmatpush.bf16.xpose.msra.mxu0 0
        %656 = vmatpush.bf16.xpose.msra.mxu0 0
        %657 = vmatpush.bf16.xpose.msra.mxu0 0
        %658 = vmatpush.bf16.xpose.msra.mxu0 0
        %659 = vmatpush.bf16.xpose.msra.mxu0 0
        %660 = vmatpush.bf16.xpose.msra.mxu0 0
        %661 = vmatpush.bf16.xpose.msra.mxu0 %v652
        %662 = vmatmul.bf16.gmra.mxu0 %v649
        %v663 = vpop.f32.mrf.mxu0
        %v664 = vadd.f32 0.0, %v663
        %v665 = vpop.f32.mrf.mxu0
        %v666 = vadd.f32 0.0, %v665
        %667 = vdwg.mxu0
        %v668 = vmul.f32 %v664, 0.17677669
        %v669 = vmul.f32 %v666, 0.17677669
        %v670 = vadd.f32 %v668, %v440
        %v671 = vadd.f32 %v669, %v440
        %v672 = vsel %vm444, %v670, -inf
        %673 = vmax.xlane.f32.xlu0 %v672
        %v674 = vpop.xlane.xlu0 %673
        %v675 = vsel %vm448, %v671, -inf
        %676 = vmax.xlane.f32.xlu0 %v675
        %v677 = vpop.xlane.xlu0 %676
        %v678 = vsub.f32 %v670, %v674
        %v679 = vsub.f32 %v671, %v677
        %v680 = vmul.f32 %v678, 1.442695
        %v681 = vpow.pop %v680
        %v682 = vmul.f32 %v679, 1.442695
        %v683 = vpow.pop %v682
        %v684 = vsel %vm444, %v681, 0.0
        %685 = vadd.xlane.f32.xlu0 %v684
        %v686 = vpop.xlane.xlu0 %685
        %v687 = vsel %vm448, %v683, 0.0
        %688 = vadd.xlane.f32.xlu0 %v687
        %v689 = vpop.xlane.xlu0 %688
        %v690 = vrcp.pop %v686
        %v691 = vrcp.pop %v689
        %v692 = vmul.f32 %v681, %v690
        %v693 = vmul.f32 %v683, %v691
        %v694 = vpack.c.bf16 %v693, %v692
        %695 = vrot.lane.b32.xlu0 %v473, 32
        %v696 = vpop.permute.xlu0 %695
        %v698 = vsel %vm444, %v694, 0
        %v701 = vand.u32 %v696, %v480
        %703 = vmatpush.bf16.msra.mxu0 0
        %704 = vmatpush.bf16.msra.mxu0 0
        %705 = vmatpush.bf16.msra.mxu0 0
        %706 = vmatpush.bf16.msra.mxu0 0
        %707 = vmatpush.bf16.msra.mxu0 0
        %708 = vmatpush.bf16.msra.mxu0 0
        %709 = vmatpush.bf16.msra.mxu0 0
        %710 = vmatpush.bf16.msra.mxu0 %v701
        %711 = vmatmul.bf16.gmra.mxu0 %v698
        %v712 = vpop.f32.mrf.mxu0
        %v713 = vadd.f32 0.0, %v712
        %v714 = vpop.f32.mrf.mxu0
        %v715 = vadd.f32 0.0, %v714
        %716 = vdwg.mxu0
        %719 = vrot.lane.b32.xlu0 %v567, 32
        %v720 = vpop.permute.xlu0 %719
        %721 = vrot.lane.b32.xlu0 %v569, 32
        %v722 = vpop.permute.xlu0 %721
        %727 = vrot.lane.b32.xlu0 %v640, 64
        %v728 = vpop.permute.xlu0 %727
        %729 = vrot.lane.b32.xlu0 %v642, 64
        %v730 = vpop.permute.xlu0 %729
        %735 = vrot.lane.b32.xlu0 %v713, 96
        %v736 = vpop.permute.xlu0 %735
        %737 = vrot.lane.b32.xlu0 %v715, 96
        %v738 = vpop.permute.xlu0 %737
        %v741 = vsel %vm415, %v494, %v720
        %v742 = vsel %vm415, %v496, %v722
        %vm743 = vcmask 523264
        %v744 = vsel %vm743, %v741, %v728
        %v745 = vsel %vm743, %v742, %v730
        %vm746 = vcmask 785408
        %v747 = vsel %vm746, %v744, %v736
        %v748 = vsel %vm746, %v745, %v738
        %v749 = vpack.c.bf16 %v747, %v747
        %v750 = vpack.c.bf16 %v748, %v748
        %751 = vst [vmem:[%s397] sm:$0xf] %v749
        %vm752 = vcmask 1040384
        %vm753 = vsmask.f32 256
        %vm754 = vmand %vm752, %vm753
        %v755 = vld [vmem:[%s397 + $0x4] sm:$0x1]
        %v756 = vsel %vm754, %v750, %v755
        %757 = vst [vmem:[%s397 + $0x4] sm:$0x1] %v756
        %p758 = scmp.lt.s32.totalorder %s15, 1
        %s759 = scalar_select %p758, %s15, 1
        %s760 = smul.addr %s759, 2
        %s761 = smul.addr %s760, 4
        %s762 = scalar_lea.vmem %s4, %s761
        // Predicated region
        $region160: #{video_expert_forward.23} parent=146 // pred_check
          %p763 = pneg %p137
        $region161: #{video_expert_forward.23} parent=146 // pred_check_branch
          %765 = sbr.rel (%p763) target = $region163
        $region162: #{video_expert_forward.23} parent=146 // pred_region
          _
        $region163: #{video_expert_forward.23} parent=146 // pred_fallthru
          _
      $region147: #{video_expert_forward.23} parent=5 // pred_fallthru
        _
      %p766 = scmp.le.s32.totalorder 2, %s10
      // Predicated region
      $region164: #{video_expert_forward.23} parent=5 // pred_check
        %p767 = pneg %p766
      $region165: #{video_expert_forward.23} parent=5 // pred_check_branch
        %769 = sbr.rel (%p767) target = $region167
      $region166: #{video_expert_forward.23} parent=5 // pred_region
        %s770 = ssub.s32 %s10, 2
        // Predicated region
        $region168: #{video_expert_forward.23} parent=166 // pred_check
          %p771 = pneg %p143
        $region169: #{video_expert_forward.23} parent=166 // pred_check_branch
          %773 = sbr.rel (%p771) target = $region171
        $region170: #{video_expert_forward.23} parent=166 // pred_region
          %p774 = scmp.lt.s32.totalorder %s16, 1
          %s775 = scalar_select %p774, %s16, 1
          %s776 = smul.addr %s775, 2
          %s777 = smul.addr %s776, 4
          %s778 = scalar_lea.vmem %s4, %s777
        $region171: #{video_expert_forward.23} parent=166 // pred_fallthru
          _
      $region167: #{video_expert_forward.23} parent=5 // pred_fallthru
        _
    $region6: #{video_expert_forward.23} parent=1 // loop_footer
      %s14 = sadd.s32 1, %s10
    $region7: #{video_expert_forward.23} parent=1 // loop_footer_branch
      %9 = sbr.rel target = $region3
    $region8: #{video_expert_forward.23} parent=1 // loop_exit
      _

// kernel: video_expert_forward.25
$region0: #{video_expert_forward.25}
  #allocation0 [shape = 'u32[]', space=smem, size = 0x4, offset = 0x4, fixed_abs, tag = 'smem constant byte address 0x4 - core index']
  #allocation1 [shape = 'u32[72,128]{1,0:T(1,128)}', space=vmem, size = 0x9000, scoped, tag = 'internal scratch']
  %s0 = inlined_call_operand.vmem [shape: f32[32,128], index: 0, kind: input, shape index: {}]
  %s1 = inlined_call_operand.vmem [shape: bf16[128,256], index: 1, kind: input, shape index: {}]
  %s2 = inlined_call_operand.vmem [shape: f32[1,256], index: 2, kind: input, shape index: {}]
  %s3 = inlined_call_operand.vmem [shape: f32[1,128], index: 3, kind: input, shape index: {}]
  %s4 = inlined_call_operand.vmem [shape: f32[1,128], index: 4, kind: input, shape index: {}]
  %s5 = inlined_call_operand.vmem [shape: bf16[32,256], index: 5, kind: output, shape index: {}]
  %s6 = sld [smem:[#allocation0]]
  $region30: #{video_expert_forward.25} parent=0
    _
  %s8 = ssub.s32 1, %s6
  %s9 = scalar_select 0, %s8, %s6
  // Predicated region
  $region2: #{video_expert_forward.25} parent=0 // pred_check
    _
  $region3: #{video_expert_forward.25} parent=0 // pred_check_branch
    %11 = sbr.rel (0) target = $region5
  $region4: #{video_expert_forward.25} parent=0 // pred_region
    _
  $region5: #{video_expert_forward.25} parent=0 // pred_fallthru
    _
  // Predicated region
  $region6: #{video_expert_forward.25} parent=0 // pred_check
    _
  $region7: #{video_expert_forward.25} parent=0 // pred_check_branch
    %13 = sbr.rel (0) target = $region9
  $region8: #{video_expert_forward.25} parent=0 // pred_region
    _
  $region9: #{video_expert_forward.25} parent=0 // pred_fallthru
    _
  // Predicated region
  $region10: #{video_expert_forward.25} parent=0 // pred_check
    _
  $region11: #{video_expert_forward.25} parent=0 // pred_check_branch
    %15 = sbr.rel (0) target = $region13
  $region12: #{video_expert_forward.25} parent=0 // pred_region
    _
  $region13: #{video_expert_forward.25} parent=0 // pred_fallthru
    _
  // Predicated region
  $region14: #{video_expert_forward.25} parent=0 // pred_check
    _
  $region15: #{video_expert_forward.25} parent=0 // pred_check_branch
    %17 = sbr.rel (0) target = $region17
  $region16: #{video_expert_forward.25} parent=0 // pred_region
    _
  $region17: #{video_expert_forward.25} parent=0 // pred_fallthru
    _
  // Predicated region
  $region18: #{video_expert_forward.25} parent=0 // pred_check
    _
  $region19: #{video_expert_forward.25} parent=0 // pred_check_branch
    %19 = sbr.rel (0) target = $region21
  $region20: #{video_expert_forward.25} parent=0 // pred_region
    _
  $region21: #{video_expert_forward.25} parent=0 // pred_fallthru
    _
  %v20 = vld [vmem:[%s0] sm:$0xff]
  %v21 = vld [vmem:[%s0 + $0x8] sm:$0xff]
  %v22 = vld [vmem:[%s0 + $0x10] sm:$0xff]
  %v23 = vld [vmem:[%s0 + $0x18] sm:$0xff]
  %24 = vadd.xlane.f32.xlu0 %v20
  %v25 = vpop.xlane.xlu0 %24
  %26 = vadd.xlane.f32.xlu0 %v21
  %v27 = vpop.xlane.xlu0 %26
  %28 = vadd.xlane.f32.xlu0 %v22
  %v29 = vpop.xlane.xlu0 %28
  %30 = vadd.xlane.f32.xlu0 %v23
  %v31 = vpop.xlane.xlu0 %30
  %v32 = vrcp.pop 128.0
  %v33 = vmul.f32 128.0, %v32
  %v34 = vsub.f32 1.0, %v33
  %v35 = vmul.f32 %v32, %v34
  %v36 = vadd.f32 %v32, %v35
  %vm37 = vweird.f32 %v32
  %v38 = vsel %vm37, %v32, %v36
  %v39 = vmul.f32 %v25, %v38
  %v40 = vmul.f32 %v27, %v38
  %v41 = vmul.f32 %v29, %v38
  %v42 = vmul.f32 %v31, %v38
  %v43 = vmul.f32 %v20, %v20
  %v44 = vmul.f32 %v21, %v21
  %v45 = vmul.f32 %v22, %v22
  %v46 = vmul.f32 %v23, %v23
  %47 = vadd.xlane.f32.xlu0 %v43
  %v48 = vpop.xlane.xlu0 %47
  %49 = vadd.xlane.f32.xlu0 %v44
  %v50 = vpop.xlane.xlu0 %49
  %51 = vadd.xlane.f32.xlu0 %v45
  %v52 = vpop.xlane.xlu0 %51
  %53 = vadd.xlane.f32.xlu0 %v46
  %v54 = vpop.xlane.xlu0 %53
  %v55 = vmul.f32 %v48, %v38
  %v56 = vmul.f32 %v50, %v38
  %v57 = vmul.f32 %v52, %v38
  %v58 = vmul.f32 %v54, %v38
  %v59 = vmul.f32 %v39, %v39
  %v60 = vmul.f32 %v40, %v40
  %v61 = vmul.f32 %v41, %v41
  %v62 = vmul.f32 %v42, %v42
  %v63 = vsub.f32 %v55, %v59
  %v64 = vsub.f32 %v56, %v60
  %v65 = vsub.f32 %v57, %v61
  %v66 = vsub.f32 %v58, %v62
  %v67 = vsub.f32 %v20, %v39
  %v68 = vsub.f32 %v21, %v40
  %v69 = vsub.f32 %v22, %v41
  %v70 = vsub.f32 %v23, %v42
  %v71 = vadd.f32 %v63, 1e-05
  %v72 = vadd.f32 %v64, 1e-05
  %v73 = vadd.f32 %v65, 1e-05
  %v74 = vadd.f32 %v66, 1e-05
  %v75 = vrsqrt.pop %v71
  %v76 = vmul.f32 %v75, %v71
  %v77 = vmul.f32 %v76, %v75
  %v78 = vmul.f32 0.5, %v77
  %v79 = vsub.f32 1.5, %v78
  %v80 = vmul.f32 %v75, %v79
  %vm81 = vweird.f32 %v71
  %vm82 = vweird.f32 %v75
  %vm83 = vmor %vm81, %vm82
  %v84 = vsel %vm83, %v75, %v80
  %v85 = vrsqrt.pop %v72
  %v86 = vmul.f32 %v85, %v72
  %v87 = vmul.f32 %v86, %v85
  %v88 = vmul.f32 0.5, %v87
  %v89 = vsub.f32 1.5, %v88
  %v90 = vmul.f32 %v85, %v89
  %vm91 = vweird.f32 %v72
  %vm92 = vweird.f32 %v85
  %vm93 = vmor %vm91, %vm92
  %v94 = vsel %vm93, %v85, %v90
  %v95 = vrsqrt.pop %v73
  %v96 = vmul.f32 %v95, %v73
  %v97 = vmul.f32 %v96, %v95
  %v98 = vmul.f32 0.5, %v97
  %v99 = vsub.f32 1.5, %v98
  %v100 = vmul.f32 %v95, %v99
  %vm101 = vweird.f32 %v73
  %vm102 = vweird.f32 %v95
  %vm103 = vmor %vm101, %vm102
  %v104 = vsel %vm103, %v95, %v100
  %v105 = vrsqrt.pop %v74
  %v106 = vmul.f32 %v105, %v74
  %v107 = vmul.f32 %v106, %v105
  %v108 = vmul.f32 0.5, %v107
  %v109 = vsub.f32 1.5, %v108
  %v110 = vmul.f32 %v105, %v109
  %vm111 = vweird.f32 %v74
  %vm112 = vweird.f32 %v105
  %vm113 = vmor %vm111, %vm112
  %v114 = vsel %vm113, %v105, %v110
  %v115 = vmul.f32 %v67, %v84
  %v116 = vmul.f32 %v68, %v94
  %v117 = vmul.f32 %v69, %v104
  %v118 = vmul.f32 %v70, %v114
  %v119 = vld [vmem:[%s3] sm:$0x1]
  %v121 = vperm.slane %v119, 0
  %v123 = vmul.f32 %v115, %v121
  %v124 = vmul.f32 %v116, %v121
  %v125 = vmul.f32 %v117, %v121
  %v126 = vmul.f32 %v118, %v121
  %v127 = vld [vmem:[%s4] sm:$0x1]
  %v129 = vperm.slane %v127, 0
  %v131 = vadd.f32 %v123, %v129
  %v132 = vadd.f32 %v124, %v129
  %v133 = vadd.f32 %v125, %v129
  %v134 = vadd.f32 %v126, %v129
  %v135 = vpack.c.bf16 %v132, %v131
  %v136 = vpack.c.bf16 %v134, %v133
  %v137 = vld [vmem:[%s1] sm:$0xff]
  %v138 = vld [vmem:[%s1 + $0x8] sm:$0xff]
  %v139 = vld [vmem:[%s1 + $0x10] sm:$0xff]
  %v140 = vld [vmem:[%s1 + $0x18] sm:$0xff]
  %v141 = vld [vmem:[%s1 + $0x20] sm:$0xff]
  %v142 = vld [vmem:[%s1 + $0x28] sm:$0xff]
  %v143 = vld [vmem:[%s1 + $0x30] sm:$0xff]
  %v144 = vld [vmem:[%s1 + $0x38] sm:$0xff]
  %v145 = vld [vmem:[%s1 + $0x40] sm:$0xff]
  %v146 = vld [vmem:[%s1 + $0x48] sm:$0xff]
  %v147 = vld [vmem:[%s1 + $0x50] sm:$0xff]
  %v148 = vld [vmem:[%s1 + $0x58] sm:$0xff]
  %v149 = vld [vmem:[%s1 + $0x60] sm:$0xff]
  %v150 = vld [vmem:[%s1 + $0x68] sm:$0xff]
  %v151 = vld [vmem:[%s1 + $0x70] sm:$0xff]
  %v152 = vld [vmem:[%s1 + $0x78] sm:$0xff]
  %v153 = vld [vmem:[%s2] sm:$0x3]
  %v155 = vperm.slane %v153, 0
  %v156 = vperm.slane %v153, 1
  %v175 = vunpack.c.l.b16 %v137
  %v176 = vunpack.c.h.b16 %v137
  %v177 = vunpack.c.l.b16 %v138
  %v178 = vunpack.c.h.b16 %v138
  %v179 = vunpack.c.l.b16 %v139
  %v180 = vunpack.c.h.b16 %v139
  %v181 = vunpack.c.l.b16 %v140
  %v182 = vunpack.c.h.b16 %v140
  %v183 = vunpack.c.l.b16 %v141
  %v184 = vunpack.c.h.b16 %v141
  %v185 = vunpack.c.l.b16 %v142
  %v186 = vunpack.c.h.b16 %v142
  %v187 = vunpack.c.l.b16 %v143
  %v188 = vunpack.c.h.b16 %v143
  %v189 = vunpack.c.l.b16 %v144
  %v190 = vunpack.c.h.b16 %v144
  %v191 = vunpack.c.l.b16 %v145
  %v192 = vunpack.c.h.b16 %v145
  %v193 = vunpack.c.l.b16 %v146
  %v194 = vunpack.c.h.b16 %v146
  %v195 = vunpack.c.l.b16 %v147
  %v196 = vunpack.c.h.b16 %v147
  %v197 = vunpack.c.l.b16 %v148
  %v198 = vunpack.c.h.b16 %v148
  %v199 = vunpack.c.l.b16 %v149
  %v200 = vunpack.c.h.b16 %v149
  %v201 = vunpack.c.l.b16 %v150
  %v202 = vunpack.c.h.b16 %v150
  %v203 = vunpack.c.l.b16 %v151
  %v204 = vunpack.c.h.b16 %v151
  %v205 = vunpack.c.l.b16 %v152
  %v206 = vunpack.c.h.b16 %v152
  %v207 = vpack.c.b16 %v177, %v175
  %v208 = vpack.c.b16 %v178, %v176
  %v209 = vpack.c.b16 %v181, %v179
  %v210 = vpack.c.b16 %v182, %v180
  %v211 = vpack.c.b16 %v185, %v183
  %v212 = vpack.c.b16 %v186, %v184
  %v213 = vpack.c.b16 %v189, %v187
  %v214 = vpack.c.b16 %v190, %v188
  %v215 = vpack.c.b16 %v193, %v191
  %v216 = vpack.c.b16 %v194, %v192
  %v217 = vpack.c.b16 %v197, %v195
  %v218 = vpack.c.b16 %v198, %v196
  %v219 = vpack.c.b16 %v201, %v199
  %v220 = vpack.c.b16 %v202, %v200
  %v221 = vpack.c.b16 %v205, %v203
  %v222 = vpack.c.b16 %v206, %v204
  %239 = vmatpush.bf16.msra.mxu0 %v221
  %240 = vmatpush.bf16.msra.mxu0 %v219
  %241 = vmatpush.bf16.msra.mxu0 %v217
  %242 = vmatpush.bf16.msra.mxu0 %v215
  %243 = vmatpush.bf16.msra.mxu0 %v213
  %244 = vmatpush.bf16.msra.mxu0 %v211
  %245 = vmatpush.bf16.msra.mxu0 %v209
  %246 = vmatpush.bf16.msra.mxu0 %v207
  %247 = vmatmul.bf16.gmra.mxu0 %v135
  %v248 = vpop.f32.mrf.mxu0
  %v249 = vadd.f32 %v155, %v248
  %v250 = vpop.f32.mrf.mxu0
  %v251 = vadd.f32 %v155, %v250
  %252 = vmatmul.bf16.gmra.mxu0 %v136
  %v253 = vpop.f32.mrf.mxu0
  %v254 = vadd.f32 %v155, %v253
  %v255 = vpop.f32.mrf.mxu0
  %v256 = vadd.f32 %v155, %v255
  %257 = vdwg.mxu0
  %258 = vmatpush.bf16.msra.mxu0 %v222
  %259 = vmatpush.bf16.msra.mxu0 %v220
  %260 = vmatpush.bf16.msra.mxu0 %v218
  %261 = vmatpush.bf16.msra.mxu0 %v216
  %262 = vmatpush.bf16.msra.mxu0 %v214
  %263 = vmatpush.bf16.msra.mxu0 %v212
  %264 = vmatpush.bf16.msra.mxu0 %v210
  %265 = vmatpush.bf16.msra.mxu0 %v208
  %266 = vmatmul.bf16.gmra.mxu0 %v135
  %v267 = vpop.f32.mrf.mxu0
  %v268 = vadd.f32 %v156, %v267
  %v269 = vpop.f32.mrf.mxu0
  %v270 = vadd.f32 %v156, %v269
  %271 = vmatmul.bf16.gmra.mxu0 %v136
  %v272 = vpop.f32.mrf.mxu0
  %v273 = vadd.f32 %v156, %v272
  %v274 = vpop.f32.mrf.mxu0
  %v275 = vadd.f32 %v156, %v274
  %276 = vdwg.mxu0
  %v277 = vmul.f32 %v249, %v249
  %v278 = vmul.f32 %v268, %v268
  %v279 = vmul.f32 %v251, %v251
  %v280 = vmul.f32 %v270, %v270
  %v281 = vmul.f32 %v254, %v254
  %v282 = vmul.f32 %v273, %v273
  %v283 = vmul.f32 %v256, %v256
  %v284 = vmul.f32 %v275, %v275
  %v285 = vmul.f32 %v249, %v277
  %v286 = vmul.f32 %v268, %v278
  %v287 = vmul.f32 %v251, %v279
  %v288 = vmul.f32 %v270, %v280
  %v289 = vmul.f32 %v254, %v281
  %v290 = vmul.f32 %v273, %v282
  %v291 = vmul.f32 %v256, %v283
  %v292 = vmul.f32 %v275, %v284
  %v293 = vmul.f32 %v285, 0.044715
  %v294 = vmul.f32 %v286, 0.044715
  %v295 = vmul.f32 %v287, 0.044715
  %v296 = vmul.f32 %v288, 0.044715
  %v297 = vmul.f32 %v289, 0.044715
  %v298 = vmul.f32 %v290, 0.044715
  %v299 = vmul.f32 %v291, 0.044715
  %v300 = vmul.f32 %v292, 0.044715
  %v301 = vadd.f32 %v249, %v293
  %v302 = vadd.f32 %v268, %v294
  %v303 = vadd.f32 %v251, %v295
  %v304 = vadd.f32 %v270, %v296
  %v305 = vadd.f32 %v254, %v297
  %v306 = vadd.f32 %v273, %v298
  %v307 = vadd.f32 %v256, %v299
  %v308 = vadd.f32 %v275, %v300
  %v309 = vmul.f32 %v301, 0.7978846
  %v310 = vmul.f32 %v302, 0.7978846
  %v311 = vmul.f32 %v303, 0.7978846
  %v312 = vmul.f32 %v304, 0.7978846
  %v313 = vmul.f32 %v305, 0.7978846
  %v314 = vmul.f32 %v306, 0.7978846
  %v315 = vmul.f32 %v307, 0.7978846
  %v316 = vmul.f32 %v308, 0.7978846
  %v317 = vtanh.pop %v309
  %v318 = vtanh.pop %v310
  %v319 = vtanh.pop %v311
  %v320 = vtanh.pop %v312
  %v321 = vtanh.pop %v313
  %v322 = vtanh.pop %v314
  %v323 = vtanh.pop %v315
  %v324 = vtanh.pop %v316
  %v325 = vadd.f32 %v317, 1.0
  %v326 = vadd.f32 %v318, 1.0
  %v327 = vadd.f32 %v319, 1.0
  %v328 = vadd.f32 %v320, 1.0
  %v329 = vadd.f32 %v321, 1.0
  %v330 = vadd.f32 %v322, 1.0
  %v331 = vadd.f32 %v323, 1.0
  %v332 = vadd.f32 %v324, 1.0
  %v333 = vmul.f32 %v325, 0.5
  %v334 = vmul.f32 %v326, 0.5
  %v335 = vmul.f32 %v327, 0.5
  %v336 = vmul.f32 %v328, 0.5
  %v337 = vmul.f32 %v329, 0.5
  %v338 = vmul.f32 %v330, 0.5
  %v339 = vmul.f32 %v331, 0.5
  %v340 = vmul.f32 %v332, 0.5
  %v341 = vmul.f32 %v249, %v333
  %v342 = vmul.f32 %v268, %v334
  %v343 = vmul.f32 %v251, %v335
  %v344 = vmul.f32 %v270, %v336
  %v345 = vmul.f32 %v254, %v337
  %v346 = vmul.f32 %v273, %v338
  %v347 = vmul.f32 %v256, %v339
  %v348 = vmul.f32 %v275, %v340
  %v349 = vpack.c.bf16 %v342, %v341
  %v350 = vpack.c.bf16 %v344, %v343
  %v351 = vpack.c.bf16 %v346, %v345
  %v352 = vpack.c.bf16 %v348, %v347
  %353 = vst [vmem:[%s5] sm:$0xff] %v349
  %354 = vst [vmem:[%s5 + $0x8] sm:$0xff] %v350
  %355 = vst [vmem:[%s5 + $0x10] sm:$0xff] %v351
  %356 = vst [vmem:[%s5 + $0x18] sm:$0xff] %v352
  // Predicated region
  $region22: #{video_expert_forward.25} parent=0 // pred_check
    _
  $region23: #{video_expert_forward.25} parent=0 // pred_check_branch
    %358 = sbr.rel (0) target = $region25
  $region24: #{video_expert_forward.25} parent=0 // pred_region
    _
  $region25: #{video_expert_forward.25} parent=0 // pred_fallthru
    _
  // Predicated region
  $region26: #{video_expert_forward.25} parent=0 // pred_check
    _
  $region27: #{video_expert_forward.25} parent=0 // pred_check_branch
    %360 = sbr.rel (0) target = $region29
  $region28: #{video_expert_forward.25} parent=0 // pred_region
    _
  $region29: #{video_expert_forward.25} parent=0 // pred_fallthru
    _

// kernel: video_expert_forward.27
$region0: #{video_expert_forward.27}
  #allocation0 [shape = 'u32[]', space=smem, size = 0x4, offset = 0x4, fixed_abs, tag = 'smem constant byte address 0x4 - core index']
  #allocation1 [shape = 'u32[72,128]{1,0:T(1,128)}', space=vmem, size = 0x9000, scoped, tag = 'internal scratch']
  %s0 = inlined_call_operand.vmem [shape: f32[24,128], index: 0, kind: input, shape index: {}]
  %s1 = inlined_call_operand.vmem [shape: f32[1,128], index: 1, kind: input, shape index: {}]
  %s2 = inlined_call_operand.vmem [shape: f32[1,128], index: 2, kind: input, shape index: {}]
  %s3 = inlined_call_operand.vmem [shape: f32[24,128], index: 3, kind: output, shape index: {}]
  %s4 = sld [smem:[#allocation0]]
  $region22: #{video_expert_forward.27} parent=0
    _
  %s6 = ssub.s32 1, %s4
  %s7 = scalar_select 0, %s6, %s4
  // Predicated region
  $region2: #{video_expert_forward.27} parent=0 // pred_check
    _
  $region3: #{video_expert_forward.27} parent=0 // pred_check_branch
    %9 = sbr.rel (0) target = $region5
  $region4: #{video_expert_forward.27} parent=0 // pred_region
    _
  $region5: #{video_expert_forward.27} parent=0 // pred_fallthru
    _
  // Predicated region
  $region6: #{video_expert_forward.27} parent=0 // pred_check
    _
  $region7: #{video_expert_forward.27} parent=0 // pred_check_branch
    %11 = sbr.rel (0) target = $region9
  $region8: #{video_expert_forward.27} parent=0 // pred_region
    _
  $region9: #{video_expert_forward.27} parent=0 // pred_fallthru
    _
  // Predicated region
  $region10: #{video_expert_forward.27} parent=0 // pred_check
    _
  $region11: #{video_expert_forward.27} parent=0 // pred_check_branch
    %13 = sbr.rel (0) target = $region13
  $region12: #{video_expert_forward.27} parent=0 // pred_region
    _
  $region13: #{video_expert_forward.27} parent=0 // pred_fallthru
    _
  %v14 = vld [vmem:[%s0] sm:$0xff]
  %v15 = vld [vmem:[%s0 + $0x8] sm:$0xff]
  %v16 = vld [vmem:[%s0 + $0x10] sm:$0xff]
  %17 = vadd.xlane.f32.xlu0 %v14
  %v18 = vpop.xlane.xlu0 %17
  %19 = vadd.xlane.f32.xlu0 %v15
  %v20 = vpop.xlane.xlu0 %19
  %21 = vadd.xlane.f32.xlu0 %v16
  %v22 = vpop.xlane.xlu0 %21
  %v23 = vrcp.pop 128.0
  %v24 = vmul.f32 128.0, %v23
  %v25 = vsub.f32 1.0, %v24
  %v26 = vmul.f32 %v23, %v25
  %v27 = vadd.f32 %v23, %v26
  %vm28 = vweird.f32 %v23
  %v29 = vsel %vm28, %v23, %v27
  %v30 = vmul.f32 %v18, %v29
  %v31 = vmul.f32 %v20, %v29
  %v32 = vmul.f32 %v22, %v29
  %v33 = vsub.f32 %v14, %v30
  %v34 = vsub.f32 %v15, %v31
  %v35 = vsub.f32 %v16, %v32
  %v36 = vmul.f32 %v33, %v33
  %v37 = vmul.f32 %v34, %v34
  %v38 = vmul.f32 %v35, %v35
  %39 = vadd.xlane.f32.xlu0 %v36
  %v40 = vpop.xlane.xlu0 %39
  %41 = vadd.xlane.f32.xlu0 %v37
  %v42 = vpop.xlane.xlu0 %41
  %43 = vadd.xlane.f32.xlu0 %v38
  %v44 = vpop.xlane.xlu0 %43
  %v45 = vmul.f32 %v40, %v29
  %v46 = vmul.f32 %v42, %v29
  %v47 = vmul.f32 %v44, %v29
  %v48 = vadd.f32 %v45, 1e-05
  %v49 = vadd.f32 %v46, 1e-05
  %v50 = vadd.f32 %v47, 1e-05
  %v51 = vrsqrt.pop %v48
  %v52 = vmul.f32 %v51, %v48
  %v53 = vmul.f32 %v52, %v51
  %v54 = vmul.f32 0.5, %v53
  %v55 = vsub.f32 1.5, %v54
  %v56 = vmul.f32 %v51, %v55
  %vm57 = vweird.f32 %v48
  %vm58 = vweird.f32 %v51
  %vm59 = vmor %vm57, %vm58
  %v60 = vsel %vm59, %v51, %v56
  %v61 = vrsqrt.pop %v49
  %v62 = vmul.f32 %v61, %v49
  %v63 = vmul.f32 %v62, %v61
  %v64 = vmul.f32 0.5, %v63
  %v65 = vsub.f32 1.5, %v64
  %v66 = vmul.f32 %v61, %v65
  %vm67 = vweird.f32 %v49
  %vm68 = vweird.f32 %v61
  %vm69 = vmor %vm67, %vm68
  %v70 = vsel %vm69, %v61, %v66
  %v71 = vrsqrt.pop %v50
  %v72 = vmul.f32 %v71, %v50
  %v73 = vmul.f32 %v72, %v71
  %v74 = vmul.f32 0.5, %v73
  %v75 = vsub.f32 1.5, %v74
  %v76 = vmul.f32 %v71, %v75
  %vm77 = vweird.f32 %v50
  %vm78 = vweird.f32 %v71
  %vm79 = vmor %vm77, %vm78
  %v80 = vsel %vm79, %v71, %v76
  %v81 = vmul.f32 %v33, %v60
  %v82 = vmul.f32 %v34, %v70
  %v83 = vmul.f32 %v35, %v80
  %v84 = vld [vmem:[%s1] sm:$0x1]
  %v86 = vperm.slane %v84, 0
  %v88 = vmul.f32 %v81, %v86
  %v89 = vmul.f32 %v82, %v86
  %v90 = vmul.f32 %v83, %v86
  %v91 = vld [vmem:[%s2] sm:$0x1]
  %v93 = vperm.slane %v91, 0
  %v95 = vadd.f32 %v88, %v93
  %v96 = vadd.f32 %v89, %v93
  %v97 = vadd.f32 %v90, %v93
  %98 = vst [vmem:[%s3] sm:$0xff] %v95
  %99 = vst [vmem:[%s3 + $0x8] sm:$0xff] %v96
  %100 = vst [vmem:[%s3 + $0x10] sm:$0xff] %v97
  // Predicated region
  $region14: #{video_expert_forward.27} parent=0 // pred_check
    _
  $region15: #{video_expert_forward.27} parent=0 // pred_check_branch
    %102 = sbr.rel (0) target = $region17
  $region16: #{video_expert_forward.27} parent=0 // pred_region
    _
  $region17: #{video_expert_forward.27} parent=0 // pred_fallthru
    _
  // Predicated region
  $region18: #{video_expert_forward.27} parent=0 // pred_check
    _
  $region19: #{video_expert_forward.27} parent=0 // pred_check_branch
    %104 = sbr.rel (0) target = $region21
  $region20: #{video_expert_forward.27} parent=0 // pred_region
    _
  $region21: #{video_expert_forward.27} parent=0 // pred_fallthru
    _

// kernel: video_expert_forward.26
$region0: #{video_expert_forward.26}
  #allocation0 [shape = 'u32[]', space=smem, size = 0x4, offset = 0x4, fixed_abs, tag = 'smem constant byte address 0x4 - core index']
  #allocation1 [shape = 'u32[72,128]{1,0:T(1,128)}', space=vmem, size = 0x9000, scoped, tag = 'internal scratch']
  %s0 = inlined_call_operand.vmem [shape: bf16[32,256], index: 0, kind: input, shape index: {}]
  %s1 = inlined_call_operand.vmem [shape: bf16[256,128], index: 1, kind: input, shape index: {}]
  %s2 = inlined_call_operand.vmem [shape: f32[1,128], index: 2, kind: input, shape index: {}]
  %s3 = inlined_call_operand.vmem [shape: f32[32,128], index: 3, kind: input, shape index: {}]
  %s4 = inlined_call_operand.vmem [shape: f32[32,128], index: 4, kind: output, shape index: {}]
  %s5 = sld [smem:[#allocation0]]
  $region26: #{video_expert_forward.26} parent=0
    _
  %s7 = ssub.s32 1, %s5
  %s8 = scalar_select 0, %s7, %s5
  // Predicated region
  $region2: #{video_expert_forward.26} parent=0 // pred_check
    _
  $region3: #{video_expert_forward.26} parent=0 // pred_check_branch
    %10 = sbr.rel (0) target = $region5
  $region4: #{video_expert_forward.26} parent=0 // pred_region
    _
  $region5: #{video_expert_forward.26} parent=0 // pred_fallthru
    _
  // Predicated region
  $region6: #{video_expert_forward.26} parent=0 // pred_check
    _
  $region7: #{video_expert_forward.26} parent=0 // pred_check_branch
    %12 = sbr.rel (0) target = $region9
  $region8: #{video_expert_forward.26} parent=0 // pred_region
    _
  $region9: #{video_expert_forward.26} parent=0 // pred_fallthru
    _
  // Predicated region
  $region10: #{video_expert_forward.26} parent=0 // pred_check
    _
  $region11: #{video_expert_forward.26} parent=0 // pred_check_branch
    %14 = sbr.rel (0) target = $region13
  $region12: #{video_expert_forward.26} parent=0 // pred_region
    _
  $region13: #{video_expert_forward.26} parent=0 // pred_fallthru
    _
  // Predicated region
  $region14: #{video_expert_forward.26} parent=0 // pred_check
    _
  $region15: #{video_expert_forward.26} parent=0 // pred_check_branch
    %16 = sbr.rel (0) target = $region17
  $region16: #{video_expert_forward.26} parent=0 // pred_region
    _
  $region17: #{video_expert_forward.26} parent=0 // pred_fallthru
    _
  %v17 = vld [vmem:[%s0] sm:$0xff]
  %v18 = vld [vmem:[%s0 + $0x8] sm:$0xff]
  %v19 = vld [vmem:[%s0 + $0x10] sm:$0xff]
  %v20 = vld [vmem:[%s0 + $0x18] sm:$0xff]
  %v21 = vld [vmem:[%s1] sm:$0xf]
  %v22 = vld [vmem:[%s1 + $0x4] sm:$0xf]
  %v23 = vld [vmem:[%s1 + $0x8] sm:$0xf]
  %v24 = vld [vmem:[%s1 + $0xc] sm:$0xf]
  %v25 = vld [vmem:[%s1 + $0x10] sm:$0xf]
  %v26 = vld [vmem:[%s1 + $0x14] sm:$0xf]
  %v27 = vld [vmem:[%s1 + $0x18] sm:$0xf]
  %v28 = vld [vmem:[%s1 + $0x1c] sm:$0xf]
  %v29 = vld [vmem:[%s1 + $0x20] sm:$0xf]
  %v30 = vld [vmem:[%s1 + $0x24] sm:$0xf]
  %v31 = vld [vmem:[%s1 + $0x28] sm:$0xf]
  %v32 = vld [vmem:[%s1 + $0x2c] sm:$0xf]
  %v33 = vld [vmem:[%s1 + $0x30] sm:$0xf]
  %v34 = vld [vmem:[%s1 + $0x34] sm:$0xf]
  %v35 = vld [vmem:[%s1 + $0x38] sm:$0xf]
  %v36 = vld [vmem:[%s1 + $0x3c] sm:$0xf]
  %v37 = vld [vmem:[%s1 + $0x40] sm:$0xf]
  %v38 = vld [vmem:[%s1 + $0x44] sm:$0xf]
  %v39 = vld [vmem:[%s1 + $0x48] sm:$0xf]
  %v40 = vld [vmem:[%s1 + $0x4c] sm:$0xf]
  %v41 = vld [vmem:[%s1 + $0x50] sm:$0xf]
  %v42 = vld [vmem:[%s1 + $0x54] sm:$0xf]
  %v43 = vld [vmem:[%s1 + $0x58] sm:$0xf]
  %v44 = vld [vmem:[%s1 + $0x5c] sm:$0xf]
  %v45 = vld [vmem:[%s1 + $0x60] sm:$0xf]
  %v46 = vld [vmem:[%s1 + $0x64] sm:$0xf]
  %v47 = vld [vmem:[%s1 + $0x68] sm:$0xf]
  %v48 = vld [vmem:[%s1 + $0x6c] sm:$0xf]
  %v49 = vld [vmem:[%s1 + $0x70] sm:$0xf]
  %v50 = vld [vmem:[%s1 + $0x74] sm:$0xf]
  %v51 = vld [vmem:[%s1 + $0x78] sm:$0xf]
  %v52 = vld [vmem:[%s1 + $0x7c] sm:$0xf]
  %v53 = vld [vmem:[%s2] sm:$0x1]
  %v55 = vperm.slane %v53, 0
  %v61 = vunpack.c.l.b16 %v17
  %v62 = vunpack.c.h.b16 %v17
  %v63 = vunpack.c.l.b16 %v18
  %v64 = vunpack.c.h.b16 %v18
  %v65 = vunpack.c.l.b16 %v19
  %v66 = vunpack.c.h.b16 %v19
  %v67 = vunpack.c.l.b16 %v20
  %v68 = vunpack.c.h.b16 %v20
  %v69 = vpack.c.b16 %v63, %v61
  %v70 = vpack.c.b16 %v64, %v62
  %v71 = vpack.c.b16 %v67, %v65
  %v72 = vpack.c.b16 %v68, %v66
  %v109 = vunpack.c.l.b16 %v21
  %v110 = vunpack.c.l.b16 %v22
  %v111 = vunpack.c.l.b16 %v23
  %v112 = vunpack.c.l.b16 %v24
  %v113 = vunpack.c.l.b16 %v25
  %v114 = vunpack.c.l.b16 %v26
  %v115 = vunpack.c.l.b16 %v27
  %v116 = vunpack.c.l.b16 %v28
  %v117 = vunpack.c.l.b16 %v29
  %v118 = vunpack.c.l.b16 %v30
  %v119 = vunpack.c.l.b16 %v31
  %v120 = vunpack.c.l.b16 %v32
  %v121 = vunpack.c.l.b16 %v33
  %v122 = vunpack.c.l.b16 %v34
  %v123 = vunpack.c.l.b16 %v35
  %v124 = vunpack.c.l.b16 %v36
  %v125 = vunpack.c.l.b16 %v37
  %v126 = vunpack.c.l.b16 %v38
  %v127 = vunpack.c.l.b16 %v39
  %v128 = vunpack.c.l.b16 %v40
  %v129 = vunpack.c.l.b16 %v41
  %v130 = vunpack.c.l.b16 %v42
  %v131 = vunpack.c.l.b16 %v43
  %v132 = vunpack.c.l.b16 %v44
  %v133 = vunpack.c.l.b16 %v45
  %v134 = vunpack.c.l.b16 %v46
  %v135 = vunpack.c.l.b16 %v47
  %v136 = vunpack.c.l.b16 %v48
  %v137 = vunpack.c.l.b16 %v49
  %v138 = vunpack.c.l.b16 %v50
  %v139 = vunpack.c.l.b16 %v51
  %v140 = vunpack.c.l.b16 %v52
  %v141 = vpack.c.b16 %v110, %v109
  %v142 = vpack.c.b16 %v112, %v111
  %v143 = vpack.c.b16 %v114, %v113
  %v144 = vpack.c.b16 %v116, %v115
  %v145 = vpack.c.b16 %v118, %v117
  %v146 = vpack.c.b16 %v120, %v119
  %v147 = vpack.c.b16 %v122, %v121
  %v148 = vpack.c.b16 %v124, %v123
  %v149 = vpack.c.b16 %v126, %v125
  %v150 = vpack.c.b16 %v128, %v127
  %v151 = vpack.c.b16 %v130, %v129
  %v152 = vpack.c.b16 %v132, %v131
  %v153 = vpack.c.b16 %v134, %v133
  %v154 = vpack.c.b16 %v136, %v135
  %v155 = vpack.c.b16 %v138, %v137
  %v156 = vpack.c.b16 %v140, %v139
  %173 = vmatpush.bf16.msra.mxu0 %v148
  %174 = vmatpush.bf16.msra.mxu0 %v147
  %175 = vmatpush.bf16.msra.mxu0 %v146
  %176 = vmatpush.bf16.msra.mxu0 %v145
  %177 = vmatpush.bf16.msra.mxu0 %v144
  %178 = vmatpush.bf16.msra.mxu0 %v143
  %179 = vmatpush.bf16.msra.mxu0 %v142
  %180 = vmatpush.bf16.msra.mxu0 %v141
  %181 = vmatmul.bf16.gmra.mxu0 %v69
  %v182 = vpop.f32.mrf.mxu0
  %v183 = vadd.f32 %v55, %v182
  %v184 = vpop.f32.mrf.mxu0
  %v185 = vadd.f32 %v55, %v184
  %186 = vmatmul.bf16.gmra.mxu0 %v71
  %v187 = vpop.f32.mrf.mxu0
  %v188 = vadd.f32 %v55, %v187
  %v189 = vpop.f32.mrf.mxu0
  %v190 = vadd.f32 %v55, %v189
  %191 = vdwg.mxu0
  %192 = vmatpush.bf16.msra.mxu0 %v156
  %193 = vmatpush.bf16.msra.mxu0 %v155
  %194 = vmatpush.bf16.msra.mxu0 %v154
  %195 = vmatpush.bf16.msra.mxu0 %v153
  %196 = vmatpush.bf16.msra.mxu0 %v152
  %197 = vmatpush.bf16.msra.mxu0 %v151
  %198 = vmatpush.bf16.msra.mxu0 %v150
  %199 = vmatpush.bf16.msra.mxu0 %v149
  %200 = vmatmul.bf16.gmra.mxu0 %v70
  %v201 = vpop.f32.mrf.mxu0
  %v202 = vadd.f32 %v183, %v201
  %v203 = vpop.f32.mrf.mxu0
  %v204 = vadd.f32 %v185, %v203
  %205 = vmatmul.bf16.gmra.mxu0 %v72
  %v206 = vpop.f32.mrf.mxu0
  %v207 = vadd.f32 %v188, %v206
  %v208 = vpop.f32.mrf.mxu0
  %v209 = vadd.f32 %v190, %v208
  %210 = vdwg.mxu0
  %v211 = vld [vmem:[%s3] sm:$0xff]
  %v212 = vld [vmem:[%s3 + $0x8] sm:$0xff]
  %v213 = vld [vmem:[%s3 + $0x10] sm:$0xff]
  %v214 = vld [vmem:[%s3 + $0x18] sm:$0xff]
  %v215 = vadd.f32 %v202, %v211
  %v216 = vadd.f32 %v204, %v212
  %v217 = vadd.f32 %v207, %v213
  %v218 = vadd.f32 %v209, %v214
  %219 = vst [vmem:[%s4] sm:$0xff] %v215
  %220 = vst [vmem:[%s4 + $0x8] sm:$0xff] %v216
  %221 = vst [vmem:[%s4 + $0x10] sm:$0xff] %v217
  %222 = vst [vmem:[%s4 + $0x18] sm:$0xff] %v218
  // Predicated region
  $region18: #{video_expert_forward.26} parent=0 // pred_check
    _
  $region19: #{video_expert_forward.26} parent=0 // pred_check_branch
    %224 = sbr.rel (0) target = $region21
  $region20: #{video_expert_forward.26} parent=0 // pred_region
    _
  $region21: #{video_expert_forward.26} parent=0 // pred_fallthru
    _
  // Predicated region
  $region22: #{video_expert_forward.26} parent=0 // pred_check
    _
  $region23: #{video_expert_forward.26} parent=0 // pred_check_branch
    %226 = sbr.rel (0) target = $region25
  $region24: #{video_expert_forward.26} parent=0 // pred_region
    _
  $region25: #{video_expert_forward.26} parent=0 // pred_fallthru
    _

// kernel: video_expert_forward.29
$region0: #{video_expert_forward.29}
  #allocation0 [shape = 'u32[]', space=smem, size = 0x4, offset = 0x4, fixed_abs, tag = 'smem constant byte address 0x4 - core index']
  #allocation1 [shape = 'u32[72,128]{1,0:T(1,128)}', space=vmem, size = 0x9000, scoped, tag = 'internal scratch']
  %s0 = inlined_call_operand.vmem [shape: f32[16,128], index: 0, kind: input, shape index: {}]
  %s1 = inlined_call_operand.hbm [shape: f32[16,128], index: 1, kind: output, shape index: {}]
  %s2 = sld [smem:[#allocation0]]
  $region14: #{video_expert_forward.29} parent=0
    _
  %s4 = ssub.s32 1, %s2
  %s5 = scalar_select 0, %s4, %s2
  $region1: #{video_expert_forward.29} parent=0
    #allocation2 [shape = 'u8[8192]{0}', space=vmem, size = 0x2000, scoped, tag = 'output window, operand 0, single buffered']
    #allocation3 [shape = 's32[1]{0}', space=sflag, size = 0x4, scoped, tag = 'scoped memory for video_expert_forward.29']
    %6 = vsyncpa [#allocation3], 0
    // Predicated region
    $region2: #{video_expert_forward.29} parent=1 // pred_check
      _
    $region3: #{video_expert_forward.29} parent=1 // pred_check_branch
      %8 = sbr.rel (0) target = $region5
    $region4: #{video_expert_forward.29} parent=1 // pred_region
      _
    $region5: #{video_expert_forward.29} parent=1 // pred_fallthru
      _
    %v9 = vld [vmem:[%s0] sm:$0xff]
    %v10 = vld [vmem:[%s0 + $0x8] sm:$0xff]
    %v11 = vmul.f32 %v9, %v9
    %v12 = vmul.f32 %v10, %v10
    %13 = vadd.xlane.f32.xlu0 %v11
    %v14 = vpop.xlane.xlu0 %13
    %15 = vadd.xlane.f32.xlu0 %v12
    %v16 = vpop.xlane.xlu0 %15
    %v17 = vrsqrt.pop %v14
    %v18 = vmul.f32 %v17, %v14
    %v19 = vmul.f32 %v18, %v17
    %v20 = vmul.f32 0.5, %v19
    %v21 = vsub.f32 1.5, %v20
    %v22 = vmul.f32 %v17, %v21
    %v23 = vmul.f32 %v14, %v22
    %vm24 = vcmp.eq.f32.partialorder %v14, inf
    %v25 = vsel %vm24, %v14, %v23
    %vm26 = vcmp.eq.f32.partialorder %v14, 0.0
    %v27 = vand.u32 %v14, 2147483648
    %v28 = vsel %vm26, %v27, %v25
    %v29 = vrsqrt.pop %v16
    %v30 = vmul.f32 %v29, %v16
    %v31 = vmul.f32 %v30, %v29
    %v32 = vmul.f32 0.5, %v31
    %v33 = vsub.f32 1.5, %v32
    %v34 = vmul.f32 %v29, %v33
    %v35 = vmul.f32 %v16, %v34
    %vm36 = vcmp.eq.f32.partialorder %v16, inf
    %v37 = vsel %vm36, %v16, %v35
    %vm38 = vcmp.eq.f32.partialorder %v16, 0.0
    %v39 = vand.u32 %v16, 2147483648
    %v40 = vsel %vm38, %v39, %v37
    %v41 = vmax.f32 %v28, 1e-12
    %v42 = vmax.f32 %v40, 1e-12
    %v43 = vrcp.pop %v41
    %v44 = vmul.f32 %v41, %v43
    %v45 = vsub.f32 1.0, %v44
    %v46 = vmul.f32 %v43, %v45
    %v47 = vadd.f32 %v43, %v46
    %vm48 = vweird.f32 %v41
    %vm49 = vweird.f32 %v43
    %vm50 = vmor %vm48, %vm49
    %v51 = vsel %vm50, %v43, %v47
    %v52 = vand.u32 2147483647, %v41
    %vm53 = vcmp.eq.f32.partialorder %v52, 8.507059e+37
    %v54 = vand.u32 %v41, 2147483648
    %v55 = vor.u32 1.1754944e-38, %v54
    %v56 = vsel %vm53, %v55, %v51
    %v57 = vmul.f32 %v9, %v56
    %v58 = vrcp.pop %v42
    %v59 = vmul.f32 %v42, %v58
    %v60 = vsub.f32 1.0, %v59
    %v61 = vmul.f32 %v58, %v60
    %v62 = vadd.f32 %v58, %v61
    %vm63 = vweird.f32 %v42
    %vm64 = vweird.f32 %v58
    %vm65 = vmor %vm63, %vm64
    %v66 = vsel %vm65, %v58, %v62
    %v67 = vand.u32 2147483647, %v42
    %vm68 = vcmp.eq.f32.partialorder %v67, 8.507059e+37
    %v69 = vand.u32 %v42, 2147483648
    %v70 = vor.u32 1.1754944e-38, %v69
    %v71 = vsel %vm68, %v70, %v66
    %v72 = vmul.f32 %v10, %v71
    %73 = vst [vmem:[#allocation2] sm:$0xff] %v57
    %74 = vst [vmem:[#allocation2 + $0x8] sm:$0xff] %v72
    // Predicated region
    $region6: #{video_expert_forward.29} parent=1 // pred_check
      _
    $region7: #{video_expert_forward.29} parent=1 // pred_check_branch
      %76 = sbr.rel (0) target = $region9
    $region8: #{video_expert_forward.29} parent=1 // pred_region
      %78 = vsyncadd [#allocation3], 0
      %s79 = sshll.u32 [#allocation2], 4
      %s80 = int_to_ptr.vmem [resolvable:$true] %s79
      %s81 = sshll.u32 %s1, 4
      %s82 = int_to_ptr.hbm [resolvable:$true] %s81
      %87 = dma.vmem_to_hbm [thread:$0]  %s80, 256, %s82, [#allocation3], 128, 128, 8
    $region9: #{video_expert_forward.29} parent=1 // pred_fallthru
      _
    // Predicated region
    $region10: #{video_expert_forward.29} parent=1 // pred_check
      _
    $region11: #{video_expert_forward.29} parent=1 // pred_check_branch
      %89 = sbr.rel (0) target = $region13
    $region12: #{video_expert_forward.29} parent=1 // pred_region
      %91 = dma.done [#allocation3], 256
    $region13: #{video_expert_forward.29} parent=1 // pred_fallthru
      _
    %92 = vsyncpa [#allocation3], 1

// kernel: video_expert_forward.28
$region0: #{video_expert_forward.28}
  #allocation0 [shape = 'u32[]', space=smem, size = 0x4, offset = 0x4, fixed_abs, tag = 'smem constant byte address 0x4 - core index']
  #allocation1 [shape = 'u32[72,128]{1,0:T(1,128)}', space=vmem, size = 0x9000, scoped, tag = 'internal scratch']
  %s0 = inlined_call_operand.vmem [shape: f32[8,128], index: 0, kind: input, shape index: {}]
  %s1 = inlined_call_operand.vmem [shape: f32[8,128], index: 1, kind: output, shape index: {}]
  %s2 = sld [smem:[#allocation0]]
  $region14: #{video_expert_forward.28} parent=0
    _
  %s4 = ssub.s32 1, %s2
  %s5 = scalar_select 0, %s4, %s2
  // Predicated region
  $region2: #{video_expert_forward.28} parent=0 // pred_check
    _
  $region3: #{video_expert_forward.28} parent=0 // pred_check_branch
    %7 = sbr.rel (0) target = $region5
  $region4: #{video_expert_forward.28} parent=0 // pred_region
    _
  $region5: #{video_expert_forward.28} parent=0 // pred_fallthru
    _
  %v8 = vld [vmem:[%s0] sm:$0xff]
  %v9 = vmul.f32 %v8, %v8
  %10 = vadd.xlane.f32.xlu0 %v9
  %v11 = vpop.xlane.xlu0 %10
  %v12 = vrsqrt.pop %v11
  %v13 = vmul.f32 %v12, %v11
  %v14 = vmul.f32 %v13, %v12
  %v15 = vmul.f32 0.5, %v14
  %v16 = vsub.f32 1.5, %v15
  %v17 = vmul.f32 %v12, %v16
  %v18 = vmul.f32 %v11, %v17
  %vm19 = vcmp.eq.f32.partialorder %v11, inf
  %v20 = vsel %vm19, %v11, %v18
  %vm21 = vcmp.eq.f32.partialorder %v11, 0.0
  %v22 = vand.u32 %v11, 2147483648
  %v23 = vsel %vm21, %v22, %v20
  %v24 = vmax.f32 %v23, 1e-12
  %v25 = vrcp.pop %v24
  %v26 = vmul.f32 %v24, %v25
  %v27 = vsub.f32 1.0, %v26
  %v28 = vmul.f32 %v25, %v27
  %v29 = vadd.f32 %v25, %v28
  %vm30 = vweird.f32 %v24
  %vm31 = vweird.f32 %v25
  %vm32 = vmor %vm30, %vm31
  %v33 = vsel %vm32, %v25, %v29
  %v34 = vand.u32 2147483647, %v24
  %vm35 = vcmp.eq.f32.partialorder %v34, 8.507059e+37
  %v36 = vand.u32 %v24, 2147483648
  %v37 = vor.u32 1.1754944e-38, %v36
  %v38 = vsel %vm35, %v37, %v33
  %v39 = vmul.f32 %v8, %v38
  %40 = vst [vmem:[%s1] sm:$0xff] %v39
  // Predicated region
  $region6: #{video_expert_forward.28} parent=0 // pred_check
    _
  $region7: #{video_expert_forward.28} parent=0 // pred_check_branch
    %42 = sbr.rel (0) target = $region9
  $region8: #{video_expert_forward.28} parent=0 // pred_region
    _
  $region9: #{video_expert_forward.28} parent=0 // pred_fallthru
    _
  // Predicated region
  $region10: #{video_expert_forward.28} parent=0 // pred_check
    _
  $region11: #{video_expert_forward.28} parent=0 // pred_check_branch
    %44 = sbr.rel (0) target = $region13
  $region12: #{video_expert_forward.28} parent=0 // pred_region
    _
  $region13: #{video_expert_forward.28} parent=0 // pred_fallthru
    _

</llo_original>
